<compile_context>
chip_gen: v6e
topology: v6e:2x2x1
jax: 0.10.0
libtpu: 0.0.40
codegen_flags: <defaults>
</compile_context>

<pallas_src>
import functools

import jax
import jax.numpy as jnp
from jax.experimental import pallas as pl
from jax.experimental.pallas import tpu as pltpu


# ------------------------------ fused kernel ---------------------------------
def stn3d_kernel(x_ref, w1_ref, b1_ref, w2_ref, b2_ref, w3_ref, b3_ref,
                 wf1_ref, bf1_ref, wf2_ref, bf2_ref, wf3_ref, bf3_ref,
                 out_ref, *, n_points, tb):
    # x_ref: (TB*N, C) bf16 -- points along sublanes, channels along lanes.

    # conv1 / bn1 / relu : (TB*N, C) @ (C, 64) -> (TB*N, 64)
    h = jnp.dot(x_ref[...], w1_ref[...],
                preferred_element_type=jnp.float32) + b1_ref[...]
    h = jnp.maximum(h, 0.0).astype(jnp.bfloat16)

    # conv2 / bn2 / relu : -> (TB*N, 128)
    h = jnp.dot(h, w2_ref[...],
                preferred_element_type=jnp.float32) + b2_ref[...]
    h = jnp.maximum(h, 0.0).astype(jnp.bfloat16)

    # conv3 : -> (TB*N, 1024).  Bias + ReLU deferred past the max-pool:
    # max_p(relu(x_p + b)) == relu(max_p(x_p) + b)  (ReLU monotone, b per-column).
    h = jnp.dot(h, w3_ref[...], preferred_element_type=jnp.float32)

    # global max over points for each of the TB clouds, single cross-sublane
    # reduce + one full-block result; bias/ReLU applied on the tiny (TB, 1024) tile.
    pooled = jnp.max(h.reshape(tb, n_points, 1024), axis=1)        # (TB, 1024) f32
    feat = jnp.maximum(pooled + b3_ref[...], 0.0).astype(jnp.bfloat16)

    # fc1 / bn4 / relu : (TB, 1024) @ (1024, 512)
    g = jnp.dot(feat, wf1_ref[...],
                preferred_element_type=jnp.float32) + bf1_ref[...]
    g = jnp.maximum(g, 0.0).astype(jnp.bfloat16)

    # fc2 / bn5 / relu : -> (TB, 256)
    g = jnp.dot(g, wf2_ref[...],
                preferred_element_type=jnp.float32) + bf2_ref[...]
    g = jnp.maximum(g, 0.0).astype(jnp.bfloat16)

    # fc3 + identity (identity already folded into bf3) : -> (TB, 9)
    out_ref[...] = jnp.dot(g, wf3_ref[...],
                           preferred_element_type=jnp.float32) + bf3_ref[...]


# --------------------------------- wrapper ------------------------------------
def stn3d_forward(x_bcn, params):
    """x_bcn: (B, C, N) float32 (PyTorch NCW). Returns (B, 3, 3) float32."""
    (w1, b1, w2, b2, w3, b3, wf1, bf1, wf2, bf2, wf3, bf3i) = params
    B, C, N = x_bcn.shape

    TB = 8                                     # sublane-aligned batch block
    B_pad = ((B + TB - 1) // TB) * TB

    # (B, C, N) -> (B_pad, N, C) -> (B_pad*N, C), bf16 activations.
    x = jnp.transpose(x_bcn, (0, 2, 1))
    if B_pad != B:
        x = jnp.concatenate(
            [x, jnp.zeros((B_pad - B, N, C), x.dtype)], axis=0)
    x2d = x.reshape(B_pad * N, C).astype(jnp.bfloat16)

    def whole(arr):  # constant-index whole-array block (all params are 2D)
        return pl.BlockSpec(arr.shape, lambda i: (0, 0))

    flops = 2 * B_pad * N * (C * 64 + 64 * 128 + 128 * 1024) \
        + 2 * B_pad * (1024 * 512 + 512 * 256 + 256 * 9)
    bytes_accessed = (
        x2d.size * 2
        + (w1.size + w2.size + w3.size + wf1.size + wf2.size + wf3.size) * 2
        + (b1.size + b2.size + b3.size + bf1.size + bf2.size + bf3i.size) * 4
        + B_pad * 9 * 4)

    out = pl.pallas_call(
        functools.partial(stn3d_kernel, n_points=N, tb=TB),
        out_shape=jax.ShapeDtypeStruct((B_pad, 9), jnp.float32),
        grid=(B_pad // TB,),
        in_specs=[pl.BlockSpec((TB * N, C), lambda i: (i, 0)),
                  whole(w1), whole(b1), whole(w2), whole(b2),
                  whole(w3), whole(b3),
                  whole(wf1), whole(bf1), whole(wf2), whole(bf2),
                  whole(wf3), whole(bf3i)],
        out_specs=pl.BlockSpec((TB, 9), lambda i: (i, 0)),
        compiler_params=pltpu.CompilerParams(
            dimension_semantics=("parallel",)),
        cost_estimate=pl.CostEstimate(flops=flops, transcendentals=0,
                                      bytes_accessed=bytes_accessed),
    )(x2d, w1, b1, w2, b2, w3, b3, wf1, bf1, wf2, bf2, wf3, bf3i)

    return out[:B].reshape(B, 3, 3)


# ------------------------- deterministic parameters ---------------------------
def make_params(channel, key):
    """Conv/fc weights with eval-mode BN folded in. Weights bf16, biases f32.
    The 3x3 identity is folded into the fc3 bias."""
    eps = 1e-5
    dims = [(channel, 64), (64, 128), (128, 1024),      # conv1..3 (kernel_size=1)
            (1024, 512), (512, 256), (256, 9)]          # fc1..3
    has_bn = [True, True, True, True, True, False]

    keys = jax.random.split(key, len(dims) * 6)
    params = []
    ki = 0
    for (din, dout), bn in zip(dims, has_bn):
        w = jax.random.normal(keys[ki], (din, dout), jnp.float32) * 0.05; ki += 1
        b = jax.random.normal(keys[ki], (dout,), jnp.float32) * 0.05;     ki += 1
        if bn:
            gamma = 1.0 + 0.1 * jax.random.normal(keys[ki], (dout,), jnp.float32); ki += 1
            beta = 0.1 * jax.random.normal(keys[ki], (dout,), jnp.float32);        ki += 1
            mean = 0.1 * jax.random.normal(keys[ki], (dout,), jnp.float32);        ki += 1
            var = jax.random.uniform(keys[ki], (dout,), jnp.float32, 0.5, 1.5);    ki += 1
            scale = gamma / jnp.sqrt(var + eps)
            w = w * scale[None, :]
            b = b * scale + beta - mean * scale
        else:
            ki += 4
            # fold the 3x3 identity (flattened) into the fc3 bias
            b = b + jnp.array([1, 0, 0, 0, 1, 0, 0, 0, 1], jnp.float32)
        params.append(w.astype(jnp.bfloat16))   # bf16: MXU-native, half the DMA bytes
        params.append(b.reshape(1, dout))       # f32: added to the f32 accumulator
    return tuple(params)


# ------------------------------- reference ------------------------------------
def stn3d_reference(x_bcn, params):
    (w1, b1, w2, b2, w3, b3, wf1, bf1, wf2, bf2, wf3, bf3i) = [
        p.astype(jnp.float32) for p in params]
    x = jnp.transpose(x_bcn, (0, 2, 1))                              # (B, N, C)
    h = jax.nn.relu(x @ w1 + b1)
    h = jax.nn.relu(h @ w2 + b2)
    h = jax.nn.relu(h @ w3 + b3)
    feat = jnp.max(h, axis=1)                                        # (B, 1024)
    f = jax.nn.relu(feat @ wf1 + bf1)
    f = jax.nn.relu(f @ wf2 + bf2)
    y = f @ wf3 + bf3i                                               # iden folded in
    return y.reshape(-1, 3, 3)


# ---------------------------------- main ---------------------------------------
if __name__ == "__main__":
    key = jax.random.PRNGKey(0)
    kx, kp = jax.random.split(key)

    B, C, N = 2, 3, 128                      # batch of 2 point clouds, 128 pts, xyz
    x = jax.random.normal(kx, (B, C, N), jnp.float32)
    params = make_params(C, kp)

    out = stn3d_forward(x, params)
    out = jax.block_until_ready(out)

    ref = stn3d_reference(x, params)
    assert out.shape == (B, 3, 3)
    # bf16 weights/activations -> relaxed tolerance vs the f32 reference
    assert jnp.allclose(out, ref, atol=2e-2, rtol=2e-2), "mismatch vs reference"

    print("KERNEL_OK")
</pallas_src>

<mosaic_0001>
module attributes {stable_mosaic.version = 11 : i64} {
  func.func @stn3d_kernel(%arg0: i32, %arg1: memref<1024x3xbf16, #tpu.memory_space<vmem>>, %arg2: memref<3x64xbf16, #tpu.memory_space<vmem>>, %arg3: memref<1x64xf32, #tpu.memory_space<vmem>>, %arg4: memref<64x128xbf16, #tpu.memory_space<vmem>>, %arg5: memref<1x128xf32, #tpu.memory_space<vmem>>, %arg6: memref<128x1024xbf16, #tpu.memory_space<vmem>>, %arg7: memref<1x1024xf32, #tpu.memory_space<vmem>>, %arg8: memref<1024x512xbf16, #tpu.memory_space<vmem>>, %arg9: memref<1x512xf32, #tpu.memory_space<vmem>>, %arg10: memref<512x256xbf16, #tpu.memory_space<vmem>>, %arg11: memref<1x256xf32, #tpu.memory_space<vmem>>, %arg12: memref<256x9xbf16, #tpu.memory_space<vmem>>, %arg13: memref<1x9xf32, #tpu.memory_space<vmem>>, %arg14: memref<8x9xf32, #tpu.memory_space<vmem>>) attributes {dimension_semantics = [#tpu.dimension_semantics<parallel>], iteration_bounds = array<i64: 1>, scalar_prefetch = 0 : i64, scratch_operands = 0 : i64, tpu.core_type = #tpu.core_type<tc>, window_params = [{transform_indices = @transform_0, window_bounds = array<i64: 1024, 3>}, {pipeline_mode = #tpu.pipeline_mode<synchronous>, transform_indices = @transform_1, window_bounds = array<i64: 3, 64>}, {pipeline_mode = #tpu.pipeline_mode<synchronous>, transform_indices = @transform_2, window_bounds = array<i64: 1, 64>}, {pipeline_mode = #tpu.pipeline_mode<synchronous>, transform_indices = @transform_3, window_bounds = array<i64: 64, 128>}, {pipeline_mode = #tpu.pipeline_mode<synchronous>, transform_indices = @transform_4, window_bounds = array<i64: 1, 128>}, {pipeline_mode = #tpu.pipeline_mode<synchronous>, transform_indices = @transform_5, window_bounds = array<i64: 128, 1024>}, {pipeline_mode = #tpu.pipeline_mode<synchronous>, transform_indices = @transform_6, window_bounds = array<i64: 1, 1024>}, {pipeline_mode = #tpu.pipeline_mode<synchronous>, transform_indices = @transform_7, window_bounds = array<i64: 1024, 512>}, {pipeline_mode = #tpu.pipeline_mode<synchronous>, transform_indices = @transform_8, window_bounds = array<i64: 1, 512>}, {pipeline_mode = #tpu.pipeline_mode<synchronous>, transform_indices = @transform_9, window_bounds = array<i64: 512, 256>}, {pipeline_mode = #tpu.pipeline_mode<synchronous>, transform_indices = @transform_10, window_bounds = array<i64: 1, 256>}, {pipeline_mode = #tpu.pipeline_mode<synchronous>, transform_indices = @transform_11, window_bounds = array<i64: 256, 9>}, {pipeline_mode = #tpu.pipeline_mode<synchronous>, transform_indices = @transform_12, window_bounds = array<i64: 1, 9>}, {transform_indices = @transform_13, window_bounds = array<i64: 8, 9>}]} {
    %c0 = arith.constant 0 : index
    %c0_0 = arith.constant 0 : index
    %0 = vector.load %arg1[%c0, %c0_0] : memref<1024x3xbf16, #tpu.memory_space<vmem>>, vector<1024x3xbf16>
    %c0_1 = arith.constant 0 : index
    %c0_2 = arith.constant 0 : index
    %1 = vector.load %arg2[%c0_1, %c0_2] : memref<3x64xbf16, #tpu.memory_space<vmem>>, vector<3x64xbf16>
    %cst = arith.constant dense<0.000000e+00> : vector<1024x64xf32>
    %2 = tpu.matmul %0, %1, %cst {dimension_numbers = #tpu.dot_dimension_numbers<[1], [0], [0], [1], [0, 0, 1, 1], [], []>} : vector<1024x3xbf16>, vector<3x64xbf16>, vector<1024x64xf32> -> vector<1024x64xf32>
    %c0_3 = arith.constant 0 : index
    %c0_4 = arith.constant 0 : index
    %3 = vector.load %arg3[%c0_3, %c0_4] : memref<1x64xf32, #tpu.memory_space<vmem>>, vector<1x64xf32>
    %4 = vector.broadcast %3 : vector<1x64xf32> to vector<1024x64xf32>
    %5 = arith.addf %2, %4 : vector<1024x64xf32>
    %cst_5 = arith.constant 0.000000e+00 : f32
    %6 = vector.broadcast %cst_5 : f32 to vector<1024x64xf32>
    %7 = arith.maximumf %5, %6 : vector<1024x64xf32>
    %8 = arith.truncf %7 : vector<1024x64xf32> to vector<1024x64xbf16>
    %c0_6 = arith.constant 0 : index
    %c0_7 = arith.constant 0 : index
    %9 = vector.load %arg4[%c0_6, %c0_7] : memref<64x128xbf16, #tpu.memory_space<vmem>>, vector<64x128xbf16>
    %cst_8 = arith.constant dense<0.000000e+00> : vector<1024x128xf32>
    %10 = tpu.matmul %8, %9, %cst_8 {dimension_numbers = #tpu.dot_dimension_numbers<[1], [0], [0], [1], [0, 0, 1, 1], [], []>} : vector<1024x64xbf16>, vector<64x128xbf16>, vector<1024x128xf32> -> vector<1024x128xf32>
    %c0_9 = arith.constant 0 : index
    %c0_10 = arith.constant 0 : index
    %11 = vector.load %arg5[%c0_9, %c0_10] : memref<1x128xf32, #tpu.memory_space<vmem>>, vector<1x128xf32>
    %12 = vector.broadcast %11 : vector<1x128xf32> to vector<1024x128xf32>
    %13 = arith.addf %10, %12 : vector<1024x128xf32>
    %cst_11 = arith.constant 0.000000e+00 : f32
    %14 = vector.broadcast %cst_11 : f32 to vector<1024x128xf32>
    %15 = arith.maximumf %13, %14 : vector<1024x128xf32>
    %16 = arith.truncf %15 : vector<1024x128xf32> to vector<1024x128xbf16>
    %c0_12 = arith.constant 0 : index
    %c0_13 = arith.constant 0 : index
    %17 = vector.load %arg6[%c0_12, %c0_13] : memref<128x1024xbf16, #tpu.memory_space<vmem>>, vector<128x1024xbf16>
    %cst_14 = arith.constant dense<0.000000e+00> : vector<1024x1024xf32>
    %18 = tpu.matmul %16, %17, %cst_14 {dimension_numbers = #tpu.dot_dimension_numbers<[1], [0], [0], [1], [0, 0, 1, 1], [], []>} : vector<1024x128xbf16>, vector<128x1024xbf16>, vector<1024x1024xf32> -> vector<1024x1024xf32>
    %19 = vector.shape_cast %18 : vector<1024x1024xf32> to vector<8x128x1024xf32>
    %cst_15 = arith.constant dense<0xFF800000> : vector<8x1024xf32>
    %20 = vector.multi_reduction <maximumf>, %19, %cst_15 [1] : vector<8x128x1024xf32> to vector<8x1024xf32>
    %c0_16 = arith.constant 0 : index
    %c0_17 = arith.constant 0 : index
    %21 = vector.load %arg7[%c0_16, %c0_17] : memref<1x1024xf32, #tpu.memory_space<vmem>>, vector<1x1024xf32>
    %22 = vector.broadcast %21 : vector<1x1024xf32> to vector<8x1024xf32>
    %23 = arith.addf %20, %22 : vector<8x1024xf32>
    %cst_18 = arith.constant 0.000000e+00 : f32
    %24 = vector.broadcast %cst_18 : f32 to vector<8x1024xf32>
    %25 = arith.maximumf %23, %24 : vector<8x1024xf32>
    %26 = arith.truncf %25 : vector<8x1024xf32> to vector<8x1024xbf16>
    %c0_19 = arith.constant 0 : index
    %c0_20 = arith.constant 0 : index
    %27 = vector.load %arg8[%c0_19, %c0_20] : memref<1024x512xbf16, #tpu.memory_space<vmem>>, vector<1024x512xbf16>
    %cst_21 = arith.constant dense<0.000000e+00> : vector<8x512xf32>
    %28 = tpu.matmul %26, %27, %cst_21 {dimension_numbers = #tpu.dot_dimension_numbers<[1], [0], [0], [1], [0, 0, 1, 1], [], []>} : vector<8x1024xbf16>, vector<1024x512xbf16>, vector<8x512xf32> -> vector<8x512xf32>
    %c0_22 = arith.constant 0 : index
    %c0_23 = arith.constant 0 : index
    %29 = vector.load %arg9[%c0_22, %c0_23] : memref<1x512xf32, #tpu.memory_space<vmem>>, vector<1x512xf32>
    %30 = vector.broadcast %29 : vector<1x512xf32> to vector<8x512xf32>
    %31 = arith.addf %28, %30 : vector<8x512xf32>
    %cst_24 = arith.constant 0.000000e+00 : f32
    %32 = vector.broadcast %cst_24 : f32 to vector<8x512xf32>
    %33 = arith.maximumf %31, %32 : vector<8x512xf32>
    %34 = arith.truncf %33 : vector<8x512xf32> to vector<8x512xbf16>
    %c0_25 = arith.constant 0 : index
    %c0_26 = arith.constant 0 : index
    %35 = vector.load %arg10[%c0_25, %c0_26] : memref<512x256xbf16, #tpu.memory_space<vmem>>, vector<512x256xbf16>
    %cst_27 = arith.constant dense<0.000000e+00> : vector<8x256xf32>
    %36 = tpu.matmul %34, %35, %cst_27 {dimension_numbers = #tpu.dot_dimension_numbers<[1], [0], [0], [1], [0, 0, 1, 1], [], []>} : vector<8x512xbf16>, vector<512x256xbf16>, vector<8x256xf32> -> vector<8x256xf32>
    %c0_28 = arith.constant 0 : index
    %c0_29 = arith.constant 0 : index
    %37 = vector.load %arg11[%c0_28, %c0_29] : memref<1x256xf32, #tpu.memory_space<vmem>>, vector<1x256xf32>
    %38 = vector.broadcast %37 : vector<1x256xf32> to vector<8x256xf32>
    %39 = arith.addf %36, %38 : vector<8x256xf32>
    %cst_30 = arith.constant 0.000000e+00 : f32
    %40 = vector.broadcast %cst_30 : f32 to vector<8x256xf32>
    %41 = arith.maximumf %39, %40 : vector<8x256xf32>
    %42 = arith.truncf %41 : vector<8x256xf32> to vector<8x256xbf16>
    %c0_31 = arith.constant 0 : index
    %c0_32 = arith.constant 0 : index
    %43 = vector.load %arg12[%c0_31, %c0_32] : memref<256x9xbf16, #tpu.memory_space<vmem>>, vector<256x9xbf16>
    %cst_33 = arith.constant dense<0.000000e+00> : vector<8x9xf32>
    %44 = tpu.matmul %42, %43, %cst_33 {dimension_numbers = #tpu.dot_dimension_numbers<[1], [0], [0], [1], [0, 0, 1, 1], [], []>} : vector<8x256xbf16>, vector<256x9xbf16>, vector<8x9xf32> -> vector<8x9xf32>
    %c0_34 = arith.constant 0 : index
    %c0_35 = arith.constant 0 : index
    %45 = vector.load %arg13[%c0_34, %c0_35] : memref<1x9xf32, #tpu.memory_space<vmem>>, vector<1x9xf32>
    %46 = vector.broadcast %45 : vector<1x9xf32> to vector<8x9xf32>
    %47 = arith.addf %44, %46 : vector<8x9xf32>
    %c0_36 = arith.constant 0 : index
    %c0_37 = arith.constant 0 : index
    %48 = vector.load %arg14[%c0_36, %c0_37] : memref<8x9xf32, #tpu.memory_space<vmem>>, vector<8x9xf32>
    tpu.vector_store %arg14[%c0_36, %c0_37], %47 {strides = array<i32>} : memref<8x9xf32, #tpu.memory_space<vmem>>, vector<8x9xf32>,
    return
  }
  func.func @transform_0(%arg0: i32) -> (i32, i32) {
    %c0_i32 = arith.constant 0 : i32
    %c0_i32_0 = arith.constant 0 : i32
    return %arg0, %c0_i32 : i32, i32
  }
  func.func @transform_1(%arg0: i32) -> (i32, i32) {
    %c0_i32 = arith.constant 0 : i32
    %c0_i32_0 = arith.constant 0 : i32
    %c0_i32_1 = arith.constant 0 : i32
    return %c0_i32, %c0_i32_0 : i32, i32
  }
  func.func @transform_2(%arg0: i32) -> (i32, i32) {
    %c0_i32 = arith.constant 0 : i32
    %c0_i32_0 = arith.constant 0 : i32
    %c0_i32_1 = arith.constant 0 : i32
    return %c0_i32, %c0_i32_0 : i32, i32
  }
  func.func @transform_3(%arg0: i32) -> (i32, i32) {
    %c0_i32 = arith.constant 0 : i32
    %c0_i32_0 = arith.constant 0 : i32
    %c0_i32_1 = arith.constant 0 : i32
    return %c0_i32, %c0_i32_0 : i32, i32
  }
  func.func @transform_4(%arg0: i32) -> (i32, i32) {
    %c0_i32 = arith.constant 0 : i32
    %c0_i32_0 = arith.constant 0 : i32
    %c0_i32_1 = arith.constant 0 : i32
    return %c0_i32, %c0_i32_0 : i32, i32
  }
  func.func @transform_5(%arg0: i32) -> (i32, i32) {
    %c0_i32 = arith.constant 0 : i32
    %c0_i32_0 = arith.constant 0 : i32
    %c0_i32_1 = arith.constant 0 : i32
    return %c0_i32, %c0_i32_0 : i32, i32
  }
  func.func @transform_6(%arg0: i32) -> (i32, i32) {
    %c0_i32 = arith.constant 0 : i32
    %c0_i32_0 = arith.constant 0 : i32
    %c0_i32_1 = arith.constant 0 : i32
    return %c0_i32, %c0_i32_0 : i32, i32
  }
  func.func @transform_7(%arg0: i32) -> (i32, i32) {
    %c0_i32 = arith.constant 0 : i32
    %c0_i32_0 = arith.constant 0 : i32
    %c0_i32_1 = arith.constant 0 : i32
    return %c0_i32, %c0_i32_0 : i32, i32
  }
  func.func @transform_8(%arg0: i32) -> (i32, i32) {
    %c0_i32 = arith.constant 0 : i32
    %c0_i32_0 = arith.constant 0 : i32
    %c0_i32_1 = arith.constant 0 : i32
    return %c0_i32, %c0_i32_0 : i32, i32
  }
  func.func @transform_9(%arg0: i32) -> (i32, i32) {
    %c0_i32 = arith.constant 0 : i32
    %c0_i32_0 = arith.constant 0 : i32
    %c0_i32_1 = arith.constant 0 : i32
    return %c0_i32, %c0_i32_0 : i32, i32
  }
  func.func @transform_10(%arg0: i32) -> (i32, i32) {
    %c0_i32 = arith.constant 0 : i32
    %c0_i32_0 = arith.constant 0 : i32
    %c0_i32_1 = arith.constant 0 : i32
    return %c0_i32, %c0_i32_0 : i32, i32
  }
  func.func @transform_11(%arg0: i32) -> (i32, i32) {
    %c0_i32 = arith.constant 0 : i32
    %c0_i32_0 = arith.constant 0 : i32
    %c0_i32_1 = arith.constant 0 : i32
    return %c0_i32, %c0_i32_0 : i32, i32
  }
  func.func @transform_12(%arg0: i32) -> (i32, i32) {
    %c0_i32 = arith.constant 0 : i32
    %c0_i32_0 = arith.constant 0 : i32
    %c0_i32_1 = arith.constant 0 : i32
    return %c0_i32, %c0_i32_0 : i32, i32
  }
  func.func @transform_13(%arg0: i32) -> (i32, i32) {
    %c0_i32 = arith.constant 0 : i32
    %c0_i32_0 = arith.constant 0 : i32
    return %arg0, %c0_i32 : i32, i32
  }
}

</mosaic_0001>

<llo_original>
// kernel: tpu_custom_call.1
$region0: #{tpu_custom_call.1}
  #allocation0 [shape = 'u32[]', space=smem, size = 0x4, offset = 0x4, fixed_abs, tag = 'smem constant byte address 0x4 - core index']
  #allocation1 [shape = 'u32[144,128]{1,0:T(1,128)}', space=vmem, size = 0x12000, scoped, tag = 'internal scratch']
  %s0 = inlined_call_operand.vmem [shape: bf16[1024,3], index: 0, kind: input, shape index: {}]
  %s1 = inlined_call_operand.vmem [shape: bf16[3,64], index: 1, kind: input, shape index: {}]
  %s2 = inlined_call_operand.vmem [shape: f32[1,64], index: 2, kind: input, shape index: {}]
  %s3 = inlined_call_operand.vmem [shape: bf16[64,128], index: 3, kind: input, shape index: {}]
  %s4 = inlined_call_operand.vmem [shape: f32[1,128], index: 4, kind: input, shape index: {}]
  %s5 = inlined_call_operand.vmem [shape: bf16[128,1024], index: 5, kind: input, shape index: {}]
  %s6 = inlined_call_operand.vmem [shape: f32[1,1024], index: 6, kind: input, shape index: {}]
  %s7 = inlined_call_operand.hbm [shape: bf16[1024,512], index: 7, kind: input, shape index: {}]
  %s8 = inlined_call_operand.vmem [shape: f32[1,512], index: 8, kind: input, shape index: {}]
  %s9 = inlined_call_operand.hbm [shape: bf16[512,256], index: 9, kind: input, shape index: {}]
  %s10 = inlined_call_operand.vmem [shape: f32[1,256], index: 10, kind: input, shape index: {}]
  %s11 = inlined_call_operand.vmem [shape: bf16[256,9], index: 11, kind: input, shape index: {}]
  %s12 = inlined_call_operand.vmem [shape: f32[1,9], index: 12, kind: input, shape index: {}]
  %s13 = inlined_call_operand.hbm [shape: f32[8,9], index: 13, kind: output, shape index: {}]
  %s14 = sld [smem:[#allocation0]]
  $region70: #{tpu_custom_call.1} parent=0
    _
  %s16 = ssub.s32 1, %s14
  %s17 = scalar_select 0, %s16, %s14
  $region1: #{tpu_custom_call.1} parent=0
    #allocation2 [shape = 'u8[1048576]{0}', space=vmem, size = 0x100000, scoped, tag = 'input window, operand 7, single buffered']
    #allocation3 [shape = 's32[1]{0}', space=sflag, size = 0x4, scoped, tag = 'scoped memory for tpu_custom_call.1']
    #allocation4 [shape = 's32[1]{0}', space=sflag, size = 0x4, scoped, tag = 'scoped memory for tpu_custom_call.1']
    #allocation5 [shape = 'u8[262144]{0}', space=vmem, size = 0x40000, scoped, tag = 'input window, operand 9, single buffered']
    #allocation6 [shape = 's32[1]{0}', space=sflag, size = 0x4, scoped, tag = 'scoped memory for tpu_custom_call.1']
    #allocation7 [shape = 'u8[4096]{0}', space=vmem, size = 0x1000, scoped, tag = 'output window, operand 0, single buffered']
    %18 = vsyncpa [#allocation3], 0
    %19 = vsyncpa [#allocation6], 0
    %20 = vsyncpa [#allocation4], 0
    // Predicated region
    $region2: #{tpu_custom_call.1} parent=1 // pred_check
      _
    $region3: #{tpu_custom_call.1} parent=1 // pred_check_branch
      %22 = sbr.rel (0) target = $region5
    $region4: #{tpu_custom_call.1} parent=1 // pred_region
      _
    $region5: #{tpu_custom_call.1} parent=1 // pred_fallthru
      _
    // Predicated region
    $region6: #{tpu_custom_call.1} parent=1 // pred_check
      _
    $region7: #{tpu_custom_call.1} parent=1 // pred_check_branch
      %24 = sbr.rel (0) target = $region9
    $region8: #{tpu_custom_call.1} parent=1 // pred_region
      _
    $region9: #{tpu_custom_call.1} parent=1 // pred_fallthru
      _
    // Predicated region
    $region10: #{tpu_custom_call.1} parent=1 // pred_check
      _
    $region11: #{tpu_custom_call.1} parent=1 // pred_check_branch
      %26 = sbr.rel (0) target = $region13
    $region12: #{tpu_custom_call.1} parent=1 // pred_region
      _
    $region13: #{tpu_custom_call.1} parent=1 // pred_fallthru
      _
    // Predicated region
    $region14: #{tpu_custom_call.1} parent=1 // pred_check
      _
    $region15: #{tpu_custom_call.1} parent=1 // pred_check_branch
      %28 = sbr.rel (0) target = $region17
    $region16: #{tpu_custom_call.1} parent=1 // pred_region
      _
    $region17: #{tpu_custom_call.1} parent=1 // pred_fallthru
      _
    // Predicated region
    $region18: #{tpu_custom_call.1} parent=1 // pred_check
      _
    $region19: #{tpu_custom_call.1} parent=1 // pred_check_branch
      %30 = sbr.rel (0) target = $region21
    $region20: #{tpu_custom_call.1} parent=1 // pred_region
      _
    $region21: #{tpu_custom_call.1} parent=1 // pred_fallthru
      _
    // Predicated region
    $region22: #{tpu_custom_call.1} parent=1 // pred_check
      _
    $region23: #{tpu_custom_call.1} parent=1 // pred_check_branch
      %32 = sbr.rel (0) target = $region25
    $region24: #{tpu_custom_call.1} parent=1 // pred_region
      _
    $region25: #{tpu_custom_call.1} parent=1 // pred_fallthru
      _
    // Predicated region
    $region26: #{tpu_custom_call.1} parent=1 // pred_check
      _
    $region27: #{tpu_custom_call.1} parent=1 // pred_check_branch
      %34 = sbr.rel (0) target = $region29
    $region28: #{tpu_custom_call.1} parent=1 // pred_region
      _
    $region29: #{tpu_custom_call.1} parent=1 // pred_fallthru
      _
    // Predicated region
    $region30: #{tpu_custom_call.1} parent=1 // pred_check
      _
    $region31: #{tpu_custom_call.1} parent=1 // pred_check_branch
      %36 = sbr.rel (0) target = $region33
    $region32: #{tpu_custom_call.1} parent=1 // pred_region
      %s38 = ssub.s32 32768, 32768
      %39 = vsyncadd [#allocation3], %s38
      %s40 = sshll.u32 [#allocation2], 4
      %s41 = int_to_ptr.vmem [resolvable:$true] %s40
      %46 = dma.hbm_to_vmem [thread:$0]  %s7, 32768, %s41, [#allocation3], 256, 256, 16
    $region33: #{tpu_custom_call.1} parent=1 // pred_fallthru
      _
    // Predicated region
    $region34: #{tpu_custom_call.1} parent=1 // pred_check
      _
    $region35: #{tpu_custom_call.1} parent=1 // pred_check_branch
      %48 = sbr.rel (0) target = $region37
    $region36: #{tpu_custom_call.1} parent=1 // pred_region
      _
    $region37: #{tpu_custom_call.1} parent=1 // pred_fallthru
      _
    // Predicated region
    $region38: #{tpu_custom_call.1} parent=1 // pred_check
      _
    $region39: #{tpu_custom_call.1} parent=1 // pred_check_branch
      %50 = sbr.rel (0) target = $region41
    $region40: #{tpu_custom_call.1} parent=1 // pred_region
      %s52 = ssub.s32 8192, 8192
      %53 = vsyncadd [#allocation6], %s52
      %s54 = sshll.u32 [#allocation5], 4
      %s55 = int_to_ptr.vmem [resolvable:$true] %s54
      %60 = dma.hbm_to_vmem [thread:$0]  %s9, 8192, %s55, [#allocation6], 128, 128, 8
    $region41: #{tpu_custom_call.1} parent=1 // pred_fallthru
      _
    // Predicated region
    $region42: #{tpu_custom_call.1} parent=1 // pred_check
      _
    $region43: #{tpu_custom_call.1} parent=1 // pred_check_branch
      %62 = sbr.rel (0) target = $region45
    $region44: #{tpu_custom_call.1} parent=1 // pred_region
      _
    $region45: #{tpu_custom_call.1} parent=1 // pred_fallthru
      _
    // Predicated region
    $region46: #{tpu_custom_call.1} parent=1 // pred_check
      _
    $region47: #{tpu_custom_call.1} parent=1 // pred_check_branch
      %64 = sbr.rel (0) target = $region49
    $region48: #{tpu_custom_call.1} parent=1 // pred_region
      _
    $region49: #{tpu_custom_call.1} parent=1 // pred_fallthru
      _
    // Predicated region
    $region50: #{tpu_custom_call.1} parent=1 // pred_check
      _
    $region51: #{tpu_custom_call.1} parent=1 // pred_check_branch
      %66 = sbr.rel (0) target = $region53
    $region52: #{tpu_custom_call.1} parent=1 // pred_region
      _
    $region53: #{tpu_custom_call.1} parent=1 // pred_fallthru
      _
    // Predicated region
    $region54: #{tpu_custom_call.1} parent=1 // pred_check
      _
    $region55: #{tpu_custom_call.1} parent=1 // pred_check_branch
      %68 = sbr.rel (0) target = $region57
    $region56: #{tpu_custom_call.1} parent=1 // pred_region
      %69 = dma.done [#allocation3], 32768
    $region57: #{tpu_custom_call.1} parent=1 // pred_fallthru
      _
    // Predicated region
    $region58: #{tpu_custom_call.1} parent=1 // pred_check
      _
    $region59: #{tpu_custom_call.1} parent=1 // pred_check_branch
      %71 = sbr.rel (0) target = $region61
    $region60: #{tpu_custom_call.1} parent=1 // pred_region
      %72 = dma.done [#allocation6], 8192
    $region61: #{tpu_custom_call.1} parent=1 // pred_fallthru
      _
    %v74 = vld [vmem:[%s0] sm:$0xf]
    %v75 = vld [vmem:[%s0 + $0x4] sm:$0xf]
    %v76 = vld [vmem:[%s0 + $0x8] sm:$0xf]
    %v77 = vld [vmem:[%s0 + $0xc] sm:$0xf]
    %v78 = vld [vmem:[%s0 + $0x10] sm:$0xf]
    %v79 = vld [vmem:[%s0 + $0x14] sm:$0xf]
    %v80 = vld [vmem:[%s0 + $0x18] sm:$0xf]
    %v81 = vld [vmem:[%s0 + $0x1c] sm:$0xf]
    %v82 = vld [vmem:[%s0 + $0x20] sm:$0xf]
    %v83 = vld [vmem:[%s0 + $0x24] sm:$0xf]
    %v84 = vld [vmem:[%s0 + $0x28] sm:$0xf]
    %v85 = vld [vmem:[%s0 + $0x2c] sm:$0xf]
    %v86 = vld [vmem:[%s0 + $0x30] sm:$0xf]
    %v87 = vld [vmem:[%s0 + $0x34] sm:$0xf]
    %v88 = vld [vmem:[%s0 + $0x38] sm:$0xf]
    %v89 = vld [vmem:[%s0 + $0x3c] sm:$0xf]
    %v90 = vld [vmem:[%s0 + $0x40] sm:$0xf]
    %v91 = vld [vmem:[%s0 + $0x44] sm:$0xf]
    %v92 = vld [vmem:[%s0 + $0x48] sm:$0xf]
    %v93 = vld [vmem:[%s0 + $0x4c] sm:$0xf]
    %v94 = vld [vmem:[%s0 + $0x50] sm:$0xf]
    %v95 = vld [vmem:[%s0 + $0x54] sm:$0xf]
    %v96 = vld [vmem:[%s0 + $0x58] sm:$0xf]
    %v97 = vld [vmem:[%s0 + $0x5c] sm:$0xf]
    %v98 = vld [vmem:[%s0 + $0x60] sm:$0xf]
    %v99 = vld [vmem:[%s0 + $0x64] sm:$0xf]
    %v100 = vld [vmem:[%s0 + $0x68] sm:$0xf]
    %v101 = vld [vmem:[%s0 + $0x6c] sm:$0xf]
    %v102 = vld [vmem:[%s0 + $0x70] sm:$0xf]
    %v103 = vld [vmem:[%s0 + $0x74] sm:$0xf]
    %v104 = vld [vmem:[%s0 + $0x78] sm:$0xf]
    %v105 = vld [vmem:[%s0 + $0x7c] sm:$0xf]
    %v106 = vld [vmem:[%s0 + $0x80] sm:$0xf]
    %v107 = vld [vmem:[%s0 + $0x84] sm:$0xf]
    %v108 = vld [vmem:[%s0 + $0x88] sm:$0xf]
    %v109 = vld [vmem:[%s0 + $0x8c] sm:$0xf]
    %v110 = vld [vmem:[%s0 + $0x90] sm:$0xf]
    %v111 = vld [vmem:[%s0 + $0x94] sm:$0xf]
    %v112 = vld [vmem:[%s0 + $0x98] sm:$0xf]
    %v113 = vld [vmem:[%s0 + $0x9c] sm:$0xf]
    %v114 = vld [vmem:[%s0 + $0xa0] sm:$0xf]
    %v115 = vld [vmem:[%s0 + $0xa4] sm:$0xf]
    %v116 = vld [vmem:[%s0 + $0xa8] sm:$0xf]
    %v117 = vld [vmem:[%s0 + $0xac] sm:$0xf]
    %v118 = vld [vmem:[%s0 + $0xb0] sm:$0xf]
    %v119 = vld [vmem:[%s0 + $0xb4] sm:$0xf]
    %v120 = vld [vmem:[%s0 + $0xb8] sm:$0xf]
    %v121 = vld [vmem:[%s0 + $0xbc] sm:$0xf]
    %v122 = vld [vmem:[%s0 + $0xc0] sm:$0xf]
    %v123 = vld [vmem:[%s0 + $0xc4] sm:$0xf]
    %v124 = vld [vmem:[%s0 + $0xc8] sm:$0xf]
    %v125 = vld [vmem:[%s0 + $0xcc] sm:$0xf]
    %v126 = vld [vmem:[%s0 + $0xd0] sm:$0xf]
    %v127 = vld [vmem:[%s0 + $0xd4] sm:$0xf]
    %v128 = vld [vmem:[%s0 + $0xd8] sm:$0xf]
    %v129 = vld [vmem:[%s0 + $0xdc] sm:$0xf]
    %v130 = vld [vmem:[%s0 + $0xe0] sm:$0xf]
    %v131 = vld [vmem:[%s0 + $0xe4] sm:$0xf]
    %v132 = vld [vmem:[%s0 + $0xe8] sm:$0xf]
    %v133 = vld [vmem:[%s0 + $0xec] sm:$0xf]
    %v134 = vld [vmem:[%s0 + $0xf0] sm:$0xf]
    %v135 = vld [vmem:[%s0 + $0xf4] sm:$0xf]
    %v136 = vld [vmem:[%s0 + $0xf8] sm:$0xf]
    %v137 = vld [vmem:[%s0 + $0xfc] sm:$0xf]
    %v138 = vld [vmem:[%s0 + $0x100] sm:$0xf]
    %v139 = vld [vmem:[%s0 + $0x104] sm:$0xf]
    %v140 = vld [vmem:[%s0 + $0x108] sm:$0xf]
    %v141 = vld [vmem:[%s0 + $0x10c] sm:$0xf]
    %v142 = vld [vmem:[%s0 + $0x110] sm:$0xf]
    %v143 = vld [vmem:[%s0 + $0x114] sm:$0xf]
    %v144 = vld [vmem:[%s0 + $0x118] sm:$0xf]
    %v145 = vld [vmem:[%s0 + $0x11c] sm:$0xf]
    %v146 = vld [vmem:[%s0 + $0x120] sm:$0xf]
    %v147 = vld [vmem:[%s0 + $0x124] sm:$0xf]
    %v148 = vld [vmem:[%s0 + $0x128] sm:$0xf]
    %v149 = vld [vmem:[%s0 + $0x12c] sm:$0xf]
    %v150 = vld [vmem:[%s0 + $0x130] sm:$0xf]
    %v151 = vld [vmem:[%s0 + $0x134] sm:$0xf]
    %v152 = vld [vmem:[%s0 + $0x138] sm:$0xf]
    %v153 = vld [vmem:[%s0 + $0x13c] sm:$0xf]
    %v154 = vld [vmem:[%s0 + $0x140] sm:$0xf]
    %v155 = vld [vmem:[%s0 + $0x144] sm:$0xf]
    %v156 = vld [vmem:[%s0 + $0x148] sm:$0xf]
    %v157 = vld [vmem:[%s0 + $0x14c] sm:$0xf]
    %v158 = vld [vmem:[%s0 + $0x150] sm:$0xf]
    %v159 = vld [vmem:[%s0 + $0x154] sm:$0xf]
    %v160 = vld [vmem:[%s0 + $0x158] sm:$0xf]
    %v161 = vld [vmem:[%s0 + $0x15c] sm:$0xf]
    %v162 = vld [vmem:[%s0 + $0x160] sm:$0xf]
    %v163 = vld [vmem:[%s0 + $0x164] sm:$0xf]
    %v164 = vld [vmem:[%s0 + $0x168] sm:$0xf]
    %v165 = vld [vmem:[%s0 + $0x16c] sm:$0xf]
    %v166 = vld [vmem:[%s0 + $0x170] sm:$0xf]
    %v167 = vld [vmem:[%s0 + $0x174] sm:$0xf]
    %v168 = vld [vmem:[%s0 + $0x178] sm:$0xf]
    %v169 = vld [vmem:[%s0 + $0x17c] sm:$0xf]
    %v170 = vld [vmem:[%s0 + $0x180] sm:$0xf]
    %v171 = vld [vmem:[%s0 + $0x184] sm:$0xf]
    %v172 = vld [vmem:[%s0 + $0x188] sm:$0xf]
    %v173 = vld [vmem:[%s0 + $0x18c] sm:$0xf]
    %v174 = vld [vmem:[%s0 + $0x190] sm:$0xf]
    %v175 = vld [vmem:[%s0 + $0x194] sm:$0xf]
    %v176 = vld [vmem:[%s0 + $0x198] sm:$0xf]
    %v177 = vld [vmem:[%s0 + $0x19c] sm:$0xf]
    %v178 = vld [vmem:[%s0 + $0x1a0] sm:$0xf]
    %v179 = vld [vmem:[%s0 + $0x1a4] sm:$0xf]
    %v180 = vld [vmem:[%s0 + $0x1a8] sm:$0xf]
    %v181 = vld [vmem:[%s0 + $0x1ac] sm:$0xf]
    %v182 = vld [vmem:[%s0 + $0x1b0] sm:$0xf]
    %v183 = vld [vmem:[%s0 + $0x1b4] sm:$0xf]
    %v184 = vld [vmem:[%s0 + $0x1b8] sm:$0xf]
    %v185 = vld [vmem:[%s0 + $0x1bc] sm:$0xf]
    %v186 = vld [vmem:[%s0 + $0x1c0] sm:$0xf]
    %v187 = vld [vmem:[%s0 + $0x1c4] sm:$0xf]
    %v188 = vld [vmem:[%s0 + $0x1c8] sm:$0xf]
    %v189 = vld [vmem:[%s0 + $0x1cc] sm:$0xf]
    %v190 = vld [vmem:[%s0 + $0x1d0] sm:$0xf]
    %v191 = vld [vmem:[%s0 + $0x1d4] sm:$0xf]
    %v192 = vld [vmem:[%s0 + $0x1d8] sm:$0xf]
    %v193 = vld [vmem:[%s0 + $0x1dc] sm:$0xf]
    %v194 = vld [vmem:[%s0 + $0x1e0] sm:$0xf]
    %v195 = vld [vmem:[%s0 + $0x1e4] sm:$0xf]
    %v196 = vld [vmem:[%s0 + $0x1e8] sm:$0xf]
    %v197 = vld [vmem:[%s0 + $0x1ec] sm:$0xf]
    %v198 = vld [vmem:[%s0 + $0x1f0] sm:$0xf]
    %v199 = vld [vmem:[%s0 + $0x1f4] sm:$0xf]
    %v200 = vld [vmem:[%s0 + $0x1f8] sm:$0xf]
    %v201 = vld [vmem:[%s0 + $0x1fc] sm:$0xf]
    %v202 = vld [vmem:[%s1] sm:$0x3]
    %v203 = vld [vmem:[%s2] sm:$0x1]
    %v205 = vlaneseq
    %v206 = vshrl.u32 %v205, 7
    %v207 = vsub.s32 0, %v206
    %v208 = vrot.slane %v203, %v207
    %v338 = vunpack.c.l.b16 %v74
    %v339 = vunpack.c.l.b16 %v75
    %v340 = vunpack.c.l.b16 %v76
    %v341 = vunpack.c.l.b16 %v77
    %v342 = vunpack.c.l.b16 %v78
    %v343 = vunpack.c.l.b16 %v79
    %v344 = vunpack.c.l.b16 %v80
    %v345 = vunpack.c.l.b16 %v81
    %v346 = vunpack.c.l.b16 %v82
    %v347 = vunpack.c.l.b16 %v83
    %v348 = vunpack.c.l.b16 %v84
    %v349 = vunpack.c.l.b16 %v85
    %v350 = vunpack.c.l.b16 %v86
    %v351 = vunpack.c.l.b16 %v87
    %v352 = vunpack.c.l.b16 %v88
    %v353 = vunpack.c.l.b16 %v89
    %v354 = vunpack.c.l.b16 %v90
    %v355 = vunpack.c.l.b16 %v91
    %v356 = vunpack.c.l.b16 %v92
    %v357 = vunpack.c.l.b16 %v93
    %v358 = vunpack.c.l.b16 %v94
    %v359 = vunpack.c.l.b16 %v95
    %v360 = vunpack.c.l.b16 %v96
    %v361 = vunpack.c.l.b16 %v97
    %v362 = vunpack.c.l.b16 %v98
    %v363 = vunpack.c.l.b16 %v99
    %v364 = vunpack.c.l.b16 %v100
    %v365 = vunpack.c.l.b16 %v101
    %v366 = vunpack.c.l.b16 %v102
    %v367 = vunpack.c.l.b16 %v103
    %v368 = vunpack.c.l.b16 %v104
    %v369 = vunpack.c.l.b16 %v105
    %v370 = vunpack.c.l.b16 %v106
    %v371 = vunpack.c.l.b16 %v107
    %v372 = vunpack.c.l.b16 %v108
    %v373 = vunpack.c.l.b16 %v109
    %v374 = vunpack.c.l.b16 %v110
    %v375 = vunpack.c.l.b16 %v111
    %v376 = vunpack.c.l.b16 %v112
    %v377 = vunpack.c.l.b16 %v113
    %v378 = vunpack.c.l.b16 %v114
    %v379 = vunpack.c.l.b16 %v115
    %v380 = vunpack.c.l.b16 %v116
    %v381 = vunpack.c.l.b16 %v117
    %v382 = vunpack.c.l.b16 %v118
    %v383 = vunpack.c.l.b16 %v119
    %v384 = vunpack.c.l.b16 %v120
    %v385 = vunpack.c.l.b16 %v121
    %v386 = vunpack.c.l.b16 %v122
    %v387 = vunpack.c.l.b16 %v123
    %v388 = vunpack.c.l.b16 %v124
    %v389 = vunpack.c.l.b16 %v125
    %v390 = vunpack.c.l.b16 %v126
    %v391 = vunpack.c.l.b16 %v127
    %v392 = vunpack.c.l.b16 %v128
    %v393 = vunpack.c.l.b16 %v129
    %v394 = vunpack.c.l.b16 %v130
    %v395 = vunpack.c.l.b16 %v131
    %v396 = vunpack.c.l.b16 %v132
    %v397 = vunpack.c.l.b16 %v133
    %v398 = vunpack.c.l.b16 %v134
    %v399 = vunpack.c.l.b16 %v135
    %v400 = vunpack.c.l.b16 %v136
    %v401 = vunpack.c.l.b16 %v137
    %v402 = vunpack.c.l.b16 %v138
    %v403 = vunpack.c.l.b16 %v139
    %v404 = vunpack.c.l.b16 %v140
    %v405 = vunpack.c.l.b16 %v141
    %v406 = vunpack.c.l.b16 %v142
    %v407 = vunpack.c.l.b16 %v143
    %v408 = vunpack.c.l.b16 %v144
    %v409 = vunpack.c.l.b16 %v145
    %v410 = vunpack.c.l.b16 %v146
    %v411 = vunpack.c.l.b16 %v147
    %v412 = vunpack.c.l.b16 %v148
    %v413 = vunpack.c.l.b16 %v149
    %v414 = vunpack.c.l.b16 %v150
    %v415 = vunpack.c.l.b16 %v151
    %v416 = vunpack.c.l.b16 %v152
    %v417 = vunpack.c.l.b16 %v153
    %v418 = vunpack.c.l.b16 %v154
    %v419 = vunpack.c.l.b16 %v155
    %v420 = vunpack.c.l.b16 %v156
    %v421 = vunpack.c.l.b16 %v157
    %v422 = vunpack.c.l.b16 %v158
    %v423 = vunpack.c.l.b16 %v159
    %v424 = vunpack.c.l.b16 %v160
    %v425 = vunpack.c.l.b16 %v161
    %v426 = vunpack.c.l.b16 %v162
    %v427 = vunpack.c.l.b16 %v163
    %v428 = vunpack.c.l.b16 %v164
    %v429 = vunpack.c.l.b16 %v165
    %v430 = vunpack.c.l.b16 %v166
    %v431 = vunpack.c.l.b16 %v167
    %v432 = vunpack.c.l.b16 %v168
    %v433 = vunpack.c.l.b16 %v169
    %v434 = vunpack.c.l.b16 %v170
    %v435 = vunpack.c.l.b16 %v171
    %v436 = vunpack.c.l.b16 %v172
    %v437 = vunpack.c.l.b16 %v173
    %v438 = vunpack.c.l.b16 %v174
    %v439 = vunpack.c.l.b16 %v175
    %v440 = vunpack.c.l.b16 %v176
    %v441 = vunpack.c.l.b16 %v177
    %v442 = vunpack.c.l.b16 %v178
    %v443 = vunpack.c.l.b16 %v179
    %v444 = vunpack.c.l.b16 %v180
    %v445 = vunpack.c.l.b16 %v181
    %v446 = vunpack.c.l.b16 %v182
    %v447 = vunpack.c.l.b16 %v183
    %v448 = vunpack.c.l.b16 %v184
    %v449 = vunpack.c.l.b16 %v185
    %v450 = vunpack.c.l.b16 %v186
    %v451 = vunpack.c.l.b16 %v187
    %v452 = vunpack.c.l.b16 %v188
    %v453 = vunpack.c.l.b16 %v189
    %v454 = vunpack.c.l.b16 %v190
    %v455 = vunpack.c.l.b16 %v191
    %v456 = vunpack.c.l.b16 %v192
    %v457 = vunpack.c.l.b16 %v193
    %v458 = vunpack.c.l.b16 %v194
    %v459 = vunpack.c.l.b16 %v195
    %v460 = vunpack.c.l.b16 %v196
    %v461 = vunpack.c.l.b16 %v197
    %v462 = vunpack.c.l.b16 %v198
    %v463 = vunpack.c.l.b16 %v199
    %v464 = vunpack.c.l.b16 %v200
    %v465 = vunpack.c.l.b16 %v201
    %v466 = vpack.c.b16 %v339, %v338
    %v467 = vpack.c.b16 %v341, %v340
    %v468 = vpack.c.b16 %v343, %v342
    %v469 = vpack.c.b16 %v345, %v344
    %v470 = vpack.c.b16 %v347, %v346
    %v471 = vpack.c.b16 %v349, %v348
    %v472 = vpack.c.b16 %v351, %v350
    %v473 = vpack.c.b16 %v353, %v352
    %v474 = vpack.c.b16 %v355, %v354
    %v475 = vpack.c.b16 %v357, %v356
    %v476 = vpack.c.b16 %v359, %v358
    %v477 = vpack.c.b16 %v361, %v360
    %v478 = vpack.c.b16 %v363, %v362
    %v479 = vpack.c.b16 %v365, %v364
    %v480 = vpack.c.b16 %v367, %v366
    %v481 = vpack.c.b16 %v369, %v368
    %v482 = vpack.c.b16 %v371, %v370
    %v483 = vpack.c.b16 %v373, %v372
    %v484 = vpack.c.b16 %v375, %v374
    %v485 = vpack.c.b16 %v377, %v376
    %v486 = vpack.c.b16 %v379, %v378
    %v487 = vpack.c.b16 %v381, %v380
    %v488 = vpack.c.b16 %v383, %v382
    %v489 = vpack.c.b16 %v385, %v384
    %v490 = vpack.c.b16 %v387, %v386
    %v491 = vpack.c.b16 %v389, %v388
    %v492 = vpack.c.b16 %v391, %v390
    %v493 = vpack.c.b16 %v393, %v392
    %v494 = vpack.c.b16 %v395, %v394
    %v495 = vpack.c.b16 %v397, %v396
    %v496 = vpack.c.b16 %v399, %v398
    %v497 = vpack.c.b16 %v401, %v400
    %v498 = vpack.c.b16 %v403, %v402
    %v499 = vpack.c.b16 %v405, %v404
    %v500 = vpack.c.b16 %v407, %v406
    %v501 = vpack.c.b16 %v409, %v408
    %v502 = vpack.c.b16 %v411, %v410
    %v503 = vpack.c.b16 %v413, %v412
    %v504 = vpack.c.b16 %v415, %v414
    %v505 = vpack.c.b16 %v417, %v416
    %v506 = vpack.c.b16 %v419, %v418
    %v507 = vpack.c.b16 %v421, %v420
    %v508 = vpack.c.b16 %v423, %v422
    %v509 = vpack.c.b16 %v425, %v424
    %v510 = vpack.c.b16 %v427, %v426
    %v511 = vpack.c.b16 %v429, %v428
    %v512 = vpack.c.b16 %v431, %v430
    %v513 = vpack.c.b16 %v433, %v432
    %v514 = vpack.c.b16 %v435, %v434
    %v515 = vpack.c.b16 %v437, %v436
    %v516 = vpack.c.b16 %v439, %v438
    %v517 = vpack.c.b16 %v441, %v440
    %v518 = vpack.c.b16 %v443, %v442
    %v519 = vpack.c.b16 %v445, %v444
    %v520 = vpack.c.b16 %v447, %v446
    %v521 = vpack.c.b16 %v449, %v448
    %v522 = vpack.c.b16 %v451, %v450
    %v523 = vpack.c.b16 %v453, %v452
    %v524 = vpack.c.b16 %v455, %v454
    %v525 = vpack.c.b16 %v457, %v456
    %v526 = vpack.c.b16 %v459, %v458
    %v527 = vpack.c.b16 %v461, %v460
    %v528 = vpack.c.b16 %v463, %v462
    %v529 = vpack.c.b16 %v465, %v464
    %vm530 = vcmask 23552
    %v532 = vsel %vm530, %v466, 0
    %v535 = vsel %vm530, %v467, 0
    %v538 = vsel %vm530, %v468, 0
    %v541 = vsel %vm530, %v469, 0
    %v544 = vsel %vm530, %v470, 0
    %v547 = vsel %vm530, %v471, 0
    %v550 = vsel %vm530, %v472, 0
    %v553 = vsel %vm530, %v473, 0
    %v556 = vsel %vm530, %v474, 0
    %v559 = vsel %vm530, %v475, 0
    %v562 = vsel %vm530, %v476, 0
    %v565 = vsel %vm530, %v477, 0
    %v568 = vsel %vm530, %v478, 0
    %v571 = vsel %vm530, %v479, 0
    %v574 = vsel %vm530, %v480, 0
    %v577 = vsel %vm530, %v481, 0
    %v580 = vsel %vm530, %v482, 0
    %v583 = vsel %vm530, %v483, 0
    %v586 = vsel %vm530, %v484, 0
    %v589 = vsel %vm530, %v485, 0
    %v592 = vsel %vm530, %v486, 0
    %v595 = vsel %vm530, %v487, 0
    %v598 = vsel %vm530, %v488, 0
    %v601 = vsel %vm530, %v489, 0
    %v604 = vsel %vm530, %v490, 0
    %v607 = vsel %vm530, %v491, 0
    %v610 = vsel %vm530, %v492, 0
    %v613 = vsel %vm530, %v493, 0
    %v616 = vsel %vm530, %v494, 0
    %v619 = vsel %vm530, %v495, 0
    %v622 = vsel %vm530, %v496, 0
    %v625 = vsel %vm530, %v497, 0
    %v628 = vsel %vm530, %v498, 0
    %v631 = vsel %vm530, %v499, 0
    %v634 = vsel %vm530, %v500, 0
    %v637 = vsel %vm530, %v501, 0
    %v640 = vsel %vm530, %v502, 0
    %v643 = vsel %vm530, %v503, 0
    %v646 = vsel %vm530, %v504, 0
    %v649 = vsel %vm530, %v505, 0
    %v652 = vsel %vm530, %v506, 0
    %v655 = vsel %vm530, %v507, 0
    %v658 = vsel %vm530, %v508, 0
    %v661 = vsel %vm530, %v509, 0
    %v664 = vsel %vm530, %v510, 0
    %v667 = vsel %vm530, %v511, 0
    %v670 = vsel %vm530, %v512, 0
    %v673 = vsel %vm530, %v513, 0
    %v676 = vsel %vm530, %v514, 0
    %v679 = vsel %vm530, %v515, 0
    %v682 = vsel %vm530, %v516, 0
    %v685 = vsel %vm530, %v517, 0
    %v688 = vsel %vm530, %v518, 0
    %v691 = vsel %vm530, %v519, 0
    %v694 = vsel %vm530, %v520, 0
    %v697 = vsel %vm530, %v521, 0
    %v700 = vsel %vm530, %v522, 0
    %v703 = vsel %vm530, %v523, 0
    %v706 = vsel %vm530, %v524, 0
    %v709 = vsel %vm530, %v525, 0
    %v712 = vsel %vm530, %v526, 0
    %v715 = vsel %vm530, %v527, 0
    %v718 = vsel %vm530, %v528, 0
    %v721 = vsel %vm530, %v529, 0
    %vm723 = vcmask 1040384
    %vm724 = vcmask 1041408
    %v725 = vsel %vm723, 4294967295, 65535
    %v726 = vsel %vm724, %v725, 0
    %v728 = vand.u32 %v202, %v726
    %730 = vmatprep.subr.bf16.mxu0 0
    %731 = vmatpush1.bf16.msra.mxu0 0
    %732 = vmatprep.subr.bf16.mxu0 0
    %733 = vmatpush1.bf16.msra.mxu0 0
    %734 = vmatprep.subr.bf16.mxu0 0
    %735 = vmatpush1.bf16.msra.mxu0 0
    %736 = vmatprep.subr.bf16.mxu0 0
    %737 = vmatpush1.bf16.msra.mxu0 0
    %738 = vmatprep.subr.bf16.mxu0 0
    %739 = vmatpush1.bf16.msra.mxu0 0
    %740 = vmatprep.subr.bf16.mxu0 0
    %741 = vmatpush1.bf16.msra.mxu0 0
    %742 = vmatprep.subr.bf16.mxu0 0
    %743 = vmatpush1.bf16.msra.mxu0 0
    %744 = vmatprep.subr.bf16.mxu0 0
    %745 = vmatpush1.bf16.msra.mxu0 %v728
    %746 = vmatprep.subr.bf16.mxu0 0
    %747 = vmatpush2.bf16.msra.mxu0 0
    %748 = vmatprep.subr.bf16.mxu0 0
    %749 = vmatpush2.bf16.msra.mxu0 0
    %750 = vmatprep.subr.bf16.mxu0 0
    %751 = vmatpush2.bf16.msra.mxu0 0
    %752 = vmatprep.subr.bf16.mxu0 0
    %753 = vmatpush2.bf16.msra.mxu0 0
    %754 = vmatprep.subr.bf16.mxu0 0
    %755 = vmatpush2.bf16.msra.mxu0 0
    %756 = vmatprep.subr.bf16.mxu0 0
    %757 = vmatpush2.bf16.msra.mxu0 0
    %758 = vmatprep.subr.bf16.mxu0 0
    %759 = vmatpush2.bf16.msra.mxu0 0
    %760 = vmatprep.subr.bf16.mxu0 0
    %761 = vmatpush2.bf16.msra.mxu0 0
    %762 = vmatprep.mubr.bf16.mxu0 0
    %763 = vmatmul.mubr.bf16.gmra.mxu0 %v532
    %v764 = vpop.f32.mrf.mxu0
    %v765 = vadd.f32 %v208, %v764
    %v766 = vpop.f32.mrf.mxu0
    %v767 = vpop.f32.mrf.mxu0
    %v768 = vadd.f32 %v208, %v767
    %v769 = vpop.f32.mrf.mxu0
    %770 = vmatprep.mubr.bf16.mxu0 0
    %771 = vmatmul.mubr.bf16.gmra.mxu0 %v535
    %v772 = vpop.f32.mrf.mxu0
    %v773 = vadd.f32 %v208, %v772
    %v774 = vpop.f32.mrf.mxu0
    %v775 = vpop.f32.mrf.mxu0
    %v776 = vadd.f32 %v208, %v775
    %v777 = vpop.f32.mrf.mxu0
    %778 = vmatprep.mubr.bf16.mxu0 0
    %779 = vmatmul.mubr.bf16.gmra.mxu0 %v538
    %v780 = vpop.f32.mrf.mxu0
    %v781 = vadd.f32 %v208, %v780
    %v782 = vpop.f32.mrf.mxu0
    %v783 = vpop.f32.mrf.mxu0
    %v784 = vadd.f32 %v208, %v783
    %v785 = vpop.f32.mrf.mxu0
    %786 = vmatprep.mubr.bf16.mxu0 0
    %787 = vmatmul.mubr.bf16.gmra.mxu0 %v541
    %v788 = vpop.f32.mrf.mxu0
    %v789 = vadd.f32 %v208, %v788
    %v790 = vpop.f32.mrf.mxu0
    %v791 = vpop.f32.mrf.mxu0
    %v792 = vadd.f32 %v208, %v791
    %v793 = vpop.f32.mrf.mxu0
    %794 = vmatprep.mubr.bf16.mxu0 0
    %795 = vmatmul.mubr.bf16.gmra.mxu0 %v544
    %v796 = vpop.f32.mrf.mxu0
    %v797 = vadd.f32 %v208, %v796
    %v798 = vpop.f32.mrf.mxu0
    %v799 = vpop.f32.mrf.mxu0
    %v800 = vadd.f32 %v208, %v799
    %v801 = vpop.f32.mrf.mxu0
    %802 = vmatprep.mubr.bf16.mxu0 0
    %803 = vmatmul.mubr.bf16.gmra.mxu0 %v547
    %v804 = vpop.f32.mrf.mxu0
    %v805 = vadd.f32 %v208, %v804
    %v806 = vpop.f32.mrf.mxu0
    %v807 = vpop.f32.mrf.mxu0
    %v808 = vadd.f32 %v208, %v807
    %v809 = vpop.f32.mrf.mxu0
    %810 = vmatprep.mubr.bf16.mxu0 0
    %811 = vmatmul.mubr.bf16.gmra.mxu0 %v550
    %v812 = vpop.f32.mrf.mxu0
    %v813 = vadd.f32 %v208, %v812
    %v814 = vpop.f32.mrf.mxu0
    %v815 = vpop.f32.mrf.mxu0
    %v816 = vadd.f32 %v208, %v815
    %v817 = vpop.f32.mrf.mxu0
    %818 = vmatprep.mubr.bf16.mxu0 0
    %819 = vmatmul.mubr.bf16.gmra.mxu0 %v553
    %v820 = vpop.f32.mrf.mxu0
    %v821 = vadd.f32 %v208, %v820
    %v822 = vpop.f32.mrf.mxu0
    %v823 = vpop.f32.mrf.mxu0
    %v824 = vadd.f32 %v208, %v823
    %v825 = vpop.f32.mrf.mxu0
    %826 = vmatprep.mubr.bf16.mxu0 0
    %827 = vmatmul.mubr.bf16.gmra.mxu0 %v556
    %v828 = vpop.f32.mrf.mxu0
    %v829 = vadd.f32 %v208, %v828
    %v830 = vpop.f32.mrf.mxu0
    %v831 = vpop.f32.mrf.mxu0
    %v832 = vadd.f32 %v208, %v831
    %v833 = vpop.f32.mrf.mxu0
    %834 = vmatprep.mubr.bf16.mxu0 0
    %835 = vmatmul.mubr.bf16.gmra.mxu0 %v559
    %v836 = vpop.f32.mrf.mxu0
    %v837 = vadd.f32 %v208, %v836
    %v838 = vpop.f32.mrf.mxu0
    %v839 = vpop.f32.mrf.mxu0
    %v840 = vadd.f32 %v208, %v839
    %v841 = vpop.f32.mrf.mxu0
    %842 = vmatprep.mubr.bf16.mxu0 0
    %843 = vmatmul.mubr.bf16.gmra.mxu0 %v562
    %v844 = vpop.f32.mrf.mxu0
    %v845 = vadd.f32 %v208, %v844
    %v846 = vpop.f32.mrf.mxu0
    %v847 = vpop.f32.mrf.mxu0
    %v848 = vadd.f32 %v208, %v847
    %v849 = vpop.f32.mrf.mxu0
    %850 = vmatprep.mubr.bf16.mxu0 0
    %851 = vmatmul.mubr.bf16.gmra.mxu0 %v565
    %v852 = vpop.f32.mrf.mxu0
    %v853 = vadd.f32 %v208, %v852
    %v854 = vpop.f32.mrf.mxu0
    %v855 = vpop.f32.mrf.mxu0
    %v856 = vadd.f32 %v208, %v855
    %v857 = vpop.f32.mrf.mxu0
    %858 = vmatprep.mubr.bf16.mxu0 0
    %859 = vmatmul.mubr.bf16.gmra.mxu0 %v568
    %v860 = vpop.f32.mrf.mxu0
    %v861 = vadd.f32 %v208, %v860
    %v862 = vpop.f32.mrf.mxu0
    %v863 = vpop.f32.mrf.mxu0
    %v864 = vadd.f32 %v208, %v863
    %v865 = vpop.f32.mrf.mxu0
    %866 = vmatprep.mubr.bf16.mxu0 0
    %867 = vmatmul.mubr.bf16.gmra.mxu0 %v571
    %v868 = vpop.f32.mrf.mxu0
    %v869 = vadd.f32 %v208, %v868
    %v870 = vpop.f32.mrf.mxu0
    %v871 = vpop.f32.mrf.mxu0
    %v872 = vadd.f32 %v208, %v871
    %v873 = vpop.f32.mrf.mxu0
    %874 = vmatprep.mubr.bf16.mxu0 0
    %875 = vmatmul.mubr.bf16.gmra.mxu0 %v574
    %v876 = vpop.f32.mrf.mxu0
    %v877 = vadd.f32 %v208, %v876
    %v878 = vpop.f32.mrf.mxu0
    %v879 = vpop.f32.mrf.mxu0
    %v880 = vadd.f32 %v208, %v879
    %v881 = vpop.f32.mrf.mxu0
    %882 = vmatprep.mubr.bf16.mxu0 0
    %883 = vmatmul.mubr.bf16.gmra.mxu0 %v577
    %v884 = vpop.f32.mrf.mxu0
    %v885 = vadd.f32 %v208, %v884
    %v886 = vpop.f32.mrf.mxu0
    %v887 = vpop.f32.mrf.mxu0
    %v888 = vadd.f32 %v208, %v887
    %v889 = vpop.f32.mrf.mxu0
    %890 = vmatprep.mubr.bf16.mxu0 0
    %891 = vmatmul.mubr.bf16.gmra.mxu0 %v580
    %v892 = vpop.f32.mrf.mxu0
    %v893 = vadd.f32 %v208, %v892
    %v894 = vpop.f32.mrf.mxu0
    %v895 = vpop.f32.mrf.mxu0
    %v896 = vadd.f32 %v208, %v895
    %v897 = vpop.f32.mrf.mxu0
    %898 = vmatprep.mubr.bf16.mxu0 0
    %899 = vmatmul.mubr.bf16.gmra.mxu0 %v583
    %v900 = vpop.f32.mrf.mxu0
    %v901 = vadd.f32 %v208, %v900
    %v902 = vpop.f32.mrf.mxu0
    %v903 = vpop.f32.mrf.mxu0
    %v904 = vadd.f32 %v208, %v903
    %v905 = vpop.f32.mrf.mxu0
    %906 = vmatprep.mubr.bf16.mxu0 0
    %907 = vmatmul.mubr.bf16.gmra.mxu0 %v586
    %v908 = vpop.f32.mrf.mxu0
    %v909 = vadd.f32 %v208, %v908
    %v910 = vpop.f32.mrf.mxu0
    %v911 = vpop.f32.mrf.mxu0
    %v912 = vadd.f32 %v208, %v911
    %v913 = vpop.f32.mrf.mxu0
    %914 = vmatprep.mubr.bf16.mxu0 0
    %915 = vmatmul.mubr.bf16.gmra.mxu0 %v589
    %v916 = vpop.f32.mrf.mxu0
    %v917 = vadd.f32 %v208, %v916
    %v918 = vpop.f32.mrf.mxu0
    %v919 = vpop.f32.mrf.mxu0
    %v920 = vadd.f32 %v208, %v919
    %v921 = vpop.f32.mrf.mxu0
    %922 = vmatprep.mubr.bf16.mxu0 0
    %923 = vmatmul.mubr.bf16.gmra.mxu0 %v592
    %v924 = vpop.f32.mrf.mxu0
    %v925 = vadd.f32 %v208, %v924
    %v926 = vpop.f32.mrf.mxu0
    %v927 = vpop.f32.mrf.mxu0
    %v928 = vadd.f32 %v208, %v927
    %v929 = vpop.f32.mrf.mxu0
    %930 = vmatprep.mubr.bf16.mxu0 0
    %931 = vmatmul.mubr.bf16.gmra.mxu0 %v595
    %v932 = vpop.f32.mrf.mxu0
    %v933 = vadd.f32 %v208, %v932
    %v934 = vpop.f32.mrf.mxu0
    %v935 = vpop.f32.mrf.mxu0
    %v936 = vadd.f32 %v208, %v935
    %v937 = vpop.f32.mrf.mxu0
    %938 = vmatprep.mubr.bf16.mxu0 0
    %939 = vmatmul.mubr.bf16.gmra.mxu0 %v598
    %v940 = vpop.f32.mrf.mxu0
    %v941 = vadd.f32 %v208, %v940
    %v942 = vpop.f32.mrf.mxu0
    %v943 = vpop.f32.mrf.mxu0
    %v944 = vadd.f32 %v208, %v943
    %v945 = vpop.f32.mrf.mxu0
    %946 = vmatprep.mubr.bf16.mxu0 0
    %947 = vmatmul.mubr.bf16.gmra.mxu0 %v601
    %v948 = vpop.f32.mrf.mxu0
    %v949 = vadd.f32 %v208, %v948
    %v950 = vpop.f32.mrf.mxu0
    %v951 = vpop.f32.mrf.mxu0
    %v952 = vadd.f32 %v208, %v951
    %v953 = vpop.f32.mrf.mxu0
    %954 = vmatprep.mubr.bf16.mxu0 0
    %955 = vmatmul.mubr.bf16.gmra.mxu0 %v604
    %v956 = vpop.f32.mrf.mxu0
    %v957 = vadd.f32 %v208, %v956
    %v958 = vpop.f32.mrf.mxu0
    %v959 = vpop.f32.mrf.mxu0
    %v960 = vadd.f32 %v208, %v959
    %v961 = vpop.f32.mrf.mxu0
    %962 = vmatprep.mubr.bf16.mxu0 0
    %963 = vmatmul.mubr.bf16.gmra.mxu0 %v607
    %v964 = vpop.f32.mrf.mxu0
    %v965 = vadd.f32 %v208, %v964
    %v966 = vpop.f32.mrf.mxu0
    %v967 = vpop.f32.mrf.mxu0
    %v968 = vadd.f32 %v208, %v967
    %v969 = vpop.f32.mrf.mxu0
    %970 = vmatprep.mubr.bf16.mxu0 0
    %971 = vmatmul.mubr.bf16.gmra.mxu0 %v610
    %v972 = vpop.f32.mrf.mxu0
    %v973 = vadd.f32 %v208, %v972
    %v974 = vpop.f32.mrf.mxu0
    %v975 = vpop.f32.mrf.mxu0
    %v976 = vadd.f32 %v208, %v975
    %v977 = vpop.f32.mrf.mxu0
    %978 = vmatprep.mubr.bf16.mxu0 0
    %979 = vmatmul.mubr.bf16.gmra.mxu0 %v613
    %v980 = vpop.f32.mrf.mxu0
    %v981 = vadd.f32 %v208, %v980
    %v982 = vpop.f32.mrf.mxu0
    %v983 = vpop.f32.mrf.mxu0
    %v984 = vadd.f32 %v208, %v983
    %v985 = vpop.f32.mrf.mxu0
    %986 = vmatprep.mubr.bf16.mxu0 0
    %987 = vmatmul.mubr.bf16.gmra.mxu0 %v616
    %v988 = vpop.f32.mrf.mxu0
    %v989 = vadd.f32 %v208, %v988
    %v990 = vpop.f32.mrf.mxu0
    %v991 = vpop.f32.mrf.mxu0
    %v992 = vadd.f32 %v208, %v991
    %v993 = vpop.f32.mrf.mxu0
    %994 = vmatprep.mubr.bf16.mxu0 0
    %995 = vmatmul.mubr.bf16.gmra.mxu0 %v619
    %v996 = vpop.f32.mrf.mxu0
    %v997 = vadd.f32 %v208, %v996
    %v998 = vpop.f32.mrf.mxu0
    %v999 = vpop.f32.mrf.mxu0
    %v1000 = vadd.f32 %v208, %v999
    %v1001 = vpop.f32.mrf.mxu0
    %1002 = vmatprep.mubr.bf16.mxu0 0
    %1003 = vmatmul.mubr.bf16.gmra.mxu0 %v622
    %v1004 = vpop.f32.mrf.mxu0
    %v1005 = vadd.f32 %v208, %v1004
    %v1006 = vpop.f32.mrf.mxu0
    %v1007 = vpop.f32.mrf.mxu0
    %v1008 = vadd.f32 %v208, %v1007
    %v1009 = vpop.f32.mrf.mxu0
    %1010 = vmatprep.mubr.bf16.mxu0 0
    %1011 = vmatmul.mubr.bf16.gmra.mxu0 %v625
    %v1012 = vpop.f32.mrf.mxu0
    %v1013 = vadd.f32 %v208, %v1012
    %v1014 = vpop.f32.mrf.mxu0
    %v1015 = vpop.f32.mrf.mxu0
    %v1016 = vadd.f32 %v208, %v1015
    %v1017 = vpop.f32.mrf.mxu0
    %1018 = vmatprep.mubr.bf16.mxu0 0
    %1019 = vmatmul.mubr.bf16.gmra.mxu0 %v628
    %v1020 = vpop.f32.mrf.mxu0
    %v1021 = vadd.f32 %v208, %v1020
    %v1022 = vpop.f32.mrf.mxu0
    %v1023 = vpop.f32.mrf.mxu0
    %v1024 = vadd.f32 %v208, %v1023
    %v1025 = vpop.f32.mrf.mxu0
    %1026 = vmatprep.mubr.bf16.mxu0 0
    %1027 = vmatmul.mubr.bf16.gmra.mxu0 %v631
    %v1028 = vpop.f32.mrf.mxu0
    %v1029 = vadd.f32 %v208, %v1028
    %v1030 = vpop.f32.mrf.mxu0
    %v1031 = vpop.f32.mrf.mxu0
    %v1032 = vadd.f32 %v208, %v1031
    %v1033 = vpop.f32.mrf.mxu0
    %1034 = vmatprep.mubr.bf16.mxu0 0
    %1035 = vmatmul.mubr.bf16.gmra.mxu0 %v634
    %v1036 = vpop.f32.mrf.mxu0
    %v1037 = vadd.f32 %v208, %v1036
    %v1038 = vpop.f32.mrf.mxu0
    %v1039 = vpop.f32.mrf.mxu0
    %v1040 = vadd.f32 %v208, %v1039
    %v1041 = vpop.f32.mrf.mxu0
    %1042 = vmatprep.mubr.bf16.mxu0 0
    %1043 = vmatmul.mubr.bf16.gmra.mxu0 %v637
    %v1044 = vpop.f32.mrf.mxu0
    %v1045 = vadd.f32 %v208, %v1044
    %v1046 = vpop.f32.mrf.mxu0
    %v1047 = vpop.f32.mrf.mxu0
    %v1048 = vadd.f32 %v208, %v1047
    %v1049 = vpop.f32.mrf.mxu0
    %1050 = vmatprep.mubr.bf16.mxu0 0
    %1051 = vmatmul.mubr.bf16.gmra.mxu0 %v640
    %v1052 = vpop.f32.mrf.mxu0
    %v1053 = vadd.f32 %v208, %v1052
    %v1054 = vpop.f32.mrf.mxu0
    %v1055 = vpop.f32.mrf.mxu0
    %v1056 = vadd.f32 %v208, %v1055
    %v1057 = vpop.f32.mrf.mxu0
    %1058 = vmatprep.mubr.bf16.mxu0 0
    %1059 = vmatmul.mubr.bf16.gmra.mxu0 %v643
    %v1060 = vpop.f32.mrf.mxu0
    %v1061 = vadd.f32 %v208, %v1060
    %v1062 = vpop.f32.mrf.mxu0
    %v1063 = vpop.f32.mrf.mxu0
    %v1064 = vadd.f32 %v208, %v1063
    %v1065 = vpop.f32.mrf.mxu0
    %1066 = vmatprep.mubr.bf16.mxu0 0
    %1067 = vmatmul.mubr.bf16.gmra.mxu0 %v646
    %v1068 = vpop.f32.mrf.mxu0
    %v1069 = vadd.f32 %v208, %v1068
    %v1070 = vpop.f32.mrf.mxu0
    %v1071 = vpop.f32.mrf.mxu0
    %v1072 = vadd.f32 %v208, %v1071
    %v1073 = vpop.f32.mrf.mxu0
    %1074 = vmatprep.mubr.bf16.mxu0 0
    %1075 = vmatmul.mubr.bf16.gmra.mxu0 %v649
    %v1076 = vpop.f32.mrf.mxu0
    %v1077 = vadd.f32 %v208, %v1076
    %v1078 = vpop.f32.mrf.mxu0
    %v1079 = vpop.f32.mrf.mxu0
    %v1080 = vadd.f32 %v208, %v1079
    %v1081 = vpop.f32.mrf.mxu0
    %1082 = vmatprep.mubr.bf16.mxu0 0
    %1083 = vmatmul.mubr.bf16.gmra.mxu0 %v652
    %v1084 = vpop.f32.mrf.mxu0
    %v1085 = vadd.f32 %v208, %v1084
    %v1086 = vpop.f32.mrf.mxu0
    %v1087 = vpop.f32.mrf.mxu0
    %v1088 = vadd.f32 %v208, %v1087
    %v1089 = vpop.f32.mrf.mxu0
    %1090 = vmatprep.mubr.bf16.mxu0 0
    %1091 = vmatmul.mubr.bf16.gmra.mxu0 %v655
    %v1092 = vpop.f32.mrf.mxu0
    %v1093 = vadd.f32 %v208, %v1092
    %v1094 = vpop.f32.mrf.mxu0
    %v1095 = vpop.f32.mrf.mxu0
    %v1096 = vadd.f32 %v208, %v1095
    %v1097 = vpop.f32.mrf.mxu0
    %1098 = vmatprep.mubr.bf16.mxu0 0
    %1099 = vmatmul.mubr.bf16.gmra.mxu0 %v658
    %v1100 = vpop.f32.mrf.mxu0
    %v1101 = vadd.f32 %v208, %v1100
    %v1102 = vpop.f32.mrf.mxu0
    %v1103 = vpop.f32.mrf.mxu0
    %v1104 = vadd.f32 %v208, %v1103
    %v1105 = vpop.f32.mrf.mxu0
    %1106 = vmatprep.mubr.bf16.mxu0 0
    %1107 = vmatmul.mubr.bf16.gmra.mxu0 %v661
    %v1108 = vpop.f32.mrf.mxu0
    %v1109 = vadd.f32 %v208, %v1108
    %v1110 = vpop.f32.mrf.mxu0
    %v1111 = vpop.f32.mrf.mxu0
    %v1112 = vadd.f32 %v208, %v1111
    %v1113 = vpop.f32.mrf.mxu0
    %1114 = vmatprep.mubr.bf16.mxu0 0
    %1115 = vmatmul.mubr.bf16.gmra.mxu0 %v664
    %v1116 = vpop.f32.mrf.mxu0
    %v1117 = vadd.f32 %v208, %v1116
    %v1118 = vpop.f32.mrf.mxu0
    %v1119 = vpop.f32.mrf.mxu0
    %v1120 = vadd.f32 %v208, %v1119
    %v1121 = vpop.f32.mrf.mxu0
    %1122 = vmatprep.mubr.bf16.mxu0 0
    %1123 = vmatmul.mubr.bf16.gmra.mxu0 %v667
    %v1124 = vpop.f32.mrf.mxu0
    %v1125 = vadd.f32 %v208, %v1124
    %v1126 = vpop.f32.mrf.mxu0
    %v1127 = vpop.f32.mrf.mxu0
    %v1128 = vadd.f32 %v208, %v1127
    %v1129 = vpop.f32.mrf.mxu0
    %1130 = vmatprep.mubr.bf16.mxu0 0
    %1131 = vmatmul.mubr.bf16.gmra.mxu0 %v670
    %v1132 = vpop.f32.mrf.mxu0
    %v1133 = vadd.f32 %v208, %v1132
    %v1134 = vpop.f32.mrf.mxu0
    %v1135 = vpop.f32.mrf.mxu0
    %v1136 = vadd.f32 %v208, %v1135
    %v1137 = vpop.f32.mrf.mxu0
    %1138 = vmatprep.mubr.bf16.mxu0 0
    %1139 = vmatmul.mubr.bf16.gmra.mxu0 %v673
    %v1140 = vpop.f32.mrf.mxu0
    %v1141 = vadd.f32 %v208, %v1140
    %v1142 = vpop.f32.mrf.mxu0
    %v1143 = vpop.f32.mrf.mxu0
    %v1144 = vadd.f32 %v208, %v1143
    %v1145 = vpop.f32.mrf.mxu0
    %1146 = vmatprep.mubr.bf16.mxu0 0
    %1147 = vmatmul.mubr.bf16.gmra.mxu0 %v676
    %v1148 = vpop.f32.mrf.mxu0
    %v1149 = vadd.f32 %v208, %v1148
    %v1150 = vpop.f32.mrf.mxu0
    %v1151 = vpop.f32.mrf.mxu0
    %v1152 = vadd.f32 %v208, %v1151
    %v1153 = vpop.f32.mrf.mxu0
    %1154 = vmatprep.mubr.bf16.mxu0 0
    %1155 = vmatmul.mubr.bf16.gmra.mxu0 %v679
    %v1156 = vpop.f32.mrf.mxu0
    %v1157 = vadd.f32 %v208, %v1156
    %v1158 = vpop.f32.mrf.mxu0
    %v1159 = vpop.f32.mrf.mxu0
    %v1160 = vadd.f32 %v208, %v1159
    %v1161 = vpop.f32.mrf.mxu0
    %1162 = vmatprep.mubr.bf16.mxu0 0
    %1163 = vmatmul.mubr.bf16.gmra.mxu0 %v682
    %v1164 = vpop.f32.mrf.mxu0
    %v1165 = vadd.f32 %v208, %v1164
    %v1166 = vpop.f32.mrf.mxu0
    %v1167 = vpop.f32.mrf.mxu0
    %v1168 = vadd.f32 %v208, %v1167
    %v1169 = vpop.f32.mrf.mxu0
    %1170 = vmatprep.mubr.bf16.mxu0 0
    %1171 = vmatmul.mubr.bf16.gmra.mxu0 %v685
    %v1172 = vpop.f32.mrf.mxu0
    %v1173 = vadd.f32 %v208, %v1172
    %v1174 = vpop.f32.mrf.mxu0
    %v1175 = vpop.f32.mrf.mxu0
    %v1176 = vadd.f32 %v208, %v1175
    %v1177 = vpop.f32.mrf.mxu0
    %1178 = vmatprep.mubr.bf16.mxu0 0
    %1179 = vmatmul.mubr.bf16.gmra.mxu0 %v688
    %v1180 = vpop.f32.mrf.mxu0
    %v1181 = vadd.f32 %v208, %v1180
    %v1182 = vpop.f32.mrf.mxu0
    %v1183 = vpop.f32.mrf.mxu0
    %v1184 = vadd.f32 %v208, %v1183
    %v1185 = vpop.f32.mrf.mxu0
    %1186 = vmatprep.mubr.bf16.mxu0 0
    %1187 = vmatmul.mubr.bf16.gmra.mxu0 %v691
    %v1188 = vpop.f32.mrf.mxu0
    %v1189 = vadd.f32 %v208, %v1188
    %v1190 = vpop.f32.mrf.mxu0
    %v1191 = vpop.f32.mrf.mxu0
    %v1192 = vadd.f32 %v208, %v1191
    %v1193 = vpop.f32.mrf.mxu0
    %1194 = vmatprep.mubr.bf16.mxu0 0
    %1195 = vmatmul.mubr.bf16.gmra.mxu0 %v694
    %v1196 = vpop.f32.mrf.mxu0
    %v1197 = vadd.f32 %v208, %v1196
    %v1198 = vpop.f32.mrf.mxu0
    %v1199 = vpop.f32.mrf.mxu0
    %v1200 = vadd.f32 %v208, %v1199
    %v1201 = vpop.f32.mrf.mxu0
    %1202 = vmatprep.mubr.bf16.mxu0 0
    %1203 = vmatmul.mubr.bf16.gmra.mxu0 %v697
    %v1204 = vpop.f32.mrf.mxu0
    %v1205 = vadd.f32 %v208, %v1204
    %v1206 = vpop.f32.mrf.mxu0
    %v1207 = vpop.f32.mrf.mxu0
    %v1208 = vadd.f32 %v208, %v1207
    %v1209 = vpop.f32.mrf.mxu0
    %1210 = vmatprep.mubr.bf16.mxu0 0
    %1211 = vmatmul.mubr.bf16.gmra.mxu0 %v700
    %v1212 = vpop.f32.mrf.mxu0
    %v1213 = vadd.f32 %v208, %v1212
    %v1214 = vpop.f32.mrf.mxu0
    %v1215 = vpop.f32.mrf.mxu0
    %v1216 = vadd.f32 %v208, %v1215
    %v1217 = vpop.f32.mrf.mxu0
    %1218 = vmatprep.mubr.bf16.mxu0 0
    %1219 = vmatmul.mubr.bf16.gmra.mxu0 %v703
    %v1220 = vpop.f32.mrf.mxu0
    %v1221 = vadd.f32 %v208, %v1220
    %v1222 = vpop.f32.mrf.mxu0
    %v1223 = vpop.f32.mrf.mxu0
    %v1224 = vadd.f32 %v208, %v1223
    %v1225 = vpop.f32.mrf.mxu0
    %1226 = vmatprep.mubr.bf16.mxu0 0
    %1227 = vmatmul.mubr.bf16.gmra.mxu0 %v706
    %v1228 = vpop.f32.mrf.mxu0
    %v1229 = vadd.f32 %v208, %v1228
    %v1230 = vpop.f32.mrf.mxu0
    %v1231 = vpop.f32.mrf.mxu0
    %v1232 = vadd.f32 %v208, %v1231
    %v1233 = vpop.f32.mrf.mxu0
    %1234 = vmatprep.mubr.bf16.mxu0 0
    %1235 = vmatmul.mubr.bf16.gmra.mxu0 %v709
    %v1236 = vpop.f32.mrf.mxu0
    %v1237 = vadd.f32 %v208, %v1236
    %v1238 = vpop.f32.mrf.mxu0
    %v1239 = vpop.f32.mrf.mxu0
    %v1240 = vadd.f32 %v208, %v1239
    %v1241 = vpop.f32.mrf.mxu0
    %1242 = vmatprep.mubr.bf16.mxu0 0
    %1243 = vmatmul.mubr.bf16.gmra.mxu0 %v712
    %v1244 = vpop.f32.mrf.mxu0
    %v1245 = vadd.f32 %v208, %v1244
    %v1246 = vpop.f32.mrf.mxu0
    %v1247 = vpop.f32.mrf.mxu0
    %v1248 = vadd.f32 %v208, %v1247
    %v1249 = vpop.f32.mrf.mxu0
    %1250 = vmatprep.mubr.bf16.mxu0 0
    %1251 = vmatmul.mubr.bf16.gmra.mxu0 %v715
    %v1252 = vpop.f32.mrf.mxu0
    %v1253 = vadd.f32 %v208, %v1252
    %v1254 = vpop.f32.mrf.mxu0
    %v1255 = vpop.f32.mrf.mxu0
    %v1256 = vadd.f32 %v208, %v1255
    %v1257 = vpop.f32.mrf.mxu0
    %1258 = vmatprep.mubr.bf16.mxu0 0
    %1259 = vmatmul.mubr.bf16.gmra.mxu0 %v718
    %v1260 = vpop.f32.mrf.mxu0
    %v1261 = vadd.f32 %v208, %v1260
    %v1262 = vpop.f32.mrf.mxu0
    %v1263 = vpop.f32.mrf.mxu0
    %v1264 = vadd.f32 %v208, %v1263
    %v1265 = vpop.f32.mrf.mxu0
    %1266 = vmatprep.mubr.bf16.mxu0 0
    %1267 = vmatmul.mubr.bf16.gmra.mxu0 %v721
    %v1268 = vpop.f32.mrf.mxu0
    %v1269 = vadd.f32 %v208, %v1268
    %v1270 = vpop.f32.mrf.mxu0
    %v1271 = vpop.f32.mrf.mxu0
    %v1272 = vadd.f32 %v208, %v1271
    %v1273 = vpop.f32.mrf.mxu0
    %1274 = vdwg.mxu0
    %v1275 = vmax.f32 %v765, 0.0
    %v1276 = vmax.f32 %v768, 0.0
    %v1277 = vmax.f32 %v773, 0.0
    %v1278 = vmax.f32 %v776, 0.0
    %v1279 = vmax.f32 %v781, 0.0
    %v1280 = vmax.f32 %v784, 0.0
    %v1281 = vmax.f32 %v789, 0.0
    %v1282 = vmax.f32 %v792, 0.0
    %v1283 = vmax.f32 %v797, 0.0
    %v1284 = vmax.f32 %v800, 0.0
    %v1285 = vmax.f32 %v805, 0.0
    %v1286 = vmax.f32 %v808, 0.0
    %v1287 = vmax.f32 %v813, 0.0
    %v1288 = vmax.f32 %v816, 0.0
    %v1289 = vmax.f32 %v821, 0.0
    %v1290 = vmax.f32 %v824, 0.0
    %v1291 = vmax.f32 %v829, 0.0
    %v1292 = vmax.f32 %v832, 0.0
    %v1293 = vmax.f32 %v837, 0.0
    %v1294 = vmax.f32 %v840, 0.0
    %v1295 = vmax.f32 %v845, 0.0
    %v1296 = vmax.f32 %v848, 0.0
    %v1297 = vmax.f32 %v853, 0.0
    %v1298 = vmax.f32 %v856, 0.0
    %v1299 = vmax.f32 %v861, 0.0
    %v1300 = vmax.f32 %v864, 0.0
    %v1301 = vmax.f32 %v869, 0.0
    %v1302 = vmax.f32 %v872, 0.0
    %v1303 = vmax.f32 %v877, 0.0
    %v1304 = vmax.f32 %v880, 0.0
    %v1305 = vmax.f32 %v885, 0.0
    %v1306 = vmax.f32 %v888, 0.0
    %v1307 = vmax.f32 %v893, 0.0
    %v1308 = vmax.f32 %v896, 0.0
    %v1309 = vmax.f32 %v901, 0.0
    %v1310 = vmax.f32 %v904, 0.0
    %v1311 = vmax.f32 %v909, 0.0
    %v1312 = vmax.f32 %v912, 0.0
    %v1313 = vmax.f32 %v917, 0.0
    %v1314 = vmax.f32 %v920, 0.0
    %v1315 = vmax.f32 %v925, 0.0
    %v1316 = vmax.f32 %v928, 0.0
    %v1317 = vmax.f32 %v933, 0.0
    %v1318 = vmax.f32 %v936, 0.0
    %v1319 = vmax.f32 %v941, 0.0
    %v1320 = vmax.f32 %v944, 0.0
    %v1321 = vmax.f32 %v949, 0.0
    %v1322 = vmax.f32 %v952, 0.0
    %v1323 = vmax.f32 %v957, 0.0
    %v1324 = vmax.f32 %v960, 0.0
    %v1325 = vmax.f32 %v965, 0.0
    %v1326 = vmax.f32 %v968, 0.0
    %v1327 = vmax.f32 %v973, 0.0
    %v1328 = vmax.f32 %v976, 0.0
    %v1329 = vmax.f32 %v981, 0.0
    %v1330 = vmax.f32 %v984, 0.0
    %v1331 = vmax.f32 %v989, 0.0
    %v1332 = vmax.f32 %v992, 0.0
    %v1333 = vmax.f32 %v997, 0.0
    %v1334 = vmax.f32 %v1000, 0.0
    %v1335 = vmax.f32 %v1005, 0.0
    %v1336 = vmax.f32 %v1008, 0.0
    %v1337 = vmax.f32 %v1013, 0.0
    %v1338 = vmax.f32 %v1016, 0.0
    %v1339 = vmax.f32 %v1021, 0.0
    %v1340 = vmax.f32 %v1024, 0.0
    %v1341 = vmax.f32 %v1029, 0.0
    %v1342 = vmax.f32 %v1032, 0.0
    %v1343 = vmax.f32 %v1037, 0.0
    %v1344 = vmax.f32 %v1040, 0.0
    %v1345 = vmax.f32 %v1045, 0.0
    %v1346 = vmax.f32 %v1048, 0.0
    %v1347 = vmax.f32 %v1053, 0.0
    %v1348 = vmax.f32 %v1056, 0.0
    %v1349 = vmax.f32 %v1061, 0.0
    %v1350 = vmax.f32 %v1064, 0.0
    %v1351 = vmax.f32 %v1069, 0.0
    %v1352 = vmax.f32 %v1072, 0.0
    %v1353 = vmax.f32 %v1077, 0.0
    %v1354 = vmax.f32 %v1080, 0.0
    %v1355 = vmax.f32 %v1085, 0.0
    %v1356 = vmax.f32 %v1088, 0.0
    %v1357 = vmax.f32 %v1093, 0.0
    %v1358 = vmax.f32 %v1096, 0.0
    %v1359 = vmax.f32 %v1101, 0.0
    %v1360 = vmax.f32 %v1104, 0.0
    %v1361 = vmax.f32 %v1109, 0.0
    %v1362 = vmax.f32 %v1112, 0.0
    %v1363 = vmax.f32 %v1117, 0.0
    %v1364 = vmax.f32 %v1120, 0.0
    %v1365 = vmax.f32 %v1125, 0.0
    %v1366 = vmax.f32 %v1128, 0.0
    %v1367 = vmax.f32 %v1133, 0.0
    %v1368 = vmax.f32 %v1136, 0.0
    %v1369 = vmax.f32 %v1141, 0.0
    %v1370 = vmax.f32 %v1144, 0.0
    %v1371 = vmax.f32 %v1149, 0.0
    %v1372 = vmax.f32 %v1152, 0.0
    %v1373 = vmax.f32 %v1157, 0.0
    %v1374 = vmax.f32 %v1160, 0.0
    %v1375 = vmax.f32 %v1165, 0.0
    %v1376 = vmax.f32 %v1168, 0.0
    %v1377 = vmax.f32 %v1173, 0.0
    %v1378 = vmax.f32 %v1176, 0.0
    %v1379 = vmax.f32 %v1181, 0.0
    %v1380 = vmax.f32 %v1184, 0.0
    %v1381 = vmax.f32 %v1189, 0.0
    %v1382 = vmax.f32 %v1192, 0.0
    %v1383 = vmax.f32 %v1197, 0.0
    %v1384 = vmax.f32 %v1200, 0.0
    %v1385 = vmax.f32 %v1205, 0.0
    %v1386 = vmax.f32 %v1208, 0.0
    %v1387 = vmax.f32 %v1213, 0.0
    %v1388 = vmax.f32 %v1216, 0.0
    %v1389 = vmax.f32 %v1221, 0.0
    %v1390 = vmax.f32 %v1224, 0.0
    %v1391 = vmax.f32 %v1229, 0.0
    %v1392 = vmax.f32 %v1232, 0.0
    %v1393 = vmax.f32 %v1237, 0.0
    %v1394 = vmax.f32 %v1240, 0.0
    %v1395 = vmax.f32 %v1245, 0.0
    %v1396 = vmax.f32 %v1248, 0.0
    %v1397 = vmax.f32 %v1253, 0.0
    %v1398 = vmax.f32 %v1256, 0.0
    %v1399 = vmax.f32 %v1261, 0.0
    %v1400 = vmax.f32 %v1264, 0.0
    %v1401 = vmax.f32 %v1269, 0.0
    %v1402 = vmax.f32 %v1272, 0.0
    %v1403 = vpack.c.bf16 %v1276, %v1275
    %v1404 = vpack.c.bf16 %v1278, %v1277
    %v1405 = vpack.c.bf16 %v1280, %v1279
    %v1406 = vpack.c.bf16 %v1282, %v1281
    %v1407 = vpack.c.bf16 %v1284, %v1283
    %v1408 = vpack.c.bf16 %v1286, %v1285
    %v1409 = vpack.c.bf16 %v1288, %v1287
    %v1410 = vpack.c.bf16 %v1290, %v1289
    %v1411 = vpack.c.bf16 %v1292, %v1291
    %v1412 = vpack.c.bf16 %v1294, %v1293
    %v1413 = vpack.c.bf16 %v1296, %v1295
    %v1414 = vpack.c.bf16 %v1298, %v1297
    %v1415 = vpack.c.bf16 %v1300, %v1299
    %v1416 = vpack.c.bf16 %v1302, %v1301
    %v1417 = vpack.c.bf16 %v1304, %v1303
    %v1418 = vpack.c.bf16 %v1306, %v1305
    %v1419 = vpack.c.bf16 %v1308, %v1307
    %v1420 = vpack.c.bf16 %v1310, %v1309
    %v1421 = vpack.c.bf16 %v1312, %v1311
    %v1422 = vpack.c.bf16 %v1314, %v1313
    %v1423 = vpack.c.bf16 %v1316, %v1315
    %v1424 = vpack.c.bf16 %v1318, %v1317
    %v1425 = vpack.c.bf16 %v1320, %v1319
    %v1426 = vpack.c.bf16 %v1322, %v1321
    %v1427 = vpack.c.bf16 %v1324, %v1323
    %v1428 = vpack.c.bf16 %v1326, %v1325
    %v1429 = vpack.c.bf16 %v1328, %v1327
    %v1430 = vpack.c.bf16 %v1330, %v1329
    %v1431 = vpack.c.bf16 %v1332, %v1331
    %v1432 = vpack.c.bf16 %v1334, %v1333
    %v1433 = vpack.c.bf16 %v1336, %v1335
    %v1434 = vpack.c.bf16 %v1338, %v1337
    %v1435 = vpack.c.bf16 %v1340, %v1339
    %v1436 = vpack.c.bf16 %v1342, %v1341
    %v1437 = vpack.c.bf16 %v1344, %v1343
    %v1438 = vpack.c.bf16 %v1346, %v1345
    %v1439 = vpack.c.bf16 %v1348, %v1347
    %v1440 = vpack.c.bf16 %v1350, %v1349
    %v1441 = vpack.c.bf16 %v1352, %v1351
    %v1442 = vpack.c.bf16 %v1354, %v1353
    %v1443 = vpack.c.bf16 %v1356, %v1355
    %v1444 = vpack.c.bf16 %v1358, %v1357
    %v1445 = vpack.c.bf16 %v1360, %v1359
    %v1446 = vpack.c.bf16 %v1362, %v1361
    %v1447 = vpack.c.bf16 %v1364, %v1363
    %v1448 = vpack.c.bf16 %v1366, %v1365
    %v1449 = vpack.c.bf16 %v1368, %v1367
    %v1450 = vpack.c.bf16 %v1370, %v1369
    %v1451 = vpack.c.bf16 %v1372, %v1371
    %v1452 = vpack.c.bf16 %v1374, %v1373
    %v1453 = vpack.c.bf16 %v1376, %v1375
    %v1454 = vpack.c.bf16 %v1378, %v1377
    %v1455 = vpack.c.bf16 %v1380, %v1379
    %v1456 = vpack.c.bf16 %v1382, %v1381
    %v1457 = vpack.c.bf16 %v1384, %v1383
    %v1458 = vpack.c.bf16 %v1386, %v1385
    %v1459 = vpack.c.bf16 %v1388, %v1387
    %v1460 = vpack.c.bf16 %v1390, %v1389
    %v1461 = vpack.c.bf16 %v1392, %v1391
    %v1462 = vpack.c.bf16 %v1394, %v1393
    %v1463 = vpack.c.bf16 %v1396, %v1395
    %v1464 = vpack.c.bf16 %v1398, %v1397
    %v1465 = vpack.c.bf16 %v1400, %v1399
    %v1466 = vpack.c.bf16 %v1402, %v1401
    %v1467 = vld [vmem:[%s3] sm:$0xf]
    %v1468 = vld [vmem:[%s3 + $0x4] sm:$0xf]
    %v1469 = vld [vmem:[%s3 + $0x8] sm:$0xf]
    %v1470 = vld [vmem:[%s3 + $0xc] sm:$0xf]
    %v1471 = vld [vmem:[%s3 + $0x10] sm:$0xf]
    %v1472 = vld [vmem:[%s3 + $0x14] sm:$0xf]
    %v1473 = vld [vmem:[%s3 + $0x18] sm:$0xf]
    %v1474 = vld [vmem:[%s3 + $0x1c] sm:$0xf]
    %v1475 = vld [vmem:[%s4] sm:$0x1]
    %v1477 = vlaneseq
    %v1478 = vshrl.u32 %v1477, 7
    %v1479 = vsub.s32 0, %v1478
    %v1480 = vrot.slane %v1475, %v1479
    %v1490 = vunpack.c.l.b16 %v1467
    %v1491 = vunpack.c.l.b16 %v1468
    %v1492 = vunpack.c.l.b16 %v1469
    %v1493 = vunpack.c.l.b16 %v1470
    %v1494 = vunpack.c.l.b16 %v1471
    %v1495 = vunpack.c.l.b16 %v1472
    %v1496 = vunpack.c.l.b16 %v1473
    %v1497 = vunpack.c.l.b16 %v1474
    %v1498 = vpack.c.b16 %v1491, %v1490
    %v1499 = vpack.c.b16 %v1493, %v1492
    %v1500 = vpack.c.b16 %v1495, %v1494
    %v1501 = vpack.c.b16 %v1497, %v1496
    %vm1506 = vcmask 523264
    %v1508 = vsel %vm1506, %v1403, 0
    %v1511 = vsel %vm1506, %v1404, 0
    %v1514 = vsel %vm1506, %v1405, 0
    %v1517 = vsel %vm1506, %v1406, 0
    %v1520 = vsel %vm1506, %v1407, 0
    %v1523 = vsel %vm1506, %v1408, 0
    %v1526 = vsel %vm1506, %v1409, 0
    %v1529 = vsel %vm1506, %v1410, 0
    %v1532 = vsel %vm1506, %v1411, 0
    %v1535 = vsel %vm1506, %v1412, 0
    %v1538 = vsel %vm1506, %v1413, 0
    %v1541 = vsel %vm1506, %v1414, 0
    %v1544 = vsel %vm1506, %v1415, 0
    %v1547 = vsel %vm1506, %v1416, 0
    %v1550 = vsel %vm1506, %v1417, 0
    %v1553 = vsel %vm1506, %v1418, 0
    %v1556 = vsel %vm1506, %v1419, 0
    %v1559 = vsel %vm1506, %v1420, 0
    %v1562 = vsel %vm1506, %v1421, 0
    %v1565 = vsel %vm1506, %v1422, 0
    %v1568 = vsel %vm1506, %v1423, 0
    %v1571 = vsel %vm1506, %v1424, 0
    %v1574 = vsel %vm1506, %v1425, 0
    %v1577 = vsel %vm1506, %v1426, 0
    %v1580 = vsel %vm1506, %v1427, 0
    %v1583 = vsel %vm1506, %v1428, 0
    %v1586 = vsel %vm1506, %v1429, 0
    %v1589 = vsel %vm1506, %v1430, 0
    %v1592 = vsel %vm1506, %v1431, 0
    %v1595 = vsel %vm1506, %v1432, 0
    %v1598 = vsel %vm1506, %v1433, 0
    %v1601 = vsel %vm1506, %v1434, 0
    %v1604 = vsel %vm1506, %v1435, 0
    %v1607 = vsel %vm1506, %v1436, 0
    %v1610 = vsel %vm1506, %v1437, 0
    %v1613 = vsel %vm1506, %v1438, 0
    %v1616 = vsel %vm1506, %v1439, 0
    %v1619 = vsel %vm1506, %v1440, 0
    %v1622 = vsel %vm1506, %v1441, 0
    %v1625 = vsel %vm1506, %v1442, 0
    %v1628 = vsel %vm1506, %v1443, 0
    %v1631 = vsel %vm1506, %v1444, 0
    %v1634 = vsel %vm1506, %v1445, 0
    %v1637 = vsel %vm1506, %v1446, 0
    %v1640 = vsel %vm1506, %v1447, 0
    %v1643 = vsel %vm1506, %v1448, 0
    %v1646 = vsel %vm1506, %v1449, 0
    %v1649 = vsel %vm1506, %v1450, 0
    %v1652 = vsel %vm1506, %v1451, 0
    %v1655 = vsel %vm1506, %v1452, 0
    %v1658 = vsel %vm1506, %v1453, 0
    %v1661 = vsel %vm1506, %v1454, 0
    %v1664 = vsel %vm1506, %v1455, 0
    %v1667 = vsel %vm1506, %v1456, 0
    %v1670 = vsel %vm1506, %v1457, 0
    %v1673 = vsel %vm1506, %v1458, 0
    %v1676 = vsel %vm1506, %v1459, 0
    %v1679 = vsel %vm1506, %v1460, 0
    %v1682 = vsel %vm1506, %v1461, 0
    %v1685 = vsel %vm1506, %v1462, 0
    %v1688 = vsel %vm1506, %v1463, 0
    %v1691 = vsel %vm1506, %v1464, 0
    %v1694 = vsel %vm1506, %v1465, 0
    %v1697 = vsel %vm1506, %v1466, 0
    %1699 = vmatprep.subr.bf16.mxu0 0
    %1700 = vmatpush1.bf16.msra.mxu0 0
    %1701 = vmatprep.subr.bf16.mxu0 0
    %1702 = vmatpush1.bf16.msra.mxu0 0
    %1703 = vmatprep.subr.bf16.mxu0 0
    %1704 = vmatpush1.bf16.msra.mxu0 0
    %1705 = vmatprep.subr.bf16.mxu0 0
    %1706 = vmatpush1.bf16.msra.mxu0 0
    %1707 = vmatprep.subr.bf16.mxu0 0
    %1708 = vmatpush1.bf16.msra.mxu0 %v1501
    %1709 = vmatprep.subr.bf16.mxu0 0
    %1710 = vmatpush1.bf16.msra.mxu0 %v1500
    %1711 = vmatprep.subr.bf16.mxu0 0
    %1712 = vmatpush1.bf16.msra.mxu0 %v1499
    %1713 = vmatprep.subr.bf16.mxu0 0
    %1714 = vmatpush1.bf16.msra.mxu0 %v1498
    %1715 = vmatprep.subr.bf16.mxu0 0
    %1716 = vmatpush2.bf16.msra.mxu0 0
    %1717 = vmatprep.subr.bf16.mxu0 0
    %1718 = vmatpush2.bf16.msra.mxu0 0
    %1719 = vmatprep.subr.bf16.mxu0 0
    %1720 = vmatpush2.bf16.msra.mxu0 0
    %1721 = vmatprep.subr.bf16.mxu0 0
    %1722 = vmatpush2.bf16.msra.mxu0 0
    %1723 = vmatprep.subr.bf16.mxu0 0
    %1724 = vmatpush2.bf16.msra.mxu0 0
    %1725 = vmatprep.subr.bf16.mxu0 0
    %1726 = vmatpush2.bf16.msra.mxu0 0
    %1727 = vmatprep.subr.bf16.mxu0 0
    %1728 = vmatpush2.bf16.msra.mxu0 0
    %1729 = vmatprep.subr.bf16.mxu0 0
    %1730 = vmatpush2.bf16.msra.mxu0 0
    %1731 = vmatprep.mubr.bf16.mxu0 0
    %1732 = vmatmul.mubr.bf16.gmra.mxu0 %v1508
    %v1733 = vpop.f32.mrf.mxu0
    %v1734 = vadd.f32 %v1480, %v1733
    %v1735 = vpop.f32.mrf.mxu0
    %v1736 = vpop.f32.mrf.mxu0
    %v1737 = vadd.f32 %v1480, %v1736
    %v1738 = vpop.f32.mrf.mxu0
    %1739 = vmatprep.mubr.bf16.mxu0 0
    %1740 = vmatmul.mubr.bf16.gmra.mxu0 %v1511
    %v1741 = vpop.f32.mrf.mxu0
    %v1742 = vadd.f32 %v1480, %v1741
    %v1743 = vpop.f32.mrf.mxu0
    %v1744 = vpop.f32.mrf.mxu0
    %v1745 = vadd.f32 %v1480, %v1744
    %v1746 = vpop.f32.mrf.mxu0
    %1747 = vmatprep.mubr.bf16.mxu0 0
    %1748 = vmatmul.mubr.bf16.gmra.mxu0 %v1514
    %v1749 = vpop.f32.mrf.mxu0
    %v1750 = vadd.f32 %v1480, %v1749
    %v1751 = vpop.f32.mrf.mxu0
    %v1752 = vpop.f32.mrf.mxu0
    %v1753 = vadd.f32 %v1480, %v1752
    %v1754 = vpop.f32.mrf.mxu0
    %1755 = vmatprep.mubr.bf16.mxu0 0
    %1756 = vmatmul.mubr.bf16.gmra.mxu0 %v1517
    %v1757 = vpop.f32.mrf.mxu0
    %v1758 = vadd.f32 %v1480, %v1757
    %v1759 = vpop.f32.mrf.mxu0
    %v1760 = vpop.f32.mrf.mxu0
    %v1761 = vadd.f32 %v1480, %v1760
    %v1762 = vpop.f32.mrf.mxu0
    %1763 = vmatprep.mubr.bf16.mxu0 0
    %1764 = vmatmul.mubr.bf16.gmra.mxu0 %v1520
    %v1765 = vpop.f32.mrf.mxu0
    %v1766 = vadd.f32 %v1480, %v1765
    %v1767 = vpop.f32.mrf.mxu0
    %v1768 = vpop.f32.mrf.mxu0
    %v1769 = vadd.f32 %v1480, %v1768
    %v1770 = vpop.f32.mrf.mxu0
    %1771 = vmatprep.mubr.bf16.mxu0 0
    %1772 = vmatmul.mubr.bf16.gmra.mxu0 %v1523
    %v1773 = vpop.f32.mrf.mxu0
    %v1774 = vadd.f32 %v1480, %v1773
    %v1775 = vpop.f32.mrf.mxu0
    %v1776 = vpop.f32.mrf.mxu0
    %v1777 = vadd.f32 %v1480, %v1776
    %v1778 = vpop.f32.mrf.mxu0
    %1779 = vmatprep.mubr.bf16.mxu0 0
    %1780 = vmatmul.mubr.bf16.gmra.mxu0 %v1526
    %v1781 = vpop.f32.mrf.mxu0
    %v1782 = vadd.f32 %v1480, %v1781
    %v1783 = vpop.f32.mrf.mxu0
    %v1784 = vpop.f32.mrf.mxu0
    %v1785 = vadd.f32 %v1480, %v1784
    %v1786 = vpop.f32.mrf.mxu0
    %1787 = vmatprep.mubr.bf16.mxu0 0
    %1788 = vmatmul.mubr.bf16.gmra.mxu0 %v1529
    %v1789 = vpop.f32.mrf.mxu0
    %v1790 = vadd.f32 %v1480, %v1789
    %v1791 = vpop.f32.mrf.mxu0
    %v1792 = vpop.f32.mrf.mxu0
    %v1793 = vadd.f32 %v1480, %v1792
    %v1794 = vpop.f32.mrf.mxu0
    %1795 = vmatprep.mubr.bf16.mxu0 0
    %1796 = vmatmul.mubr.bf16.gmra.mxu0 %v1532
    %v1797 = vpop.f32.mrf.mxu0
    %v1798 = vadd.f32 %v1480, %v1797
    %v1799 = vpop.f32.mrf.mxu0
    %v1800 = vpop.f32.mrf.mxu0
    %v1801 = vadd.f32 %v1480, %v1800
    %v1802 = vpop.f32.mrf.mxu0
    %1803 = vmatprep.mubr.bf16.mxu0 0
    %1804 = vmatmul.mubr.bf16.gmra.mxu0 %v1535
    %v1805 = vpop.f32.mrf.mxu0
    %v1806 = vadd.f32 %v1480, %v1805
    %v1807 = vpop.f32.mrf.mxu0
    %v1808 = vpop.f32.mrf.mxu0
    %v1809 = vadd.f32 %v1480, %v1808
    %v1810 = vpop.f32.mrf.mxu0
    %1811 = vmatprep.mubr.bf16.mxu0 0
    %1812 = vmatmul.mubr.bf16.gmra.mxu0 %v1538
    %v1813 = vpop.f32.mrf.mxu0
    %v1814 = vadd.f32 %v1480, %v1813
    %v1815 = vpop.f32.mrf.mxu0
    %v1816 = vpop.f32.mrf.mxu0
    %v1817 = vadd.f32 %v1480, %v1816
    %v1818 = vpop.f32.mrf.mxu0
    %1819 = vmatprep.mubr.bf16.mxu0 0
    %1820 = vmatmul.mubr.bf16.gmra.mxu0 %v1541
    %v1821 = vpop.f32.mrf.mxu0
    %v1822 = vadd.f32 %v1480, %v1821
    %v1823 = vpop.f32.mrf.mxu0
    %v1824 = vpop.f32.mrf.mxu0
    %v1825 = vadd.f32 %v1480, %v1824
    %v1826 = vpop.f32.mrf.mxu0
    %1827 = vmatprep.mubr.bf16.mxu0 0
    %1828 = vmatmul.mubr.bf16.gmra.mxu0 %v1544
    %v1829 = vpop.f32.mrf.mxu0
    %v1830 = vadd.f32 %v1480, %v1829
    %v1831 = vpop.f32.mrf.mxu0
    %v1832 = vpop.f32.mrf.mxu0
    %v1833 = vadd.f32 %v1480, %v1832
    %v1834 = vpop.f32.mrf.mxu0
    %1835 = vmatprep.mubr.bf16.mxu0 0
    %1836 = vmatmul.mubr.bf16.gmra.mxu0 %v1547
    %v1837 = vpop.f32.mrf.mxu0
    %v1838 = vadd.f32 %v1480, %v1837
    %v1839 = vpop.f32.mrf.mxu0
    %v1840 = vpop.f32.mrf.mxu0
    %v1841 = vadd.f32 %v1480, %v1840
    %v1842 = vpop.f32.mrf.mxu0
    %1843 = vmatprep.mubr.bf16.mxu0 0
    %1844 = vmatmul.mubr.bf16.gmra.mxu0 %v1550
    %v1845 = vpop.f32.mrf.mxu0
    %v1846 = vadd.f32 %v1480, %v1845
    %v1847 = vpop.f32.mrf.mxu0
    %v1848 = vpop.f32.mrf.mxu0
    %v1849 = vadd.f32 %v1480, %v1848
    %v1850 = vpop.f32.mrf.mxu0
    %1851 = vmatprep.mubr.bf16.mxu0 0
    %1852 = vmatmul.mubr.bf16.gmra.mxu0 %v1553
    %v1853 = vpop.f32.mrf.mxu0
    %v1854 = vadd.f32 %v1480, %v1853
    %v1855 = vpop.f32.mrf.mxu0
    %v1856 = vpop.f32.mrf.mxu0
    %v1857 = vadd.f32 %v1480, %v1856
    %v1858 = vpop.f32.mrf.mxu0
    %1859 = vmatprep.mubr.bf16.mxu0 0
    %1860 = vmatmul.mubr.bf16.gmra.mxu0 %v1556
    %v1861 = vpop.f32.mrf.mxu0
    %v1862 = vadd.f32 %v1480, %v1861
    %v1863 = vpop.f32.mrf.mxu0
    %v1864 = vpop.f32.mrf.mxu0
    %v1865 = vadd.f32 %v1480, %v1864
    %v1866 = vpop.f32.mrf.mxu0
    %1867 = vmatprep.mubr.bf16.mxu0 0
    %1868 = vmatmul.mubr.bf16.gmra.mxu0 %v1559
    %v1869 = vpop.f32.mrf.mxu0
    %v1870 = vadd.f32 %v1480, %v1869
    %v1871 = vpop.f32.mrf.mxu0
    %v1872 = vpop.f32.mrf.mxu0
    %v1873 = vadd.f32 %v1480, %v1872
    %v1874 = vpop.f32.mrf.mxu0
    %1875 = vmatprep.mubr.bf16.mxu0 0
    %1876 = vmatmul.mubr.bf16.gmra.mxu0 %v1562
    %v1877 = vpop.f32.mrf.mxu0
    %v1878 = vadd.f32 %v1480, %v1877
    %v1879 = vpop.f32.mrf.mxu0
    %v1880 = vpop.f32.mrf.mxu0
    %v1881 = vadd.f32 %v1480, %v1880
    %v1882 = vpop.f32.mrf.mxu0
    %1883 = vmatprep.mubr.bf16.mxu0 0
    %1884 = vmatmul.mubr.bf16.gmra.mxu0 %v1565
    %v1885 = vpop.f32.mrf.mxu0
    %v1886 = vadd.f32 %v1480, %v1885
    %v1887 = vpop.f32.mrf.mxu0
    %v1888 = vpop.f32.mrf.mxu0
    %v1889 = vadd.f32 %v1480, %v1888
    %v1890 = vpop.f32.mrf.mxu0
    %1891 = vmatprep.mubr.bf16.mxu0 0
    %1892 = vmatmul.mubr.bf16.gmra.mxu0 %v1568
    %v1893 = vpop.f32.mrf.mxu0
    %v1894 = vadd.f32 %v1480, %v1893
    %v1895 = vpop.f32.mrf.mxu0
    %v1896 = vpop.f32.mrf.mxu0
    %v1897 = vadd.f32 %v1480, %v1896
    %v1898 = vpop.f32.mrf.mxu0
    %1899 = vmatprep.mubr.bf16.mxu0 0
    %1900 = vmatmul.mubr.bf16.gmra.mxu0 %v1571
    %v1901 = vpop.f32.mrf.mxu0
    %v1902 = vadd.f32 %v1480, %v1901
    %v1903 = vpop.f32.mrf.mxu0
    %v1904 = vpop.f32.mrf.mxu0
    %v1905 = vadd.f32 %v1480, %v1904
    %v1906 = vpop.f32.mrf.mxu0
    %1907 = vmatprep.mubr.bf16.mxu0 0
    %1908 = vmatmul.mubr.bf16.gmra.mxu0 %v1574
    %v1909 = vpop.f32.mrf.mxu0
    %v1910 = vadd.f32 %v1480, %v1909
    %v1911 = vpop.f32.mrf.mxu0
    %v1912 = vpop.f32.mrf.mxu0
    %v1913 = vadd.f32 %v1480, %v1912
    %v1914 = vpop.f32.mrf.mxu0
    %1915 = vmatprep.mubr.bf16.mxu0 0
    %1916 = vmatmul.mubr.bf16.gmra.mxu0 %v1577
    %v1917 = vpop.f32.mrf.mxu0
    %v1918 = vadd.f32 %v1480, %v1917
    %v1919 = vpop.f32.mrf.mxu0
    %v1920 = vpop.f32.mrf.mxu0
    %v1921 = vadd.f32 %v1480, %v1920
    %v1922 = vpop.f32.mrf.mxu0
    %1923 = vmatprep.mubr.bf16.mxu0 0
    %1924 = vmatmul.mubr.bf16.gmra.mxu0 %v1580
    %v1925 = vpop.f32.mrf.mxu0
    %v1926 = vadd.f32 %v1480, %v1925
    %v1927 = vpop.f32.mrf.mxu0
    %v1928 = vpop.f32.mrf.mxu0
    %v1929 = vadd.f32 %v1480, %v1928
    %v1930 = vpop.f32.mrf.mxu0
    %1931 = vmatprep.mubr.bf16.mxu0 0
    %1932 = vmatmul.mubr.bf16.gmra.mxu0 %v1583
    %v1933 = vpop.f32.mrf.mxu0
    %v1934 = vadd.f32 %v1480, %v1933
    %v1935 = vpop.f32.mrf.mxu0
    %v1936 = vpop.f32.mrf.mxu0
    %v1937 = vadd.f32 %v1480, %v1936
    %v1938 = vpop.f32.mrf.mxu0
    %1939 = vmatprep.mubr.bf16.mxu0 0
    %1940 = vmatmul.mubr.bf16.gmra.mxu0 %v1586
    %v1941 = vpop.f32.mrf.mxu0
    %v1942 = vadd.f32 %v1480, %v1941
    %v1943 = vpop.f32.mrf.mxu0
    %v1944 = vpop.f32.mrf.mxu0
    %v1945 = vadd.f32 %v1480, %v1944
    %v1946 = vpop.f32.mrf.mxu0
    %1947 = vmatprep.mubr.bf16.mxu0 0
    %1948 = vmatmul.mubr.bf16.gmra.mxu0 %v1589
    %v1949 = vpop.f32.mrf.mxu0
    %v1950 = vadd.f32 %v1480, %v1949
    %v1951 = vpop.f32.mrf.mxu0
    %v1952 = vpop.f32.mrf.mxu0
    %v1953 = vadd.f32 %v1480, %v1952
    %v1954 = vpop.f32.mrf.mxu0
    %1955 = vmatprep.mubr.bf16.mxu0 0
    %1956 = vmatmul.mubr.bf16.gmra.mxu0 %v1592
    %v1957 = vpop.f32.mrf.mxu0
    %v1958 = vadd.f32 %v1480, %v1957
    %v1959 = vpop.f32.mrf.mxu0
    %v1960 = vpop.f32.mrf.mxu0
    %v1961 = vadd.f32 %v1480, %v1960
    %v1962 = vpop.f32.mrf.mxu0
    %1963 = vmatprep.mubr.bf16.mxu0 0
    %1964 = vmatmul.mubr.bf16.gmra.mxu0 %v1595
    %v1965 = vpop.f32.mrf.mxu0
    %v1966 = vadd.f32 %v1480, %v1965
    %v1967 = vpop.f32.mrf.mxu0
    %v1968 = vpop.f32.mrf.mxu0
    %v1969 = vadd.f32 %v1480, %v1968
    %v1970 = vpop.f32.mrf.mxu0
    %1971 = vmatprep.mubr.bf16.mxu0 0
    %1972 = vmatmul.mubr.bf16.gmra.mxu0 %v1598
    %v1973 = vpop.f32.mrf.mxu0
    %v1974 = vadd.f32 %v1480, %v1973
    %v1975 = vpop.f32.mrf.mxu0
    %v1976 = vpop.f32.mrf.mxu0
    %v1977 = vadd.f32 %v1480, %v1976
    %v1978 = vpop.f32.mrf.mxu0
    %1979 = vmatprep.mubr.bf16.mxu0 0
    %1980 = vmatmul.mubr.bf16.gmra.mxu0 %v1601
    %v1981 = vpop.f32.mrf.mxu0
    %v1982 = vadd.f32 %v1480, %v1981
    %v1983 = vpop.f32.mrf.mxu0
    %v1984 = vpop.f32.mrf.mxu0
    %v1985 = vadd.f32 %v1480, %v1984
    %v1986 = vpop.f32.mrf.mxu0
    %1987 = vmatprep.mubr.bf16.mxu0 0
    %1988 = vmatmul.mubr.bf16.gmra.mxu0 %v1604
    %v1989 = vpop.f32.mrf.mxu0
    %v1990 = vadd.f32 %v1480, %v1989
    %v1991 = vpop.f32.mrf.mxu0
    %v1992 = vpop.f32.mrf.mxu0
    %v1993 = vadd.f32 %v1480, %v1992
    %v1994 = vpop.f32.mrf.mxu0
    %1995 = vmatprep.mubr.bf16.mxu0 0
    %1996 = vmatmul.mubr.bf16.gmra.mxu0 %v1607
    %v1997 = vpop.f32.mrf.mxu0
    %v1998 = vadd.f32 %v1480, %v1997
    %v1999 = vpop.f32.mrf.mxu0
    %v2000 = vpop.f32.mrf.mxu0
    %v2001 = vadd.f32 %v1480, %v2000
    %v2002 = vpop.f32.mrf.mxu0
    %2003 = vmatprep.mubr.bf16.mxu0 0
    %2004 = vmatmul.mubr.bf16.gmra.mxu0 %v1610
    %v2005 = vpop.f32.mrf.mxu0
    %v2006 = vadd.f32 %v1480, %v2005
    %v2007 = vpop.f32.mrf.mxu0
    %v2008 = vpop.f32.mrf.mxu0
    %v2009 = vadd.f32 %v1480, %v2008
    %v2010 = vpop.f32.mrf.mxu0
    %2011 = vmatprep.mubr.bf16.mxu0 0
    %2012 = vmatmul.mubr.bf16.gmra.mxu0 %v1613
    %v2013 = vpop.f32.mrf.mxu0
    %v2014 = vadd.f32 %v1480, %v2013
    %v2015 = vpop.f32.mrf.mxu0
    %v2016 = vpop.f32.mrf.mxu0
    %v2017 = vadd.f32 %v1480, %v2016
    %v2018 = vpop.f32.mrf.mxu0
    %2019 = vmatprep.mubr.bf16.mxu0 0
    %2020 = vmatmul.mubr.bf16.gmra.mxu0 %v1616
    %v2021 = vpop.f32.mrf.mxu0
    %v2022 = vadd.f32 %v1480, %v2021
    %v2023 = vpop.f32.mrf.mxu0
    %v2024 = vpop.f32.mrf.mxu0
    %v2025 = vadd.f32 %v1480, %v2024
    %v2026 = vpop.f32.mrf.mxu0
    %2027 = vmatprep.mubr.bf16.mxu0 0
    %2028 = vmatmul.mubr.bf16.gmra.mxu0 %v1619
    %v2029 = vpop.f32.mrf.mxu0
    %v2030 = vadd.f32 %v1480, %v2029
    %v2031 = vpop.f32.mrf.mxu0
    %v2032 = vpop.f32.mrf.mxu0
    %v2033 = vadd.f32 %v1480, %v2032
    %v2034 = vpop.f32.mrf.mxu0
    %2035 = vmatprep.mubr.bf16.mxu0 0
    %2036 = vmatmul.mubr.bf16.gmra.mxu0 %v1622
    %v2037 = vpop.f32.mrf.mxu0
    %v2038 = vadd.f32 %v1480, %v2037
    %v2039 = vpop.f32.mrf.mxu0
    %v2040 = vpop.f32.mrf.mxu0
    %v2041 = vadd.f32 %v1480, %v2040
    %v2042 = vpop.f32.mrf.mxu0
    %2043 = vmatprep.mubr.bf16.mxu0 0
    %2044 = vmatmul.mubr.bf16.gmra.mxu0 %v1625
    %v2045 = vpop.f32.mrf.mxu0
    %v2046 = vadd.f32 %v1480, %v2045
    %v2047 = vpop.f32.mrf.mxu0
    %v2048 = vpop.f32.mrf.mxu0
    %v2049 = vadd.f32 %v1480, %v2048
    %v2050 = vpop.f32.mrf.mxu0
    %2051 = vmatprep.mubr.bf16.mxu0 0
    %2052 = vmatmul.mubr.bf16.gmra.mxu0 %v1628
    %v2053 = vpop.f32.mrf.mxu0
    %v2054 = vadd.f32 %v1480, %v2053
    %v2055 = vpop.f32.mrf.mxu0
    %v2056 = vpop.f32.mrf.mxu0
    %v2057 = vadd.f32 %v1480, %v2056
    %v2058 = vpop.f32.mrf.mxu0
    %2059 = vmatprep.mubr.bf16.mxu0 0
    %2060 = vmatmul.mubr.bf16.gmra.mxu0 %v1631
    %v2061 = vpop.f32.mrf.mxu0
    %v2062 = vadd.f32 %v1480, %v2061
    %v2063 = vpop.f32.mrf.mxu0
    %v2064 = vpop.f32.mrf.mxu0
    %v2065 = vadd.f32 %v1480, %v2064
    %v2066 = vpop.f32.mrf.mxu0
    %2067 = vmatprep.mubr.bf16.mxu0 0
    %2068 = vmatmul.mubr.bf16.gmra.mxu0 %v1634
    %v2069 = vpop.f32.mrf.mxu0
    %v2070 = vadd.f32 %v1480, %v2069
    %v2071 = vpop.f32.mrf.mxu0
    %v2072 = vpop.f32.mrf.mxu0
    %v2073 = vadd.f32 %v1480, %v2072
    %v2074 = vpop.f32.mrf.mxu0
    %2075 = vmatprep.mubr.bf16.mxu0 0
    %2076 = vmatmul.mubr.bf16.gmra.mxu0 %v1637
    %v2077 = vpop.f32.mrf.mxu0
    %v2078 = vadd.f32 %v1480, %v2077
    %v2079 = vpop.f32.mrf.mxu0
    %v2080 = vpop.f32.mrf.mxu0
    %v2081 = vadd.f32 %v1480, %v2080
    %v2082 = vpop.f32.mrf.mxu0
    %2083 = vmatprep.mubr.bf16.mxu0 0
    %2084 = vmatmul.mubr.bf16.gmra.mxu0 %v1640
    %v2085 = vpop.f32.mrf.mxu0
    %v2086 = vadd.f32 %v1480, %v2085
    %v2087 = vpop.f32.mrf.mxu0
    %v2088 = vpop.f32.mrf.mxu0
    %v2089 = vadd.f32 %v1480, %v2088
    %v2090 = vpop.f32.mrf.mxu0
    %2091 = vmatprep.mubr.bf16.mxu0 0
    %2092 = vmatmul.mubr.bf16.gmra.mxu0 %v1643
    %v2093 = vpop.f32.mrf.mxu0
    %v2094 = vadd.f32 %v1480, %v2093
    %v2095 = vpop.f32.mrf.mxu0
    %v2096 = vpop.f32.mrf.mxu0
    %v2097 = vadd.f32 %v1480, %v2096
    %v2098 = vpop.f32.mrf.mxu0
    %2099 = vmatprep.mubr.bf16.mxu0 0
    %2100 = vmatmul.mubr.bf16.gmra.mxu0 %v1646
    %v2101 = vpop.f32.mrf.mxu0
    %v2102 = vadd.f32 %v1480, %v2101
    %v2103 = vpop.f32.mrf.mxu0
    %v2104 = vpop.f32.mrf.mxu0
    %v2105 = vadd.f32 %v1480, %v2104
    %v2106 = vpop.f32.mrf.mxu0
    %2107 = vmatprep.mubr.bf16.mxu0 0
    %2108 = vmatmul.mubr.bf16.gmra.mxu0 %v1649
    %v2109 = vpop.f32.mrf.mxu0
    %v2110 = vadd.f32 %v1480, %v2109
    %v2111 = vpop.f32.mrf.mxu0
    %v2112 = vpop.f32.mrf.mxu0
    %v2113 = vadd.f32 %v1480, %v2112
    %v2114 = vpop.f32.mrf.mxu0
    %2115 = vmatprep.mubr.bf16.mxu0 0
    %2116 = vmatmul.mubr.bf16.gmra.mxu0 %v1652
    %v2117 = vpop.f32.mrf.mxu0
    %v2118 = vadd.f32 %v1480, %v2117
    %v2119 = vpop.f32.mrf.mxu0
    %v2120 = vpop.f32.mrf.mxu0
    %v2121 = vadd.f32 %v1480, %v2120
    %v2122 = vpop.f32.mrf.mxu0
    %2123 = vmatprep.mubr.bf16.mxu0 0
    %2124 = vmatmul.mubr.bf16.gmra.mxu0 %v1655
    %v2125 = vpop.f32.mrf.mxu0
    %v2126 = vadd.f32 %v1480, %v2125
    %v2127 = vpop.f32.mrf.mxu0
    %v2128 = vpop.f32.mrf.mxu0
    %v2129 = vadd.f32 %v1480, %v2128
    %v2130 = vpop.f32.mrf.mxu0
    %2131 = vmatprep.mubr.bf16.mxu0 0
    %2132 = vmatmul.mubr.bf16.gmra.mxu0 %v1658
    %v2133 = vpop.f32.mrf.mxu0
    %v2134 = vadd.f32 %v1480, %v2133
    %v2135 = vpop.f32.mrf.mxu0
    %v2136 = vpop.f32.mrf.mxu0
    %v2137 = vadd.f32 %v1480, %v2136
    %v2138 = vpop.f32.mrf.mxu0
    %2139 = vmatprep.mubr.bf16.mxu0 0
    %2140 = vmatmul.mubr.bf16.gmra.mxu0 %v1661
    %v2141 = vpop.f32.mrf.mxu0
    %v2142 = vadd.f32 %v1480, %v2141
    %v2143 = vpop.f32.mrf.mxu0
    %v2144 = vpop.f32.mrf.mxu0
    %v2145 = vadd.f32 %v1480, %v2144
    %v2146 = vpop.f32.mrf.mxu0
    %2147 = vmatprep.mubr.bf16.mxu0 0
    %2148 = vmatmul.mubr.bf16.gmra.mxu0 %v1664
    %v2149 = vpop.f32.mrf.mxu0
    %v2150 = vadd.f32 %v1480, %v2149
    %v2151 = vpop.f32.mrf.mxu0
    %v2152 = vpop.f32.mrf.mxu0
    %v2153 = vadd.f32 %v1480, %v2152
    %v2154 = vpop.f32.mrf.mxu0
    %2155 = vmatprep.mubr.bf16.mxu0 0
    %2156 = vmatmul.mubr.bf16.gmra.mxu0 %v1667
    %v2157 = vpop.f32.mrf.mxu0
    %v2158 = vadd.f32 %v1480, %v2157
    %v2159 = vpop.f32.mrf.mxu0
    %v2160 = vpop.f32.mrf.mxu0
    %v2161 = vadd.f32 %v1480, %v2160
    %v2162 = vpop.f32.mrf.mxu0
    %2163 = vmatprep.mubr.bf16.mxu0 0
    %2164 = vmatmul.mubr.bf16.gmra.mxu0 %v1670
    %v2165 = vpop.f32.mrf.mxu0
    %v2166 = vadd.f32 %v1480, %v2165
    %v2167 = vpop.f32.mrf.mxu0
    %v2168 = vpop.f32.mrf.mxu0
    %v2169 = vadd.f32 %v1480, %v2168
    %v2170 = vpop.f32.mrf.mxu0
    %2171 = vmatprep.mubr.bf16.mxu0 0
    %2172 = vmatmul.mubr.bf16.gmra.mxu0 %v1673
    %v2173 = vpop.f32.mrf.mxu0
    %v2174 = vadd.f32 %v1480, %v2173
    %v2175 = vpop.f32.mrf.mxu0
    %v2176 = vpop.f32.mrf.mxu0
    %v2177 = vadd.f32 %v1480, %v2176
    %v2178 = vpop.f32.mrf.mxu0
    %2179 = vmatprep.mubr.bf16.mxu0 0
    %2180 = vmatmul.mubr.bf16.gmra.mxu0 %v1676
    %v2181 = vpop.f32.mrf.mxu0
    %v2182 = vadd.f32 %v1480, %v2181
    %v2183 = vpop.f32.mrf.mxu0
    %v2184 = vpop.f32.mrf.mxu0
    %v2185 = vadd.f32 %v1480, %v2184
    %v2186 = vpop.f32.mrf.mxu0
    %2187 = vmatprep.mubr.bf16.mxu0 0
    %2188 = vmatmul.mubr.bf16.gmra.mxu0 %v1679
    %v2189 = vpop.f32.mrf.mxu0
    %v2190 = vadd.f32 %v1480, %v2189
    %v2191 = vpop.f32.mrf.mxu0
    %v2192 = vpop.f32.mrf.mxu0
    %v2193 = vadd.f32 %v1480, %v2192
    %v2194 = vpop.f32.mrf.mxu0
    %2195 = vmatprep.mubr.bf16.mxu0 0
    %2196 = vmatmul.mubr.bf16.gmra.mxu0 %v1682
    %v2197 = vpop.f32.mrf.mxu0
    %v2198 = vadd.f32 %v1480, %v2197
    %v2199 = vpop.f32.mrf.mxu0
    %v2200 = vpop.f32.mrf.mxu0
    %v2201 = vadd.f32 %v1480, %v2200
    %v2202 = vpop.f32.mrf.mxu0
    %2203 = vmatprep.mubr.bf16.mxu0 0
    %2204 = vmatmul.mubr.bf16.gmra.mxu0 %v1685
    %v2205 = vpop.f32.mrf.mxu0
    %v2206 = vadd.f32 %v1480, %v2205
    %v2207 = vpop.f32.mrf.mxu0
    %v2208 = vpop.f32.mrf.mxu0
    %v2209 = vadd.f32 %v1480, %v2208
    %v2210 = vpop.f32.mrf.mxu0
    %2211 = vmatprep.mubr.bf16.mxu0 0
    %2212 = vmatmul.mubr.bf16.gmra.mxu0 %v1688
    %v2213 = vpop.f32.mrf.mxu0
    %v2214 = vadd.f32 %v1480, %v2213
    %v2215 = vpop.f32.mrf.mxu0
    %v2216 = vpop.f32.mrf.mxu0
    %v2217 = vadd.f32 %v1480, %v2216
    %v2218 = vpop.f32.mrf.mxu0
    %2219 = vmatprep.mubr.bf16.mxu0 0
    %2220 = vmatmul.mubr.bf16.gmra.mxu0 %v1691
    %v2221 = vpop.f32.mrf.mxu0
    %v2222 = vadd.f32 %v1480, %v2221
    %v2223 = vpop.f32.mrf.mxu0
    %v2224 = vpop.f32.mrf.mxu0
    %v2225 = vadd.f32 %v1480, %v2224
    %v2226 = vpop.f32.mrf.mxu0
    %2227 = vmatprep.mubr.bf16.mxu0 0
    %2228 = vmatmul.mubr.bf16.gmra.mxu0 %v1694
    %v2229 = vpop.f32.mrf.mxu0
    %v2230 = vadd.f32 %v1480, %v2229
    %v2231 = vpop.f32.mrf.mxu0
    %v2232 = vpop.f32.mrf.mxu0
    %v2233 = vadd.f32 %v1480, %v2232
    %v2234 = vpop.f32.mrf.mxu0
    %2235 = vmatprep.mubr.bf16.mxu0 0
    %2236 = vmatmul.mubr.bf16.gmra.mxu0 %v1697
    %v2237 = vpop.f32.mrf.mxu0
    %v2238 = vadd.f32 %v1480, %v2237
    %v2239 = vpop.f32.mrf.mxu0
    %v2240 = vpop.f32.mrf.mxu0
    %v2241 = vadd.f32 %v1480, %v2240
    %v2242 = vpop.f32.mrf.mxu0
    %2243 = vdwg.mxu0
    %v2244 = vmax.f32 %v1734, 0.0
    %v2245 = vmax.f32 %v1737, 0.0
    %v2246 = vmax.f32 %v1742, 0.0
    %v2247 = vmax.f32 %v1745, 0.0
    %v2248 = vmax.f32 %v1750, 0.0
    %v2249 = vmax.f32 %v1753, 0.0
    %v2250 = vmax.f32 %v1758, 0.0
    %v2251 = vmax.f32 %v1761, 0.0
    %v2252 = vmax.f32 %v1766, 0.0
    %v2253 = vmax.f32 %v1769, 0.0
    %v2254 = vmax.f32 %v1774, 0.0
    %v2255 = vmax.f32 %v1777, 0.0
    %v2256 = vmax.f32 %v1782, 0.0
    %v2257 = vmax.f32 %v1785, 0.0
    %v2258 = vmax.f32 %v1790, 0.0
    %v2259 = vmax.f32 %v1793, 0.0
    %v2260 = vmax.f32 %v1798, 0.0
    %v2261 = vmax.f32 %v1801, 0.0
    %v2262 = vmax.f32 %v1806, 0.0
    %v2263 = vmax.f32 %v1809, 0.0
    %v2264 = vmax.f32 %v1814, 0.0
    %v2265 = vmax.f32 %v1817, 0.0
    %v2266 = vmax.f32 %v1822, 0.0
    %v2267 = vmax.f32 %v1825, 0.0
    %v2268 = vmax.f32 %v1830, 0.0
    %v2269 = vmax.f32 %v1833, 0.0
    %v2270 = vmax.f32 %v1838, 0.0
    %v2271 = vmax.f32 %v1841, 0.0
    %v2272 = vmax.f32 %v1846, 0.0
    %v2273 = vmax.f32 %v1849, 0.0
    %v2274 = vmax.f32 %v1854, 0.0
    %v2275 = vmax.f32 %v1857, 0.0
    %v2276 = vmax.f32 %v1862, 0.0
    %v2277 = vmax.f32 %v1865, 0.0
    %v2278 = vmax.f32 %v1870, 0.0
    %v2279 = vmax.f32 %v1873, 0.0
    %v2280 = vmax.f32 %v1878, 0.0
    %v2281 = vmax.f32 %v1881, 0.0
    %v2282 = vmax.f32 %v1886, 0.0
    %v2283 = vmax.f32 %v1889, 0.0
    %v2284 = vmax.f32 %v1894, 0.0
    %v2285 = vmax.f32 %v1897, 0.0
    %v2286 = vmax.f32 %v1902, 0.0
    %v2287 = vmax.f32 %v1905, 0.0
    %v2288 = vmax.f32 %v1910, 0.0
    %v2289 = vmax.f32 %v1913, 0.0
    %v2290 = vmax.f32 %v1918, 0.0
    %v2291 = vmax.f32 %v1921, 0.0
    %v2292 = vmax.f32 %v1926, 0.0
    %v2293 = vmax.f32 %v1929, 0.0
    %v2294 = vmax.f32 %v1934, 0.0
    %v2295 = vmax.f32 %v1937, 0.0
    %v2296 = vmax.f32 %v1942, 0.0
    %v2297 = vmax.f32 %v1945, 0.0
    %v2298 = vmax.f32 %v1950, 0.0
    %v2299 = vmax.f32 %v1953, 0.0
    %v2300 = vmax.f32 %v1958, 0.0
    %v2301 = vmax.f32 %v1961, 0.0
    %v2302 = vmax.f32 %v1966, 0.0
    %v2303 = vmax.f32 %v1969, 0.0
    %v2304 = vmax.f32 %v1974, 0.0
    %v2305 = vmax.f32 %v1977, 0.0
    %v2306 = vmax.f32 %v1982, 0.0
    %v2307 = vmax.f32 %v1985, 0.0
    %v2308 = vmax.f32 %v1990, 0.0
    %v2309 = vmax.f32 %v1993, 0.0
    %v2310 = vmax.f32 %v1998, 0.0
    %v2311 = vmax.f32 %v2001, 0.0
    %v2312 = vmax.f32 %v2006, 0.0
    %v2313 = vmax.f32 %v2009, 0.0
    %v2314 = vmax.f32 %v2014, 0.0
    %v2315 = vmax.f32 %v2017, 0.0
    %v2316 = vmax.f32 %v2022, 0.0
    %v2317 = vmax.f32 %v2025, 0.0
    %v2318 = vmax.f32 %v2030, 0.0
    %v2319 = vmax.f32 %v2033, 0.0
    %v2320 = vmax.f32 %v2038, 0.0
    %v2321 = vmax.f32 %v2041, 0.0
    %v2322 = vmax.f32 %v2046, 0.0
    %v2323 = vmax.f32 %v2049, 0.0
    %v2324 = vmax.f32 %v2054, 0.0
    %v2325 = vmax.f32 %v2057, 0.0
    %v2326 = vmax.f32 %v2062, 0.0
    %v2327 = vmax.f32 %v2065, 0.0
    %v2328 = vmax.f32 %v2070, 0.0
    %v2329 = vmax.f32 %v2073, 0.0
    %v2330 = vmax.f32 %v2078, 0.0
    %v2331 = vmax.f32 %v2081, 0.0
    %v2332 = vmax.f32 %v2086, 0.0
    %v2333 = vmax.f32 %v2089, 0.0
    %v2334 = vmax.f32 %v2094, 0.0
    %v2335 = vmax.f32 %v2097, 0.0
    %v2336 = vmax.f32 %v2102, 0.0
    %v2337 = vmax.f32 %v2105, 0.0
    %v2338 = vmax.f32 %v2110, 0.0
    %v2339 = vmax.f32 %v2113, 0.0
    %v2340 = vmax.f32 %v2118, 0.0
    %v2341 = vmax.f32 %v2121, 0.0
    %v2342 = vmax.f32 %v2126, 0.0
    %v2343 = vmax.f32 %v2129, 0.0
    %v2344 = vmax.f32 %v2134, 0.0
    %v2345 = vmax.f32 %v2137, 0.0
    %v2346 = vmax.f32 %v2142, 0.0
    %v2347 = vmax.f32 %v2145, 0.0
    %v2348 = vmax.f32 %v2150, 0.0
    %v2349 = vmax.f32 %v2153, 0.0
    %v2350 = vmax.f32 %v2158, 0.0
    %v2351 = vmax.f32 %v2161, 0.0
    %v2352 = vmax.f32 %v2166, 0.0
    %v2353 = vmax.f32 %v2169, 0.0
    %v2354 = vmax.f32 %v2174, 0.0
    %v2355 = vmax.f32 %v2177, 0.0
    %v2356 = vmax.f32 %v2182, 0.0
    %v2357 = vmax.f32 %v2185, 0.0
    %v2358 = vmax.f32 %v2190, 0.0
    %v2359 = vmax.f32 %v2193, 0.0
    %v2360 = vmax.f32 %v2198, 0.0
    %v2361 = vmax.f32 %v2201, 0.0
    %v2362 = vmax.f32 %v2206, 0.0
    %v2363 = vmax.f32 %v2209, 0.0
    %v2364 = vmax.f32 %v2214, 0.0
    %v2365 = vmax.f32 %v2217, 0.0
    %v2366 = vmax.f32 %v2222, 0.0
    %v2367 = vmax.f32 %v2225, 0.0
    %v2368 = vmax.f32 %v2230, 0.0
    %v2369 = vmax.f32 %v2233, 0.0
    %v2370 = vmax.f32 %v2238, 0.0
    %v2371 = vmax.f32 %v2241, 0.0
    %v2372 = vpack.c.bf16 %v2245, %v2244
    %v2373 = vpack.c.bf16 %v2247, %v2246
    %v2374 = vpack.c.bf16 %v2249, %v2248
    %v2375 = vpack.c.bf16 %v2251, %v2250
    %v2376 = vpack.c.bf16 %v2253, %v2252
    %v2377 = vpack.c.bf16 %v2255, %v2254
    %v2378 = vpack.c.bf16 %v2257, %v2256
    %v2379 = vpack.c.bf16 %v2259, %v2258
    %v2380 = vpack.c.bf16 %v2261, %v2260
    %v2381 = vpack.c.bf16 %v2263, %v2262
    %v2382 = vpack.c.bf16 %v2265, %v2264
    %v2383 = vpack.c.bf16 %v2267, %v2266
    %v2384 = vpack.c.bf16 %v2269, %v2268
    %v2385 = vpack.c.bf16 %v2271, %v2270
    %v2386 = vpack.c.bf16 %v2273, %v2272
    %v2387 = vpack.c.bf16 %v2275, %v2274
    %v2388 = vpack.c.bf16 %v2277, %v2276
    %v2389 = vpack.c.bf16 %v2279, %v2278
    %v2390 = vpack.c.bf16 %v2281, %v2280
    %v2391 = vpack.c.bf16 %v2283, %v2282
    %v2392 = vpack.c.bf16 %v2285, %v2284
    %v2393 = vpack.c.bf16 %v2287, %v2286
    %v2394 = vpack.c.bf16 %v2289, %v2288
    %v2395 = vpack.c.bf16 %v2291, %v2290
    %v2396 = vpack.c.bf16 %v2293, %v2292
    %v2397 = vpack.c.bf16 %v2295, %v2294
    %v2398 = vpack.c.bf16 %v2297, %v2296
    %v2399 = vpack.c.bf16 %v2299, %v2298
    %v2400 = vpack.c.bf16 %v2301, %v2300
    %v2401 = vpack.c.bf16 %v2303, %v2302
    %v2402 = vpack.c.bf16 %v2305, %v2304
    %v2403 = vpack.c.bf16 %v2307, %v2306
    %v2404 = vpack.c.bf16 %v2309, %v2308
    %v2405 = vpack.c.bf16 %v2311, %v2310
    %v2406 = vpack.c.bf16 %v2313, %v2312
    %v2407 = vpack.c.bf16 %v2315, %v2314
    %v2408 = vpack.c.bf16 %v2317, %v2316
    %v2409 = vpack.c.bf16 %v2319, %v2318
    %v2410 = vpack.c.bf16 %v2321, %v2320
    %v2411 = vpack.c.bf16 %v2323, %v2322
    %v2412 = vpack.c.bf16 %v2325, %v2324
    %v2413 = vpack.c.bf16 %v2327, %v2326
    %v2414 = vpack.c.bf16 %v2329, %v2328
    %v2415 = vpack.c.bf16 %v2331, %v2330
    %v2416 = vpack.c.bf16 %v2333, %v2332
    %v2417 = vpack.c.bf16 %v2335, %v2334
    %v2418 = vpack.c.bf16 %v2337, %v2336
    %v2419 = vpack.c.bf16 %v2339, %v2338
    %v2420 = vpack.c.bf16 %v2341, %v2340
    %v2421 = vpack.c.bf16 %v2343, %v2342
    %v2422 = vpack.c.bf16 %v2345, %v2344
    %v2423 = vpack.c.bf16 %v2347, %v2346
    %v2424 = vpack.c.bf16 %v2349, %v2348
    %v2425 = vpack.c.bf16 %v2351, %v2350
    %v2426 = vpack.c.bf16 %v2353, %v2352
    %v2427 = vpack.c.bf16 %v2355, %v2354
    %v2428 = vpack.c.bf16 %v2357, %v2356
    %v2429 = vpack.c.bf16 %v2359, %v2358
    %v2430 = vpack.c.bf16 %v2361, %v2360
    %v2431 = vpack.c.bf16 %v2363, %v2362
    %v2432 = vpack.c.bf16 %v2365, %v2364
    %v2433 = vpack.c.bf16 %v2367, %v2366
    %v2434 = vpack.c.bf16 %v2369, %v2368
    %v2435 = vpack.c.bf16 %v2371, %v2370
    %v2436 = vld [vmem:[%s5] sm:$0xff]
    %v2437 = vld [vmem:[%s5 + $0x8] sm:$0xff]
    %v2438 = vld [vmem:[%s5 + $0x10] sm:$0xff]
    %v2439 = vld [vmem:[%s5 + $0x18] sm:$0xff]
    %v2440 = vld [vmem:[%s5 + $0x20] sm:$0xff]
    %v2441 = vld [vmem:[%s5 + $0x28] sm:$0xff]
    %v2442 = vld [vmem:[%s5 + $0x30] sm:$0xff]
    %v2443 = vld [vmem:[%s5 + $0x38] sm:$0xff]
    %v2444 = vld [vmem:[%s5 + $0x40] sm:$0xff]
    %v2445 = vld [vmem:[%s5 + $0x48] sm:$0xff]
    %v2446 = vld [vmem:[%s5 + $0x50] sm:$0xff]
    %v2447 = vld [vmem:[%s5 + $0x58] sm:$0xff]
    %v2448 = vld [vmem:[%s5 + $0x60] sm:$0xff]
    %v2449 = vld [vmem:[%s5 + $0x68] sm:$0xff]
    %v2450 = vld [vmem:[%s5 + $0x70] sm:$0xff]
    %v2451 = vld [vmem:[%s5 + $0x78] sm:$0xff]
    %v2452 = vld [vmem:[%s5 + $0x80] sm:$0xff]
    %v2453 = vld [vmem:[%s5 + $0x88] sm:$0xff]
    %v2454 = vld [vmem:[%s5 + $0x90] sm:$0xff]
    %v2455 = vld [vmem:[%s5 + $0x98] sm:$0xff]
    %v2456 = vld [vmem:[%s5 + $0xa0] sm:$0xff]
    %v2457 = vld [vmem:[%s5 + $0xa8] sm:$0xff]
    %v2458 = vld [vmem:[%s5 + $0xb0] sm:$0xff]
    %v2459 = vld [vmem:[%s5 + $0xb8] sm:$0xff]
    %v2460 = vld [vmem:[%s5 + $0xc0] sm:$0xff]
    %v2461 = vld [vmem:[%s5 + $0xc8] sm:$0xff]
    %v2462 = vld [vmem:[%s5 + $0xd0] sm:$0xff]
    %v2463 = vld [vmem:[%s5 + $0xd8] sm:$0xff]
    %v2464 = vld [vmem:[%s5 + $0xe0] sm:$0xff]
    %v2465 = vld [vmem:[%s5 + $0xe8] sm:$0xff]
    %v2466 = vld [vmem:[%s5 + $0xf0] sm:$0xff]
    %v2467 = vld [vmem:[%s5 + $0xf8] sm:$0xff]
    %v2468 = vld [vmem:[%s5 + $0x100] sm:$0xff]
    %v2469 = vld [vmem:[%s5 + $0x108] sm:$0xff]
    %v2470 = vld [vmem:[%s5 + $0x110] sm:$0xff]
    %v2471 = vld [vmem:[%s5 + $0x118] sm:$0xff]
    %v2472 = vld [vmem:[%s5 + $0x120] sm:$0xff]
    %v2473 = vld [vmem:[%s5 + $0x128] sm:$0xff]
    %v2474 = vld [vmem:[%s5 + $0x130] sm:$0xff]
    %v2475 = vld [vmem:[%s5 + $0x138] sm:$0xff]
    %v2476 = vld [vmem:[%s5 + $0x140] sm:$0xff]
    %v2477 = vld [vmem:[%s5 + $0x148] sm:$0xff]
    %v2478 = vld [vmem:[%s5 + $0x150] sm:$0xff]
    %v2479 = vld [vmem:[%s5 + $0x158] sm:$0xff]
    %v2480 = vld [vmem:[%s5 + $0x160] sm:$0xff]
    %v2481 = vld [vmem:[%s5 + $0x168] sm:$0xff]
    %v2482 = vld [vmem:[%s5 + $0x170] sm:$0xff]
    %v2483 = vld [vmem:[%s5 + $0x178] sm:$0xff]
    %v2484 = vld [vmem:[%s5 + $0x180] sm:$0xff]
    %v2485 = vld [vmem:[%s5 + $0x188] sm:$0xff]
    %v2486 = vld [vmem:[%s5 + $0x190] sm:$0xff]
    %v2487 = vld [vmem:[%s5 + $0x198] sm:$0xff]
    %v2488 = vld [vmem:[%s5 + $0x1a0] sm:$0xff]
    %v2489 = vld [vmem:[%s5 + $0x1a8] sm:$0xff]
    %v2490 = vld [vmem:[%s5 + $0x1b0] sm:$0xff]
    %v2491 = vld [vmem:[%s5 + $0x1b8] sm:$0xff]
    %v2492 = vld [vmem:[%s5 + $0x1c0] sm:$0xff]
    %v2493 = vld [vmem:[%s5 + $0x1c8] sm:$0xff]
    %v2494 = vld [vmem:[%s5 + $0x1d0] sm:$0xff]
    %v2495 = vld [vmem:[%s5 + $0x1d8] sm:$0xff]
    %v2496 = vld [vmem:[%s5 + $0x1e0] sm:$0xff]
    %v2497 = vld [vmem:[%s5 + $0x1e8] sm:$0xff]
    %v2498 = vld [vmem:[%s5 + $0x1f0] sm:$0xff]
    %v2499 = vld [vmem:[%s5 + $0x1f8] sm:$0xff]
    %v2564 = vunpack.c.l.b16 %v2436
    %v2565 = vunpack.c.h.b16 %v2436
    %v2566 = vunpack.c.l.b16 %v2437
    %v2567 = vunpack.c.h.b16 %v2437
    %v2568 = vunpack.c.l.b16 %v2438
    %v2569 = vunpack.c.h.b16 %v2438
    %v2570 = vunpack.c.l.b16 %v2439
    %v2571 = vunpack.c.h.b16 %v2439
    %v2572 = vunpack.c.l.b16 %v2440
    %v2573 = vunpack.c.h.b16 %v2440
    %v2574 = vunpack.c.l.b16 %v2441
    %v2575 = vunpack.c.h.b16 %v2441
    %v2576 = vunpack.c.l.b16 %v2442
    %v2577 = vunpack.c.h.b16 %v2442
    %v2578 = vunpack.c.l.b16 %v2443
    %v2579 = vunpack.c.h.b16 %v2443
    %v2580 = vunpack.c.l.b16 %v2444
    %v2581 = vunpack.c.h.b16 %v2444
    %v2582 = vunpack.c.l.b16 %v2445
    %v2583 = vunpack.c.h.b16 %v2445
    %v2584 = vunpack.c.l.b16 %v2446
    %v2585 = vunpack.c.h.b16 %v2446
    %v2586 = vunpack.c.l.b16 %v2447
    %v2587 = vunpack.c.h.b16 %v2447
    %v2588 = vunpack.c.l.b16 %v2448
    %v2589 = vunpack.c.h.b16 %v2448
    %v2590 = vunpack.c.l.b16 %v2449
    %v2591 = vunpack.c.h.b16 %v2449
    %v2592 = vunpack.c.l.b16 %v2450
    %v2593 = vunpack.c.h.b16 %v2450
    %v2594 = vunpack.c.l.b16 %v2451
    %v2595 = vunpack.c.h.b16 %v2451
    %v2596 = vunpack.c.l.b16 %v2452
    %v2597 = vunpack.c.h.b16 %v2452
    %v2598 = vunpack.c.l.b16 %v2453
    %v2599 = vunpack.c.h.b16 %v2453
    %v2600 = vunpack.c.l.b16 %v2454
    %v2601 = vunpack.c.h.b16 %v2454
    %v2602 = vunpack.c.l.b16 %v2455
    %v2603 = vunpack.c.h.b16 %v2455
    %v2604 = vunpack.c.l.b16 %v2456
    %v2605 = vunpack.c.h.b16 %v2456
    %v2606 = vunpack.c.l.b16 %v2457
    %v2607 = vunpack.c.h.b16 %v2457
    %v2608 = vunpack.c.l.b16 %v2458
    %v2609 = vunpack.c.h.b16 %v2458
    %v2610 = vunpack.c.l.b16 %v2459
    %v2611 = vunpack.c.h.b16 %v2459
    %v2612 = vunpack.c.l.b16 %v2460
    %v2613 = vunpack.c.h.b16 %v2460
    %v2614 = vunpack.c.l.b16 %v2461
    %v2615 = vunpack.c.h.b16 %v2461
    %v2616 = vunpack.c.l.b16 %v2462
    %v2617 = vunpack.c.h.b16 %v2462
    %v2618 = vunpack.c.l.b16 %v2463
    %v2619 = vunpack.c.h.b16 %v2463
    %v2620 = vunpack.c.l.b16 %v2464
    %v2621 = vunpack.c.h.b16 %v2464
    %v2622 = vunpack.c.l.b16 %v2465
    %v2623 = vunpack.c.h.b16 %v2465
    %v2624 = vunpack.c.l.b16 %v2466
    %v2625 = vunpack.c.h.b16 %v2466
    %v2626 = vunpack.c.l.b16 %v2467
    %v2627 = vunpack.c.h.b16 %v2467
    %v2628 = vunpack.c.l.b16 %v2468
    %v2629 = vunpack.c.h.b16 %v2468
    %v2630 = vunpack.c.l.b16 %v2469
    %v2631 = vunpack.c.h.b16 %v2469
    %v2632 = vunpack.c.l.b16 %v2470
    %v2633 = vunpack.c.h.b16 %v2470
    %v2634 = vunpack.c.l.b16 %v2471
    %v2635 = vunpack.c.h.b16 %v2471
    %v2636 = vunpack.c.l.b16 %v2472
    %v2637 = vunpack.c.h.b16 %v2472
    %v2638 = vunpack.c.l.b16 %v2473
    %v2639 = vunpack.c.h.b16 %v2473
    %v2640 = vunpack.c.l.b16 %v2474
    %v2641 = vunpack.c.h.b16 %v2474
    %v2642 = vunpack.c.l.b16 %v2475
    %v2643 = vunpack.c.h.b16 %v2475
    %v2644 = vunpack.c.l.b16 %v2476
    %v2645 = vunpack.c.h.b16 %v2476
    %v2646 = vunpack.c.l.b16 %v2477
    %v2647 = vunpack.c.h.b16 %v2477
    %v2648 = vunpack.c.l.b16 %v2478
    %v2649 = vunpack.c.h.b16 %v2478
    %v2650 = vunpack.c.l.b16 %v2479
    %v2651 = vunpack.c.h.b16 %v2479
    %v2652 = vunpack.c.l.b16 %v2480
    %v2653 = vunpack.c.h.b16 %v2480
    %v2654 = vunpack.c.l.b16 %v2481
    %v2655 = vunpack.c.h.b16 %v2481
    %v2656 = vunpack.c.l.b16 %v2482
    %v2657 = vunpack.c.h.b16 %v2482
    %v2658 = vunpack.c.l.b16 %v2483
    %v2659 = vunpack.c.h.b16 %v2483
    %v2660 = vunpack.c.l.b16 %v2484
    %v2661 = vunpack.c.h.b16 %v2484
    %v2662 = vunpack.c.l.b16 %v2485
    %v2663 = vunpack.c.h.b16 %v2485
    %v2664 = vunpack.c.l.b16 %v2486
    %v2665 = vunpack.c.h.b16 %v2486
    %v2666 = vunpack.c.l.b16 %v2487
    %v2667 = vunpack.c.h.b16 %v2487
    %v2668 = vunpack.c.l.b16 %v2488
    %v2669 = vunpack.c.h.b16 %v2488
    %v2670 = vunpack.c.l.b16 %v2489
    %v2671 = vunpack.c.h.b16 %v2489
    %v2672 = vunpack.c.l.b16 %v2490
    %v2673 = vunpack.c.h.b16 %v2490
    %v2674 = vunpack.c.l.b16 %v2491
    %v2675 = vunpack.c.h.b16 %v2491
    %v2676 = vunpack.c.l.b16 %v2492
    %v2677 = vunpack.c.h.b16 %v2492
    %v2678 = vunpack.c.l.b16 %v2493
    %v2679 = vunpack.c.h.b16 %v2493
    %v2680 = vunpack.c.l.b16 %v2494
    %v2681 = vunpack.c.h.b16 %v2494
    %v2682 = vunpack.c.l.b16 %v2495
    %v2683 = vunpack.c.h.b16 %v2495
    %v2684 = vunpack.c.l.b16 %v2496
    %v2685 = vunpack.c.h.b16 %v2496
    %v2686 = vunpack.c.l.b16 %v2497
    %v2687 = vunpack.c.h.b16 %v2497
    %v2688 = vunpack.c.l.b16 %v2498
    %v2689 = vunpack.c.h.b16 %v2498
    %v2690 = vunpack.c.l.b16 %v2499
    %v2691 = vunpack.c.h.b16 %v2499
    %v2692 = vpack.c.b16 %v2572, %v2564
    %v2693 = vpack.c.b16 %v2573, %v2565
    %v2694 = vpack.c.b16 %v2574, %v2566
    %v2695 = vpack.c.b16 %v2575, %v2567
    %v2696 = vpack.c.b16 %v2576, %v2568
    %v2697 = vpack.c.b16 %v2577, %v2569
    %v2698 = vpack.c.b16 %v2578, %v2570
    %v2699 = vpack.c.b16 %v2579, %v2571
    %v2700 = vpack.c.b16 %v2588, %v2580
    %v2701 = vpack.c.b16 %v2589, %v2581
    %v2702 = vpack.c.b16 %v2590, %v2582
    %v2703 = vpack.c.b16 %v2591, %v2583
    %v2704 = vpack.c.b16 %v2592, %v2584
    %v2705 = vpack.c.b16 %v2593, %v2585
    %v2706 = vpack.c.b16 %v2594, %v2586
    %v2707 = vpack.c.b16 %v2595, %v2587
    %v2708 = vpack.c.b16 %v2604, %v2596
    %v2709 = vpack.c.b16 %v2605, %v2597
    %v2710 = vpack.c.b16 %v2606, %v2598
    %v2711 = vpack.c.b16 %v2607, %v2599
    %v2712 = vpack.c.b16 %v2608, %v2600
    %v2713 = vpack.c.b16 %v2609, %v2601
    %v2714 = vpack.c.b16 %v2610, %v2602
    %v2715 = vpack.c.b16 %v2611, %v2603
    %v2716 = vpack.c.b16 %v2620, %v2612
    %v2717 = vpack.c.b16 %v2621, %v2613
    %v2718 = vpack.c.b16 %v2622, %v2614
    %v2719 = vpack.c.b16 %v2623, %v2615
    %v2720 = vpack.c.b16 %v2624, %v2616
    %v2721 = vpack.c.b16 %v2625, %v2617
    %v2722 = vpack.c.b16 %v2626, %v2618
    %v2723 = vpack.c.b16 %v2627, %v2619
    %v2724 = vpack.c.b16 %v2636, %v2628
    %v2725 = vpack.c.b16 %v2637, %v2629
    %v2726 = vpack.c.b16 %v2638, %v2630
    %v2727 = vpack.c.b16 %v2639, %v2631
    %v2728 = vpack.c.b16 %v2640, %v2632
    %v2729 = vpack.c.b16 %v2641, %v2633
    %v2730 = vpack.c.b16 %v2642, %v2634
    %v2731 = vpack.c.b16 %v2643, %v2635
    %v2732 = vpack.c.b16 %v2652, %v2644
    %v2733 = vpack.c.b16 %v2653, %v2645
    %v2734 = vpack.c.b16 %v2654, %v2646
    %v2735 = vpack.c.b16 %v2655, %v2647
    %v2736 = vpack.c.b16 %v2656, %v2648
    %v2737 = vpack.c.b16 %v2657, %v2649
    %v2738 = vpack.c.b16 %v2658, %v2650
    %v2739 = vpack.c.b16 %v2659, %v2651
    %v2740 = vpack.c.b16 %v2668, %v2660
    %v2741 = vpack.c.b16 %v2669, %v2661
    %v2742 = vpack.c.b16 %v2670, %v2662
    %v2743 = vpack.c.b16 %v2671, %v2663
    %v2744 = vpack.c.b16 %v2672, %v2664
    %v2745 = vpack.c.b16 %v2673, %v2665
    %v2746 = vpack.c.b16 %v2674, %v2666
    %v2747 = vpack.c.b16 %v2675, %v2667
    %v2748 = vpack.c.b16 %v2684, %v2676
    %v2749 = vpack.c.b16 %v2685, %v2677
    %v2750 = vpack.c.b16 %v2686, %v2678
    %v2751 = vpack.c.b16 %v2687, %v2679
    %v2752 = vpack.c.b16 %v2688, %v2680
    %v2753 = vpack.c.b16 %v2689, %v2681
    %v2754 = vpack.c.b16 %v2690, %v2682
    %v2755 = vpack.c.b16 %v2691, %v2683
    %2820 = vmatprep.subr.bf16.mxu0 %v2749
    %2821 = vmatpush1.bf16.msra.mxu0 %v2748
    %2822 = vmatprep.subr.bf16.mxu0 %v2741
    %2823 = vmatpush1.bf16.msra.mxu0 %v2740
    %2824 = vmatprep.subr.bf16.mxu0 %v2733
    %2825 = vmatpush1.bf16.msra.mxu0 %v2732
    %2826 = vmatprep.subr.bf16.mxu0 %v2725
    %2827 = vmatpush1.bf16.msra.mxu0 %v2724
    %2828 = vmatprep.subr.bf16.mxu0 %v2717
    %2829 = vmatpush1.bf16.msra.mxu0 %v2716
    %2830 = vmatprep.subr.bf16.mxu0 %v2709
    %2831 = vmatpush1.bf16.msra.mxu0 %v2708
    %2832 = vmatprep.subr.bf16.mxu0 %v2701
    %2833 = vmatpush1.bf16.msra.mxu0 %v2700
    %2834 = vmatprep.subr.bf16.mxu0 %v2693
    %2835 = vmatpush1.bf16.msra.mxu0 %v2692
    %2836 = vmatprep.subr.bf16.mxu0 0
    %2837 = vmatpush2.bf16.msra.mxu0 0
    %2838 = vmatprep.subr.bf16.mxu0 0
    %2839 = vmatpush2.bf16.msra.mxu0 0
    %2840 = vmatprep.subr.bf16.mxu0 0
    %2841 = vmatpush2.bf16.msra.mxu0 0
    %2842 = vmatprep.subr.bf16.mxu0 0
    %2843 = vmatpush2.bf16.msra.mxu0 0
    %2844 = vmatprep.subr.bf16.mxu0 0
    %2845 = vmatpush2.bf16.msra.mxu0 0
    %2846 = vmatprep.subr.bf16.mxu0 0
    %2847 = vmatpush2.bf16.msra.mxu0 0
    %2848 = vmatprep.subr.bf16.mxu0 0
    %2849 = vmatpush2.bf16.msra.mxu0 0
    %2850 = vmatprep.subr.bf16.mxu0 0
    %2851 = vmatpush2.bf16.msra.mxu0 0
    %2852 = vmatprep.mubr.bf16.mxu0 0
    %2853 = vmatmul.mubr.bf16.gmra.mxu0 %v2372
    %v2854 = vpop.f32.mrf.mxu0
    %v2855 = vadd.f32 0.0, %v2854
    %v2856 = vpop.f32.mrf.mxu0
    %v2857 = vadd.f32 0.0, %v2856
    %v2858 = vpop.f32.mrf.mxu0
    %v2859 = vadd.f32 0.0, %v2858
    %v2860 = vpop.f32.mrf.mxu0
    %v2861 = vadd.f32 0.0, %v2860
    %2862 = vmatprep.mubr.bf16.mxu0 0
    %2863 = vmatmul.mubr.bf16.gmra.mxu0 %v2373
    %v2864 = vpop.f32.mrf.mxu0
    %v2865 = vadd.f32 0.0, %v2864
    %v2866 = vpop.f32.mrf.mxu0
    %v2867 = vadd.f32 0.0, %v2866
    %v2868 = vpop.f32.mrf.mxu0
    %v2869 = vadd.f32 0.0, %v2868
    %v2870 = vpop.f32.mrf.mxu0
    %v2871 = vadd.f32 0.0, %v2870
    %2872 = vmatprep.mubr.bf16.mxu0 0
    %2873 = vmatmul.mubr.bf16.gmra.mxu0 %v2374
    %v2874 = vpop.f32.mrf.mxu0
    %v2875 = vadd.f32 0.0, %v2874
    %v2876 = vpop.f32.mrf.mxu0
    %v2877 = vadd.f32 0.0, %v2876
    %v2878 = vpop.f32.mrf.mxu0
    %v2879 = vadd.f32 0.0, %v2878
    %v2880 = vpop.f32.mrf.mxu0
    %v2881 = vadd.f32 0.0, %v2880
    %2882 = vmatprep.mubr.bf16.mxu0 0
    %2883 = vmatmul.mubr.bf16.gmra.mxu0 %v2375
    %v2884 = vpop.f32.mrf.mxu0
    %v2885 = vadd.f32 0.0, %v2884
    %v2886 = vpop.f32.mrf.mxu0
    %v2887 = vadd.f32 0.0, %v2886
    %v2888 = vpop.f32.mrf.mxu0
    %v2889 = vadd.f32 0.0, %v2888
    %v2890 = vpop.f32.mrf.mxu0
    %v2891 = vadd.f32 0.0, %v2890
    %2892 = vmatprep.mubr.bf16.mxu0 0
    %2893 = vmatmul.mubr.bf16.gmra.mxu0 %v2376
    %v2894 = vpop.f32.mrf.mxu0
    %v2895 = vadd.f32 0.0, %v2894
    %v2896 = vpop.f32.mrf.mxu0
    %v2897 = vadd.f32 0.0, %v2896
    %v2898 = vpop.f32.mrf.mxu0
    %v2899 = vadd.f32 0.0, %v2898
    %v2900 = vpop.f32.mrf.mxu0
    %v2901 = vadd.f32 0.0, %v2900
    %2902 = vmatprep.mubr.bf16.mxu0 0
    %2903 = vmatmul.mubr.bf16.gmra.mxu0 %v2377
    %v2904 = vpop.f32.mrf.mxu0
    %v2905 = vadd.f32 0.0, %v2904
    %v2906 = vpop.f32.mrf.mxu0
    %v2907 = vadd.f32 0.0, %v2906
    %v2908 = vpop.f32.mrf.mxu0
    %v2909 = vadd.f32 0.0, %v2908
    %v2910 = vpop.f32.mrf.mxu0
    %v2911 = vadd.f32 0.0, %v2910
    %2912 = vmatprep.mubr.bf16.mxu0 0
    %2913 = vmatmul.mubr.bf16.gmra.mxu0 %v2378
    %v2914 = vpop.f32.mrf.mxu0
    %v2915 = vadd.f32 0.0, %v2914
    %v2916 = vpop.f32.mrf.mxu0
    %v2917 = vadd.f32 0.0, %v2916
    %v2918 = vpop.f32.mrf.mxu0
    %v2919 = vadd.f32 0.0, %v2918
    %v2920 = vpop.f32.mrf.mxu0
    %v2921 = vadd.f32 0.0, %v2920
    %2922 = vmatprep.mubr.bf16.mxu0 0
    %2923 = vmatmul.mubr.bf16.gmra.mxu0 %v2379
    %v2924 = vpop.f32.mrf.mxu0
    %v2925 = vadd.f32 0.0, %v2924
    %v2926 = vpop.f32.mrf.mxu0
    %v2927 = vadd.f32 0.0, %v2926
    %v2928 = vpop.f32.mrf.mxu0
    %v2929 = vadd.f32 0.0, %v2928
    %v2930 = vpop.f32.mrf.mxu0
    %v2931 = vadd.f32 0.0, %v2930
    %2932 = vmatprep.mubr.bf16.mxu0 0
    %2933 = vmatmul.mubr.bf16.gmra.mxu0 %v2380
    %v2934 = vpop.f32.mrf.mxu0
    %v2935 = vadd.f32 0.0, %v2934
    %v2936 = vpop.f32.mrf.mxu0
    %v2937 = vadd.f32 0.0, %v2936
    %v2938 = vpop.f32.mrf.mxu0
    %v2939 = vadd.f32 0.0, %v2938
    %v2940 = vpop.f32.mrf.mxu0
    %v2941 = vadd.f32 0.0, %v2940
    %2942 = vmatprep.mubr.bf16.mxu0 0
    %2943 = vmatmul.mubr.bf16.gmra.mxu0 %v2381
    %v2944 = vpop.f32.mrf.mxu0
    %v2945 = vadd.f32 0.0, %v2944
    %v2946 = vpop.f32.mrf.mxu0
    %v2947 = vadd.f32 0.0, %v2946
    %v2948 = vpop.f32.mrf.mxu0
    %v2949 = vadd.f32 0.0, %v2948
    %v2950 = vpop.f32.mrf.mxu0
    %v2951 = vadd.f32 0.0, %v2950
    %2952 = vmatprep.mubr.bf16.mxu0 0
    %2953 = vmatmul.mubr.bf16.gmra.mxu0 %v2382
    %v2954 = vpop.f32.mrf.mxu0
    %v2955 = vadd.f32 0.0, %v2954
    %v2956 = vpop.f32.mrf.mxu0
    %v2957 = vadd.f32 0.0, %v2956
    %v2958 = vpop.f32.mrf.mxu0
    %v2959 = vadd.f32 0.0, %v2958
    %v2960 = vpop.f32.mrf.mxu0
    %v2961 = vadd.f32 0.0, %v2960
    %2962 = vmatprep.mubr.bf16.mxu0 0
    %2963 = vmatmul.mubr.bf16.gmra.mxu0 %v2383
    %v2964 = vpop.f32.mrf.mxu0
    %v2965 = vadd.f32 0.0, %v2964
    %v2966 = vpop.f32.mrf.mxu0
    %v2967 = vadd.f32 0.0, %v2966
    %v2968 = vpop.f32.mrf.mxu0
    %v2969 = vadd.f32 0.0, %v2968
    %v2970 = vpop.f32.mrf.mxu0
    %v2971 = vadd.f32 0.0, %v2970
    %2972 = vmatprep.mubr.bf16.mxu0 0
    %2973 = vmatmul.mubr.bf16.gmra.mxu0 %v2384
    %v2974 = vpop.f32.mrf.mxu0
    %v2975 = vadd.f32 0.0, %v2974
    %v2976 = vpop.f32.mrf.mxu0
    %v2977 = vadd.f32 0.0, %v2976
    %v2978 = vpop.f32.mrf.mxu0
    %v2979 = vadd.f32 0.0, %v2978
    %v2980 = vpop.f32.mrf.mxu0
    %v2981 = vadd.f32 0.0, %v2980
    %2982 = vmatprep.mubr.bf16.mxu0 0
    %2983 = vmatmul.mubr.bf16.gmra.mxu0 %v2385
    %v2984 = vpop.f32.mrf.mxu0
    %v2985 = vadd.f32 0.0, %v2984
    %v2986 = vpop.f32.mrf.mxu0
    %v2987 = vadd.f32 0.0, %v2986
    %v2988 = vpop.f32.mrf.mxu0
    %v2989 = vadd.f32 0.0, %v2988
    %v2990 = vpop.f32.mrf.mxu0
    %v2991 = vadd.f32 0.0, %v2990
    %2992 = vmatprep.mubr.bf16.mxu0 0
    %2993 = vmatmul.mubr.bf16.gmra.mxu0 %v2386
    %v2994 = vpop.f32.mrf.mxu0
    %v2995 = vadd.f32 0.0, %v2994
    %v2996 = vpop.f32.mrf.mxu0
    %v2997 = vadd.f32 0.0, %v2996
    %v2998 = vpop.f32.mrf.mxu0
    %v2999 = vadd.f32 0.0, %v2998
    %v3000 = vpop.f32.mrf.mxu0
    %v3001 = vadd.f32 0.0, %v3000
    %3002 = vmatprep.mubr.bf16.mxu0 0
    %3003 = vmatmul.mubr.bf16.gmra.mxu0 %v2387
    %v3004 = vpop.f32.mrf.mxu0
    %v3005 = vadd.f32 0.0, %v3004
    %v3006 = vpop.f32.mrf.mxu0
    %v3007 = vadd.f32 0.0, %v3006
    %v3008 = vpop.f32.mrf.mxu0
    %v3009 = vadd.f32 0.0, %v3008
    %v3010 = vpop.f32.mrf.mxu0
    %v3011 = vadd.f32 0.0, %v3010
    %3012 = vmatprep.mubr.bf16.mxu0 0
    %3013 = vmatmul.mubr.bf16.gmra.mxu0 %v2388
    %v3014 = vpop.f32.mrf.mxu0
    %v3015 = vadd.f32 0.0, %v3014
    %v3016 = vpop.f32.mrf.mxu0
    %v3017 = vadd.f32 0.0, %v3016
    %v3018 = vpop.f32.mrf.mxu0
    %v3019 = vadd.f32 0.0, %v3018
    %v3020 = vpop.f32.mrf.mxu0
    %v3021 = vadd.f32 0.0, %v3020
    %3022 = vmatprep.mubr.bf16.mxu0 0
    %3023 = vmatmul.mubr.bf16.gmra.mxu0 %v2389
    %v3024 = vpop.f32.mrf.mxu0
    %v3025 = vadd.f32 0.0, %v3024
    %v3026 = vpop.f32.mrf.mxu0
    %v3027 = vadd.f32 0.0, %v3026
    %v3028 = vpop.f32.mrf.mxu0
    %v3029 = vadd.f32 0.0, %v3028
    %v3030 = vpop.f32.mrf.mxu0
    %v3031 = vadd.f32 0.0, %v3030
    %3032 = vmatprep.mubr.bf16.mxu0 0
    %3033 = vmatmul.mubr.bf16.gmra.mxu0 %v2390
    %v3034 = vpop.f32.mrf.mxu0
    %v3035 = vadd.f32 0.0, %v3034
    %v3036 = vpop.f32.mrf.mxu0
    %v3037 = vadd.f32 0.0, %v3036
    %v3038 = vpop.f32.mrf.mxu0
    %v3039 = vadd.f32 0.0, %v3038
    %v3040 = vpop.f32.mrf.mxu0
    %v3041 = vadd.f32 0.0, %v3040
    %3042 = vmatprep.mubr.bf16.mxu0 0
    %3043 = vmatmul.mubr.bf16.gmra.mxu0 %v2391
    %v3044 = vpop.f32.mrf.mxu0
    %v3045 = vadd.f32 0.0, %v3044
    %v3046 = vpop.f32.mrf.mxu0
    %v3047 = vadd.f32 0.0, %v3046
    %v3048 = vpop.f32.mrf.mxu0
    %v3049 = vadd.f32 0.0, %v3048
    %v3050 = vpop.f32.mrf.mxu0
    %v3051 = vadd.f32 0.0, %v3050
    %3052 = vmatprep.mubr.bf16.mxu0 0
    %3053 = vmatmul.mubr.bf16.gmra.mxu0 %v2392
    %v3054 = vpop.f32.mrf.mxu0
    %v3055 = vadd.f32 0.0, %v3054
    %v3056 = vpop.f32.mrf.mxu0
    %v3057 = vadd.f32 0.0, %v3056
    %v3058 = vpop.f32.mrf.mxu0
    %v3059 = vadd.f32 0.0, %v3058
    %v3060 = vpop.f32.mrf.mxu0
    %v3061 = vadd.f32 0.0, %v3060
    %3062 = vmatprep.mubr.bf16.mxu0 0
    %3063 = vmatmul.mubr.bf16.gmra.mxu0 %v2393
    %v3064 = vpop.f32.mrf.mxu0
    %v3065 = vadd.f32 0.0, %v3064
    %v3066 = vpop.f32.mrf.mxu0
    %v3067 = vadd.f32 0.0, %v3066
    %v3068 = vpop.f32.mrf.mxu0
    %v3069 = vadd.f32 0.0, %v3068
    %v3070 = vpop.f32.mrf.mxu0
    %v3071 = vadd.f32 0.0, %v3070
    %3072 = vmatprep.mubr.bf16.mxu0 0
    %3073 = vmatmul.mubr.bf16.gmra.mxu0 %v2394
    %v3074 = vpop.f32.mrf.mxu0
    %v3075 = vadd.f32 0.0, %v3074
    %v3076 = vpop.f32.mrf.mxu0
    %v3077 = vadd.f32 0.0, %v3076
    %v3078 = vpop.f32.mrf.mxu0
    %v3079 = vadd.f32 0.0, %v3078
    %v3080 = vpop.f32.mrf.mxu0
    %v3081 = vadd.f32 0.0, %v3080
    %3082 = vmatprep.mubr.bf16.mxu0 0
    %3083 = vmatmul.mubr.bf16.gmra.mxu0 %v2395
    %v3084 = vpop.f32.mrf.mxu0
    %v3085 = vadd.f32 0.0, %v3084
    %v3086 = vpop.f32.mrf.mxu0
    %v3087 = vadd.f32 0.0, %v3086
    %v3088 = vpop.f32.mrf.mxu0
    %v3089 = vadd.f32 0.0, %v3088
    %v3090 = vpop.f32.mrf.mxu0
    %v3091 = vadd.f32 0.0, %v3090
    %3092 = vmatprep.mubr.bf16.mxu0 0
    %3093 = vmatmul.mubr.bf16.gmra.mxu0 %v2396
    %v3094 = vpop.f32.mrf.mxu0
    %v3095 = vadd.f32 0.0, %v3094
    %v3096 = vpop.f32.mrf.mxu0
    %v3097 = vadd.f32 0.0, %v3096
    %v3098 = vpop.f32.mrf.mxu0
    %v3099 = vadd.f32 0.0, %v3098
    %v3100 = vpop.f32.mrf.mxu0
    %v3101 = vadd.f32 0.0, %v3100
    %3102 = vmatprep.mubr.bf16.mxu0 0
    %3103 = vmatmul.mubr.bf16.gmra.mxu0 %v2397
    %v3104 = vpop.f32.mrf.mxu0
    %v3105 = vadd.f32 0.0, %v3104
    %v3106 = vpop.f32.mrf.mxu0
    %v3107 = vadd.f32 0.0, %v3106
    %v3108 = vpop.f32.mrf.mxu0
    %v3109 = vadd.f32 0.0, %v3108
    %v3110 = vpop.f32.mrf.mxu0
    %v3111 = vadd.f32 0.0, %v3110
    %3112 = vmatprep.mubr.bf16.mxu0 0
    %3113 = vmatmul.mubr.bf16.gmra.mxu0 %v2398
    %v3114 = vpop.f32.mrf.mxu0
    %v3115 = vadd.f32 0.0, %v3114
    %v3116 = vpop.f32.mrf.mxu0
    %v3117 = vadd.f32 0.0, %v3116
    %v3118 = vpop.f32.mrf.mxu0
    %v3119 = vadd.f32 0.0, %v3118
    %v3120 = vpop.f32.mrf.mxu0
    %v3121 = vadd.f32 0.0, %v3120
    %3122 = vmatprep.mubr.bf16.mxu0 0
    %3123 = vmatmul.mubr.bf16.gmra.mxu0 %v2399
    %v3124 = vpop.f32.mrf.mxu0
    %v3125 = vadd.f32 0.0, %v3124
    %v3126 = vpop.f32.mrf.mxu0
    %v3127 = vadd.f32 0.0, %v3126
    %v3128 = vpop.f32.mrf.mxu0
    %v3129 = vadd.f32 0.0, %v3128
    %v3130 = vpop.f32.mrf.mxu0
    %v3131 = vadd.f32 0.0, %v3130
    %3132 = vmatprep.mubr.bf16.mxu0 0
    %3133 = vmatmul.mubr.bf16.gmra.mxu0 %v2400
    %v3134 = vpop.f32.mrf.mxu0
    %v3135 = vadd.f32 0.0, %v3134
    %v3136 = vpop.f32.mrf.mxu0
    %v3137 = vadd.f32 0.0, %v3136
    %v3138 = vpop.f32.mrf.mxu0
    %v3139 = vadd.f32 0.0, %v3138
    %v3140 = vpop.f32.mrf.mxu0
    %v3141 = vadd.f32 0.0, %v3140
    %3142 = vmatprep.mubr.bf16.mxu0 0
    %3143 = vmatmul.mubr.bf16.gmra.mxu0 %v2401
    %v3144 = vpop.f32.mrf.mxu0
    %v3145 = vadd.f32 0.0, %v3144
    %v3146 = vpop.f32.mrf.mxu0
    %v3147 = vadd.f32 0.0, %v3146
    %v3148 = vpop.f32.mrf.mxu0
    %v3149 = vadd.f32 0.0, %v3148
    %v3150 = vpop.f32.mrf.mxu0
    %v3151 = vadd.f32 0.0, %v3150
    %3152 = vmatprep.mubr.bf16.mxu0 0
    %3153 = vmatmul.mubr.bf16.gmra.mxu0 %v2402
    %v3154 = vpop.f32.mrf.mxu0
    %v3155 = vadd.f32 0.0, %v3154
    %v3156 = vpop.f32.mrf.mxu0
    %v3157 = vadd.f32 0.0, %v3156
    %v3158 = vpop.f32.mrf.mxu0
    %v3159 = vadd.f32 0.0, %v3158
    %v3160 = vpop.f32.mrf.mxu0
    %v3161 = vadd.f32 0.0, %v3160
    %3162 = vmatprep.mubr.bf16.mxu0 0
    %3163 = vmatmul.mubr.bf16.gmra.mxu0 %v2403
    %v3164 = vpop.f32.mrf.mxu0
    %v3165 = vadd.f32 0.0, %v3164
    %v3166 = vpop.f32.mrf.mxu0
    %v3167 = vadd.f32 0.0, %v3166
    %v3168 = vpop.f32.mrf.mxu0
    %v3169 = vadd.f32 0.0, %v3168
    %v3170 = vpop.f32.mrf.mxu0
    %v3171 = vadd.f32 0.0, %v3170
    %3172 = vmatprep.mubr.bf16.mxu0 0
    %3173 = vmatmul.mubr.bf16.gmra.mxu0 %v2404
    %v3174 = vpop.f32.mrf.mxu0
    %v3175 = vadd.f32 0.0, %v3174
    %v3176 = vpop.f32.mrf.mxu0
    %v3177 = vadd.f32 0.0, %v3176
    %v3178 = vpop.f32.mrf.mxu0
    %v3179 = vadd.f32 0.0, %v3178
    %v3180 = vpop.f32.mrf.mxu0
    %v3181 = vadd.f32 0.0, %v3180
    %3182 = vmatprep.mubr.bf16.mxu0 0
    %3183 = vmatmul.mubr.bf16.gmra.mxu0 %v2405
    %v3184 = vpop.f32.mrf.mxu0
    %v3185 = vadd.f32 0.0, %v3184
    %v3186 = vpop.f32.mrf.mxu0
    %v3187 = vadd.f32 0.0, %v3186
    %v3188 = vpop.f32.mrf.mxu0
    %v3189 = vadd.f32 0.0, %v3188
    %v3190 = vpop.f32.mrf.mxu0
    %v3191 = vadd.f32 0.0, %v3190
    %3192 = vmatprep.mubr.bf16.mxu0 0
    %3193 = vmatmul.mubr.bf16.gmra.mxu0 %v2406
    %v3194 = vpop.f32.mrf.mxu0
    %v3195 = vadd.f32 0.0, %v3194
    %v3196 = vpop.f32.mrf.mxu0
    %v3197 = vadd.f32 0.0, %v3196
    %v3198 = vpop.f32.mrf.mxu0
    %v3199 = vadd.f32 0.0, %v3198
    %v3200 = vpop.f32.mrf.mxu0
    %v3201 = vadd.f32 0.0, %v3200
    %3202 = vmatprep.mubr.bf16.mxu0 0
    %3203 = vmatmul.mubr.bf16.gmra.mxu0 %v2407
    %v3204 = vpop.f32.mrf.mxu0
    %v3205 = vadd.f32 0.0, %v3204
    %v3206 = vpop.f32.mrf.mxu0
    %v3207 = vadd.f32 0.0, %v3206
    %v3208 = vpop.f32.mrf.mxu0
    %v3209 = vadd.f32 0.0, %v3208
    %v3210 = vpop.f32.mrf.mxu0
    %v3211 = vadd.f32 0.0, %v3210
    %3212 = vmatprep.mubr.bf16.mxu0 0
    %3213 = vmatmul.mubr.bf16.gmra.mxu0 %v2408
    %v3214 = vpop.f32.mrf.mxu0
    %v3215 = vadd.f32 0.0, %v3214
    %v3216 = vpop.f32.mrf.mxu0
    %v3217 = vadd.f32 0.0, %v3216
    %v3218 = vpop.f32.mrf.mxu0
    %v3219 = vadd.f32 0.0, %v3218
    %v3220 = vpop.f32.mrf.mxu0
    %v3221 = vadd.f32 0.0, %v3220
    %3222 = vmatprep.mubr.bf16.mxu0 0
    %3223 = vmatmul.mubr.bf16.gmra.mxu0 %v2409
    %v3224 = vpop.f32.mrf.mxu0
    %v3225 = vadd.f32 0.0, %v3224
    %v3226 = vpop.f32.mrf.mxu0
    %v3227 = vadd.f32 0.0, %v3226
    %v3228 = vpop.f32.mrf.mxu0
    %v3229 = vadd.f32 0.0, %v3228
    %v3230 = vpop.f32.mrf.mxu0
    %v3231 = vadd.f32 0.0, %v3230
    %3232 = vmatprep.mubr.bf16.mxu0 0
    %3233 = vmatmul.mubr.bf16.gmra.mxu0 %v2410
    %v3234 = vpop.f32.mrf.mxu0
    %v3235 = vadd.f32 0.0, %v3234
    %v3236 = vpop.f32.mrf.mxu0
    %v3237 = vadd.f32 0.0, %v3236
    %v3238 = vpop.f32.mrf.mxu0
    %v3239 = vadd.f32 0.0, %v3238
    %v3240 = vpop.f32.mrf.mxu0
    %v3241 = vadd.f32 0.0, %v3240
    %3242 = vmatprep.mubr.bf16.mxu0 0
    %3243 = vmatmul.mubr.bf16.gmra.mxu0 %v2411
    %v3244 = vpop.f32.mrf.mxu0
    %v3245 = vadd.f32 0.0, %v3244
    %v3246 = vpop.f32.mrf.mxu0
    %v3247 = vadd.f32 0.0, %v3246
    %v3248 = vpop.f32.mrf.mxu0
    %v3249 = vadd.f32 0.0, %v3248
    %v3250 = vpop.f32.mrf.mxu0
    %v3251 = vadd.f32 0.0, %v3250
    %3252 = vmatprep.mubr.bf16.mxu0 0
    %3253 = vmatmul.mubr.bf16.gmra.mxu0 %v2412
    %v3254 = vpop.f32.mrf.mxu0
    %v3255 = vadd.f32 0.0, %v3254
    %v3256 = vpop.f32.mrf.mxu0
    %v3257 = vadd.f32 0.0, %v3256
    %v3258 = vpop.f32.mrf.mxu0
    %v3259 = vadd.f32 0.0, %v3258
    %v3260 = vpop.f32.mrf.mxu0
    %v3261 = vadd.f32 0.0, %v3260
    %3262 = vmatprep.mubr.bf16.mxu0 0
    %3263 = vmatmul.mubr.bf16.gmra.mxu0 %v2413
    %v3264 = vpop.f32.mrf.mxu0
    %v3265 = vadd.f32 0.0, %v3264
    %v3266 = vpop.f32.mrf.mxu0
    %v3267 = vadd.f32 0.0, %v3266
    %v3268 = vpop.f32.mrf.mxu0
    %v3269 = vadd.f32 0.0, %v3268
    %v3270 = vpop.f32.mrf.mxu0
    %v3271 = vadd.f32 0.0, %v3270
    %3272 = vmatprep.mubr.bf16.mxu0 0
    %3273 = vmatmul.mubr.bf16.gmra.mxu0 %v2414
    %v3274 = vpop.f32.mrf.mxu0
    %v3275 = vadd.f32 0.0, %v3274
    %v3276 = vpop.f32.mrf.mxu0
    %v3277 = vadd.f32 0.0, %v3276
    %v3278 = vpop.f32.mrf.mxu0
    %v3279 = vadd.f32 0.0, %v3278
    %v3280 = vpop.f32.mrf.mxu0
    %v3281 = vadd.f32 0.0, %v3280
    %3282 = vmatprep.mubr.bf16.mxu0 0
    %3283 = vmatmul.mubr.bf16.gmra.mxu0 %v2415
    %v3284 = vpop.f32.mrf.mxu0
    %v3285 = vadd.f32 0.0, %v3284
    %v3286 = vpop.f32.mrf.mxu0
    %v3287 = vadd.f32 0.0, %v3286
    %v3288 = vpop.f32.mrf.mxu0
    %v3289 = vadd.f32 0.0, %v3288
    %v3290 = vpop.f32.mrf.mxu0
    %v3291 = vadd.f32 0.0, %v3290
    %3292 = vmatprep.mubr.bf16.mxu0 0
    %3293 = vmatmul.mubr.bf16.gmra.mxu0 %v2416
    %v3294 = vpop.f32.mrf.mxu0
    %v3295 = vadd.f32 0.0, %v3294
    %v3296 = vpop.f32.mrf.mxu0
    %v3297 = vadd.f32 0.0, %v3296
    %v3298 = vpop.f32.mrf.mxu0
    %v3299 = vadd.f32 0.0, %v3298
    %v3300 = vpop.f32.mrf.mxu0
    %v3301 = vadd.f32 0.0, %v3300
    %3302 = vmatprep.mubr.bf16.mxu0 0
    %3303 = vmatmul.mubr.bf16.gmra.mxu0 %v2417
    %v3304 = vpop.f32.mrf.mxu0
    %v3305 = vadd.f32 0.0, %v3304
    %v3306 = vpop.f32.mrf.mxu0
    %v3307 = vadd.f32 0.0, %v3306
    %v3308 = vpop.f32.mrf.mxu0
    %v3309 = vadd.f32 0.0, %v3308
    %v3310 = vpop.f32.mrf.mxu0
    %v3311 = vadd.f32 0.0, %v3310
    %3312 = vmatprep.mubr.bf16.mxu0 0
    %3313 = vmatmul.mubr.bf16.gmra.mxu0 %v2418
    %v3314 = vpop.f32.mrf.mxu0
    %v3315 = vadd.f32 0.0, %v3314
    %v3316 = vpop.f32.mrf.mxu0
    %v3317 = vadd.f32 0.0, %v3316
    %v3318 = vpop.f32.mrf.mxu0
    %v3319 = vadd.f32 0.0, %v3318
    %v3320 = vpop.f32.mrf.mxu0
    %v3321 = vadd.f32 0.0, %v3320
    %3322 = vmatprep.mubr.bf16.mxu0 0
    %3323 = vmatmul.mubr.bf16.gmra.mxu0 %v2419
    %v3324 = vpop.f32.mrf.mxu0
    %v3325 = vadd.f32 0.0, %v3324
    %v3326 = vpop.f32.mrf.mxu0
    %v3327 = vadd.f32 0.0, %v3326
    %v3328 = vpop.f32.mrf.mxu0
    %v3329 = vadd.f32 0.0, %v3328
    %v3330 = vpop.f32.mrf.mxu0
    %v3331 = vadd.f32 0.0, %v3330
    %3332 = vmatprep.mubr.bf16.mxu0 0
    %3333 = vmatmul.mubr.bf16.gmra.mxu0 %v2420
    %v3334 = vpop.f32.mrf.mxu0
    %v3335 = vadd.f32 0.0, %v3334
    %v3336 = vpop.f32.mrf.mxu0
    %v3337 = vadd.f32 0.0, %v3336
    %v3338 = vpop.f32.mrf.mxu0
    %v3339 = vadd.f32 0.0, %v3338
    %v3340 = vpop.f32.mrf.mxu0
    %v3341 = vadd.f32 0.0, %v3340
    %3342 = vmatprep.mubr.bf16.mxu0 0
    %3343 = vmatmul.mubr.bf16.gmra.mxu0 %v2421
    %v3344 = vpop.f32.mrf.mxu0
    %v3345 = vadd.f32 0.0, %v3344
    %v3346 = vpop.f32.mrf.mxu0
    %v3347 = vadd.f32 0.0, %v3346
    %v3348 = vpop.f32.mrf.mxu0
    %v3349 = vadd.f32 0.0, %v3348
    %v3350 = vpop.f32.mrf.mxu0
    %v3351 = vadd.f32 0.0, %v3350
    %3352 = vmatprep.mubr.bf16.mxu0 0
    %3353 = vmatmul.mubr.bf16.gmra.mxu0 %v2422
    %v3354 = vpop.f32.mrf.mxu0
    %v3355 = vadd.f32 0.0, %v3354
    %v3356 = vpop.f32.mrf.mxu0
    %v3357 = vadd.f32 0.0, %v3356
    %v3358 = vpop.f32.mrf.mxu0
    %v3359 = vadd.f32 0.0, %v3358
    %v3360 = vpop.f32.mrf.mxu0
    %v3361 = vadd.f32 0.0, %v3360
    %3362 = vmatprep.mubr.bf16.mxu0 0
    %3363 = vmatmul.mubr.bf16.gmra.mxu0 %v2423
    %v3364 = vpop.f32.mrf.mxu0
    %v3365 = vadd.f32 0.0, %v3364
    %v3366 = vpop.f32.mrf.mxu0
    %v3367 = vadd.f32 0.0, %v3366
    %v3368 = vpop.f32.mrf.mxu0
    %v3369 = vadd.f32 0.0, %v3368
    %v3370 = vpop.f32.mrf.mxu0
    %v3371 = vadd.f32 0.0, %v3370
    %3372 = vmatprep.mubr.bf16.mxu0 0
    %3373 = vmatmul.mubr.bf16.gmra.mxu0 %v2424
    %v3374 = vpop.f32.mrf.mxu0
    %v3375 = vadd.f32 0.0, %v3374
    %v3376 = vpop.f32.mrf.mxu0
    %v3377 = vadd.f32 0.0, %v3376
    %v3378 = vpop.f32.mrf.mxu0
    %v3379 = vadd.f32 0.0, %v3378
    %v3380 = vpop.f32.mrf.mxu0
    %v3381 = vadd.f32 0.0, %v3380
    %3382 = vmatprep.mubr.bf16.mxu0 0
    %3383 = vmatmul.mubr.bf16.gmra.mxu0 %v2425
    %v3384 = vpop.f32.mrf.mxu0
    %v3385 = vadd.f32 0.0, %v3384
    %v3386 = vpop.f32.mrf.mxu0
    %v3387 = vadd.f32 0.0, %v3386
    %v3388 = vpop.f32.mrf.mxu0
    %v3389 = vadd.f32 0.0, %v3388
    %v3390 = vpop.f32.mrf.mxu0
    %v3391 = vadd.f32 0.0, %v3390
    %3392 = vmatprep.mubr.bf16.mxu0 0
    %3393 = vmatmul.mubr.bf16.gmra.mxu0 %v2426
    %v3394 = vpop.f32.mrf.mxu0
    %v3395 = vadd.f32 0.0, %v3394
    %v3396 = vpop.f32.mrf.mxu0
    %v3397 = vadd.f32 0.0, %v3396
    %v3398 = vpop.f32.mrf.mxu0
    %v3399 = vadd.f32 0.0, %v3398
    %v3400 = vpop.f32.mrf.mxu0
    %v3401 = vadd.f32 0.0, %v3400
    %3402 = vmatprep.mubr.bf16.mxu0 0
    %3403 = vmatmul.mubr.bf16.gmra.mxu0 %v2427
    %v3404 = vpop.f32.mrf.mxu0
    %v3405 = vadd.f32 0.0, %v3404
    %v3406 = vpop.f32.mrf.mxu0
    %v3407 = vadd.f32 0.0, %v3406
    %v3408 = vpop.f32.mrf.mxu0
    %v3409 = vadd.f32 0.0, %v3408
    %v3410 = vpop.f32.mrf.mxu0
    %v3411 = vadd.f32 0.0, %v3410
    %3412 = vmatprep.mubr.bf16.mxu0 0
    %3413 = vmatmul.mubr.bf16.gmra.mxu0 %v2428
    %v3414 = vpop.f32.mrf.mxu0
    %v3415 = vadd.f32 0.0, %v3414
    %v3416 = vpop.f32.mrf.mxu0
    %v3417 = vadd.f32 0.0, %v3416
    %v3418 = vpop.f32.mrf.mxu0
    %v3419 = vadd.f32 0.0, %v3418
    %v3420 = vpop.f32.mrf.mxu0
    %v3421 = vadd.f32 0.0, %v3420
    %3422 = vmatprep.mubr.bf16.mxu0 0
    %3423 = vmatmul.mubr.bf16.gmra.mxu0 %v2429
    %v3424 = vpop.f32.mrf.mxu0
    %v3425 = vadd.f32 0.0, %v3424
    %v3426 = vpop.f32.mrf.mxu0
    %v3427 = vadd.f32 0.0, %v3426
    %v3428 = vpop.f32.mrf.mxu0
    %v3429 = vadd.f32 0.0, %v3428
    %v3430 = vpop.f32.mrf.mxu0
    %v3431 = vadd.f32 0.0, %v3430
    %3432 = vmatprep.mubr.bf16.mxu0 0
    %3433 = vmatmul.mubr.bf16.gmra.mxu0 %v2430
    %v3434 = vpop.f32.mrf.mxu0
    %v3435 = vadd.f32 0.0, %v3434
    %v3436 = vpop.f32.mrf.mxu0
    %v3437 = vadd.f32 0.0, %v3436
    %v3438 = vpop.f32.mrf.mxu0
    %v3439 = vadd.f32 0.0, %v3438
    %v3440 = vpop.f32.mrf.mxu0
    %v3441 = vadd.f32 0.0, %v3440
    %3442 = vmatprep.mubr.bf16.mxu0 0
    %3443 = vmatmul.mubr.bf16.gmra.mxu0 %v2431
    %v3444 = vpop.f32.mrf.mxu0
    %v3445 = vadd.f32 0.0, %v3444
    %v3446 = vpop.f32.mrf.mxu0
    %v3447 = vadd.f32 0.0, %v3446
    %v3448 = vpop.f32.mrf.mxu0
    %v3449 = vadd.f32 0.0, %v3448
    %v3450 = vpop.f32.mrf.mxu0
    %v3451 = vadd.f32 0.0, %v3450
    %3452 = vmatprep.mubr.bf16.mxu0 0
    %3453 = vmatmul.mubr.bf16.gmra.mxu0 %v2432
    %v3454 = vpop.f32.mrf.mxu0
    %v3455 = vadd.f32 0.0, %v3454
    %v3456 = vpop.f32.mrf.mxu0
    %v3457 = vadd.f32 0.0, %v3456
    %v3458 = vpop.f32.mrf.mxu0
    %v3459 = vadd.f32 0.0, %v3458
    %v3460 = vpop.f32.mrf.mxu0
    %v3461 = vadd.f32 0.0, %v3460
    %3462 = vmatprep.mubr.bf16.mxu0 0
    %3463 = vmatmul.mubr.bf16.gmra.mxu0 %v2433
    %v3464 = vpop.f32.mrf.mxu0
    %v3465 = vadd.f32 0.0, %v3464
    %v3466 = vpop.f32.mrf.mxu0
    %v3467 = vadd.f32 0.0, %v3466
    %v3468 = vpop.f32.mrf.mxu0
    %v3469 = vadd.f32 0.0, %v3468
    %v3470 = vpop.f32.mrf.mxu0
    %v3471 = vadd.f32 0.0, %v3470
    %3472 = vmatprep.mubr.bf16.mxu0 0
    %3473 = vmatmul.mubr.bf16.gmra.mxu0 %v2434
    %v3474 = vpop.f32.mrf.mxu0
    %v3475 = vadd.f32 0.0, %v3474
    %v3476 = vpop.f32.mrf.mxu0
    %v3477 = vadd.f32 0.0, %v3476
    %v3478 = vpop.f32.mrf.mxu0
    %v3479 = vadd.f32 0.0, %v3478
    %v3480 = vpop.f32.mrf.mxu0
    %v3481 = vadd.f32 0.0, %v3480
    %3482 = vmatprep.mubr.bf16.mxu0 0
    %3483 = vmatmul.mubr.bf16.gmra.mxu0 %v2435
    %v3484 = vpop.f32.mrf.mxu0
    %v3485 = vadd.f32 0.0, %v3484
    %v3486 = vpop.f32.mrf.mxu0
    %v3487 = vadd.f32 0.0, %v3486
    %v3488 = vpop.f32.mrf.mxu0
    %v3489 = vadd.f32 0.0, %v3488
    %v3490 = vpop.f32.mrf.mxu0
    %v3491 = vadd.f32 0.0, %v3490
    %3492 = vdwg.mxu0
    %3493 = vmatprep.subr.bf16.mxu0 %v2751
    %3494 = vmatpush1.bf16.msra.mxu0 %v2750
    %3495 = vmatprep.subr.bf16.mxu0 %v2743
    %3496 = vmatpush1.bf16.msra.mxu0 %v2742
    %3497 = vmatprep.subr.bf16.mxu0 %v2735
    %3498 = vmatpush1.bf16.msra.mxu0 %v2734
    %3499 = vmatprep.subr.bf16.mxu0 %v2727
    %3500 = vmatpush1.bf16.msra.mxu0 %v2726
    %3501 = vmatprep.subr.bf16.mxu0 %v2719
    %3502 = vmatpush1.bf16.msra.mxu0 %v2718
    %3503 = vmatprep.subr.bf16.mxu0 %v2711
    %3504 = vmatpush1.bf16.msra.mxu0 %v2710
    %3505 = vmatprep.subr.bf16.mxu0 %v2703
    %3506 = vmatpush1.bf16.msra.mxu0 %v2702
    %3507 = vmatprep.subr.bf16.mxu0 %v2695
    %3508 = vmatpush1.bf16.msra.mxu0 %v2694
    %3509 = vmatprep.subr.bf16.mxu0 0
    %3510 = vmatpush2.bf16.msra.mxu0 0
    %3511 = vmatprep.subr.bf16.mxu0 0
    %3512 = vmatpush2.bf16.msra.mxu0 0
    %3513 = vmatprep.subr.bf16.mxu0 0
    %3514 = vmatpush2.bf16.msra.mxu0 0
    %3515 = vmatprep.subr.bf16.mxu0 0
    %3516 = vmatpush2.bf16.msra.mxu0 0
    %3517 = vmatprep.subr.bf16.mxu0 0
    %3518 = vmatpush2.bf16.msra.mxu0 0
    %3519 = vmatprep.subr.bf16.mxu0 0
    %3520 = vmatpush2.bf16.msra.mxu0 0
    %3521 = vmatprep.subr.bf16.mxu0 0
    %3522 = vmatpush2.bf16.msra.mxu0 0
    %3523 = vmatprep.subr.bf16.mxu0 0
    %3524 = vmatpush2.bf16.msra.mxu0 0
    %3525 = vmatprep.mubr.bf16.mxu0 0
    %3526 = vmatmul.mubr.bf16.gmra.mxu0 %v2372
    %v3527 = vpop.f32.mrf.mxu0
    %v3528 = vadd.f32 0.0, %v3527
    %v3529 = vpop.f32.mrf.mxu0
    %v3530 = vadd.f32 0.0, %v3529
    %v3531 = vpop.f32.mrf.mxu0
    %v3532 = vadd.f32 0.0, %v3531
    %v3533 = vpop.f32.mrf.mxu0
    %v3534 = vadd.f32 0.0, %v3533
    %3535 = vmatprep.mubr.bf16.mxu0 0
    %3536 = vmatmul.mubr.bf16.gmra.mxu0 %v2373
    %v3537 = vpop.f32.mrf.mxu0
    %v3538 = vadd.f32 0.0, %v3537
    %v3539 = vpop.f32.mrf.mxu0
    %v3540 = vadd.f32 0.0, %v3539
    %v3541 = vpop.f32.mrf.mxu0
    %v3542 = vadd.f32 0.0, %v3541
    %v3543 = vpop.f32.mrf.mxu0
    %v3544 = vadd.f32 0.0, %v3543
    %3545 = vmatprep.mubr.bf16.mxu0 0
    %3546 = vmatmul.mubr.bf16.gmra.mxu0 %v2374
    %v3547 = vpop.f32.mrf.mxu0
    %v3548 = vadd.f32 0.0, %v3547
    %v3549 = vpop.f32.mrf.mxu0
    %v3550 = vadd.f32 0.0, %v3549
    %v3551 = vpop.f32.mrf.mxu0
    %v3552 = vadd.f32 0.0, %v3551
    %v3553 = vpop.f32.mrf.mxu0
    %v3554 = vadd.f32 0.0, %v3553
    %3555 = vmatprep.mubr.bf16.mxu0 0
    %3556 = vmatmul.mubr.bf16.gmra.mxu0 %v2375
    %v3557 = vpop.f32.mrf.mxu0
    %v3558 = vadd.f32 0.0, %v3557
    %v3559 = vpop.f32.mrf.mxu0
    %v3560 = vadd.f32 0.0, %v3559
    %v3561 = vpop.f32.mrf.mxu0
    %v3562 = vadd.f32 0.0, %v3561
    %v3563 = vpop.f32.mrf.mxu0
    %v3564 = vadd.f32 0.0, %v3563
    %3565 = vmatprep.mubr.bf16.mxu0 0
    %3566 = vmatmul.mubr.bf16.gmra.mxu0 %v2376
    %v3567 = vpop.f32.mrf.mxu0
    %v3568 = vadd.f32 0.0, %v3567
    %v3569 = vpop.f32.mrf.mxu0
    %v3570 = vadd.f32 0.0, %v3569
    %v3571 = vpop.f32.mrf.mxu0
    %v3572 = vadd.f32 0.0, %v3571
    %v3573 = vpop.f32.mrf.mxu0
    %v3574 = vadd.f32 0.0, %v3573
    %3575 = vmatprep.mubr.bf16.mxu0 0
    %3576 = vmatmul.mubr.bf16.gmra.mxu0 %v2377
    %v3577 = vpop.f32.mrf.mxu0
    %v3578 = vadd.f32 0.0, %v3577
    %v3579 = vpop.f32.mrf.mxu0
    %v3580 = vadd.f32 0.0, %v3579
    %v3581 = vpop.f32.mrf.mxu0
    %v3582 = vadd.f32 0.0, %v3581
    %v3583 = vpop.f32.mrf.mxu0
    %v3584 = vadd.f32 0.0, %v3583
    %3585 = vmatprep.mubr.bf16.mxu0 0
    %3586 = vmatmul.mubr.bf16.gmra.mxu0 %v2378
    %v3587 = vpop.f32.mrf.mxu0
    %v3588 = vadd.f32 0.0, %v3587
    %v3589 = vpop.f32.mrf.mxu0
    %v3590 = vadd.f32 0.0, %v3589
    %v3591 = vpop.f32.mrf.mxu0
    %v3592 = vadd.f32 0.0, %v3591
    %v3593 = vpop.f32.mrf.mxu0
    %v3594 = vadd.f32 0.0, %v3593
    %3595 = vmatprep.mubr.bf16.mxu0 0
    %3596 = vmatmul.mubr.bf16.gmra.mxu0 %v2379
    %v3597 = vpop.f32.mrf.mxu0
    %v3598 = vadd.f32 0.0, %v3597
    %v3599 = vpop.f32.mrf.mxu0
    %v3600 = vadd.f32 0.0, %v3599
    %v3601 = vpop.f32.mrf.mxu0
    %v3602 = vadd.f32 0.0, %v3601
    %v3603 = vpop.f32.mrf.mxu0
    %v3604 = vadd.f32 0.0, %v3603
    %3605 = vmatprep.mubr.bf16.mxu0 0
    %3606 = vmatmul.mubr.bf16.gmra.mxu0 %v2380
    %v3607 = vpop.f32.mrf.mxu0
    %v3608 = vadd.f32 0.0, %v3607
    %v3609 = vpop.f32.mrf.mxu0
    %v3610 = vadd.f32 0.0, %v3609
    %v3611 = vpop.f32.mrf.mxu0
    %v3612 = vadd.f32 0.0, %v3611
    %v3613 = vpop.f32.mrf.mxu0
    %v3614 = vadd.f32 0.0, %v3613
    %3615 = vmatprep.mubr.bf16.mxu0 0
    %3616 = vmatmul.mubr.bf16.gmra.mxu0 %v2381
    %v3617 = vpop.f32.mrf.mxu0
    %v3618 = vadd.f32 0.0, %v3617
    %v3619 = vpop.f32.mrf.mxu0
    %v3620 = vadd.f32 0.0, %v3619
    %v3621 = vpop.f32.mrf.mxu0
    %v3622 = vadd.f32 0.0, %v3621
    %v3623 = vpop.f32.mrf.mxu0
    %v3624 = vadd.f32 0.0, %v3623
    %3625 = vmatprep.mubr.bf16.mxu0 0
    %3626 = vmatmul.mubr.bf16.gmra.mxu0 %v2382
    %v3627 = vpop.f32.mrf.mxu0
    %v3628 = vadd.f32 0.0, %v3627
    %v3629 = vpop.f32.mrf.mxu0
    %v3630 = vadd.f32 0.0, %v3629
    %v3631 = vpop.f32.mrf.mxu0
    %v3632 = vadd.f32 0.0, %v3631
    %v3633 = vpop.f32.mrf.mxu0
    %v3634 = vadd.f32 0.0, %v3633
    %3635 = vmatprep.mubr.bf16.mxu0 0
    %3636 = vmatmul.mubr.bf16.gmra.mxu0 %v2383
    %v3637 = vpop.f32.mrf.mxu0
    %v3638 = vadd.f32 0.0, %v3637
    %v3639 = vpop.f32.mrf.mxu0
    %v3640 = vadd.f32 0.0, %v3639
    %v3641 = vpop.f32.mrf.mxu0
    %v3642 = vadd.f32 0.0, %v3641
    %v3643 = vpop.f32.mrf.mxu0
    %v3644 = vadd.f32 0.0, %v3643
    %3645 = vmatprep.mubr.bf16.mxu0 0
    %3646 = vmatmul.mubr.bf16.gmra.mxu0 %v2384
    %v3647 = vpop.f32.mrf.mxu0
    %v3648 = vadd.f32 0.0, %v3647
    %v3649 = vpop.f32.mrf.mxu0
    %v3650 = vadd.f32 0.0, %v3649
    %v3651 = vpop.f32.mrf.mxu0
    %v3652 = vadd.f32 0.0, %v3651
    %v3653 = vpop.f32.mrf.mxu0
    %v3654 = vadd.f32 0.0, %v3653
    %3655 = vmatprep.mubr.bf16.mxu0 0
    %3656 = vmatmul.mubr.bf16.gmra.mxu0 %v2385
    %v3657 = vpop.f32.mrf.mxu0
    %v3658 = vadd.f32 0.0, %v3657
    %v3659 = vpop.f32.mrf.mxu0
    %v3660 = vadd.f32 0.0, %v3659
    %v3661 = vpop.f32.mrf.mxu0
    %v3662 = vadd.f32 0.0, %v3661
    %v3663 = vpop.f32.mrf.mxu0
    %v3664 = vadd.f32 0.0, %v3663
    %3665 = vmatprep.mubr.bf16.mxu0 0
    %3666 = vmatmul.mubr.bf16.gmra.mxu0 %v2386
    %v3667 = vpop.f32.mrf.mxu0
    %v3668 = vadd.f32 0.0, %v3667
    %v3669 = vpop.f32.mrf.mxu0
    %v3670 = vadd.f32 0.0, %v3669
    %v3671 = vpop.f32.mrf.mxu0
    %v3672 = vadd.f32 0.0, %v3671
    %v3673 = vpop.f32.mrf.mxu0
    %v3674 = vadd.f32 0.0, %v3673
    %3675 = vmatprep.mubr.bf16.mxu0 0
    %3676 = vmatmul.mubr.bf16.gmra.mxu0 %v2387
    %v3677 = vpop.f32.mrf.mxu0
    %v3678 = vadd.f32 0.0, %v3677
    %v3679 = vpop.f32.mrf.mxu0
    %v3680 = vadd.f32 0.0, %v3679
    %v3681 = vpop.f32.mrf.mxu0
    %v3682 = vadd.f32 0.0, %v3681
    %v3683 = vpop.f32.mrf.mxu0
    %v3684 = vadd.f32 0.0, %v3683
    %3685 = vmatprep.mubr.bf16.mxu0 0
    %3686 = vmatmul.mubr.bf16.gmra.mxu0 %v2388
    %v3687 = vpop.f32.mrf.mxu0
    %v3688 = vadd.f32 0.0, %v3687
    %v3689 = vpop.f32.mrf.mxu0
    %v3690 = vadd.f32 0.0, %v3689
    %v3691 = vpop.f32.mrf.mxu0
    %v3692 = vadd.f32 0.0, %v3691
    %v3693 = vpop.f32.mrf.mxu0
    %v3694 = vadd.f32 0.0, %v3693
    %3695 = vmatprep.mubr.bf16.mxu0 0
    %3696 = vmatmul.mubr.bf16.gmra.mxu0 %v2389
    %v3697 = vpop.f32.mrf.mxu0
    %v3698 = vadd.f32 0.0, %v3697
    %v3699 = vpop.f32.mrf.mxu0
    %v3700 = vadd.f32 0.0, %v3699
    %v3701 = vpop.f32.mrf.mxu0
    %v3702 = vadd.f32 0.0, %v3701
    %v3703 = vpop.f32.mrf.mxu0
    %v3704 = vadd.f32 0.0, %v3703
    %3705 = vmatprep.mubr.bf16.mxu0 0
    %3706 = vmatmul.mubr.bf16.gmra.mxu0 %v2390
    %v3707 = vpop.f32.mrf.mxu0
    %v3708 = vadd.f32 0.0, %v3707
    %v3709 = vpop.f32.mrf.mxu0
    %v3710 = vadd.f32 0.0, %v3709
    %v3711 = vpop.f32.mrf.mxu0
    %v3712 = vadd.f32 0.0, %v3711
    %v3713 = vpop.f32.mrf.mxu0
    %v3714 = vadd.f32 0.0, %v3713
    %3715 = vmatprep.mubr.bf16.mxu0 0
    %3716 = vmatmul.mubr.bf16.gmra.mxu0 %v2391
    %v3717 = vpop.f32.mrf.mxu0
    %v3718 = vadd.f32 0.0, %v3717
    %v3719 = vpop.f32.mrf.mxu0
    %v3720 = vadd.f32 0.0, %v3719
    %v3721 = vpop.f32.mrf.mxu0
    %v3722 = vadd.f32 0.0, %v3721
    %v3723 = vpop.f32.mrf.mxu0
    %v3724 = vadd.f32 0.0, %v3723
    %3725 = vmatprep.mubr.bf16.mxu0 0
    %3726 = vmatmul.mubr.bf16.gmra.mxu0 %v2392
    %v3727 = vpop.f32.mrf.mxu0
    %v3728 = vadd.f32 0.0, %v3727
    %v3729 = vpop.f32.mrf.mxu0
    %v3730 = vadd.f32 0.0, %v3729
    %v3731 = vpop.f32.mrf.mxu0
    %v3732 = vadd.f32 0.0, %v3731
    %v3733 = vpop.f32.mrf.mxu0
    %v3734 = vadd.f32 0.0, %v3733
    %3735 = vmatprep.mubr.bf16.mxu0 0
    %3736 = vmatmul.mubr.bf16.gmra.mxu0 %v2393
    %v3737 = vpop.f32.mrf.mxu0
    %v3738 = vadd.f32 0.0, %v3737
    %v3739 = vpop.f32.mrf.mxu0
    %v3740 = vadd.f32 0.0, %v3739
    %v3741 = vpop.f32.mrf.mxu0
    %v3742 = vadd.f32 0.0, %v3741
    %v3743 = vpop.f32.mrf.mxu0
    %v3744 = vadd.f32 0.0, %v3743
    %3745 = vmatprep.mubr.bf16.mxu0 0
    %3746 = vmatmul.mubr.bf16.gmra.mxu0 %v2394
    %v3747 = vpop.f32.mrf.mxu0
    %v3748 = vadd.f32 0.0, %v3747
    %v3749 = vpop.f32.mrf.mxu0
    %v3750 = vadd.f32 0.0, %v3749
    %v3751 = vpop.f32.mrf.mxu0
    %v3752 = vadd.f32 0.0, %v3751
    %v3753 = vpop.f32.mrf.mxu0
    %v3754 = vadd.f32 0.0, %v3753
    %3755 = vmatprep.mubr.bf16.mxu0 0
    %3756 = vmatmul.mubr.bf16.gmra.mxu0 %v2395
    %v3757 = vpop.f32.mrf.mxu0
    %v3758 = vadd.f32 0.0, %v3757
    %v3759 = vpop.f32.mrf.mxu0
    %v3760 = vadd.f32 0.0, %v3759
    %v3761 = vpop.f32.mrf.mxu0
    %v3762 = vadd.f32 0.0, %v3761
    %v3763 = vpop.f32.mrf.mxu0
    %v3764 = vadd.f32 0.0, %v3763
    %3765 = vmatprep.mubr.bf16.mxu0 0
    %3766 = vmatmul.mubr.bf16.gmra.mxu0 %v2396
    %v3767 = vpop.f32.mrf.mxu0
    %v3768 = vadd.f32 0.0, %v3767
    %v3769 = vpop.f32.mrf.mxu0
    %v3770 = vadd.f32 0.0, %v3769
    %v3771 = vpop.f32.mrf.mxu0
    %v3772 = vadd.f32 0.0, %v3771
    %v3773 = vpop.f32.mrf.mxu0
    %v3774 = vadd.f32 0.0, %v3773
    %3775 = vmatprep.mubr.bf16.mxu0 0
    %3776 = vmatmul.mubr.bf16.gmra.mxu0 %v2397
    %v3777 = vpop.f32.mrf.mxu0
    %v3778 = vadd.f32 0.0, %v3777
    %v3779 = vpop.f32.mrf.mxu0
    %v3780 = vadd.f32 0.0, %v3779
    %v3781 = vpop.f32.mrf.mxu0
    %v3782 = vadd.f32 0.0, %v3781
    %v3783 = vpop.f32.mrf.mxu0
    %v3784 = vadd.f32 0.0, %v3783
    %3785 = vmatprep.mubr.bf16.mxu0 0
    %3786 = vmatmul.mubr.bf16.gmra.mxu0 %v2398
    %v3787 = vpop.f32.mrf.mxu0
    %v3788 = vadd.f32 0.0, %v3787
    %v3789 = vpop.f32.mrf.mxu0
    %v3790 = vadd.f32 0.0, %v3789
    %v3791 = vpop.f32.mrf.mxu0
    %v3792 = vadd.f32 0.0, %v3791
    %v3793 = vpop.f32.mrf.mxu0
    %v3794 = vadd.f32 0.0, %v3793
    %3795 = vmatprep.mubr.bf16.mxu0 0
    %3796 = vmatmul.mubr.bf16.gmra.mxu0 %v2399
    %v3797 = vpop.f32.mrf.mxu0
    %v3798 = vadd.f32 0.0, %v3797
    %v3799 = vpop.f32.mrf.mxu0
    %v3800 = vadd.f32 0.0, %v3799
    %v3801 = vpop.f32.mrf.mxu0
    %v3802 = vadd.f32 0.0, %v3801
    %v3803 = vpop.f32.mrf.mxu0
    %v3804 = vadd.f32 0.0, %v3803
    %3805 = vmatprep.mubr.bf16.mxu0 0
    %3806 = vmatmul.mubr.bf16.gmra.mxu0 %v2400
    %v3807 = vpop.f32.mrf.mxu0
    %v3808 = vadd.f32 0.0, %v3807
    %v3809 = vpop.f32.mrf.mxu0
    %v3810 = vadd.f32 0.0, %v3809
    %v3811 = vpop.f32.mrf.mxu0
    %v3812 = vadd.f32 0.0, %v3811
    %v3813 = vpop.f32.mrf.mxu0
    %v3814 = vadd.f32 0.0, %v3813
    %3815 = vmatprep.mubr.bf16.mxu0 0
    %3816 = vmatmul.mubr.bf16.gmra.mxu0 %v2401
    %v3817 = vpop.f32.mrf.mxu0
    %v3818 = vadd.f32 0.0, %v3817
    %v3819 = vpop.f32.mrf.mxu0
    %v3820 = vadd.f32 0.0, %v3819
    %v3821 = vpop.f32.mrf.mxu0
    %v3822 = vadd.f32 0.0, %v3821
    %v3823 = vpop.f32.mrf.mxu0
    %v3824 = vadd.f32 0.0, %v3823
    %3825 = vmatprep.mubr.bf16.mxu0 0
    %3826 = vmatmul.mubr.bf16.gmra.mxu0 %v2402
    %v3827 = vpop.f32.mrf.mxu0
    %v3828 = vadd.f32 0.0, %v3827
    %v3829 = vpop.f32.mrf.mxu0
    %v3830 = vadd.f32 0.0, %v3829
    %v3831 = vpop.f32.mrf.mxu0
    %v3832 = vadd.f32 0.0, %v3831
    %v3833 = vpop.f32.mrf.mxu0
    %v3834 = vadd.f32 0.0, %v3833
    %3835 = vmatprep.mubr.bf16.mxu0 0
    %3836 = vmatmul.mubr.bf16.gmra.mxu0 %v2403
    %v3837 = vpop.f32.mrf.mxu0
    %v3838 = vadd.f32 0.0, %v3837
    %v3839 = vpop.f32.mrf.mxu0
    %v3840 = vadd.f32 0.0, %v3839
    %v3841 = vpop.f32.mrf.mxu0
    %v3842 = vadd.f32 0.0, %v3841
    %v3843 = vpop.f32.mrf.mxu0
    %v3844 = vadd.f32 0.0, %v3843
    %3845 = vmatprep.mubr.bf16.mxu0 0
    %3846 = vmatmul.mubr.bf16.gmra.mxu0 %v2404
    %v3847 = vpop.f32.mrf.mxu0
    %v3848 = vadd.f32 0.0, %v3847
    %v3849 = vpop.f32.mrf.mxu0
    %v3850 = vadd.f32 0.0, %v3849
    %v3851 = vpop.f32.mrf.mxu0
    %v3852 = vadd.f32 0.0, %v3851
    %v3853 = vpop.f32.mrf.mxu0
    %v3854 = vadd.f32 0.0, %v3853
    %3855 = vmatprep.mubr.bf16.mxu0 0
    %3856 = vmatmul.mubr.bf16.gmra.mxu0 %v2405
    %v3857 = vpop.f32.mrf.mxu0
    %v3858 = vadd.f32 0.0, %v3857
    %v3859 = vpop.f32.mrf.mxu0
    %v3860 = vadd.f32 0.0, %v3859
    %v3861 = vpop.f32.mrf.mxu0
    %v3862 = vadd.f32 0.0, %v3861
    %v3863 = vpop.f32.mrf.mxu0
    %v3864 = vadd.f32 0.0, %v3863
    %3865 = vmatprep.mubr.bf16.mxu0 0
    %3866 = vmatmul.mubr.bf16.gmra.mxu0 %v2406
    %v3867 = vpop.f32.mrf.mxu0
    %v3868 = vadd.f32 0.0, %v3867
    %v3869 = vpop.f32.mrf.mxu0
    %v3870 = vadd.f32 0.0, %v3869
    %v3871 = vpop.f32.mrf.mxu0
    %v3872 = vadd.f32 0.0, %v3871
    %v3873 = vpop.f32.mrf.mxu0
    %v3874 = vadd.f32 0.0, %v3873
    %3875 = vmatprep.mubr.bf16.mxu0 0
    %3876 = vmatmul.mubr.bf16.gmra.mxu0 %v2407
    %v3877 = vpop.f32.mrf.mxu0
    %v3878 = vadd.f32 0.0, %v3877
    %v3879 = vpop.f32.mrf.mxu0
    %v3880 = vadd.f32 0.0, %v3879
    %v3881 = vpop.f32.mrf.mxu0
    %v3882 = vadd.f32 0.0, %v3881
    %v3883 = vpop.f32.mrf.mxu0
    %v3884 = vadd.f32 0.0, %v3883
    %3885 = vmatprep.mubr.bf16.mxu0 0
    %3886 = vmatmul.mubr.bf16.gmra.mxu0 %v2408
    %v3887 = vpop.f32.mrf.mxu0
    %v3888 = vadd.f32 0.0, %v3887
    %v3889 = vpop.f32.mrf.mxu0
    %v3890 = vadd.f32 0.0, %v3889
    %v3891 = vpop.f32.mrf.mxu0
    %v3892 = vadd.f32 0.0, %v3891
    %v3893 = vpop.f32.mrf.mxu0
    %v3894 = vadd.f32 0.0, %v3893
    %3895 = vmatprep.mubr.bf16.mxu0 0
    %3896 = vmatmul.mubr.bf16.gmra.mxu0 %v2409
    %v3897 = vpop.f32.mrf.mxu0
    %v3898 = vadd.f32 0.0, %v3897
    %v3899 = vpop.f32.mrf.mxu0
    %v3900 = vadd.f32 0.0, %v3899
    %v3901 = vpop.f32.mrf.mxu0
    %v3902 = vadd.f32 0.0, %v3901
    %v3903 = vpop.f32.mrf.mxu0
    %v3904 = vadd.f32 0.0, %v3903
    %3905 = vmatprep.mubr.bf16.mxu0 0
    %3906 = vmatmul.mubr.bf16.gmra.mxu0 %v2410
    %v3907 = vpop.f32.mrf.mxu0
    %v3908 = vadd.f32 0.0, %v3907
    %v3909 = vpop.f32.mrf.mxu0
    %v3910 = vadd.f32 0.0, %v3909
    %v3911 = vpop.f32.mrf.mxu0
    %v3912 = vadd.f32 0.0, %v3911
    %v3913 = vpop.f32.mrf.mxu0
    %v3914 = vadd.f32 0.0, %v3913
    %3915 = vmatprep.mubr.bf16.mxu0 0
    %3916 = vmatmul.mubr.bf16.gmra.mxu0 %v2411
    %v3917 = vpop.f32.mrf.mxu0
    %v3918 = vadd.f32 0.0, %v3917
    %v3919 = vpop.f32.mrf.mxu0
    %v3920 = vadd.f32 0.0, %v3919
    %v3921 = vpop.f32.mrf.mxu0
    %v3922 = vadd.f32 0.0, %v3921
    %v3923 = vpop.f32.mrf.mxu0
    %v3924 = vadd.f32 0.0, %v3923
    %3925 = vmatprep.mubr.bf16.mxu0 0
    %3926 = vmatmul.mubr.bf16.gmra.mxu0 %v2412
    %v3927 = vpop.f32.mrf.mxu0
    %v3928 = vadd.f32 0.0, %v3927
    %v3929 = vpop.f32.mrf.mxu0
    %v3930 = vadd.f32 0.0, %v3929
    %v3931 = vpop.f32.mrf.mxu0
    %v3932 = vadd.f32 0.0, %v3931
    %v3933 = vpop.f32.mrf.mxu0
    %v3934 = vadd.f32 0.0, %v3933
    %3935 = vmatprep.mubr.bf16.mxu0 0
    %3936 = vmatmul.mubr.bf16.gmra.mxu0 %v2413
    %v3937 = vpop.f32.mrf.mxu0
    %v3938 = vadd.f32 0.0, %v3937
    %v3939 = vpop.f32.mrf.mxu0
    %v3940 = vadd.f32 0.0, %v3939
    %v3941 = vpop.f32.mrf.mxu0
    %v3942 = vadd.f32 0.0, %v3941
    %v3943 = vpop.f32.mrf.mxu0
    %v3944 = vadd.f32 0.0, %v3943
    %3945 = vmatprep.mubr.bf16.mxu0 0
    %3946 = vmatmul.mubr.bf16.gmra.mxu0 %v2414
    %v3947 = vpop.f32.mrf.mxu0
    %v3948 = vadd.f32 0.0, %v3947
    %v3949 = vpop.f32.mrf.mxu0
    %v3950 = vadd.f32 0.0, %v3949
    %v3951 = vpop.f32.mrf.mxu0
    %v3952 = vadd.f32 0.0, %v3951
    %v3953 = vpop.f32.mrf.mxu0
    %v3954 = vadd.f32 0.0, %v3953
    %3955 = vmatprep.mubr.bf16.mxu0 0
    %3956 = vmatmul.mubr.bf16.gmra.mxu0 %v2415
    %v3957 = vpop.f32.mrf.mxu0
    %v3958 = vadd.f32 0.0, %v3957
    %v3959 = vpop.f32.mrf.mxu0
    %v3960 = vadd.f32 0.0, %v3959
    %v3961 = vpop.f32.mrf.mxu0
    %v3962 = vadd.f32 0.0, %v3961
    %v3963 = vpop.f32.mrf.mxu0
    %v3964 = vadd.f32 0.0, %v3963
    %3965 = vmatprep.mubr.bf16.mxu0 0
    %3966 = vmatmul.mubr.bf16.gmra.mxu0 %v2416
    %v3967 = vpop.f32.mrf.mxu0
    %v3968 = vadd.f32 0.0, %v3967
    %v3969 = vpop.f32.mrf.mxu0
    %v3970 = vadd.f32 0.0, %v3969
    %v3971 = vpop.f32.mrf.mxu0
    %v3972 = vadd.f32 0.0, %v3971
    %v3973 = vpop.f32.mrf.mxu0
    %v3974 = vadd.f32 0.0, %v3973
    %3975 = vmatprep.mubr.bf16.mxu0 0
    %3976 = vmatmul.mubr.bf16.gmra.mxu0 %v2417
    %v3977 = vpop.f32.mrf.mxu0
    %v3978 = vadd.f32 0.0, %v3977
    %v3979 = vpop.f32.mrf.mxu0
    %v3980 = vadd.f32 0.0, %v3979
    %v3981 = vpop.f32.mrf.mxu0
    %v3982 = vadd.f32 0.0, %v3981
    %v3983 = vpop.f32.mrf.mxu0
    %v3984 = vadd.f32 0.0, %v3983
    %3985 = vmatprep.mubr.bf16.mxu0 0
    %3986 = vmatmul.mubr.bf16.gmra.mxu0 %v2418
    %v3987 = vpop.f32.mrf.mxu0
    %v3988 = vadd.f32 0.0, %v3987
    %v3989 = vpop.f32.mrf.mxu0
    %v3990 = vadd.f32 0.0, %v3989
    %v3991 = vpop.f32.mrf.mxu0
    %v3992 = vadd.f32 0.0, %v3991
    %v3993 = vpop.f32.mrf.mxu0
    %v3994 = vadd.f32 0.0, %v3993
    %3995 = vmatprep.mubr.bf16.mxu0 0
    %3996 = vmatmul.mubr.bf16.gmra.mxu0 %v2419
    %v3997 = vpop.f32.mrf.mxu0
    %v3998 = vadd.f32 0.0, %v3997
    %v3999 = vpop.f32.mrf.mxu0
    %v4000 = vadd.f32 0.0, %v3999
    %v4001 = vpop.f32.mrf.mxu0
    %v4002 = vadd.f32 0.0, %v4001
    %v4003 = vpop.f32.mrf.mxu0
    %v4004 = vadd.f32 0.0, %v4003
    %4005 = vmatprep.mubr.bf16.mxu0 0
    %4006 = vmatmul.mubr.bf16.gmra.mxu0 %v2420
    %v4007 = vpop.f32.mrf.mxu0
    %v4008 = vadd.f32 0.0, %v4007
    %v4009 = vpop.f32.mrf.mxu0
    %v4010 = vadd.f32 0.0, %v4009
    %v4011 = vpop.f32.mrf.mxu0
    %v4012 = vadd.f32 0.0, %v4011
    %v4013 = vpop.f32.mrf.mxu0
    %v4014 = vadd.f32 0.0, %v4013
    %4015 = vmatprep.mubr.bf16.mxu0 0
    %4016 = vmatmul.mubr.bf16.gmra.mxu0 %v2421
    %v4017 = vpop.f32.mrf.mxu0
    %v4018 = vadd.f32 0.0, %v4017
    %v4019 = vpop.f32.mrf.mxu0
    %v4020 = vadd.f32 0.0, %v4019
    %v4021 = vpop.f32.mrf.mxu0
    %v4022 = vadd.f32 0.0, %v4021
    %v4023 = vpop.f32.mrf.mxu0
    %v4024 = vadd.f32 0.0, %v4023
    %4025 = vmatprep.mubr.bf16.mxu0 0
    %4026 = vmatmul.mubr.bf16.gmra.mxu0 %v2422
    %v4027 = vpop.f32.mrf.mxu0
    %v4028 = vadd.f32 0.0, %v4027
    %v4029 = vpop.f32.mrf.mxu0
    %v4030 = vadd.f32 0.0, %v4029
    %v4031 = vpop.f32.mrf.mxu0
    %v4032 = vadd.f32 0.0, %v4031
    %v4033 = vpop.f32.mrf.mxu0
    %v4034 = vadd.f32 0.0, %v4033
    %4035 = vmatprep.mubr.bf16.mxu0 0
    %4036 = vmatmul.mubr.bf16.gmra.mxu0 %v2423
    %v4037 = vpop.f32.mrf.mxu0
    %v4038 = vadd.f32 0.0, %v4037
    %v4039 = vpop.f32.mrf.mxu0
    %v4040 = vadd.f32 0.0, %v4039
    %v4041 = vpop.f32.mrf.mxu0
    %v4042 = vadd.f32 0.0, %v4041
    %v4043 = vpop.f32.mrf.mxu0
    %v4044 = vadd.f32 0.0, %v4043
    %4045 = vmatprep.mubr.bf16.mxu0 0
    %4046 = vmatmul.mubr.bf16.gmra.mxu0 %v2424
    %v4047 = vpop.f32.mrf.mxu0
    %v4048 = vadd.f32 0.0, %v4047
    %v4049 = vpop.f32.mrf.mxu0
    %v4050 = vadd.f32 0.0, %v4049
    %v4051 = vpop.f32.mrf.mxu0
    %v4052 = vadd.f32 0.0, %v4051
    %v4053 = vpop.f32.mrf.mxu0
    %v4054 = vadd.f32 0.0, %v4053
    %4055 = vmatprep.mubr.bf16.mxu0 0
    %4056 = vmatmul.mubr.bf16.gmra.mxu0 %v2425
    %v4057 = vpop.f32.mrf.mxu0
    %v4058 = vadd.f32 0.0, %v4057
    %v4059 = vpop.f32.mrf.mxu0
    %v4060 = vadd.f32 0.0, %v4059
    %v4061 = vpop.f32.mrf.mxu0
    %v4062 = vadd.f32 0.0, %v4061
    %v4063 = vpop.f32.mrf.mxu0
    %v4064 = vadd.f32 0.0, %v4063
    %4065 = vmatprep.mubr.bf16.mxu0 0
    %4066 = vmatmul.mubr.bf16.gmra.mxu0 %v2426
    %v4067 = vpop.f32.mrf.mxu0
    %v4068 = vadd.f32 0.0, %v4067
    %v4069 = vpop.f32.mrf.mxu0
    %v4070 = vadd.f32 0.0, %v4069
    %v4071 = vpop.f32.mrf.mxu0
    %v4072 = vadd.f32 0.0, %v4071
    %v4073 = vpop.f32.mrf.mxu0
    %v4074 = vadd.f32 0.0, %v4073
    %4075 = vmatprep.mubr.bf16.mxu0 0
    %4076 = vmatmul.mubr.bf16.gmra.mxu0 %v2427
    %v4077 = vpop.f32.mrf.mxu0
    %v4078 = vadd.f32 0.0, %v4077
    %v4079 = vpop.f32.mrf.mxu0
    %v4080 = vadd.f32 0.0, %v4079
    %v4081 = vpop.f32.mrf.mxu0
    %v4082 = vadd.f32 0.0, %v4081
    %v4083 = vpop.f32.mrf.mxu0
    %v4084 = vadd.f32 0.0, %v4083
    %4085 = vmatprep.mubr.bf16.mxu0 0
    %4086 = vmatmul.mubr.bf16.gmra.mxu0 %v2428
    %v4087 = vpop.f32.mrf.mxu0
    %v4088 = vadd.f32 0.0, %v4087
    %v4089 = vpop.f32.mrf.mxu0
    %v4090 = vadd.f32 0.0, %v4089
    %v4091 = vpop.f32.mrf.mxu0
    %v4092 = vadd.f32 0.0, %v4091
    %v4093 = vpop.f32.mrf.mxu0
    %v4094 = vadd.f32 0.0, %v4093
    %4095 = vmatprep.mubr.bf16.mxu0 0
    %4096 = vmatmul.mubr.bf16.gmra.mxu0 %v2429
    %v4097 = vpop.f32.mrf.mxu0
    %v4098 = vadd.f32 0.0, %v4097
    %v4099 = vpop.f32.mrf.mxu0
    %v4100 = vadd.f32 0.0, %v4099
    %v4101 = vpop.f32.mrf.mxu0
    %v4102 = vadd.f32 0.0, %v4101
    %v4103 = vpop.f32.mrf.mxu0
    %v4104 = vadd.f32 0.0, %v4103
    %4105 = vmatprep.mubr.bf16.mxu0 0
    %4106 = vmatmul.mubr.bf16.gmra.mxu0 %v2430
    %v4107 = vpop.f32.mrf.mxu0
    %v4108 = vadd.f32 0.0, %v4107
    %v4109 = vpop.f32.mrf.mxu0
    %v4110 = vadd.f32 0.0, %v4109
    %v4111 = vpop.f32.mrf.mxu0
    %v4112 = vadd.f32 0.0, %v4111
    %v4113 = vpop.f32.mrf.mxu0
    %v4114 = vadd.f32 0.0, %v4113
    %4115 = vmatprep.mubr.bf16.mxu0 0
    %4116 = vmatmul.mubr.bf16.gmra.mxu0 %v2431
    %v4117 = vpop.f32.mrf.mxu0
    %v4118 = vadd.f32 0.0, %v4117
    %v4119 = vpop.f32.mrf.mxu0
    %v4120 = vadd.f32 0.0, %v4119
    %v4121 = vpop.f32.mrf.mxu0
    %v4122 = vadd.f32 0.0, %v4121
    %v4123 = vpop.f32.mrf.mxu0
    %v4124 = vadd.f32 0.0, %v4123
    %4125 = vmatprep.mubr.bf16.mxu0 0
    %4126 = vmatmul.mubr.bf16.gmra.mxu0 %v2432
    %v4127 = vpop.f32.mrf.mxu0
    %v4128 = vadd.f32 0.0, %v4127
    %v4129 = vpop.f32.mrf.mxu0
    %v4130 = vadd.f32 0.0, %v4129
    %v4131 = vpop.f32.mrf.mxu0
    %v4132 = vadd.f32 0.0, %v4131
    %v4133 = vpop.f32.mrf.mxu0
    %v4134 = vadd.f32 0.0, %v4133
    %4135 = vmatprep.mubr.bf16.mxu0 0
    %4136 = vmatmul.mubr.bf16.gmra.mxu0 %v2433
    %v4137 = vpop.f32.mrf.mxu0
    %v4138 = vadd.f32 0.0, %v4137
    %v4139 = vpop.f32.mrf.mxu0
    %v4140 = vadd.f32 0.0, %v4139
    %v4141 = vpop.f32.mrf.mxu0
    %v4142 = vadd.f32 0.0, %v4141
    %v4143 = vpop.f32.mrf.mxu0
    %v4144 = vadd.f32 0.0, %v4143
    %4145 = vmatprep.mubr.bf16.mxu0 0
    %4146 = vmatmul.mubr.bf16.gmra.mxu0 %v2434
    %v4147 = vpop.f32.mrf.mxu0
    %v4148 = vadd.f32 0.0, %v4147
    %v4149 = vpop.f32.mrf.mxu0
    %v4150 = vadd.f32 0.0, %v4149
    %v4151 = vpop.f32.mrf.mxu0
    %v4152 = vadd.f32 0.0, %v4151
    %v4153 = vpop.f32.mrf.mxu0
    %v4154 = vadd.f32 0.0, %v4153
    %4155 = vmatprep.mubr.bf16.mxu0 0
    %4156 = vmatmul.mubr.bf16.gmra.mxu0 %v2435
    %v4157 = vpop.f32.mrf.mxu0
    %v4158 = vadd.f32 0.0, %v4157
    %v4159 = vpop.f32.mrf.mxu0
    %v4160 = vadd.f32 0.0, %v4159
    %v4161 = vpop.f32.mrf.mxu0
    %v4162 = vadd.f32 0.0, %v4161
    %v4163 = vpop.f32.mrf.mxu0
    %v4164 = vadd.f32 0.0, %v4163
    %4165 = vdwg.mxu0
    %4166 = vmatprep.subr.bf16.mxu0 %v2753
    %4167 = vmatpush1.bf16.msra.mxu0 %v2752
    %4168 = vmatprep.subr.bf16.mxu0 %v2745
    %4169 = vmatpush1.bf16.msra.mxu0 %v2744
    %4170 = vmatprep.subr.bf16.mxu0 %v2737
    %4171 = vmatpush1.bf16.msra.mxu0 %v2736
    %4172 = vmatprep.subr.bf16.mxu0 %v2729
    %4173 = vmatpush1.bf16.msra.mxu0 %v2728
    %4174 = vmatprep.subr.bf16.mxu0 %v2721
    %4175 = vmatpush1.bf16.msra.mxu0 %v2720
    %4176 = vmatprep.subr.bf16.mxu0 %v2713
    %4177 = vmatpush1.bf16.msra.mxu0 %v2712
    %4178 = vmatprep.subr.bf16.mxu0 %v2705
    %4179 = vmatpush1.bf16.msra.mxu0 %v2704
    %4180 = vmatprep.subr.bf16.mxu0 %v2697
    %4181 = vmatpush1.bf16.msra.mxu0 %v2696
    %4182 = vmatprep.subr.bf16.mxu0 0
    %4183 = vmatpush2.bf16.msra.mxu0 0
    %4184 = vmatprep.subr.bf16.mxu0 0
    %4185 = vmatpush2.bf16.msra.mxu0 0
    %4186 = vmatprep.subr.bf16.mxu0 0
    %4187 = vmatpush2.bf16.msra.mxu0 0
    %4188 = vmatprep.subr.bf16.mxu0 0
    %4189 = vmatpush2.bf16.msra.mxu0 0
    %4190 = vmatprep.subr.bf16.mxu0 0
    %4191 = vmatpush2.bf16.msra.mxu0 0
    %4192 = vmatprep.subr.bf16.mxu0 0
    %4193 = vmatpush2.bf16.msra.mxu0 0
    %4194 = vmatprep.subr.bf16.mxu0 0
    %4195 = vmatpush2.bf16.msra.mxu0 0
    %4196 = vmatprep.subr.bf16.mxu0 0
    %4197 = vmatpush2.bf16.msra.mxu0 0
    %4198 = vmatprep.mubr.bf16.mxu0 0
    %4199 = vmatmul.mubr.bf16.gmra.mxu0 %v2372
    %v4200 = vpop.f32.mrf.mxu0
    %v4201 = vadd.f32 0.0, %v4200
    %v4202 = vpop.f32.mrf.mxu0
    %v4203 = vadd.f32 0.0, %v4202
    %v4204 = vpop.f32.mrf.mxu0
    %v4205 = vadd.f32 0.0, %v4204
    %v4206 = vpop.f32.mrf.mxu0
    %v4207 = vadd.f32 0.0, %v4206
    %4208 = vmatprep.mubr.bf16.mxu0 0
    %4209 = vmatmul.mubr.bf16.gmra.mxu0 %v2373
    %v4210 = vpop.f32.mrf.mxu0
    %v4211 = vadd.f32 0.0, %v4210
    %v4212 = vpop.f32.mrf.mxu0
    %v4213 = vadd.f32 0.0, %v4212
    %v4214 = vpop.f32.mrf.mxu0
    %v4215 = vadd.f32 0.0, %v4214
    %v4216 = vpop.f32.mrf.mxu0
    %v4217 = vadd.f32 0.0, %v4216
    %4218 = vmatprep.mubr.bf16.mxu0 0
    %4219 = vmatmul.mubr.bf16.gmra.mxu0 %v2374
    %v4220 = vpop.f32.mrf.mxu0
    %v4221 = vadd.f32 0.0, %v4220
    %v4222 = vpop.f32.mrf.mxu0
    %v4223 = vadd.f32 0.0, %v4222
    %v4224 = vpop.f32.mrf.mxu0
    %v4225 = vadd.f32 0.0, %v4224
    %v4226 = vpop.f32.mrf.mxu0
    %v4227 = vadd.f32 0.0, %v4226
    %4228 = vmatprep.mubr.bf16.mxu0 0
    %4229 = vmatmul.mubr.bf16.gmra.mxu0 %v2375
    %v4230 = vpop.f32.mrf.mxu0
    %v4231 = vadd.f32 0.0, %v4230
    %v4232 = vpop.f32.mrf.mxu0
    %v4233 = vadd.f32 0.0, %v4232
    %v4234 = vpop.f32.mrf.mxu0
    %v4235 = vadd.f32 0.0, %v4234
    %v4236 = vpop.f32.mrf.mxu0
    %v4237 = vadd.f32 0.0, %v4236
    %4238 = vmatprep.mubr.bf16.mxu0 0
    %4239 = vmatmul.mubr.bf16.gmra.mxu0 %v2376
    %v4240 = vpop.f32.mrf.mxu0
    %v4241 = vadd.f32 0.0, %v4240
    %v4242 = vpop.f32.mrf.mxu0
    %v4243 = vadd.f32 0.0, %v4242
    %v4244 = vpop.f32.mrf.mxu0
    %v4245 = vadd.f32 0.0, %v4244
    %v4246 = vpop.f32.mrf.mxu0
    %v4247 = vadd.f32 0.0, %v4246
    %4248 = vmatprep.mubr.bf16.mxu0 0
    %4249 = vmatmul.mubr.bf16.gmra.mxu0 %v2377
    %v4250 = vpop.f32.mrf.mxu0
    %v4251 = vadd.f32 0.0, %v4250
    %v4252 = vpop.f32.mrf.mxu0
    %v4253 = vadd.f32 0.0, %v4252
    %v4254 = vpop.f32.mrf.mxu0
    %v4255 = vadd.f32 0.0, %v4254
    %v4256 = vpop.f32.mrf.mxu0
    %v4257 = vadd.f32 0.0, %v4256
    %4258 = vmatprep.mubr.bf16.mxu0 0
    %4259 = vmatmul.mubr.bf16.gmra.mxu0 %v2378
    %v4260 = vpop.f32.mrf.mxu0
    %v4261 = vadd.f32 0.0, %v4260
    %v4262 = vpop.f32.mrf.mxu0
    %v4263 = vadd.f32 0.0, %v4262
    %v4264 = vpop.f32.mrf.mxu0
    %v4265 = vadd.f32 0.0, %v4264
    %v4266 = vpop.f32.mrf.mxu0
    %v4267 = vadd.f32 0.0, %v4266
    %4268 = vmatprep.mubr.bf16.mxu0 0
    %4269 = vmatmul.mubr.bf16.gmra.mxu0 %v2379
    %v4270 = vpop.f32.mrf.mxu0
    %v4271 = vadd.f32 0.0, %v4270
    %v4272 = vpop.f32.mrf.mxu0
    %v4273 = vadd.f32 0.0, %v4272
    %v4274 = vpop.f32.mrf.mxu0
    %v4275 = vadd.f32 0.0, %v4274
    %v4276 = vpop.f32.mrf.mxu0
    %v4277 = vadd.f32 0.0, %v4276
    %4278 = vmatprep.mubr.bf16.mxu0 0
    %4279 = vmatmul.mubr.bf16.gmra.mxu0 %v2380
    %v4280 = vpop.f32.mrf.mxu0
    %v4281 = vadd.f32 0.0, %v4280
    %v4282 = vpop.f32.mrf.mxu0
    %v4283 = vadd.f32 0.0, %v4282
    %v4284 = vpop.f32.mrf.mxu0
    %v4285 = vadd.f32 0.0, %v4284
    %v4286 = vpop.f32.mrf.mxu0
    %v4287 = vadd.f32 0.0, %v4286
    %4288 = vmatprep.mubr.bf16.mxu0 0
    %4289 = vmatmul.mubr.bf16.gmra.mxu0 %v2381
    %v4290 = vpop.f32.mrf.mxu0
    %v4291 = vadd.f32 0.0, %v4290
    %v4292 = vpop.f32.mrf.mxu0
    %v4293 = vadd.f32 0.0, %v4292
    %v4294 = vpop.f32.mrf.mxu0
    %v4295 = vadd.f32 0.0, %v4294
    %v4296 = vpop.f32.mrf.mxu0
    %v4297 = vadd.f32 0.0, %v4296
    %4298 = vmatprep.mubr.bf16.mxu0 0
    %4299 = vmatmul.mubr.bf16.gmra.mxu0 %v2382
    %v4300 = vpop.f32.mrf.mxu0
    %v4301 = vadd.f32 0.0, %v4300
    %v4302 = vpop.f32.mrf.mxu0
    %v4303 = vadd.f32 0.0, %v4302
    %v4304 = vpop.f32.mrf.mxu0
    %v4305 = vadd.f32 0.0, %v4304
    %v4306 = vpop.f32.mrf.mxu0
    %v4307 = vadd.f32 0.0, %v4306
    %4308 = vmatprep.mubr.bf16.mxu0 0
    %4309 = vmatmul.mubr.bf16.gmra.mxu0 %v2383
    %v4310 = vpop.f32.mrf.mxu0
    %v4311 = vadd.f32 0.0, %v4310
    %v4312 = vpop.f32.mrf.mxu0
    %v4313 = vadd.f32 0.0, %v4312
    %v4314 = vpop.f32.mrf.mxu0
    %v4315 = vadd.f32 0.0, %v4314
    %v4316 = vpop.f32.mrf.mxu0
    %v4317 = vadd.f32 0.0, %v4316
    %4318 = vmatprep.mubr.bf16.mxu0 0
    %4319 = vmatmul.mubr.bf16.gmra.mxu0 %v2384
    %v4320 = vpop.f32.mrf.mxu0
    %v4321 = vadd.f32 0.0, %v4320
    %v4322 = vpop.f32.mrf.mxu0
    %v4323 = vadd.f32 0.0, %v4322
    %v4324 = vpop.f32.mrf.mxu0
    %v4325 = vadd.f32 0.0, %v4324
    %v4326 = vpop.f32.mrf.mxu0
    %v4327 = vadd.f32 0.0, %v4326
    %4328 = vmatprep.mubr.bf16.mxu0 0
    %4329 = vmatmul.mubr.bf16.gmra.mxu0 %v2385
    %v4330 = vpop.f32.mrf.mxu0
    %v4331 = vadd.f32 0.0, %v4330
    %v4332 = vpop.f32.mrf.mxu0
    %v4333 = vadd.f32 0.0, %v4332
    %v4334 = vpop.f32.mrf.mxu0
    %v4335 = vadd.f32 0.0, %v4334
    %v4336 = vpop.f32.mrf.mxu0
    %v4337 = vadd.f32 0.0, %v4336
    %4338 = vmatprep.mubr.bf16.mxu0 0
    %4339 = vmatmul.mubr.bf16.gmra.mxu0 %v2386
    %v4340 = vpop.f32.mrf.mxu0
    %v4341 = vadd.f32 0.0, %v4340
    %v4342 = vpop.f32.mrf.mxu0
    %v4343 = vadd.f32 0.0, %v4342
    %v4344 = vpop.f32.mrf.mxu0
    %v4345 = vadd.f32 0.0, %v4344
    %v4346 = vpop.f32.mrf.mxu0
    %v4347 = vadd.f32 0.0, %v4346
    %4348 = vmatprep.mubr.bf16.mxu0 0
    %4349 = vmatmul.mubr.bf16.gmra.mxu0 %v2387
    %v4350 = vpop.f32.mrf.mxu0
    %v4351 = vadd.f32 0.0, %v4350
    %v4352 = vpop.f32.mrf.mxu0
    %v4353 = vadd.f32 0.0, %v4352
    %v4354 = vpop.f32.mrf.mxu0
    %v4355 = vadd.f32 0.0, %v4354
    %v4356 = vpop.f32.mrf.mxu0
    %v4357 = vadd.f32 0.0, %v4356
    %4358 = vmatprep.mubr.bf16.mxu0 0
    %4359 = vmatmul.mubr.bf16.gmra.mxu0 %v2388
    %v4360 = vpop.f32.mrf.mxu0
    %v4361 = vadd.f32 0.0, %v4360
    %v4362 = vpop.f32.mrf.mxu0
    %v4363 = vadd.f32 0.0, %v4362
    %v4364 = vpop.f32.mrf.mxu0
    %v4365 = vadd.f32 0.0, %v4364
    %v4366 = vpop.f32.mrf.mxu0
    %v4367 = vadd.f32 0.0, %v4366
    %4368 = vmatprep.mubr.bf16.mxu0 0
    %4369 = vmatmul.mubr.bf16.gmra.mxu0 %v2389
    %v4370 = vpop.f32.mrf.mxu0
    %v4371 = vadd.f32 0.0, %v4370
    %v4372 = vpop.f32.mrf.mxu0
    %v4373 = vadd.f32 0.0, %v4372
    %v4374 = vpop.f32.mrf.mxu0
    %v4375 = vadd.f32 0.0, %v4374
    %v4376 = vpop.f32.mrf.mxu0
    %v4377 = vadd.f32 0.0, %v4376
    %4378 = vmatprep.mubr.bf16.mxu0 0
    %4379 = vmatmul.mubr.bf16.gmra.mxu0 %v2390
    %v4380 = vpop.f32.mrf.mxu0
    %v4381 = vadd.f32 0.0, %v4380
    %v4382 = vpop.f32.mrf.mxu0
    %v4383 = vadd.f32 0.0, %v4382
    %v4384 = vpop.f32.mrf.mxu0
    %v4385 = vadd.f32 0.0, %v4384
    %v4386 = vpop.f32.mrf.mxu0
    %v4387 = vadd.f32 0.0, %v4386
    %4388 = vmatprep.mubr.bf16.mxu0 0
    %4389 = vmatmul.mubr.bf16.gmra.mxu0 %v2391
    %v4390 = vpop.f32.mrf.mxu0
    %v4391 = vadd.f32 0.0, %v4390
    %v4392 = vpop.f32.mrf.mxu0
    %v4393 = vadd.f32 0.0, %v4392
    %v4394 = vpop.f32.mrf.mxu0
    %v4395 = vadd.f32 0.0, %v4394
    %v4396 = vpop.f32.mrf.mxu0
    %v4397 = vadd.f32 0.0, %v4396
    %4398 = vmatprep.mubr.bf16.mxu0 0
    %4399 = vmatmul.mubr.bf16.gmra.mxu0 %v2392
    %v4400 = vpop.f32.mrf.mxu0
    %v4401 = vadd.f32 0.0, %v4400
    %v4402 = vpop.f32.mrf.mxu0
    %v4403 = vadd.f32 0.0, %v4402
    %v4404 = vpop.f32.mrf.mxu0
    %v4405 = vadd.f32 0.0, %v4404
    %v4406 = vpop.f32.mrf.mxu0
    %v4407 = vadd.f32 0.0, %v4406
    %4408 = vmatprep.mubr.bf16.mxu0 0
    %4409 = vmatmul.mubr.bf16.gmra.mxu0 %v2393
    %v4410 = vpop.f32.mrf.mxu0
    %v4411 = vadd.f32 0.0, %v4410
    %v4412 = vpop.f32.mrf.mxu0
    %v4413 = vadd.f32 0.0, %v4412
    %v4414 = vpop.f32.mrf.mxu0
    %v4415 = vadd.f32 0.0, %v4414
    %v4416 = vpop.f32.mrf.mxu0
    %v4417 = vadd.f32 0.0, %v4416
    %4418 = vmatprep.mubr.bf16.mxu0 0
    %4419 = vmatmul.mubr.bf16.gmra.mxu0 %v2394
    %v4420 = vpop.f32.mrf.mxu0
    %v4421 = vadd.f32 0.0, %v4420
    %v4422 = vpop.f32.mrf.mxu0
    %v4423 = vadd.f32 0.0, %v4422
    %v4424 = vpop.f32.mrf.mxu0
    %v4425 = vadd.f32 0.0, %v4424
    %v4426 = vpop.f32.mrf.mxu0
    %v4427 = vadd.f32 0.0, %v4426
    %4428 = vmatprep.mubr.bf16.mxu0 0
    %4429 = vmatmul.mubr.bf16.gmra.mxu0 %v2395
    %v4430 = vpop.f32.mrf.mxu0
    %v4431 = vadd.f32 0.0, %v4430
    %v4432 = vpop.f32.mrf.mxu0
    %v4433 = vadd.f32 0.0, %v4432
    %v4434 = vpop.f32.mrf.mxu0
    %v4435 = vadd.f32 0.0, %v4434
    %v4436 = vpop.f32.mrf.mxu0
    %v4437 = vadd.f32 0.0, %v4436
    %4438 = vmatprep.mubr.bf16.mxu0 0
    %4439 = vmatmul.mubr.bf16.gmra.mxu0 %v2396
    %v4440 = vpop.f32.mrf.mxu0
    %v4441 = vadd.f32 0.0, %v4440
    %v4442 = vpop.f32.mrf.mxu0
    %v4443 = vadd.f32 0.0, %v4442
    %v4444 = vpop.f32.mrf.mxu0
    %v4445 = vadd.f32 0.0, %v4444
    %v4446 = vpop.f32.mrf.mxu0
    %v4447 = vadd.f32 0.0, %v4446
    %4448 = vmatprep.mubr.bf16.mxu0 0
    %4449 = vmatmul.mubr.bf16.gmra.mxu0 %v2397
    %v4450 = vpop.f32.mrf.mxu0
    %v4451 = vadd.f32 0.0, %v4450
    %v4452 = vpop.f32.mrf.mxu0
    %v4453 = vadd.f32 0.0, %v4452
    %v4454 = vpop.f32.mrf.mxu0
    %v4455 = vadd.f32 0.0, %v4454
    %v4456 = vpop.f32.mrf.mxu0
    %v4457 = vadd.f32 0.0, %v4456
    %4458 = vmatprep.mubr.bf16.mxu0 0
    %4459 = vmatmul.mubr.bf16.gmra.mxu0 %v2398
    %v4460 = vpop.f32.mrf.mxu0
    %v4461 = vadd.f32 0.0, %v4460
    %v4462 = vpop.f32.mrf.mxu0
    %v4463 = vadd.f32 0.0, %v4462
    %v4464 = vpop.f32.mrf.mxu0
    %v4465 = vadd.f32 0.0, %v4464
    %v4466 = vpop.f32.mrf.mxu0
    %v4467 = vadd.f32 0.0, %v4466
    %4468 = vmatprep.mubr.bf16.mxu0 0
    %4469 = vmatmul.mubr.bf16.gmra.mxu0 %v2399
    %v4470 = vpop.f32.mrf.mxu0
    %v4471 = vadd.f32 0.0, %v4470
    %v4472 = vpop.f32.mrf.mxu0
    %v4473 = vadd.f32 0.0, %v4472
    %v4474 = vpop.f32.mrf.mxu0
    %v4475 = vadd.f32 0.0, %v4474
    %v4476 = vpop.f32.mrf.mxu0
    %v4477 = vadd.f32 0.0, %v4476
    %4478 = vmatprep.mubr.bf16.mxu0 0
    %4479 = vmatmul.mubr.bf16.gmra.mxu0 %v2400
    %v4480 = vpop.f32.mrf.mxu0
    %v4481 = vadd.f32 0.0, %v4480
    %v4482 = vpop.f32.mrf.mxu0
    %v4483 = vadd.f32 0.0, %v4482
    %v4484 = vpop.f32.mrf.mxu0
    %v4485 = vadd.f32 0.0, %v4484
    %v4486 = vpop.f32.mrf.mxu0
    %v4487 = vadd.f32 0.0, %v4486
    %4488 = vmatprep.mubr.bf16.mxu0 0
    %4489 = vmatmul.mubr.bf16.gmra.mxu0 %v2401
    %v4490 = vpop.f32.mrf.mxu0
    %v4491 = vadd.f32 0.0, %v4490
    %v4492 = vpop.f32.mrf.mxu0
    %v4493 = vadd.f32 0.0, %v4492
    %v4494 = vpop.f32.mrf.mxu0
    %v4495 = vadd.f32 0.0, %v4494
    %v4496 = vpop.f32.mrf.mxu0
    %v4497 = vadd.f32 0.0, %v4496
    %4498 = vmatprep.mubr.bf16.mxu0 0
    %4499 = vmatmul.mubr.bf16.gmra.mxu0 %v2402
    %v4500 = vpop.f32.mrf.mxu0
    %v4501 = vadd.f32 0.0, %v4500
    %v4502 = vpop.f32.mrf.mxu0
    %v4503 = vadd.f32 0.0, %v4502
    %v4504 = vpop.f32.mrf.mxu0
    %v4505 = vadd.f32 0.0, %v4504
    %v4506 = vpop.f32.mrf.mxu0
    %v4507 = vadd.f32 0.0, %v4506
    %4508 = vmatprep.mubr.bf16.mxu0 0
    %4509 = vmatmul.mubr.bf16.gmra.mxu0 %v2403
    %v4510 = vpop.f32.mrf.mxu0
    %v4511 = vadd.f32 0.0, %v4510
    %v4512 = vpop.f32.mrf.mxu0
    %v4513 = vadd.f32 0.0, %v4512
    %v4514 = vpop.f32.mrf.mxu0
    %v4515 = vadd.f32 0.0, %v4514
    %v4516 = vpop.f32.mrf.mxu0
    %v4517 = vadd.f32 0.0, %v4516
    %4518 = vmatprep.mubr.bf16.mxu0 0
    %4519 = vmatmul.mubr.bf16.gmra.mxu0 %v2404
    %v4520 = vpop.f32.mrf.mxu0
    %v4521 = vadd.f32 0.0, %v4520
    %v4522 = vpop.f32.mrf.mxu0
    %v4523 = vadd.f32 0.0, %v4522
    %v4524 = vpop.f32.mrf.mxu0
    %v4525 = vadd.f32 0.0, %v4524
    %v4526 = vpop.f32.mrf.mxu0
    %v4527 = vadd.f32 0.0, %v4526
    %4528 = vmatprep.mubr.bf16.mxu0 0
    %4529 = vmatmul.mubr.bf16.gmra.mxu0 %v2405
    %v4530 = vpop.f32.mrf.mxu0
    %v4531 = vadd.f32 0.0, %v4530
    %v4532 = vpop.f32.mrf.mxu0
    %v4533 = vadd.f32 0.0, %v4532
    %v4534 = vpop.f32.mrf.mxu0
    %v4535 = vadd.f32 0.0, %v4534
    %v4536 = vpop.f32.mrf.mxu0
    %v4537 = vadd.f32 0.0, %v4536
    %4538 = vmatprep.mubr.bf16.mxu0 0
    %4539 = vmatmul.mubr.bf16.gmra.mxu0 %v2406
    %v4540 = vpop.f32.mrf.mxu0
    %v4541 = vadd.f32 0.0, %v4540
    %v4542 = vpop.f32.mrf.mxu0
    %v4543 = vadd.f32 0.0, %v4542
    %v4544 = vpop.f32.mrf.mxu0
    %v4545 = vadd.f32 0.0, %v4544
    %v4546 = vpop.f32.mrf.mxu0
    %v4547 = vadd.f32 0.0, %v4546
    %4548 = vmatprep.mubr.bf16.mxu0 0
    %4549 = vmatmul.mubr.bf16.gmra.mxu0 %v2407
    %v4550 = vpop.f32.mrf.mxu0
    %v4551 = vadd.f32 0.0, %v4550
    %v4552 = vpop.f32.mrf.mxu0
    %v4553 = vadd.f32 0.0, %v4552
    %v4554 = vpop.f32.mrf.mxu0
    %v4555 = vadd.f32 0.0, %v4554
    %v4556 = vpop.f32.mrf.mxu0
    %v4557 = vadd.f32 0.0, %v4556
    %4558 = vmatprep.mubr.bf16.mxu0 0
    %4559 = vmatmul.mubr.bf16.gmra.mxu0 %v2408
    %v4560 = vpop.f32.mrf.mxu0
    %v4561 = vadd.f32 0.0, %v4560
    %v4562 = vpop.f32.mrf.mxu0
    %v4563 = vadd.f32 0.0, %v4562
    %v4564 = vpop.f32.mrf.mxu0
    %v4565 = vadd.f32 0.0, %v4564
    %v4566 = vpop.f32.mrf.mxu0
    %v4567 = vadd.f32 0.0, %v4566
    %4568 = vmatprep.mubr.bf16.mxu0 0
    %4569 = vmatmul.mubr.bf16.gmra.mxu0 %v2409
    %v4570 = vpop.f32.mrf.mxu0
    %v4571 = vadd.f32 0.0, %v4570
    %v4572 = vpop.f32.mrf.mxu0
    %v4573 = vadd.f32 0.0, %v4572
    %v4574 = vpop.f32.mrf.mxu0
    %v4575 = vadd.f32 0.0, %v4574
    %v4576 = vpop.f32.mrf.mxu0
    %v4577 = vadd.f32 0.0, %v4576
    %4578 = vmatprep.mubr.bf16.mxu0 0
    %4579 = vmatmul.mubr.bf16.gmra.mxu0 %v2410
    %v4580 = vpop.f32.mrf.mxu0
    %v4581 = vadd.f32 0.0, %v4580
    %v4582 = vpop.f32.mrf.mxu0
    %v4583 = vadd.f32 0.0, %v4582
    %v4584 = vpop.f32.mrf.mxu0
    %v4585 = vadd.f32 0.0, %v4584
    %v4586 = vpop.f32.mrf.mxu0
    %v4587 = vadd.f32 0.0, %v4586
    %4588 = vmatprep.mubr.bf16.mxu0 0
    %4589 = vmatmul.mubr.bf16.gmra.mxu0 %v2411
    %v4590 = vpop.f32.mrf.mxu0
    %v4591 = vadd.f32 0.0, %v4590
    %v4592 = vpop.f32.mrf.mxu0
    %v4593 = vadd.f32 0.0, %v4592
    %v4594 = vpop.f32.mrf.mxu0
    %v4595 = vadd.f32 0.0, %v4594
    %v4596 = vpop.f32.mrf.mxu0
    %v4597 = vadd.f32 0.0, %v4596
    %4598 = vmatprep.mubr.bf16.mxu0 0
    %4599 = vmatmul.mubr.bf16.gmra.mxu0 %v2412
    %v4600 = vpop.f32.mrf.mxu0
    %v4601 = vadd.f32 0.0, %v4600
    %v4602 = vpop.f32.mrf.mxu0
    %v4603 = vadd.f32 0.0, %v4602
    %v4604 = vpop.f32.mrf.mxu0
    %v4605 = vadd.f32 0.0, %v4604
    %v4606 = vpop.f32.mrf.mxu0
    %v4607 = vadd.f32 0.0, %v4606
    %4608 = vmatprep.mubr.bf16.mxu0 0
    %4609 = vmatmul.mubr.bf16.gmra.mxu0 %v2413
    %v4610 = vpop.f32.mrf.mxu0
    %v4611 = vadd.f32 0.0, %v4610
    %v4612 = vpop.f32.mrf.mxu0
    %v4613 = vadd.f32 0.0, %v4612
    %v4614 = vpop.f32.mrf.mxu0
    %v4615 = vadd.f32 0.0, %v4614
    %v4616 = vpop.f32.mrf.mxu0
    %v4617 = vadd.f32 0.0, %v4616
    %4618 = vmatprep.mubr.bf16.mxu0 0
    %4619 = vmatmul.mubr.bf16.gmra.mxu0 %v2414
    %v4620 = vpop.f32.mrf.mxu0
    %v4621 = vadd.f32 0.0, %v4620
    %v4622 = vpop.f32.mrf.mxu0
    %v4623 = vadd.f32 0.0, %v4622
    %v4624 = vpop.f32.mrf.mxu0
    %v4625 = vadd.f32 0.0, %v4624
    %v4626 = vpop.f32.mrf.mxu0
    %v4627 = vadd.f32 0.0, %v4626
    %4628 = vmatprep.mubr.bf16.mxu0 0
    %4629 = vmatmul.mubr.bf16.gmra.mxu0 %v2415
    %v4630 = vpop.f32.mrf.mxu0
    %v4631 = vadd.f32 0.0, %v4630
    %v4632 = vpop.f32.mrf.mxu0
    %v4633 = vadd.f32 0.0, %v4632
    %v4634 = vpop.f32.mrf.mxu0
    %v4635 = vadd.f32 0.0, %v4634
    %v4636 = vpop.f32.mrf.mxu0
    %v4637 = vadd.f32 0.0, %v4636
    %4638 = vmatprep.mubr.bf16.mxu0 0
    %4639 = vmatmul.mubr.bf16.gmra.mxu0 %v2416
    %v4640 = vpop.f32.mrf.mxu0
    %v4641 = vadd.f32 0.0, %v4640
    %v4642 = vpop.f32.mrf.mxu0
    %v4643 = vadd.f32 0.0, %v4642
    %v4644 = vpop.f32.mrf.mxu0
    %v4645 = vadd.f32 0.0, %v4644
    %v4646 = vpop.f32.mrf.mxu0
    %v4647 = vadd.f32 0.0, %v4646
    %4648 = vmatprep.mubr.bf16.mxu0 0
    %4649 = vmatmul.mubr.bf16.gmra.mxu0 %v2417
    %v4650 = vpop.f32.mrf.mxu0
    %v4651 = vadd.f32 0.0, %v4650
    %v4652 = vpop.f32.mrf.mxu0
    %v4653 = vadd.f32 0.0, %v4652
    %v4654 = vpop.f32.mrf.mxu0
    %v4655 = vadd.f32 0.0, %v4654
    %v4656 = vpop.f32.mrf.mxu0
    %v4657 = vadd.f32 0.0, %v4656
    %4658 = vmatprep.mubr.bf16.mxu0 0
    %4659 = vmatmul.mubr.bf16.gmra.mxu0 %v2418
    %v4660 = vpop.f32.mrf.mxu0
    %v4661 = vadd.f32 0.0, %v4660
    %v4662 = vpop.f32.mrf.mxu0
    %v4663 = vadd.f32 0.0, %v4662
    %v4664 = vpop.f32.mrf.mxu0
    %v4665 = vadd.f32 0.0, %v4664
    %v4666 = vpop.f32.mrf.mxu0
    %v4667 = vadd.f32 0.0, %v4666
    %4668 = vmatprep.mubr.bf16.mxu0 0
    %4669 = vmatmul.mubr.bf16.gmra.mxu0 %v2419
    %v4670 = vpop.f32.mrf.mxu0
    %v4671 = vadd.f32 0.0, %v4670
    %v4672 = vpop.f32.mrf.mxu0
    %v4673 = vadd.f32 0.0, %v4672
    %v4674 = vpop.f32.mrf.mxu0
    %v4675 = vadd.f32 0.0, %v4674
    %v4676 = vpop.f32.mrf.mxu0
    %v4677 = vadd.f32 0.0, %v4676
    %4678 = vmatprep.mubr.bf16.mxu0 0
    %4679 = vmatmul.mubr.bf16.gmra.mxu0 %v2420
    %v4680 = vpop.f32.mrf.mxu0
    %v4681 = vadd.f32 0.0, %v4680
    %v4682 = vpop.f32.mrf.mxu0
    %v4683 = vadd.f32 0.0, %v4682
    %v4684 = vpop.f32.mrf.mxu0
    %v4685 = vadd.f32 0.0, %v4684
    %v4686 = vpop.f32.mrf.mxu0
    %v4687 = vadd.f32 0.0, %v4686
    %4688 = vmatprep.mubr.bf16.mxu0 0
    %4689 = vmatmul.mubr.bf16.gmra.mxu0 %v2421
    %v4690 = vpop.f32.mrf.mxu0
    %v4691 = vadd.f32 0.0, %v4690
    %v4692 = vpop.f32.mrf.mxu0
    %v4693 = vadd.f32 0.0, %v4692
    %v4694 = vpop.f32.mrf.mxu0
    %v4695 = vadd.f32 0.0, %v4694
    %v4696 = vpop.f32.mrf.mxu0
    %v4697 = vadd.f32 0.0, %v4696
    %4698 = vmatprep.mubr.bf16.mxu0 0
    %4699 = vmatmul.mubr.bf16.gmra.mxu0 %v2422
    %v4700 = vpop.f32.mrf.mxu0
    %v4701 = vadd.f32 0.0, %v4700
    %v4702 = vpop.f32.mrf.mxu0
    %v4703 = vadd.f32 0.0, %v4702
    %v4704 = vpop.f32.mrf.mxu0
    %v4705 = vadd.f32 0.0, %v4704
    %v4706 = vpop.f32.mrf.mxu0
    %v4707 = vadd.f32 0.0, %v4706
    %4708 = vmatprep.mubr.bf16.mxu0 0
    %4709 = vmatmul.mubr.bf16.gmra.mxu0 %v2423
    %v4710 = vpop.f32.mrf.mxu0
    %v4711 = vadd.f32 0.0, %v4710
    %v4712 = vpop.f32.mrf.mxu0
    %v4713 = vadd.f32 0.0, %v4712
    %v4714 = vpop.f32.mrf.mxu0
    %v4715 = vadd.f32 0.0, %v4714
    %v4716 = vpop.f32.mrf.mxu0
    %v4717 = vadd.f32 0.0, %v4716
    %4718 = vmatprep.mubr.bf16.mxu0 0
    %4719 = vmatmul.mubr.bf16.gmra.mxu0 %v2424
    %v4720 = vpop.f32.mrf.mxu0
    %v4721 = vadd.f32 0.0, %v4720
    %v4722 = vpop.f32.mrf.mxu0
    %v4723 = vadd.f32 0.0, %v4722
    %v4724 = vpop.f32.mrf.mxu0
    %v4725 = vadd.f32 0.0, %v4724
    %v4726 = vpop.f32.mrf.mxu0
    %v4727 = vadd.f32 0.0, %v4726
    %4728 = vmatprep.mubr.bf16.mxu0 0
    %4729 = vmatmul.mubr.bf16.gmra.mxu0 %v2425
    %v4730 = vpop.f32.mrf.mxu0
    %v4731 = vadd.f32 0.0, %v4730
    %v4732 = vpop.f32.mrf.mxu0
    %v4733 = vadd.f32 0.0, %v4732
    %v4734 = vpop.f32.mrf.mxu0
    %v4735 = vadd.f32 0.0, %v4734
    %v4736 = vpop.f32.mrf.mxu0
    %v4737 = vadd.f32 0.0, %v4736
    %4738 = vmatprep.mubr.bf16.mxu0 0
    %4739 = vmatmul.mubr.bf16.gmra.mxu0 %v2426
    %v4740 = vpop.f32.mrf.mxu0
    %v4741 = vadd.f32 0.0, %v4740
    %v4742 = vpop.f32.mrf.mxu0
    %v4743 = vadd.f32 0.0, %v4742
    %v4744 = vpop.f32.mrf.mxu0
    %v4745 = vadd.f32 0.0, %v4744
    %v4746 = vpop.f32.mrf.mxu0
    %v4747 = vadd.f32 0.0, %v4746
    %4748 = vmatprep.mubr.bf16.mxu0 0
    %4749 = vmatmul.mubr.bf16.gmra.mxu0 %v2427
    %v4750 = vpop.f32.mrf.mxu0
    %v4751 = vadd.f32 0.0, %v4750
    %v4752 = vpop.f32.mrf.mxu0
    %v4753 = vadd.f32 0.0, %v4752
    %v4754 = vpop.f32.mrf.mxu0
    %v4755 = vadd.f32 0.0, %v4754
    %v4756 = vpop.f32.mrf.mxu0
    %v4757 = vadd.f32 0.0, %v4756
    %4758 = vmatprep.mubr.bf16.mxu0 0
    %4759 = vmatmul.mubr.bf16.gmra.mxu0 %v2428
    %v4760 = vpop.f32.mrf.mxu0
    %v4761 = vadd.f32 0.0, %v4760
    %v4762 = vpop.f32.mrf.mxu0
    %v4763 = vadd.f32 0.0, %v4762
    %v4764 = vpop.f32.mrf.mxu0
    %v4765 = vadd.f32 0.0, %v4764
    %v4766 = vpop.f32.mrf.mxu0
    %v4767 = vadd.f32 0.0, %v4766
    %4768 = vmatprep.mubr.bf16.mxu0 0
    %4769 = vmatmul.mubr.bf16.gmra.mxu0 %v2429
    %v4770 = vpop.f32.mrf.mxu0
    %v4771 = vadd.f32 0.0, %v4770
    %v4772 = vpop.f32.mrf.mxu0
    %v4773 = vadd.f32 0.0, %v4772
    %v4774 = vpop.f32.mrf.mxu0
    %v4775 = vadd.f32 0.0, %v4774
    %v4776 = vpop.f32.mrf.mxu0
    %v4777 = vadd.f32 0.0, %v4776
    %4778 = vmatprep.mubr.bf16.mxu0 0
    %4779 = vmatmul.mubr.bf16.gmra.mxu0 %v2430
    %v4780 = vpop.f32.mrf.mxu0
    %v4781 = vadd.f32 0.0, %v4780
    %v4782 = vpop.f32.mrf.mxu0
    %v4783 = vadd.f32 0.0, %v4782
    %v4784 = vpop.f32.mrf.mxu0
    %v4785 = vadd.f32 0.0, %v4784
    %v4786 = vpop.f32.mrf.mxu0
    %v4787 = vadd.f32 0.0, %v4786
    %4788 = vmatprep.mubr.bf16.mxu0 0
    %4789 = vmatmul.mubr.bf16.gmra.mxu0 %v2431
    %v4790 = vpop.f32.mrf.mxu0
    %v4791 = vadd.f32 0.0, %v4790
    %v4792 = vpop.f32.mrf.mxu0
    %v4793 = vadd.f32 0.0, %v4792
    %v4794 = vpop.f32.mrf.mxu0
    %v4795 = vadd.f32 0.0, %v4794
    %v4796 = vpop.f32.mrf.mxu0
    %v4797 = vadd.f32 0.0, %v4796
    %4798 = vmatprep.mubr.bf16.mxu0 0
    %4799 = vmatmul.mubr.bf16.gmra.mxu0 %v2432
    %v4800 = vpop.f32.mrf.mxu0
    %v4801 = vadd.f32 0.0, %v4800
    %v4802 = vpop.f32.mrf.mxu0
    %v4803 = vadd.f32 0.0, %v4802
    %v4804 = vpop.f32.mrf.mxu0
    %v4805 = vadd.f32 0.0, %v4804
    %v4806 = vpop.f32.mrf.mxu0
    %v4807 = vadd.f32 0.0, %v4806
    %4808 = vmatprep.mubr.bf16.mxu0 0
    %4809 = vmatmul.mubr.bf16.gmra.mxu0 %v2433
    %v4810 = vpop.f32.mrf.mxu0
    %v4811 = vadd.f32 0.0, %v4810
    %v4812 = vpop.f32.mrf.mxu0
    %v4813 = vadd.f32 0.0, %v4812
    %v4814 = vpop.f32.mrf.mxu0
    %v4815 = vadd.f32 0.0, %v4814
    %v4816 = vpop.f32.mrf.mxu0
    %v4817 = vadd.f32 0.0, %v4816
    %4818 = vmatprep.mubr.bf16.mxu0 0
    %4819 = vmatmul.mubr.bf16.gmra.mxu0 %v2434
    %v4820 = vpop.f32.mrf.mxu0
    %v4821 = vadd.f32 0.0, %v4820
    %v4822 = vpop.f32.mrf.mxu0
    %v4823 = vadd.f32 0.0, %v4822
    %v4824 = vpop.f32.mrf.mxu0
    %v4825 = vadd.f32 0.0, %v4824
    %v4826 = vpop.f32.mrf.mxu0
    %v4827 = vadd.f32 0.0, %v4826
    %4828 = vmatprep.mubr.bf16.mxu0 0
    %4829 = vmatmul.mubr.bf16.gmra.mxu0 %v2435
    %v4830 = vpop.f32.mrf.mxu0
    %v4831 = vadd.f32 0.0, %v4830
    %v4832 = vpop.f32.mrf.mxu0
    %v4833 = vadd.f32 0.0, %v4832
    %v4834 = vpop.f32.mrf.mxu0
    %v4835 = vadd.f32 0.0, %v4834
    %v4836 = vpop.f32.mrf.mxu0
    %v4837 = vadd.f32 0.0, %v4836
    %4838 = vdwg.mxu0
    %4839 = vmatprep.subr.bf16.mxu0 %v2755
    %4840 = vmatpush1.bf16.msra.mxu0 %v2754
    %4841 = vmatprep.subr.bf16.mxu0 %v2747
    %4842 = vmatpush1.bf16.msra.mxu0 %v2746
    %4843 = vmatprep.subr.bf16.mxu0 %v2739
    %4844 = vmatpush1.bf16.msra.mxu0 %v2738
    %4845 = vmatprep.subr.bf16.mxu0 %v2731
    %4846 = vmatpush1.bf16.msra.mxu0 %v2730
    %4847 = vmatprep.subr.bf16.mxu0 %v2723
    %4848 = vmatpush1.bf16.msra.mxu0 %v2722
    %4849 = vmatprep.subr.bf16.mxu0 %v2715
    %4850 = vmatpush1.bf16.msra.mxu0 %v2714
    %4851 = vmatprep.subr.bf16.mxu0 %v2707
    %4852 = vmatpush1.bf16.msra.mxu0 %v2706
    %4853 = vmatprep.subr.bf16.mxu0 %v2699
    %4854 = vmatpush1.bf16.msra.mxu0 %v2698
    %4855 = vmatprep.subr.bf16.mxu0 0
    %4856 = vmatpush2.bf16.msra.mxu0 0
    %4857 = vmatprep.subr.bf16.mxu0 0
    %4858 = vmatpush2.bf16.msra.mxu0 0
    %4859 = vmatprep.subr.bf16.mxu0 0
    %4860 = vmatpush2.bf16.msra.mxu0 0
    %4861 = vmatprep.subr.bf16.mxu0 0
    %4862 = vmatpush2.bf16.msra.mxu0 0
    %4863 = vmatprep.subr.bf16.mxu0 0
    %4864 = vmatpush2.bf16.msra.mxu0 0
    %4865 = vmatprep.subr.bf16.mxu0 0
    %4866 = vmatpush2.bf16.msra.mxu0 0
    %4867 = vmatprep.subr.bf16.mxu0 0
    %4868 = vmatpush2.bf16.msra.mxu0 0
    %4869 = vmatprep.subr.bf16.mxu0 0
    %4870 = vmatpush2.bf16.msra.mxu0 0
    %4871 = vmatprep.mubr.bf16.mxu0 0
    %4872 = vmatmul.mubr.bf16.gmra.mxu0 %v2372
    %v4873 = vpop.f32.mrf.mxu0
    %v4874 = vadd.f32 0.0, %v4873
    %v4875 = vpop.f32.mrf.mxu0
    %v4876 = vadd.f32 0.0, %v4875
    %v4877 = vpop.f32.mrf.mxu0
    %v4878 = vadd.f32 0.0, %v4877
    %v4879 = vpop.f32.mrf.mxu0
    %v4880 = vadd.f32 0.0, %v4879
    %4881 = vmatprep.mubr.bf16.mxu0 0
    %4882 = vmatmul.mubr.bf16.gmra.mxu0 %v2373
    %v4883 = vpop.f32.mrf.mxu0
    %v4884 = vadd.f32 0.0, %v4883
    %v4885 = vpop.f32.mrf.mxu0
    %v4886 = vadd.f32 0.0, %v4885
    %v4887 = vpop.f32.mrf.mxu0
    %v4888 = vadd.f32 0.0, %v4887
    %v4889 = vpop.f32.mrf.mxu0
    %v4890 = vadd.f32 0.0, %v4889
    %4891 = vmatprep.mubr.bf16.mxu0 0
    %4892 = vmatmul.mubr.bf16.gmra.mxu0 %v2374
    %v4893 = vpop.f32.mrf.mxu0
    %v4894 = vadd.f32 0.0, %v4893
    %v4895 = vpop.f32.mrf.mxu0
    %v4896 = vadd.f32 0.0, %v4895
    %v4897 = vpop.f32.mrf.mxu0
    %v4898 = vadd.f32 0.0, %v4897
    %v4899 = vpop.f32.mrf.mxu0
    %v4900 = vadd.f32 0.0, %v4899
    %4901 = vmatprep.mubr.bf16.mxu0 0
    %4902 = vmatmul.mubr.bf16.gmra.mxu0 %v2375
    %v4903 = vpop.f32.mrf.mxu0
    %v4904 = vadd.f32 0.0, %v4903
    %v4905 = vpop.f32.mrf.mxu0
    %v4906 = vadd.f32 0.0, %v4905
    %v4907 = vpop.f32.mrf.mxu0
    %v4908 = vadd.f32 0.0, %v4907
    %v4909 = vpop.f32.mrf.mxu0
    %v4910 = vadd.f32 0.0, %v4909
    %4911 = vmatprep.mubr.bf16.mxu0 0
    %4912 = vmatmul.mubr.bf16.gmra.mxu0 %v2376
    %v4913 = vpop.f32.mrf.mxu0
    %v4914 = vadd.f32 0.0, %v4913
    %v4915 = vpop.f32.mrf.mxu0
    %v4916 = vadd.f32 0.0, %v4915
    %v4917 = vpop.f32.mrf.mxu0
    %v4918 = vadd.f32 0.0, %v4917
    %v4919 = vpop.f32.mrf.mxu0
    %v4920 = vadd.f32 0.0, %v4919
    %4921 = vmatprep.mubr.bf16.mxu0 0
    %4922 = vmatmul.mubr.bf16.gmra.mxu0 %v2377
    %v4923 = vpop.f32.mrf.mxu0
    %v4924 = vadd.f32 0.0, %v4923
    %v4925 = vpop.f32.mrf.mxu0
    %v4926 = vadd.f32 0.0, %v4925
    %v4927 = vpop.f32.mrf.mxu0
    %v4928 = vadd.f32 0.0, %v4927
    %v4929 = vpop.f32.mrf.mxu0
    %v4930 = vadd.f32 0.0, %v4929
    %4931 = vmatprep.mubr.bf16.mxu0 0
    %4932 = vmatmul.mubr.bf16.gmra.mxu0 %v2378
    %v4933 = vpop.f32.mrf.mxu0
    %v4934 = vadd.f32 0.0, %v4933
    %v4935 = vpop.f32.mrf.mxu0
    %v4936 = vadd.f32 0.0, %v4935
    %v4937 = vpop.f32.mrf.mxu0
    %v4938 = vadd.f32 0.0, %v4937
    %v4939 = vpop.f32.mrf.mxu0
    %v4940 = vadd.f32 0.0, %v4939
    %4941 = vmatprep.mubr.bf16.mxu0 0
    %4942 = vmatmul.mubr.bf16.gmra.mxu0 %v2379
    %v4943 = vpop.f32.mrf.mxu0
    %v4944 = vadd.f32 0.0, %v4943
    %v4945 = vpop.f32.mrf.mxu0
    %v4946 = vadd.f32 0.0, %v4945
    %v4947 = vpop.f32.mrf.mxu0
    %v4948 = vadd.f32 0.0, %v4947
    %v4949 = vpop.f32.mrf.mxu0
    %v4950 = vadd.f32 0.0, %v4949
    %4951 = vmatprep.mubr.bf16.mxu0 0
    %4952 = vmatmul.mubr.bf16.gmra.mxu0 %v2380
    %v4953 = vpop.f32.mrf.mxu0
    %v4954 = vadd.f32 0.0, %v4953
    %v4955 = vpop.f32.mrf.mxu0
    %v4956 = vadd.f32 0.0, %v4955
    %v4957 = vpop.f32.mrf.mxu0
    %v4958 = vadd.f32 0.0, %v4957
    %v4959 = vpop.f32.mrf.mxu0
    %v4960 = vadd.f32 0.0, %v4959
    %4961 = vmatprep.mubr.bf16.mxu0 0
    %4962 = vmatmul.mubr.bf16.gmra.mxu0 %v2381
    %v4963 = vpop.f32.mrf.mxu0
    %v4964 = vadd.f32 0.0, %v4963
    %v4965 = vpop.f32.mrf.mxu0
    %v4966 = vadd.f32 0.0, %v4965
    %v4967 = vpop.f32.mrf.mxu0
    %v4968 = vadd.f32 0.0, %v4967
    %v4969 = vpop.f32.mrf.mxu0
    %v4970 = vadd.f32 0.0, %v4969
    %4971 = vmatprep.mubr.bf16.mxu0 0
    %4972 = vmatmul.mubr.bf16.gmra.mxu0 %v2382
    %v4973 = vpop.f32.mrf.mxu0
    %v4974 = vadd.f32 0.0, %v4973
    %v4975 = vpop.f32.mrf.mxu0
    %v4976 = vadd.f32 0.0, %v4975
    %v4977 = vpop.f32.mrf.mxu0
    %v4978 = vadd.f32 0.0, %v4977
    %v4979 = vpop.f32.mrf.mxu0
    %v4980 = vadd.f32 0.0, %v4979
    %4981 = vmatprep.mubr.bf16.mxu0 0
    %4982 = vmatmul.mubr.bf16.gmra.mxu0 %v2383
    %v4983 = vpop.f32.mrf.mxu0
    %v4984 = vadd.f32 0.0, %v4983
    %v4985 = vpop.f32.mrf.mxu0
    %v4986 = vadd.f32 0.0, %v4985
    %v4987 = vpop.f32.mrf.mxu0
    %v4988 = vadd.f32 0.0, %v4987
    %v4989 = vpop.f32.mrf.mxu0
    %v4990 = vadd.f32 0.0, %v4989
    %4991 = vmatprep.mubr.bf16.mxu0 0
    %4992 = vmatmul.mubr.bf16.gmra.mxu0 %v2384
    %v4993 = vpop.f32.mrf.mxu0
    %v4994 = vadd.f32 0.0, %v4993
    %v4995 = vpop.f32.mrf.mxu0
    %v4996 = vadd.f32 0.0, %v4995
    %v4997 = vpop.f32.mrf.mxu0
    %v4998 = vadd.f32 0.0, %v4997
    %v4999 = vpop.f32.mrf.mxu0
    %v5000 = vadd.f32 0.0, %v4999
    %5001 = vmatprep.mubr.bf16.mxu0 0
    %5002 = vmatmul.mubr.bf16.gmra.mxu0 %v2385
    %v5003 = vpop.f32.mrf.mxu0
    %v5004 = vadd.f32 0.0, %v5003
    %v5005 = vpop.f32.mrf.mxu0
    %v5006 = vadd.f32 0.0, %v5005
    %v5007 = vpop.f32.mrf.mxu0
    %v5008 = vadd.f32 0.0, %v5007
    %v5009 = vpop.f32.mrf.mxu0
    %v5010 = vadd.f32 0.0, %v5009
    %5011 = vmatprep.mubr.bf16.mxu0 0
    %5012 = vmatmul.mubr.bf16.gmra.mxu0 %v2386
    %v5013 = vpop.f32.mrf.mxu0
    %v5014 = vadd.f32 0.0, %v5013
    %v5015 = vpop.f32.mrf.mxu0
    %v5016 = vadd.f32 0.0, %v5015
    %v5017 = vpop.f32.mrf.mxu0
    %v5018 = vadd.f32 0.0, %v5017
    %v5019 = vpop.f32.mrf.mxu0
    %v5020 = vadd.f32 0.0, %v5019
    %5021 = vmatprep.mubr.bf16.mxu0 0
    %5022 = vmatmul.mubr.bf16.gmra.mxu0 %v2387
    %v5023 = vpop.f32.mrf.mxu0
    %v5024 = vadd.f32 0.0, %v5023
    %v5025 = vpop.f32.mrf.mxu0
    %v5026 = vadd.f32 0.0, %v5025
    %v5027 = vpop.f32.mrf.mxu0
    %v5028 = vadd.f32 0.0, %v5027
    %v5029 = vpop.f32.mrf.mxu0
    %v5030 = vadd.f32 0.0, %v5029
    %5031 = vmatprep.mubr.bf16.mxu0 0
    %5032 = vmatmul.mubr.bf16.gmra.mxu0 %v2388
    %v5033 = vpop.f32.mrf.mxu0
    %v5034 = vadd.f32 0.0, %v5033
    %v5035 = vpop.f32.mrf.mxu0
    %v5036 = vadd.f32 0.0, %v5035
    %v5037 = vpop.f32.mrf.mxu0
    %v5038 = vadd.f32 0.0, %v5037
    %v5039 = vpop.f32.mrf.mxu0
    %v5040 = vadd.f32 0.0, %v5039
    %5041 = vmatprep.mubr.bf16.mxu0 0
    %5042 = vmatmul.mubr.bf16.gmra.mxu0 %v2389
    %v5043 = vpop.f32.mrf.mxu0
    %v5044 = vadd.f32 0.0, %v5043
    %v5045 = vpop.f32.mrf.mxu0
    %v5046 = vadd.f32 0.0, %v5045
    %v5047 = vpop.f32.mrf.mxu0
    %v5048 = vadd.f32 0.0, %v5047
    %v5049 = vpop.f32.mrf.mxu0
    %v5050 = vadd.f32 0.0, %v5049
    %5051 = vmatprep.mubr.bf16.mxu0 0
    %5052 = vmatmul.mubr.bf16.gmra.mxu0 %v2390
    %v5053 = vpop.f32.mrf.mxu0
    %v5054 = vadd.f32 0.0, %v5053
    %v5055 = vpop.f32.mrf.mxu0
    %v5056 = vadd.f32 0.0, %v5055
    %v5057 = vpop.f32.mrf.mxu0
    %v5058 = vadd.f32 0.0, %v5057
    %v5059 = vpop.f32.mrf.mxu0
    %v5060 = vadd.f32 0.0, %v5059
    %5061 = vmatprep.mubr.bf16.mxu0 0
    %5062 = vmatmul.mubr.bf16.gmra.mxu0 %v2391
    %v5063 = vpop.f32.mrf.mxu0
    %v5064 = vadd.f32 0.0, %v5063
    %v5065 = vpop.f32.mrf.mxu0
    %v5066 = vadd.f32 0.0, %v5065
    %v5067 = vpop.f32.mrf.mxu0
    %v5068 = vadd.f32 0.0, %v5067
    %v5069 = vpop.f32.mrf.mxu0
    %v5070 = vadd.f32 0.0, %v5069
    %5071 = vmatprep.mubr.bf16.mxu0 0
    %5072 = vmatmul.mubr.bf16.gmra.mxu0 %v2392
    %v5073 = vpop.f32.mrf.mxu0
    %v5074 = vadd.f32 0.0, %v5073
    %v5075 = vpop.f32.mrf.mxu0
    %v5076 = vadd.f32 0.0, %v5075
    %v5077 = vpop.f32.mrf.mxu0
    %v5078 = vadd.f32 0.0, %v5077
    %v5079 = vpop.f32.mrf.mxu0
    %v5080 = vadd.f32 0.0, %v5079
    %5081 = vmatprep.mubr.bf16.mxu0 0
    %5082 = vmatmul.mubr.bf16.gmra.mxu0 %v2393
    %v5083 = vpop.f32.mrf.mxu0
    %v5084 = vadd.f32 0.0, %v5083
    %v5085 = vpop.f32.mrf.mxu0
    %v5086 = vadd.f32 0.0, %v5085
    %v5087 = vpop.f32.mrf.mxu0
    %v5088 = vadd.f32 0.0, %v5087
    %v5089 = vpop.f32.mrf.mxu0
    %v5090 = vadd.f32 0.0, %v5089
    %5091 = vmatprep.mubr.bf16.mxu0 0
    %5092 = vmatmul.mubr.bf16.gmra.mxu0 %v2394
    %v5093 = vpop.f32.mrf.mxu0
    %v5094 = vadd.f32 0.0, %v5093
    %v5095 = vpop.f32.mrf.mxu0
    %v5096 = vadd.f32 0.0, %v5095
    %v5097 = vpop.f32.mrf.mxu0
    %v5098 = vadd.f32 0.0, %v5097
    %v5099 = vpop.f32.mrf.mxu0
    %v5100 = vadd.f32 0.0, %v5099
    %5101 = vmatprep.mubr.bf16.mxu0 0
    %5102 = vmatmul.mubr.bf16.gmra.mxu0 %v2395
    %v5103 = vpop.f32.mrf.mxu0
    %v5104 = vadd.f32 0.0, %v5103
    %v5105 = vpop.f32.mrf.mxu0
    %v5106 = vadd.f32 0.0, %v5105
    %v5107 = vpop.f32.mrf.mxu0
    %v5108 = vadd.f32 0.0, %v5107
    %v5109 = vpop.f32.mrf.mxu0
    %v5110 = vadd.f32 0.0, %v5109
    %5111 = vmatprep.mubr.bf16.mxu0 0
    %5112 = vmatmul.mubr.bf16.gmra.mxu0 %v2396
    %v5113 = vpop.f32.mrf.mxu0
    %v5114 = vadd.f32 0.0, %v5113
    %v5115 = vpop.f32.mrf.mxu0
    %v5116 = vadd.f32 0.0, %v5115
    %v5117 = vpop.f32.mrf.mxu0
    %v5118 = vadd.f32 0.0, %v5117
    %v5119 = vpop.f32.mrf.mxu0
    %v5120 = vadd.f32 0.0, %v5119
    %5121 = vmatprep.mubr.bf16.mxu0 0
    %5122 = vmatmul.mubr.bf16.gmra.mxu0 %v2397
    %v5123 = vpop.f32.mrf.mxu0
    %v5124 = vadd.f32 0.0, %v5123
    %v5125 = vpop.f32.mrf.mxu0
    %v5126 = vadd.f32 0.0, %v5125
    %v5127 = vpop.f32.mrf.mxu0
    %v5128 = vadd.f32 0.0, %v5127
    %v5129 = vpop.f32.mrf.mxu0
    %v5130 = vadd.f32 0.0, %v5129
    %5131 = vmatprep.mubr.bf16.mxu0 0
    %5132 = vmatmul.mubr.bf16.gmra.mxu0 %v2398
    %v5133 = vpop.f32.mrf.mxu0
    %v5134 = vadd.f32 0.0, %v5133
    %v5135 = vpop.f32.mrf.mxu0
    %v5136 = vadd.f32 0.0, %v5135
    %v5137 = vpop.f32.mrf.mxu0
    %v5138 = vadd.f32 0.0, %v5137
    %v5139 = vpop.f32.mrf.mxu0
    %v5140 = vadd.f32 0.0, %v5139
    %5141 = vmatprep.mubr.bf16.mxu0 0
    %5142 = vmatmul.mubr.bf16.gmra.mxu0 %v2399
    %v5143 = vpop.f32.mrf.mxu0
    %v5144 = vadd.f32 0.0, %v5143
    %v5145 = vpop.f32.mrf.mxu0
    %v5146 = vadd.f32 0.0, %v5145
    %v5147 = vpop.f32.mrf.mxu0
    %v5148 = vadd.f32 0.0, %v5147
    %v5149 = vpop.f32.mrf.mxu0
    %v5150 = vadd.f32 0.0, %v5149
    %5151 = vmatprep.mubr.bf16.mxu0 0
    %5152 = vmatmul.mubr.bf16.gmra.mxu0 %v2400
    %v5153 = vpop.f32.mrf.mxu0
    %v5154 = vadd.f32 0.0, %v5153
    %v5155 = vpop.f32.mrf.mxu0
    %v5156 = vadd.f32 0.0, %v5155
    %v5157 = vpop.f32.mrf.mxu0
    %v5158 = vadd.f32 0.0, %v5157
    %v5159 = vpop.f32.mrf.mxu0
    %v5160 = vadd.f32 0.0, %v5159
    %5161 = vmatprep.mubr.bf16.mxu0 0
    %5162 = vmatmul.mubr.bf16.gmra.mxu0 %v2401
    %v5163 = vpop.f32.mrf.mxu0
    %v5164 = vadd.f32 0.0, %v5163
    %v5165 = vpop.f32.mrf.mxu0
    %v5166 = vadd.f32 0.0, %v5165
    %v5167 = vpop.f32.mrf.mxu0
    %v5168 = vadd.f32 0.0, %v5167
    %v5169 = vpop.f32.mrf.mxu0
    %v5170 = vadd.f32 0.0, %v5169
    %5171 = vmatprep.mubr.bf16.mxu0 0
    %5172 = vmatmul.mubr.bf16.gmra.mxu0 %v2402
    %v5173 = vpop.f32.mrf.mxu0
    %v5174 = vadd.f32 0.0, %v5173
    %v5175 = vpop.f32.mrf.mxu0
    %v5176 = vadd.f32 0.0, %v5175
    %v5177 = vpop.f32.mrf.mxu0
    %v5178 = vadd.f32 0.0, %v5177
    %v5179 = vpop.f32.mrf.mxu0
    %v5180 = vadd.f32 0.0, %v5179
    %5181 = vmatprep.mubr.bf16.mxu0 0
    %5182 = vmatmul.mubr.bf16.gmra.mxu0 %v2403
    %v5183 = vpop.f32.mrf.mxu0
    %v5184 = vadd.f32 0.0, %v5183
    %v5185 = vpop.f32.mrf.mxu0
    %v5186 = vadd.f32 0.0, %v5185
    %v5187 = vpop.f32.mrf.mxu0
    %v5188 = vadd.f32 0.0, %v5187
    %v5189 = vpop.f32.mrf.mxu0
    %v5190 = vadd.f32 0.0, %v5189
    %5191 = vmatprep.mubr.bf16.mxu0 0
    %5192 = vmatmul.mubr.bf16.gmra.mxu0 %v2404
    %v5193 = vpop.f32.mrf.mxu0
    %v5194 = vadd.f32 0.0, %v5193
    %v5195 = vpop.f32.mrf.mxu0
    %v5196 = vadd.f32 0.0, %v5195
    %v5197 = vpop.f32.mrf.mxu0
    %v5198 = vadd.f32 0.0, %v5197
    %v5199 = vpop.f32.mrf.mxu0
    %v5200 = vadd.f32 0.0, %v5199
    %5201 = vmatprep.mubr.bf16.mxu0 0
    %5202 = vmatmul.mubr.bf16.gmra.mxu0 %v2405
    %v5203 = vpop.f32.mrf.mxu0
    %v5204 = vadd.f32 0.0, %v5203
    %v5205 = vpop.f32.mrf.mxu0
    %v5206 = vadd.f32 0.0, %v5205
    %v5207 = vpop.f32.mrf.mxu0
    %v5208 = vadd.f32 0.0, %v5207
    %v5209 = vpop.f32.mrf.mxu0
    %v5210 = vadd.f32 0.0, %v5209
    %5211 = vmatprep.mubr.bf16.mxu0 0
    %5212 = vmatmul.mubr.bf16.gmra.mxu0 %v2406
    %v5213 = vpop.f32.mrf.mxu0
    %v5214 = vadd.f32 0.0, %v5213
    %v5215 = vpop.f32.mrf.mxu0
    %v5216 = vadd.f32 0.0, %v5215
    %v5217 = vpop.f32.mrf.mxu0
    %v5218 = vadd.f32 0.0, %v5217
    %v5219 = vpop.f32.mrf.mxu0
    %v5220 = vadd.f32 0.0, %v5219
    %5221 = vmatprep.mubr.bf16.mxu0 0
    %5222 = vmatmul.mubr.bf16.gmra.mxu0 %v2407
    %v5223 = vpop.f32.mrf.mxu0
    %v5224 = vadd.f32 0.0, %v5223
    %v5225 = vpop.f32.mrf.mxu0
    %v5226 = vadd.f32 0.0, %v5225
    %v5227 = vpop.f32.mrf.mxu0
    %v5228 = vadd.f32 0.0, %v5227
    %v5229 = vpop.f32.mrf.mxu0
    %v5230 = vadd.f32 0.0, %v5229
    %5231 = vmatprep.mubr.bf16.mxu0 0
    %5232 = vmatmul.mubr.bf16.gmra.mxu0 %v2408
    %v5233 = vpop.f32.mrf.mxu0
    %v5234 = vadd.f32 0.0, %v5233
    %v5235 = vpop.f32.mrf.mxu0
    %v5236 = vadd.f32 0.0, %v5235
    %v5237 = vpop.f32.mrf.mxu0
    %v5238 = vadd.f32 0.0, %v5237
    %v5239 = vpop.f32.mrf.mxu0
    %v5240 = vadd.f32 0.0, %v5239
    %5241 = vmatprep.mubr.bf16.mxu0 0
    %5242 = vmatmul.mubr.bf16.gmra.mxu0 %v2409
    %v5243 = vpop.f32.mrf.mxu0
    %v5244 = vadd.f32 0.0, %v5243
    %v5245 = vpop.f32.mrf.mxu0
    %v5246 = vadd.f32 0.0, %v5245
    %v5247 = vpop.f32.mrf.mxu0
    %v5248 = vadd.f32 0.0, %v5247
    %v5249 = vpop.f32.mrf.mxu0
    %v5250 = vadd.f32 0.0, %v5249
    %5251 = vmatprep.mubr.bf16.mxu0 0
    %5252 = vmatmul.mubr.bf16.gmra.mxu0 %v2410
    %v5253 = vpop.f32.mrf.mxu0
    %v5254 = vadd.f32 0.0, %v5253
    %v5255 = vpop.f32.mrf.mxu0
    %v5256 = vadd.f32 0.0, %v5255
    %v5257 = vpop.f32.mrf.mxu0
    %v5258 = vadd.f32 0.0, %v5257
    %v5259 = vpop.f32.mrf.mxu0
    %v5260 = vadd.f32 0.0, %v5259
    %5261 = vmatprep.mubr.bf16.mxu0 0
    %5262 = vmatmul.mubr.bf16.gmra.mxu0 %v2411
    %v5263 = vpop.f32.mrf.mxu0
    %v5264 = vadd.f32 0.0, %v5263
    %v5265 = vpop.f32.mrf.mxu0
    %v5266 = vadd.f32 0.0, %v5265
    %v5267 = vpop.f32.mrf.mxu0
    %v5268 = vadd.f32 0.0, %v5267
    %v5269 = vpop.f32.mrf.mxu0
    %v5270 = vadd.f32 0.0, %v5269
    %5271 = vmatprep.mubr.bf16.mxu0 0
    %5272 = vmatmul.mubr.bf16.gmra.mxu0 %v2412
    %v5273 = vpop.f32.mrf.mxu0
    %v5274 = vadd.f32 0.0, %v5273
    %v5275 = vpop.f32.mrf.mxu0
    %v5276 = vadd.f32 0.0, %v5275
    %v5277 = vpop.f32.mrf.mxu0
    %v5278 = vadd.f32 0.0, %v5277
    %v5279 = vpop.f32.mrf.mxu0
    %v5280 = vadd.f32 0.0, %v5279
    %5281 = vmatprep.mubr.bf16.mxu0 0
    %5282 = vmatmul.mubr.bf16.gmra.mxu0 %v2413
    %v5283 = vpop.f32.mrf.mxu0
    %v5284 = vadd.f32 0.0, %v5283
    %v5285 = vpop.f32.mrf.mxu0
    %v5286 = vadd.f32 0.0, %v5285
    %v5287 = vpop.f32.mrf.mxu0
    %v5288 = vadd.f32 0.0, %v5287
    %v5289 = vpop.f32.mrf.mxu0
    %v5290 = vadd.f32 0.0, %v5289
    %5291 = vmatprep.mubr.bf16.mxu0 0
    %5292 = vmatmul.mubr.bf16.gmra.mxu0 %v2414
    %v5293 = vpop.f32.mrf.mxu0
    %v5294 = vadd.f32 0.0, %v5293
    %v5295 = vpop.f32.mrf.mxu0
    %v5296 = vadd.f32 0.0, %v5295
    %v5297 = vpop.f32.mrf.mxu0
    %v5298 = vadd.f32 0.0, %v5297
    %v5299 = vpop.f32.mrf.mxu0
    %v5300 = vadd.f32 0.0, %v5299
    %5301 = vmatprep.mubr.bf16.mxu0 0
    %5302 = vmatmul.mubr.bf16.gmra.mxu0 %v2415
    %v5303 = vpop.f32.mrf.mxu0
    %v5304 = vadd.f32 0.0, %v5303
    %v5305 = vpop.f32.mrf.mxu0
    %v5306 = vadd.f32 0.0, %v5305
    %v5307 = vpop.f32.mrf.mxu0
    %v5308 = vadd.f32 0.0, %v5307
    %v5309 = vpop.f32.mrf.mxu0
    %v5310 = vadd.f32 0.0, %v5309
    %5311 = vmatprep.mubr.bf16.mxu0 0
    %5312 = vmatmul.mubr.bf16.gmra.mxu0 %v2416
    %v5313 = vpop.f32.mrf.mxu0
    %v5314 = vadd.f32 0.0, %v5313
    %v5315 = vpop.f32.mrf.mxu0
    %v5316 = vadd.f32 0.0, %v5315
    %v5317 = vpop.f32.mrf.mxu0
    %v5318 = vadd.f32 0.0, %v5317
    %v5319 = vpop.f32.mrf.mxu0
    %v5320 = vadd.f32 0.0, %v5319
    %5321 = vmatprep.mubr.bf16.mxu0 0
    %5322 = vmatmul.mubr.bf16.gmra.mxu0 %v2417
    %v5323 = vpop.f32.mrf.mxu0
    %v5324 = vadd.f32 0.0, %v5323
    %v5325 = vpop.f32.mrf.mxu0
    %v5326 = vadd.f32 0.0, %v5325
    %v5327 = vpop.f32.mrf.mxu0
    %v5328 = vadd.f32 0.0, %v5327
    %v5329 = vpop.f32.mrf.mxu0
    %v5330 = vadd.f32 0.0, %v5329
    %5331 = vmatprep.mubr.bf16.mxu0 0
    %5332 = vmatmul.mubr.bf16.gmra.mxu0 %v2418
    %v5333 = vpop.f32.mrf.mxu0
    %v5334 = vadd.f32 0.0, %v5333
    %v5335 = vpop.f32.mrf.mxu0
    %v5336 = vadd.f32 0.0, %v5335
    %v5337 = vpop.f32.mrf.mxu0
    %v5338 = vadd.f32 0.0, %v5337
    %v5339 = vpop.f32.mrf.mxu0
    %v5340 = vadd.f32 0.0, %v5339
    %5341 = vmatprep.mubr.bf16.mxu0 0
    %5342 = vmatmul.mubr.bf16.gmra.mxu0 %v2419
    %v5343 = vpop.f32.mrf.mxu0
    %v5344 = vadd.f32 0.0, %v5343
    %v5345 = vpop.f32.mrf.mxu0
    %v5346 = vadd.f32 0.0, %v5345
    %v5347 = vpop.f32.mrf.mxu0
    %v5348 = vadd.f32 0.0, %v5347
    %v5349 = vpop.f32.mrf.mxu0
    %v5350 = vadd.f32 0.0, %v5349
    %5351 = vmatprep.mubr.bf16.mxu0 0
    %5352 = vmatmul.mubr.bf16.gmra.mxu0 %v2420
    %v5353 = vpop.f32.mrf.mxu0
    %v5354 = vadd.f32 0.0, %v5353
    %v5355 = vpop.f32.mrf.mxu0
    %v5356 = vadd.f32 0.0, %v5355
    %v5357 = vpop.f32.mrf.mxu0
    %v5358 = vadd.f32 0.0, %v5357
    %v5359 = vpop.f32.mrf.mxu0
    %v5360 = vadd.f32 0.0, %v5359
    %5361 = vmatprep.mubr.bf16.mxu0 0
    %5362 = vmatmul.mubr.bf16.gmra.mxu0 %v2421
    %v5363 = vpop.f32.mrf.mxu0
    %v5364 = vadd.f32 0.0, %v5363
    %v5365 = vpop.f32.mrf.mxu0
    %v5366 = vadd.f32 0.0, %v5365
    %v5367 = vpop.f32.mrf.mxu0
    %v5368 = vadd.f32 0.0, %v5367
    %v5369 = vpop.f32.mrf.mxu0
    %v5370 = vadd.f32 0.0, %v5369
    %5371 = vmatprep.mubr.bf16.mxu0 0
    %5372 = vmatmul.mubr.bf16.gmra.mxu0 %v2422
    %v5373 = vpop.f32.mrf.mxu0
    %v5374 = vadd.f32 0.0, %v5373
    %v5375 = vpop.f32.mrf.mxu0
    %v5376 = vadd.f32 0.0, %v5375
    %v5377 = vpop.f32.mrf.mxu0
    %v5378 = vadd.f32 0.0, %v5377
    %v5379 = vpop.f32.mrf.mxu0
    %v5380 = vadd.f32 0.0, %v5379
    %5381 = vmatprep.mubr.bf16.mxu0 0
    %5382 = vmatmul.mubr.bf16.gmra.mxu0 %v2423
    %v5383 = vpop.f32.mrf.mxu0
    %v5384 = vadd.f32 0.0, %v5383
    %v5385 = vpop.f32.mrf.mxu0
    %v5386 = vadd.f32 0.0, %v5385
    %v5387 = vpop.f32.mrf.mxu0
    %v5388 = vadd.f32 0.0, %v5387
    %v5389 = vpop.f32.mrf.mxu0
    %v5390 = vadd.f32 0.0, %v5389
    %5391 = vmatprep.mubr.bf16.mxu0 0
    %5392 = vmatmul.mubr.bf16.gmra.mxu0 %v2424
    %v5393 = vpop.f32.mrf.mxu0
    %v5394 = vadd.f32 0.0, %v5393
    %v5395 = vpop.f32.mrf.mxu0
    %v5396 = vadd.f32 0.0, %v5395
    %v5397 = vpop.f32.mrf.mxu0
    %v5398 = vadd.f32 0.0, %v5397
    %v5399 = vpop.f32.mrf.mxu0
    %v5400 = vadd.f32 0.0, %v5399
    %5401 = vmatprep.mubr.bf16.mxu0 0
    %5402 = vmatmul.mubr.bf16.gmra.mxu0 %v2425
    %v5403 = vpop.f32.mrf.mxu0
    %v5404 = vadd.f32 0.0, %v5403
    %v5405 = vpop.f32.mrf.mxu0
    %v5406 = vadd.f32 0.0, %v5405
    %v5407 = vpop.f32.mrf.mxu0
    %v5408 = vadd.f32 0.0, %v5407
    %v5409 = vpop.f32.mrf.mxu0
    %v5410 = vadd.f32 0.0, %v5409
    %5411 = vmatprep.mubr.bf16.mxu0 0
    %5412 = vmatmul.mubr.bf16.gmra.mxu0 %v2426
    %v5413 = vpop.f32.mrf.mxu0
    %v5414 = vadd.f32 0.0, %v5413
    %v5415 = vpop.f32.mrf.mxu0
    %v5416 = vadd.f32 0.0, %v5415
    %v5417 = vpop.f32.mrf.mxu0
    %v5418 = vadd.f32 0.0, %v5417
    %v5419 = vpop.f32.mrf.mxu0
    %v5420 = vadd.f32 0.0, %v5419
    %5421 = vmatprep.mubr.bf16.mxu0 0
    %5422 = vmatmul.mubr.bf16.gmra.mxu0 %v2427
    %v5423 = vpop.f32.mrf.mxu0
    %v5424 = vadd.f32 0.0, %v5423
    %v5425 = vpop.f32.mrf.mxu0
    %v5426 = vadd.f32 0.0, %v5425
    %v5427 = vpop.f32.mrf.mxu0
    %v5428 = vadd.f32 0.0, %v5427
    %v5429 = vpop.f32.mrf.mxu0
    %v5430 = vadd.f32 0.0, %v5429
    %5431 = vmatprep.mubr.bf16.mxu0 0
    %5432 = vmatmul.mubr.bf16.gmra.mxu0 %v2428
    %v5433 = vpop.f32.mrf.mxu0
    %v5434 = vadd.f32 0.0, %v5433
    %v5435 = vpop.f32.mrf.mxu0
    %v5436 = vadd.f32 0.0, %v5435
    %v5437 = vpop.f32.mrf.mxu0
    %v5438 = vadd.f32 0.0, %v5437
    %v5439 = vpop.f32.mrf.mxu0
    %v5440 = vadd.f32 0.0, %v5439
    %5441 = vmatprep.mubr.bf16.mxu0 0
    %5442 = vmatmul.mubr.bf16.gmra.mxu0 %v2429
    %v5443 = vpop.f32.mrf.mxu0
    %v5444 = vadd.f32 0.0, %v5443
    %v5445 = vpop.f32.mrf.mxu0
    %v5446 = vadd.f32 0.0, %v5445
    %v5447 = vpop.f32.mrf.mxu0
    %v5448 = vadd.f32 0.0, %v5447
    %v5449 = vpop.f32.mrf.mxu0
    %v5450 = vadd.f32 0.0, %v5449
    %5451 = vmatprep.mubr.bf16.mxu0 0
    %5452 = vmatmul.mubr.bf16.gmra.mxu0 %v2430
    %v5453 = vpop.f32.mrf.mxu0
    %v5454 = vadd.f32 0.0, %v5453
    %v5455 = vpop.f32.mrf.mxu0
    %v5456 = vadd.f32 0.0, %v5455
    %v5457 = vpop.f32.mrf.mxu0
    %v5458 = vadd.f32 0.0, %v5457
    %v5459 = vpop.f32.mrf.mxu0
    %v5460 = vadd.f32 0.0, %v5459
    %5461 = vmatprep.mubr.bf16.mxu0 0
    %5462 = vmatmul.mubr.bf16.gmra.mxu0 %v2431
    %v5463 = vpop.f32.mrf.mxu0
    %v5464 = vadd.f32 0.0, %v5463
    %v5465 = vpop.f32.mrf.mxu0
    %v5466 = vadd.f32 0.0, %v5465
    %v5467 = vpop.f32.mrf.mxu0
    %v5468 = vadd.f32 0.0, %v5467
    %v5469 = vpop.f32.mrf.mxu0
    %v5470 = vadd.f32 0.0, %v5469
    %5471 = vmatprep.mubr.bf16.mxu0 0
    %5472 = vmatmul.mubr.bf16.gmra.mxu0 %v2432
    %v5473 = vpop.f32.mrf.mxu0
    %v5474 = vadd.f32 0.0, %v5473
    %v5475 = vpop.f32.mrf.mxu0
    %v5476 = vadd.f32 0.0, %v5475
    %v5477 = vpop.f32.mrf.mxu0
    %v5478 = vadd.f32 0.0, %v5477
    %v5479 = vpop.f32.mrf.mxu0
    %v5480 = vadd.f32 0.0, %v5479
    %5481 = vmatprep.mubr.bf16.mxu0 0
    %5482 = vmatmul.mubr.bf16.gmra.mxu0 %v2433
    %v5483 = vpop.f32.mrf.mxu0
    %v5484 = vadd.f32 0.0, %v5483
    %v5485 = vpop.f32.mrf.mxu0
    %v5486 = vadd.f32 0.0, %v5485
    %v5487 = vpop.f32.mrf.mxu0
    %v5488 = vadd.f32 0.0, %v5487
    %v5489 = vpop.f32.mrf.mxu0
    %v5490 = vadd.f32 0.0, %v5489
    %5491 = vmatprep.mubr.bf16.mxu0 0
    %5492 = vmatmul.mubr.bf16.gmra.mxu0 %v2434
    %v5493 = vpop.f32.mrf.mxu0
    %v5494 = vadd.f32 0.0, %v5493
    %v5495 = vpop.f32.mrf.mxu0
    %v5496 = vadd.f32 0.0, %v5495
    %v5497 = vpop.f32.mrf.mxu0
    %v5498 = vadd.f32 0.0, %v5497
    %v5499 = vpop.f32.mrf.mxu0
    %v5500 = vadd.f32 0.0, %v5499
    %5501 = vmatprep.mubr.bf16.mxu0 0
    %5502 = vmatmul.mubr.bf16.gmra.mxu0 %v2435
    %v5503 = vpop.f32.mrf.mxu0
    %v5504 = vadd.f32 0.0, %v5503
    %v5505 = vpop.f32.mrf.mxu0
    %v5506 = vadd.f32 0.0, %v5505
    %v5507 = vpop.f32.mrf.mxu0
    %v5508 = vadd.f32 0.0, %v5507
    %v5509 = vpop.f32.mrf.mxu0
    %v5510 = vadd.f32 0.0, %v5509
    %5511 = vdwg.mxu0
    %v5512 = vmax.f32 %v2855, %v2859
    %v5513 = vmax.f32 %v5512, %v2865
    %v5514 = vmax.f32 %v5513, %v2869
    %v5515 = vmax.f32 %v5514, %v2875
    %v5516 = vmax.f32 %v5515, %v2879
    %v5517 = vmax.f32 %v5516, %v2885
    %v5518 = vmax.f32 %v5517, %v2889
    %v5519 = vmax.f32 %v5518, %v2895
    %v5520 = vmax.f32 %v5519, %v2899
    %v5521 = vmax.f32 %v5520, %v2905
    %v5522 = vmax.f32 %v5521, %v2909
    %v5523 = vmax.f32 %v5522, %v2915
    %v5524 = vmax.f32 %v5523, %v2919
    %v5525 = vmax.f32 %v5524, %v2925
    %v5526 = vmax.f32 %v5525, %v2929
    %v5527 = vrot.slane %v5526, 4
    %v5528 = vmax.f32 %v5526, %v5527
    %v5529 = vrot.slane %v5528, 2
    %v5530 = vmax.f32 %v5528, %v5529
    %v5531 = vrot.slane %v5530, 1
    %v5532 = vmax.f32 %v5530, %v5531
    %v5533 = vmax.f32 %v2857, %v2861
    %v5534 = vmax.f32 %v5533, %v2867
    %v5535 = vmax.f32 %v5534, %v2871
    %v5536 = vmax.f32 %v5535, %v2877
    %v5537 = vmax.f32 %v5536, %v2881
    %v5538 = vmax.f32 %v5537, %v2887
    %v5539 = vmax.f32 %v5538, %v2891
    %v5540 = vmax.f32 %v5539, %v2897
    %v5541 = vmax.f32 %v5540, %v2901
    %v5542 = vmax.f32 %v5541, %v2907
    %v5543 = vmax.f32 %v5542, %v2911
    %v5544 = vmax.f32 %v5543, %v2917
    %v5545 = vmax.f32 %v5544, %v2921
    %v5546 = vmax.f32 %v5545, %v2927
    %v5547 = vmax.f32 %v5546, %v2931
    %v5548 = vrot.slane %v5547, 4
    %v5549 = vmax.f32 %v5547, %v5548
    %v5550 = vrot.slane %v5549, 2
    %v5551 = vmax.f32 %v5549, %v5550
    %v5552 = vrot.slane %v5551, 1
    %v5553 = vmax.f32 %v5551, %v5552
    %v5554 = vmax.f32 %v3528, %v3532
    %v5555 = vmax.f32 %v5554, %v3538
    %v5556 = vmax.f32 %v5555, %v3542
    %v5557 = vmax.f32 %v5556, %v3548
    %v5558 = vmax.f32 %v5557, %v3552
    %v5559 = vmax.f32 %v5558, %v3558
    %v5560 = vmax.f32 %v5559, %v3562
    %v5561 = vmax.f32 %v5560, %v3568
    %v5562 = vmax.f32 %v5561, %v3572
    %v5563 = vmax.f32 %v5562, %v3578
    %v5564 = vmax.f32 %v5563, %v3582
    %v5565 = vmax.f32 %v5564, %v3588
    %v5566 = vmax.f32 %v5565, %v3592
    %v5567 = vmax.f32 %v5566, %v3598
    %v5568 = vmax.f32 %v5567, %v3602
    %v5569 = vrot.slane %v5568, 4
    %v5570 = vmax.f32 %v5568, %v5569
    %v5571 = vrot.slane %v5570, 2
    %v5572 = vmax.f32 %v5570, %v5571
    %v5573 = vrot.slane %v5572, 1
    %v5574 = vmax.f32 %v5572, %v5573
    %v5575 = vmax.f32 %v3530, %v3534
    %v5576 = vmax.f32 %v5575, %v3540
    %v5577 = vmax.f32 %v5576, %v3544
    %v5578 = vmax.f32 %v5577, %v3550
    %v5579 = vmax.f32 %v5578, %v3554
    %v5580 = vmax.f32 %v5579, %v3560
    %v5581 = vmax.f32 %v5580, %v3564
    %v5582 = vmax.f32 %v5581, %v3570
    %v5583 = vmax.f32 %v5582, %v3574
    %v5584 = vmax.f32 %v5583, %v3580
    %v5585 = vmax.f32 %v5584, %v3584
    %v5586 = vmax.f32 %v5585, %v3590
    %v5587 = vmax.f32 %v5586, %v3594
    %v5588 = vmax.f32 %v5587, %v3600
    %v5589 = vmax.f32 %v5588, %v3604
    %v5590 = vrot.slane %v5589, 4
    %v5591 = vmax.f32 %v5589, %v5590
    %v5592 = vrot.slane %v5591, 2
    %v5593 = vmax.f32 %v5591, %v5592
    %v5594 = vrot.slane %v5593, 1
    %v5595 = vmax.f32 %v5593, %v5594
    %v5596 = vmax.f32 %v4201, %v4205
    %v5597 = vmax.f32 %v5596, %v4211
    %v5598 = vmax.f32 %v5597, %v4215
    %v5599 = vmax.f32 %v5598, %v4221
    %v5600 = vmax.f32 %v5599, %v4225
    %v5601 = vmax.f32 %v5600, %v4231
    %v5602 = vmax.f32 %v5601, %v4235
    %v5603 = vmax.f32 %v5602, %v4241
    %v5604 = vmax.f32 %v5603, %v4245
    %v5605 = vmax.f32 %v5604, %v4251
    %v5606 = vmax.f32 %v5605, %v4255
    %v5607 = vmax.f32 %v5606, %v4261
    %v5608 = vmax.f32 %v5607, %v4265
    %v5609 = vmax.f32 %v5608, %v4271
    %v5610 = vmax.f32 %v5609, %v4275
    %v5611 = vrot.slane %v5610, 4
    %v5612 = vmax.f32 %v5610, %v5611
    %v5613 = vrot.slane %v5612, 2
    %v5614 = vmax.f32 %v5612, %v5613
    %v5615 = vrot.slane %v5614, 1
    %v5616 = vmax.f32 %v5614, %v5615
    %v5617 = vmax.f32 %v4203, %v4207
    %v5618 = vmax.f32 %v5617, %v4213
    %v5619 = vmax.f32 %v5618, %v4217
    %v5620 = vmax.f32 %v5619, %v4223
    %v5621 = vmax.f32 %v5620, %v4227
    %v5622 = vmax.f32 %v5621, %v4233
    %v5623 = vmax.f32 %v5622, %v4237
    %v5624 = vmax.f32 %v5623, %v4243
    %v5625 = vmax.f32 %v5624, %v4247
    %v5626 = vmax.f32 %v5625, %v4253
    %v5627 = vmax.f32 %v5626, %v4257
    %v5628 = vmax.f32 %v5627, %v4263
    %v5629 = vmax.f32 %v5628, %v4267
    %v5630 = vmax.f32 %v5629, %v4273
    %v5631 = vmax.f32 %v5630, %v4277
    %v5632 = vrot.slane %v5631, 4
    %v5633 = vmax.f32 %v5631, %v5632
    %v5634 = vrot.slane %v5633, 2
    %v5635 = vmax.f32 %v5633, %v5634
    %v5636 = vrot.slane %v5635, 1
    %v5637 = vmax.f32 %v5635, %v5636
    %v5638 = vmax.f32 %v4874, %v4878
    %v5639 = vmax.f32 %v5638, %v4884
    %v5640 = vmax.f32 %v5639, %v4888
    %v5641 = vmax.f32 %v5640, %v4894
    %v5642 = vmax.f32 %v5641, %v4898
    %v5643 = vmax.f32 %v5642, %v4904
    %v5644 = vmax.f32 %v5643, %v4908
    %v5645 = vmax.f32 %v5644, %v4914
    %v5646 = vmax.f32 %v5645, %v4918
    %v5647 = vmax.f32 %v5646, %v4924
    %v5648 = vmax.f32 %v5647, %v4928
    %v5649 = vmax.f32 %v5648, %v4934
    %v5650 = vmax.f32 %v5649, %v4938
    %v5651 = vmax.f32 %v5650, %v4944
    %v5652 = vmax.f32 %v5651, %v4948
    %v5653 = vrot.slane %v5652, 4
    %v5654 = vmax.f32 %v5652, %v5653
    %v5655 = vrot.slane %v5654, 2
    %v5656 = vmax.f32 %v5654, %v5655
    %v5657 = vrot.slane %v5656, 1
    %v5658 = vmax.f32 %v5656, %v5657
    %v5659 = vmax.f32 %v4876, %v4880
    %v5660 = vmax.f32 %v5659, %v4886
    %v5661 = vmax.f32 %v5660, %v4890
    %v5662 = vmax.f32 %v5661, %v4896
    %v5663 = vmax.f32 %v5662, %v4900
    %v5664 = vmax.f32 %v5663, %v4906
    %v5665 = vmax.f32 %v5664, %v4910
    %v5666 = vmax.f32 %v5665, %v4916
    %v5667 = vmax.f32 %v5666, %v4920
    %v5668 = vmax.f32 %v5667, %v4926
    %v5669 = vmax.f32 %v5668, %v4930
    %v5670 = vmax.f32 %v5669, %v4936
    %v5671 = vmax.f32 %v5670, %v4940
    %v5672 = vmax.f32 %v5671, %v4946
    %v5673 = vmax.f32 %v5672, %v4950
    %v5674 = vrot.slane %v5673, 4
    %v5675 = vmax.f32 %v5673, %v5674
    %v5676 = vrot.slane %v5675, 2
    %v5677 = vmax.f32 %v5675, %v5676
    %v5678 = vrot.slane %v5677, 1
    %v5679 = vmax.f32 %v5677, %v5678
    %v5680 = vmax.f32 %v2935, %v2939
    %v5681 = vmax.f32 %v5680, %v2945
    %v5682 = vmax.f32 %v5681, %v2949
    %v5683 = vmax.f32 %v5682, %v2955
    %v5684 = vmax.f32 %v5683, %v2959
    %v5685 = vmax.f32 %v5684, %v2965
    %v5686 = vmax.f32 %v5685, %v2969
    %v5687 = vmax.f32 %v5686, %v2975
    %v5688 = vmax.f32 %v5687, %v2979
    %v5689 = vmax.f32 %v5688, %v2985
    %v5690 = vmax.f32 %v5689, %v2989
    %v5691 = vmax.f32 %v5690, %v2995
    %v5692 = vmax.f32 %v5691, %v2999
    %v5693 = vmax.f32 %v5692, %v3005
    %v5694 = vmax.f32 %v5693, %v3009
    %v5695 = vrot.slane %v5694, 4
    %v5696 = vmax.f32 %v5694, %v5695
    %v5697 = vrot.slane %v5696, 2
    %v5698 = vmax.f32 %v5696, %v5697
    %v5699 = vrot.slane %v5698, 1
    %v5700 = vmax.f32 %v5698, %v5699
    %v5701 = vmax.f32 %v2937, %v2941
    %v5702 = vmax.f32 %v5701, %v2947
    %v5703 = vmax.f32 %v5702, %v2951
    %v5704 = vmax.f32 %v5703, %v2957
    %v5705 = vmax.f32 %v5704, %v2961
    %v5706 = vmax.f32 %v5705, %v2967
    %v5707 = vmax.f32 %v5706, %v2971
    %v5708 = vmax.f32 %v5707, %v2977
    %v5709 = vmax.f32 %v5708, %v2981
    %v5710 = vmax.f32 %v5709, %v2987
    %v5711 = vmax.f32 %v5710, %v2991
    %v5712 = vmax.f32 %v5711, %v2997
    %v5713 = vmax.f32 %v5712, %v3001
    %v5714 = vmax.f32 %v5713, %v3007
    %v5715 = vmax.f32 %v5714, %v3011
    %v5716 = vrot.slane %v5715, 4
    %v5717 = vmax.f32 %v5715, %v5716
    %v5718 = vrot.slane %v5717, 2
    %v5719 = vmax.f32 %v5717, %v5718
    %v5720 = vrot.slane %v5719, 1
    %v5721 = vmax.f32 %v5719, %v5720
    %v5722 = vmax.f32 %v3608, %v3612
    %v5723 = vmax.f32 %v5722, %v3618
    %v5724 = vmax.f32 %v5723, %v3622
    %v5725 = vmax.f32 %v5724, %v3628
    %v5726 = vmax.f32 %v5725, %v3632
    %v5727 = vmax.f32 %v5726, %v3638
    %v5728 = vmax.f32 %v5727, %v3642
    %v5729 = vmax.f32 %v5728, %v3648
    %v5730 = vmax.f32 %v5729, %v3652
    %v5731 = vmax.f32 %v5730, %v3658
    %v5732 = vmax.f32 %v5731, %v3662
    %v5733 = vmax.f32 %v5732, %v3668
    %v5734 = vmax.f32 %v5733, %v3672
    %v5735 = vmax.f32 %v5734, %v3678
    %v5736 = vmax.f32 %v5735, %v3682
    %v5737 = vrot.slane %v5736, 4
    %v5738 = vmax.f32 %v5736, %v5737
    %v5739 = vrot.slane %v5738, 2
    %v5740 = vmax.f32 %v5738, %v5739
    %v5741 = vrot.slane %v5740, 1
    %v5742 = vmax.f32 %v5740, %v5741
    %v5743 = vmax.f32 %v3610, %v3614
    %v5744 = vmax.f32 %v5743, %v3620
    %v5745 = vmax.f32 %v5744, %v3624
    %v5746 = vmax.f32 %v5745, %v3630
    %v5747 = vmax.f32 %v5746, %v3634
    %v5748 = vmax.f32 %v5747, %v3640
    %v5749 = vmax.f32 %v5748, %v3644
    %v5750 = vmax.f32 %v5749, %v3650
    %v5751 = vmax.f32 %v5750, %v3654
    %v5752 = vmax.f32 %v5751, %v3660
    %v5753 = vmax.f32 %v5752, %v3664
    %v5754 = vmax.f32 %v5753, %v3670
    %v5755 = vmax.f32 %v5754, %v3674
    %v5756 = vmax.f32 %v5755, %v3680
    %v5757 = vmax.f32 %v5756, %v3684
    %v5758 = vrot.slane %v5757, 4
    %v5759 = vmax.f32 %v5757, %v5758
    %v5760 = vrot.slane %v5759, 2
    %v5761 = vmax.f32 %v5759, %v5760
    %v5762 = vrot.slane %v5761, 1
    %v5763 = vmax.f32 %v5761, %v5762
    %v5764 = vmax.f32 %v4281, %v4285
    %v5765 = vmax.f32 %v5764, %v4291
    %v5766 = vmax.f32 %v5765, %v4295
    %v5767 = vmax.f32 %v5766, %v4301
    %v5768 = vmax.f32 %v5767, %v4305
    %v5769 = vmax.f32 %v5768, %v4311
    %v5770 = vmax.f32 %v5769, %v4315
    %v5771 = vmax.f32 %v5770, %v4321
    %v5772 = vmax.f32 %v5771, %v4325
    %v5773 = vmax.f32 %v5772, %v4331
    %v5774 = vmax.f32 %v5773, %v4335
    %v5775 = vmax.f32 %v5774, %v4341
    %v5776 = vmax.f32 %v5775, %v4345
    %v5777 = vmax.f32 %v5776, %v4351
    %v5778 = vmax.f32 %v5777, %v4355
    %v5779 = vrot.slane %v5778, 4
    %v5780 = vmax.f32 %v5778, %v5779
    %v5781 = vrot.slane %v5780, 2
    %v5782 = vmax.f32 %v5780, %v5781
    %v5783 = vrot.slane %v5782, 1
    %v5784 = vmax.f32 %v5782, %v5783
    %v5785 = vmax.f32 %v4283, %v4287
    %v5786 = vmax.f32 %v5785, %v4293
    %v5787 = vmax.f32 %v5786, %v4297
    %v5788 = vmax.f32 %v5787, %v4303
    %v5789 = vmax.f32 %v5788, %v4307
    %v5790 = vmax.f32 %v5789, %v4313
    %v5791 = vmax.f32 %v5790, %v4317
    %v5792 = vmax.f32 %v5791, %v4323
    %v5793 = vmax.f32 %v5792, %v4327
    %v5794 = vmax.f32 %v5793, %v4333
    %v5795 = vmax.f32 %v5794, %v4337
    %v5796 = vmax.f32 %v5795, %v4343
    %v5797 = vmax.f32 %v5796, %v4347
    %v5798 = vmax.f32 %v5797, %v4353
    %v5799 = vmax.f32 %v5798, %v4357
    %v5800 = vrot.slane %v5799, 4
    %v5801 = vmax.f32 %v5799, %v5800
    %v5802 = vrot.slane %v5801, 2
    %v5803 = vmax.f32 %v5801, %v5802
    %v5804 = vrot.slane %v5803, 1
    %v5805 = vmax.f32 %v5803, %v5804
    %v5806 = vmax.f32 %v4954, %v4958
    %v5807 = vmax.f32 %v5806, %v4964
    %v5808 = vmax.f32 %v5807, %v4968
    %v5809 = vmax.f32 %v5808, %v4974
    %v5810 = vmax.f32 %v5809, %v4978
    %v5811 = vmax.f32 %v5810, %v4984
    %v5812 = vmax.f32 %v5811, %v4988
    %v5813 = vmax.f32 %v5812, %v4994
    %v5814 = vmax.f32 %v5813, %v4998
    %v5815 = vmax.f32 %v5814, %v5004
    %v5816 = vmax.f32 %v5815, %v5008
    %v5817 = vmax.f32 %v5816, %v5014
    %v5818 = vmax.f32 %v5817, %v5018
    %v5819 = vmax.f32 %v5818, %v5024
    %v5820 = vmax.f32 %v5819, %v5028
    %v5821 = vrot.slane %v5820, 4
    %v5822 = vmax.f32 %v5820, %v5821
    %v5823 = vrot.slane %v5822, 2
    %v5824 = vmax.f32 %v5822, %v5823
    %v5825 = vrot.slane %v5824, 1
    %v5826 = vmax.f32 %v5824, %v5825
    %v5827 = vmax.f32 %v4956, %v4960
    %v5828 = vmax.f32 %v5827, %v4966
    %v5829 = vmax.f32 %v5828, %v4970
    %v5830 = vmax.f32 %v5829, %v4976
    %v5831 = vmax.f32 %v5830, %v4980
    %v5832 = vmax.f32 %v5831, %v4986
    %v5833 = vmax.f32 %v5832, %v4990
    %v5834 = vmax.f32 %v5833, %v4996
    %v5835 = vmax.f32 %v5834, %v5000
    %v5836 = vmax.f32 %v5835, %v5006
    %v5837 = vmax.f32 %v5836, %v5010
    %v5838 = vmax.f32 %v5837, %v5016
    %v5839 = vmax.f32 %v5838, %v5020
    %v5840 = vmax.f32 %v5839, %v5026
    %v5841 = vmax.f32 %v5840, %v5030
    %v5842 = vrot.slane %v5841, 4
    %v5843 = vmax.f32 %v5841, %v5842
    %v5844 = vrot.slane %v5843, 2
    %v5845 = vmax.f32 %v5843, %v5844
    %v5846 = vrot.slane %v5845, 1
    %v5847 = vmax.f32 %v5845, %v5846
    %v5848 = vmax.f32 %v3015, %v3019
    %v5849 = vmax.f32 %v5848, %v3025
    %v5850 = vmax.f32 %v5849, %v3029
    %v5851 = vmax.f32 %v5850, %v3035
    %v5852 = vmax.f32 %v5851, %v3039
    %v5853 = vmax.f32 %v5852, %v3045
    %v5854 = vmax.f32 %v5853, %v3049
    %v5855 = vmax.f32 %v5854, %v3055
    %v5856 = vmax.f32 %v5855, %v3059
    %v5857 = vmax.f32 %v5856, %v3065
    %v5858 = vmax.f32 %v5857, %v3069
    %v5859 = vmax.f32 %v5858, %v3075
    %v5860 = vmax.f32 %v5859, %v3079
    %v5861 = vmax.f32 %v5860, %v3085
    %v5862 = vmax.f32 %v5861, %v3089
    %v5863 = vrot.slane %v5862, 4
    %v5864 = vmax.f32 %v5862, %v5863
    %v5865 = vrot.slane %v5864, 2
    %v5866 = vmax.f32 %v5864, %v5865
    %v5867 = vrot.slane %v5866, 1
    %v5868 = vmax.f32 %v5866, %v5867
    %v5869 = vmax.f32 %v3017, %v3021
    %v5870 = vmax.f32 %v5869, %v3027
    %v5871 = vmax.f32 %v5870, %v3031
    %v5872 = vmax.f32 %v5871, %v3037
    %v5873 = vmax.f32 %v5872, %v3041
    %v5874 = vmax.f32 %v5873, %v3047
    %v5875 = vmax.f32 %v5874, %v3051
    %v5876 = vmax.f32 %v5875, %v3057
    %v5877 = vmax.f32 %v5876, %v3061
    %v5878 = vmax.f32 %v5877, %v3067
    %v5879 = vmax.f32 %v5878, %v3071
    %v5880 = vmax.f32 %v5879, %v3077
    %v5881 = vmax.f32 %v5880, %v3081
    %v5882 = vmax.f32 %v5881, %v3087
    %v5883 = vmax.f32 %v5882, %v3091
    %v5884 = vrot.slane %v5883, 4
    %v5885 = vmax.f32 %v5883, %v5884
    %v5886 = vrot.slane %v5885, 2
    %v5887 = vmax.f32 %v5885, %v5886
    %v5888 = vrot.slane %v5887, 1
    %v5889 = vmax.f32 %v5887, %v5888
    %v5890 = vmax.f32 %v3688, %v3692
    %v5891 = vmax.f32 %v5890, %v3698
    %v5892 = vmax.f32 %v5891, %v3702
    %v5893 = vmax.f32 %v5892, %v3708
    %v5894 = vmax.f32 %v5893, %v3712
    %v5895 = vmax.f32 %v5894, %v3718
    %v5896 = vmax.f32 %v5895, %v3722
    %v5897 = vmax.f32 %v5896, %v3728
    %v5898 = vmax.f32 %v5897, %v3732
    %v5899 = vmax.f32 %v5898, %v3738
    %v5900 = vmax.f32 %v5899, %v3742
    %v5901 = vmax.f32 %v5900, %v3748
    %v5902 = vmax.f32 %v5901, %v3752
    %v5903 = vmax.f32 %v5902, %v3758
    %v5904 = vmax.f32 %v5903, %v3762
    %v5905 = vrot.slane %v5904, 4
    %v5906 = vmax.f32 %v5904, %v5905
    %v5907 = vrot.slane %v5906, 2
    %v5908 = vmax.f32 %v5906, %v5907
    %v5909 = vrot.slane %v5908, 1
    %v5910 = vmax.f32 %v5908, %v5909
    %v5911 = vmax.f32 %v3690, %v3694
    %v5912 = vmax.f32 %v5911, %v3700
    %v5913 = vmax.f32 %v5912, %v3704
    %v5914 = vmax.f32 %v5913, %v3710
    %v5915 = vmax.f32 %v5914, %v3714
    %v5916 = vmax.f32 %v5915, %v3720
    %v5917 = vmax.f32 %v5916, %v3724
    %v5918 = vmax.f32 %v5917, %v3730
    %v5919 = vmax.f32 %v5918, %v3734
    %v5920 = vmax.f32 %v5919, %v3740
    %v5921 = vmax.f32 %v5920, %v3744
    %v5922 = vmax.f32 %v5921, %v3750
    %v5923 = vmax.f32 %v5922, %v3754
    %v5924 = vmax.f32 %v5923, %v3760
    %v5925 = vmax.f32 %v5924, %v3764
    %v5926 = vrot.slane %v5925, 4
    %v5927 = vmax.f32 %v5925, %v5926
    %v5928 = vrot.slane %v5927, 2
    %v5929 = vmax.f32 %v5927, %v5928
    %v5930 = vrot.slane %v5929, 1
    %v5931 = vmax.f32 %v5929, %v5930
    %v5932 = vmax.f32 %v4361, %v4365
    %v5933 = vmax.f32 %v5932, %v4371
    %v5934 = vmax.f32 %v5933, %v4375
    %v5935 = vmax.f32 %v5934, %v4381
    %v5936 = vmax.f32 %v5935, %v4385
    %v5937 = vmax.f32 %v5936, %v4391
    %v5938 = vmax.f32 %v5937, %v4395
    %v5939 = vmax.f32 %v5938, %v4401
    %v5940 = vmax.f32 %v5939, %v4405
    %v5941 = vmax.f32 %v5940, %v4411
    %v5942 = vmax.f32 %v5941, %v4415
    %v5943 = vmax.f32 %v5942, %v4421
    %v5944 = vmax.f32 %v5943, %v4425
    %v5945 = vmax.f32 %v5944, %v4431
    %v5946 = vmax.f32 %v5945, %v4435
    %v5947 = vrot.slane %v5946, 4
    %v5948 = vmax.f32 %v5946, %v5947
    %v5949 = vrot.slane %v5948, 2
    %v5950 = vmax.f32 %v5948, %v5949
    %v5951 = vrot.slane %v5950, 1
    %v5952 = vmax.f32 %v5950, %v5951
    %v5953 = vmax.f32 %v4363, %v4367
    %v5954 = vmax.f32 %v5953, %v4373
    %v5955 = vmax.f32 %v5954, %v4377
    %v5956 = vmax.f32 %v5955, %v4383
    %v5957 = vmax.f32 %v5956, %v4387
    %v5958 = vmax.f32 %v5957, %v4393
    %v5959 = vmax.f32 %v5958, %v4397
    %v5960 = vmax.f32 %v5959, %v4403
    %v5961 = vmax.f32 %v5960, %v4407
    %v5962 = vmax.f32 %v5961, %v4413
    %v5963 = vmax.f32 %v5962, %v4417
    %v5964 = vmax.f32 %v5963, %v4423
    %v5965 = vmax.f32 %v5964, %v4427
    %v5966 = vmax.f32 %v5965, %v4433
    %v5967 = vmax.f32 %v5966, %v4437
    %v5968 = vrot.slane %v5967, 4
    %v5969 = vmax.f32 %v5967, %v5968
    %v5970 = vrot.slane %v5969, 2
    %v5971 = vmax.f32 %v5969, %v5970
    %v5972 = vrot.slane %v5971, 1
    %v5973 = vmax.f32 %v5971, %v5972
    %v5974 = vmax.f32 %v5034, %v5038
    %v5975 = vmax.f32 %v5974, %v5044
    %v5976 = vmax.f32 %v5975, %v5048
    %v5977 = vmax.f32 %v5976, %v5054
    %v5978 = vmax.f32 %v5977, %v5058
    %v5979 = vmax.f32 %v5978, %v5064
    %v5980 = vmax.f32 %v5979, %v5068
    %v5981 = vmax.f32 %v5980, %v5074
    %v5982 = vmax.f32 %v5981, %v5078
    %v5983 = vmax.f32 %v5982, %v5084
    %v5984 = vmax.f32 %v5983, %v5088
    %v5985 = vmax.f32 %v5984, %v5094
    %v5986 = vmax.f32 %v5985, %v5098
    %v5987 = vmax.f32 %v5986, %v5104
    %v5988 = vmax.f32 %v5987, %v5108
    %v5989 = vrot.slane %v5988, 4
    %v5990 = vmax.f32 %v5988, %v5989
    %v5991 = vrot.slane %v5990, 2
    %v5992 = vmax.f32 %v5990, %v5991
    %v5993 = vrot.slane %v5992, 1
    %v5994 = vmax.f32 %v5992, %v5993
    %v5995 = vmax.f32 %v5036, %v5040
    %v5996 = vmax.f32 %v5995, %v5046
    %v5997 = vmax.f32 %v5996, %v5050
    %v5998 = vmax.f32 %v5997, %v5056
    %v5999 = vmax.f32 %v5998, %v5060
    %v6000 = vmax.f32 %v5999, %v5066
    %v6001 = vmax.f32 %v6000, %v5070
    %v6002 = vmax.f32 %v6001, %v5076
    %v6003 = vmax.f32 %v6002, %v5080
    %v6004 = vmax.f32 %v6003, %v5086
    %v6005 = vmax.f32 %v6004, %v5090
    %v6006 = vmax.f32 %v6005, %v5096
    %v6007 = vmax.f32 %v6006, %v5100
    %v6008 = vmax.f32 %v6007, %v5106
    %v6009 = vmax.f32 %v6008, %v5110
    %v6010 = vrot.slane %v6009, 4
    %v6011 = vmax.f32 %v6009, %v6010
    %v6012 = vrot.slane %v6011, 2
    %v6013 = vmax.f32 %v6011, %v6012
    %v6014 = vrot.slane %v6013, 1
    %v6015 = vmax.f32 %v6013, %v6014
    %v6016 = vmax.f32 %v3095, %v3099
    %v6017 = vmax.f32 %v6016, %v3105
    %v6018 = vmax.f32 %v6017, %v3109
    %v6019 = vmax.f32 %v6018, %v3115
    %v6020 = vmax.f32 %v6019, %v3119
    %v6021 = vmax.f32 %v6020, %v3125
    %v6022 = vmax.f32 %v6021, %v3129
    %v6023 = vmax.f32 %v6022, %v3135
    %v6024 = vmax.f32 %v6023, %v3139
    %v6025 = vmax.f32 %v6024, %v3145
    %v6026 = vmax.f32 %v6025, %v3149
    %v6027 = vmax.f32 %v6026, %v3155
    %v6028 = vmax.f32 %v6027, %v3159
    %v6029 = vmax.f32 %v6028, %v3165
    %v6030 = vmax.f32 %v6029, %v3169
    %v6031 = vrot.slane %v6030, 4
    %v6032 = vmax.f32 %v6030, %v6031
    %v6033 = vrot.slane %v6032, 2
    %v6034 = vmax.f32 %v6032, %v6033
    %v6035 = vrot.slane %v6034, 1
    %v6036 = vmax.f32 %v6034, %v6035
    %v6037 = vmax.f32 %v3097, %v3101
    %v6038 = vmax.f32 %v6037, %v3107
    %v6039 = vmax.f32 %v6038, %v3111
    %v6040 = vmax.f32 %v6039, %v3117
    %v6041 = vmax.f32 %v6040, %v3121
    %v6042 = vmax.f32 %v6041, %v3127
    %v6043 = vmax.f32 %v6042, %v3131
    %v6044 = vmax.f32 %v6043, %v3137
    %v6045 = vmax.f32 %v6044, %v3141
    %v6046 = vmax.f32 %v6045, %v3147
    %v6047 = vmax.f32 %v6046, %v3151
    %v6048 = vmax.f32 %v6047, %v3157
    %v6049 = vmax.f32 %v6048, %v3161
    %v6050 = vmax.f32 %v6049, %v3167
    %v6051 = vmax.f32 %v6050, %v3171
    %v6052 = vrot.slane %v6051, 4
    %v6053 = vmax.f32 %v6051, %v6052
    %v6054 = vrot.slane %v6053, 2
    %v6055 = vmax.f32 %v6053, %v6054
    %v6056 = vrot.slane %v6055, 1
    %v6057 = vmax.f32 %v6055, %v6056
    %v6058 = vmax.f32 %v3768, %v3772
    %v6059 = vmax.f32 %v6058, %v3778
    %v6060 = vmax.f32 %v6059, %v3782
    %v6061 = vmax.f32 %v6060, %v3788
    %v6062 = vmax.f32 %v6061, %v3792
    %v6063 = vmax.f32 %v6062, %v3798
    %v6064 = vmax.f32 %v6063, %v3802
    %v6065 = vmax.f32 %v6064, %v3808
    %v6066 = vmax.f32 %v6065, %v3812
    %v6067 = vmax.f32 %v6066, %v3818
    %v6068 = vmax.f32 %v6067, %v3822
    %v6069 = vmax.f32 %v6068, %v3828
    %v6070 = vmax.f32 %v6069, %v3832
    %v6071 = vmax.f32 %v6070, %v3838
    %v6072 = vmax.f32 %v6071, %v3842
    %v6073 = vrot.slane %v6072, 4
    %v6074 = vmax.f32 %v6072, %v6073
    %v6075 = vrot.slane %v6074, 2
    %v6076 = vmax.f32 %v6074, %v6075
    %v6077 = vrot.slane %v6076, 1
    %v6078 = vmax.f32 %v6076, %v6077
    %v6079 = vmax.f32 %v3770, %v3774
    %v6080 = vmax.f32 %v6079, %v3780
    %v6081 = vmax.f32 %v6080, %v3784
    %v6082 = vmax.f32 %v6081, %v3790
    %v6083 = vmax.f32 %v6082, %v3794
    %v6084 = vmax.f32 %v6083, %v3800
    %v6085 = vmax.f32 %v6084, %v3804
    %v6086 = vmax.f32 %v6085, %v3810
    %v6087 = vmax.f32 %v6086, %v3814
    %v6088 = vmax.f32 %v6087, %v3820
    %v6089 = vmax.f32 %v6088, %v3824
    %v6090 = vmax.f32 %v6089, %v3830
    %v6091 = vmax.f32 %v6090, %v3834
    %v6092 = vmax.f32 %v6091, %v3840
    %v6093 = vmax.f32 %v6092, %v3844
    %v6094 = vrot.slane %v6093, 4
    %v6095 = vmax.f32 %v6093, %v6094
    %v6096 = vrot.slane %v6095, 2
    %v6097 = vmax.f32 %v6095, %v6096
    %v6098 = vrot.slane %v6097, 1
    %v6099 = vmax.f32 %v6097, %v6098
    %v6100 = vmax.f32 %v4441, %v4445
    %v6101 = vmax.f32 %v6100, %v4451
    %v6102 = vmax.f32 %v6101, %v4455
    %v6103 = vmax.f32 %v6102, %v4461
    %v6104 = vmax.f32 %v6103, %v4465
    %v6105 = vmax.f32 %v6104, %v4471
    %v6106 = vmax.f32 %v6105, %v4475
    %v6107 = vmax.f32 %v6106, %v4481
    %v6108 = vmax.f32 %v6107, %v4485
    %v6109 = vmax.f32 %v6108, %v4491
    %v6110 = vmax.f32 %v6109, %v4495
    %v6111 = vmax.f32 %v6110, %v4501
    %v6112 = vmax.f32 %v6111, %v4505
    %v6113 = vmax.f32 %v6112, %v4511
    %v6114 = vmax.f32 %v6113, %v4515
    %v6115 = vrot.slane %v6114, 4
    %v6116 = vmax.f32 %v6114, %v6115
    %v6117 = vrot.slane %v6116, 2
    %v6118 = vmax.f32 %v6116, %v6117
    %v6119 = vrot.slane %v6118, 1
    %v6120 = vmax.f32 %v6118, %v6119
    %v6121 = vmax.f32 %v4443, %v4447
    %v6122 = vmax.f32 %v6121, %v4453
    %v6123 = vmax.f32 %v6122, %v4457
    %v6124 = vmax.f32 %v6123, %v4463
    %v6125 = vmax.f32 %v6124, %v4467
    %v6126 = vmax.f32 %v6125, %v4473
    %v6127 = vmax.f32 %v6126, %v4477
    %v6128 = vmax.f32 %v6127, %v4483
    %v6129 = vmax.f32 %v6128, %v4487
    %v6130 = vmax.f32 %v6129, %v4493
    %v6131 = vmax.f32 %v6130, %v4497
    %v6132 = vmax.f32 %v6131, %v4503
    %v6133 = vmax.f32 %v6132, %v4507
    %v6134 = vmax.f32 %v6133, %v4513
    %v6135 = vmax.f32 %v6134, %v4517
    %v6136 = vrot.slane %v6135, 4
    %v6137 = vmax.f32 %v6135, %v6136
    %v6138 = vrot.slane %v6137, 2
    %v6139 = vmax.f32 %v6137, %v6138
    %v6140 = vrot.slane %v6139, 1
    %v6141 = vmax.f32 %v6139, %v6140
    %v6142 = vmax.f32 %v5114, %v5118
    %v6143 = vmax.f32 %v6142, %v5124
    %v6144 = vmax.f32 %v6143, %v5128
    %v6145 = vmax.f32 %v6144, %v5134
    %v6146 = vmax.f32 %v6145, %v5138
    %v6147 = vmax.f32 %v6146, %v5144
    %v6148 = vmax.f32 %v6147, %v5148
    %v6149 = vmax.f32 %v6148, %v5154
    %v6150 = vmax.f32 %v6149, %v5158
    %v6151 = vmax.f32 %v6150, %v5164
    %v6152 = vmax.f32 %v6151, %v5168
    %v6153 = vmax.f32 %v6152, %v5174
    %v6154 = vmax.f32 %v6153, %v5178
    %v6155 = vmax.f32 %v6154, %v5184
    %v6156 = vmax.f32 %v6155, %v5188
    %v6157 = vrot.slane %v6156, 4
    %v6158 = vmax.f32 %v6156, %v6157
    %v6159 = vrot.slane %v6158, 2
    %v6160 = vmax.f32 %v6158, %v6159
    %v6161 = vrot.slane %v6160, 1
    %v6162 = vmax.f32 %v6160, %v6161
    %v6163 = vmax.f32 %v5116, %v5120
    %v6164 = vmax.f32 %v6163, %v5126
    %v6165 = vmax.f32 %v6164, %v5130
    %v6166 = vmax.f32 %v6165, %v5136
    %v6167 = vmax.f32 %v6166, %v5140
    %v6168 = vmax.f32 %v6167, %v5146
    %v6169 = vmax.f32 %v6168, %v5150
    %v6170 = vmax.f32 %v6169, %v5156
    %v6171 = vmax.f32 %v6170, %v5160
    %v6172 = vmax.f32 %v6171, %v5166
    %v6173 = vmax.f32 %v6172, %v5170
    %v6174 = vmax.f32 %v6173, %v5176
    %v6175 = vmax.f32 %v6174, %v5180
    %v6176 = vmax.f32 %v6175, %v5186
    %v6177 = vmax.f32 %v6176, %v5190
    %v6178 = vrot.slane %v6177, 4
    %v6179 = vmax.f32 %v6177, %v6178
    %v6180 = vrot.slane %v6179, 2
    %v6181 = vmax.f32 %v6179, %v6180
    %v6182 = vrot.slane %v6181, 1
    %v6183 = vmax.f32 %v6181, %v6182
    %v6184 = vmax.f32 %v3175, %v3179
    %v6185 = vmax.f32 %v6184, %v3185
    %v6186 = vmax.f32 %v6185, %v3189
    %v6187 = vmax.f32 %v6186, %v3195
    %v6188 = vmax.f32 %v6187, %v3199
    %v6189 = vmax.f32 %v6188, %v3205
    %v6190 = vmax.f32 %v6189, %v3209
    %v6191 = vmax.f32 %v6190, %v3215
    %v6192 = vmax.f32 %v6191, %v3219
    %v6193 = vmax.f32 %v6192, %v3225
    %v6194 = vmax.f32 %v6193, %v3229
    %v6195 = vmax.f32 %v6194, %v3235
    %v6196 = vmax.f32 %v6195, %v3239
    %v6197 = vmax.f32 %v6196, %v3245
    %v6198 = vmax.f32 %v6197, %v3249
    %v6199 = vrot.slane %v6198, 4
    %v6200 = vmax.f32 %v6198, %v6199
    %v6201 = vrot.slane %v6200, 2
    %v6202 = vmax.f32 %v6200, %v6201
    %v6203 = vrot.slane %v6202, 1
    %v6204 = vmax.f32 %v6202, %v6203
    %v6205 = vmax.f32 %v3177, %v3181
    %v6206 = vmax.f32 %v6205, %v3187
    %v6207 = vmax.f32 %v6206, %v3191
    %v6208 = vmax.f32 %v6207, %v3197
    %v6209 = vmax.f32 %v6208, %v3201
    %v6210 = vmax.f32 %v6209, %v3207
    %v6211 = vmax.f32 %v6210, %v3211
    %v6212 = vmax.f32 %v6211, %v3217
    %v6213 = vmax.f32 %v6212, %v3221
    %v6214 = vmax.f32 %v6213, %v3227
    %v6215 = vmax.f32 %v6214, %v3231
    %v6216 = vmax.f32 %v6215, %v3237
    %v6217 = vmax.f32 %v6216, %v3241
    %v6218 = vmax.f32 %v6217, %v3247
    %v6219 = vmax.f32 %v6218, %v3251
    %v6220 = vrot.slane %v6219, 4
    %v6221 = vmax.f32 %v6219, %v6220
    %v6222 = vrot.slane %v6221, 2
    %v6223 = vmax.f32 %v6221, %v6222
    %v6224 = vrot.slane %v6223, 1
    %v6225 = vmax.f32 %v6223, %v6224
    %v6226 = vmax.f32 %v3848, %v3852
    %v6227 = vmax.f32 %v6226, %v3858
    %v6228 = vmax.f32 %v6227, %v3862
    %v6229 = vmax.f32 %v6228, %v3868
    %v6230 = vmax.f32 %v6229, %v3872
    %v6231 = vmax.f32 %v6230, %v3878
    %v6232 = vmax.f32 %v6231, %v3882
    %v6233 = vmax.f32 %v6232, %v3888
    %v6234 = vmax.f32 %v6233, %v3892
    %v6235 = vmax.f32 %v6234, %v3898
    %v6236 = vmax.f32 %v6235, %v3902
    %v6237 = vmax.f32 %v6236, %v3908
    %v6238 = vmax.f32 %v6237, %v3912
    %v6239 = vmax.f32 %v6238, %v3918
    %v6240 = vmax.f32 %v6239, %v3922
    %v6241 = vrot.slane %v6240, 4
    %v6242 = vmax.f32 %v6240, %v6241
    %v6243 = vrot.slane %v6242, 2
    %v6244 = vmax.f32 %v6242, %v6243
    %v6245 = vrot.slane %v6244, 1
    %v6246 = vmax.f32 %v6244, %v6245
    %v6247 = vmax.f32 %v3850, %v3854
    %v6248 = vmax.f32 %v6247, %v3860
    %v6249 = vmax.f32 %v6248, %v3864
    %v6250 = vmax.f32 %v6249, %v3870
    %v6251 = vmax.f32 %v6250, %v3874
    %v6252 = vmax.f32 %v6251, %v3880
    %v6253 = vmax.f32 %v6252, %v3884
    %v6254 = vmax.f32 %v6253, %v3890
    %v6255 = vmax.f32 %v6254, %v3894
    %v6256 = vmax.f32 %v6255, %v3900
    %v6257 = vmax.f32 %v6256, %v3904
    %v6258 = vmax.f32 %v6257, %v3910
    %v6259 = vmax.f32 %v6258, %v3914
    %v6260 = vmax.f32 %v6259, %v3920
    %v6261 = vmax.f32 %v6260, %v3924
    %v6262 = vrot.slane %v6261, 4
    %v6263 = vmax.f32 %v6261, %v6262
    %v6264 = vrot.slane %v6263, 2
    %v6265 = vmax.f32 %v6263, %v6264
    %v6266 = vrot.slane %v6265, 1
    %v6267 = vmax.f32 %v6265, %v6266
    %v6268 = vmax.f32 %v4521, %v4525
    %v6269 = vmax.f32 %v6268, %v4531
    %v6270 = vmax.f32 %v6269, %v4535
    %v6271 = vmax.f32 %v6270, %v4541
    %v6272 = vmax.f32 %v6271, %v4545
    %v6273 = vmax.f32 %v6272, %v4551
    %v6274 = vmax.f32 %v6273, %v4555
    %v6275 = vmax.f32 %v6274, %v4561
    %v6276 = vmax.f32 %v6275, %v4565
    %v6277 = vmax.f32 %v6276, %v4571
    %v6278 = vmax.f32 %v6277, %v4575
    %v6279 = vmax.f32 %v6278, %v4581
    %v6280 = vmax.f32 %v6279, %v4585
    %v6281 = vmax.f32 %v6280, %v4591
    %v6282 = vmax.f32 %v6281, %v4595
    %v6283 = vrot.slane %v6282, 4
    %v6284 = vmax.f32 %v6282, %v6283
    %v6285 = vrot.slane %v6284, 2
    %v6286 = vmax.f32 %v6284, %v6285
    %v6287 = vrot.slane %v6286, 1
    %v6288 = vmax.f32 %v6286, %v6287
    %v6289 = vmax.f32 %v4523, %v4527
    %v6290 = vmax.f32 %v6289, %v4533
    %v6291 = vmax.f32 %v6290, %v4537
    %v6292 = vmax.f32 %v6291, %v4543
    %v6293 = vmax.f32 %v6292, %v4547
    %v6294 = vmax.f32 %v6293, %v4553
    %v6295 = vmax.f32 %v6294, %v4557
    %v6296 = vmax.f32 %v6295, %v4563
    %v6297 = vmax.f32 %v6296, %v4567
    %v6298 = vmax.f32 %v6297, %v4573
    %v6299 = vmax.f32 %v6298, %v4577
    %v6300 = vmax.f32 %v6299, %v4583
    %v6301 = vmax.f32 %v6300, %v4587
    %v6302 = vmax.f32 %v6301, %v4593
    %v6303 = vmax.f32 %v6302, %v4597
    %v6304 = vrot.slane %v6303, 4
    %v6305 = vmax.f32 %v6303, %v6304
    %v6306 = vrot.slane %v6305, 2
    %v6307 = vmax.f32 %v6305, %v6306
    %v6308 = vrot.slane %v6307, 1
    %v6309 = vmax.f32 %v6307, %v6308
    %v6310 = vmax.f32 %v5194, %v5198
    %v6311 = vmax.f32 %v6310, %v5204
    %v6312 = vmax.f32 %v6311, %v5208
    %v6313 = vmax.f32 %v6312, %v5214
    %v6314 = vmax.f32 %v6313, %v5218
    %v6315 = vmax.f32 %v6314, %v5224
    %v6316 = vmax.f32 %v6315, %v5228
    %v6317 = vmax.f32 %v6316, %v5234
    %v6318 = vmax.f32 %v6317, %v5238
    %v6319 = vmax.f32 %v6318, %v5244
    %v6320 = vmax.f32 %v6319, %v5248
    %v6321 = vmax.f32 %v6320, %v5254
    %v6322 = vmax.f32 %v6321, %v5258
    %v6323 = vmax.f32 %v6322, %v5264
    %v6324 = vmax.f32 %v6323, %v5268
    %v6325 = vrot.slane %v6324, 4
    %v6326 = vmax.f32 %v6324, %v6325
    %v6327 = vrot.slane %v6326, 2
    %v6328 = vmax.f32 %v6326, %v6327
    %v6329 = vrot.slane %v6328, 1
    %v6330 = vmax.f32 %v6328, %v6329
    %v6331 = vmax.f32 %v5196, %v5200
    %v6332 = vmax.f32 %v6331, %v5206
    %v6333 = vmax.f32 %v6332, %v5210
    %v6334 = vmax.f32 %v6333, %v5216
    %v6335 = vmax.f32 %v6334, %v5220
    %v6336 = vmax.f32 %v6335, %v5226
    %v6337 = vmax.f32 %v6336, %v5230
    %v6338 = vmax.f32 %v6337, %v5236
    %v6339 = vmax.f32 %v6338, %v5240
    %v6340 = vmax.f32 %v6339, %v5246
    %v6341 = vmax.f32 %v6340, %v5250
    %v6342 = vmax.f32 %v6341, %v5256
    %v6343 = vmax.f32 %v6342, %v5260
    %v6344 = vmax.f32 %v6343, %v5266
    %v6345 = vmax.f32 %v6344, %v5270
    %v6346 = vrot.slane %v6345, 4
    %v6347 = vmax.f32 %v6345, %v6346
    %v6348 = vrot.slane %v6347, 2
    %v6349 = vmax.f32 %v6347, %v6348
    %v6350 = vrot.slane %v6349, 1
    %v6351 = vmax.f32 %v6349, %v6350
    %v6352 = vmax.f32 %v3255, %v3259
    %v6353 = vmax.f32 %v6352, %v3265
    %v6354 = vmax.f32 %v6353, %v3269
    %v6355 = vmax.f32 %v6354, %v3275
    %v6356 = vmax.f32 %v6355, %v3279
    %v6357 = vmax.f32 %v6356, %v3285
    %v6358 = vmax.f32 %v6357, %v3289
    %v6359 = vmax.f32 %v6358, %v3295
    %v6360 = vmax.f32 %v6359, %v3299
    %v6361 = vmax.f32 %v6360, %v3305
    %v6362 = vmax.f32 %v6361, %v3309
    %v6363 = vmax.f32 %v6362, %v3315
    %v6364 = vmax.f32 %v6363, %v3319
    %v6365 = vmax.f32 %v6364, %v3325
    %v6366 = vmax.f32 %v6365, %v3329
    %v6367 = vrot.slane %v6366, 4
    %v6368 = vmax.f32 %v6366, %v6367
    %v6369 = vrot.slane %v6368, 2
    %v6370 = vmax.f32 %v6368, %v6369
    %v6371 = vrot.slane %v6370, 1
    %v6372 = vmax.f32 %v6370, %v6371
    %v6373 = vmax.f32 %v3257, %v3261
    %v6374 = vmax.f32 %v6373, %v3267
    %v6375 = vmax.f32 %v6374, %v3271
    %v6376 = vmax.f32 %v6375, %v3277
    %v6377 = vmax.f32 %v6376, %v3281
    %v6378 = vmax.f32 %v6377, %v3287
    %v6379 = vmax.f32 %v6378, %v3291
    %v6380 = vmax.f32 %v6379, %v3297
    %v6381 = vmax.f32 %v6380, %v3301
    %v6382 = vmax.f32 %v6381, %v3307
    %v6383 = vmax.f32 %v6382, %v3311
    %v6384 = vmax.f32 %v6383, %v3317
    %v6385 = vmax.f32 %v6384, %v3321
    %v6386 = vmax.f32 %v6385, %v3327
    %v6387 = vmax.f32 %v6386, %v3331
    %v6388 = vrot.slane %v6387, 4
    %v6389 = vmax.f32 %v6387, %v6388
    %v6390 = vrot.slane %v6389, 2
    %v6391 = vmax.f32 %v6389, %v6390
    %v6392 = vrot.slane %v6391, 1
    %v6393 = vmax.f32 %v6391, %v6392
    %v6394 = vmax.f32 %v3928, %v3932
    %v6395 = vmax.f32 %v6394, %v3938
    %v6396 = vmax.f32 %v6395, %v3942
    %v6397 = vmax.f32 %v6396, %v3948
    %v6398 = vmax.f32 %v6397, %v3952
    %v6399 = vmax.f32 %v6398, %v3958
    %v6400 = vmax.f32 %v6399, %v3962
    %v6401 = vmax.f32 %v6400, %v3968
    %v6402 = vmax.f32 %v6401, %v3972
    %v6403 = vmax.f32 %v6402, %v3978
    %v6404 = vmax.f32 %v6403, %v3982
    %v6405 = vmax.f32 %v6404, %v3988
    %v6406 = vmax.f32 %v6405, %v3992
    %v6407 = vmax.f32 %v6406, %v3998
    %v6408 = vmax.f32 %v6407, %v4002
    %v6409 = vrot.slane %v6408, 4
    %v6410 = vmax.f32 %v6408, %v6409
    %v6411 = vrot.slane %v6410, 2
    %v6412 = vmax.f32 %v6410, %v6411
    %v6413 = vrot.slane %v6412, 1
    %v6414 = vmax.f32 %v6412, %v6413
    %v6415 = vmax.f32 %v3930, %v3934
    %v6416 = vmax.f32 %v6415, %v3940
    %v6417 = vmax.f32 %v6416, %v3944
    %v6418 = vmax.f32 %v6417, %v3950
    %v6419 = vmax.f32 %v6418, %v3954
    %v6420 = vmax.f32 %v6419, %v3960
    %v6421 = vmax.f32 %v6420, %v3964
    %v6422 = vmax.f32 %v6421, %v3970
    %v6423 = vmax.f32 %v6422, %v3974
    %v6424 = vmax.f32 %v6423, %v3980
    %v6425 = vmax.f32 %v6424, %v3984
    %v6426 = vmax.f32 %v6425, %v3990
    %v6427 = vmax.f32 %v6426, %v3994
    %v6428 = vmax.f32 %v6427, %v4000
    %v6429 = vmax.f32 %v6428, %v4004
    %v6430 = vrot.slane %v6429, 4
    %v6431 = vmax.f32 %v6429, %v6430
    %v6432 = vrot.slane %v6431, 2
    %v6433 = vmax.f32 %v6431, %v6432
    %v6434 = vrot.slane %v6433, 1
    %v6435 = vmax.f32 %v6433, %v6434
    %v6436 = vmax.f32 %v4601, %v4605
    %v6437 = vmax.f32 %v6436, %v4611
    %v6438 = vmax.f32 %v6437, %v4615
    %v6439 = vmax.f32 %v6438, %v4621
    %v6440 = vmax.f32 %v6439, %v4625
    %v6441 = vmax.f32 %v6440, %v4631
    %v6442 = vmax.f32 %v6441, %v4635
    %v6443 = vmax.f32 %v6442, %v4641
    %v6444 = vmax.f32 %v6443, %v4645
    %v6445 = vmax.f32 %v6444, %v4651
    %v6446 = vmax.f32 %v6445, %v4655
    %v6447 = vmax.f32 %v6446, %v4661
    %v6448 = vmax.f32 %v6447, %v4665
    %v6449 = vmax.f32 %v6448, %v4671
    %v6450 = vmax.f32 %v6449, %v4675
    %v6451 = vrot.slane %v6450, 4
    %v6452 = vmax.f32 %v6450, %v6451
    %v6453 = vrot.slane %v6452, 2
    %v6454 = vmax.f32 %v6452, %v6453
    %v6455 = vrot.slane %v6454, 1
    %v6456 = vmax.f32 %v6454, %v6455
    %v6457 = vmax.f32 %v4603, %v4607
    %v6458 = vmax.f32 %v6457, %v4613
    %v6459 = vmax.f32 %v6458, %v4617
    %v6460 = vmax.f32 %v6459, %v4623
    %v6461 = vmax.f32 %v6460, %v4627
    %v6462 = vmax.f32 %v6461, %v4633
    %v6463 = vmax.f32 %v6462, %v4637
    %v6464 = vmax.f32 %v6463, %v4643
    %v6465 = vmax.f32 %v6464, %v4647
    %v6466 = vmax.f32 %v6465, %v4653
    %v6467 = vmax.f32 %v6466, %v4657
    %v6468 = vmax.f32 %v6467, %v4663
    %v6469 = vmax.f32 %v6468, %v4667
    %v6470 = vmax.f32 %v6469, %v4673
    %v6471 = vmax.f32 %v6470, %v4677
    %v6472 = vrot.slane %v6471, 4
    %v6473 = vmax.f32 %v6471, %v6472
    %v6474 = vrot.slane %v6473, 2
    %v6475 = vmax.f32 %v6473, %v6474
    %v6476 = vrot.slane %v6475, 1
    %v6477 = vmax.f32 %v6475, %v6476
    %v6478 = vmax.f32 %v5274, %v5278
    %v6479 = vmax.f32 %v6478, %v5284
    %v6480 = vmax.f32 %v6479, %v5288
    %v6481 = vmax.f32 %v6480, %v5294
    %v6482 = vmax.f32 %v6481, %v5298
    %v6483 = vmax.f32 %v6482, %v5304
    %v6484 = vmax.f32 %v6483, %v5308
    %v6485 = vmax.f32 %v6484, %v5314
    %v6486 = vmax.f32 %v6485, %v5318
    %v6487 = vmax.f32 %v6486, %v5324
    %v6488 = vmax.f32 %v6487, %v5328
    %v6489 = vmax.f32 %v6488, %v5334
    %v6490 = vmax.f32 %v6489, %v5338
    %v6491 = vmax.f32 %v6490, %v5344
    %v6492 = vmax.f32 %v6491, %v5348
    %v6493 = vrot.slane %v6492, 4
    %v6494 = vmax.f32 %v6492, %v6493
    %v6495 = vrot.slane %v6494, 2
    %v6496 = vmax.f32 %v6494, %v6495
    %v6497 = vrot.slane %v6496, 1
    %v6498 = vmax.f32 %v6496, %v6497
    %v6499 = vmax.f32 %v5276, %v5280
    %v6500 = vmax.f32 %v6499, %v5286
    %v6501 = vmax.f32 %v6500, %v5290
    %v6502 = vmax.f32 %v6501, %v5296
    %v6503 = vmax.f32 %v6502, %v5300
    %v6504 = vmax.f32 %v6503, %v5306
    %v6505 = vmax.f32 %v6504, %v5310
    %v6506 = vmax.f32 %v6505, %v5316
    %v6507 = vmax.f32 %v6506, %v5320
    %v6508 = vmax.f32 %v6507, %v5326
    %v6509 = vmax.f32 %v6508, %v5330
    %v6510 = vmax.f32 %v6509, %v5336
    %v6511 = vmax.f32 %v6510, %v5340
    %v6512 = vmax.f32 %v6511, %v5346
    %v6513 = vmax.f32 %v6512, %v5350
    %v6514 = vrot.slane %v6513, 4
    %v6515 = vmax.f32 %v6513, %v6514
    %v6516 = vrot.slane %v6515, 2
    %v6517 = vmax.f32 %v6515, %v6516
    %v6518 = vrot.slane %v6517, 1
    %v6519 = vmax.f32 %v6517, %v6518
    %v6520 = vmax.f32 %v3335, %v3339
    %v6521 = vmax.f32 %v6520, %v3345
    %v6522 = vmax.f32 %v6521, %v3349
    %v6523 = vmax.f32 %v6522, %v3355
    %v6524 = vmax.f32 %v6523, %v3359
    %v6525 = vmax.f32 %v6524, %v3365
    %v6526 = vmax.f32 %v6525, %v3369
    %v6527 = vmax.f32 %v6526, %v3375
    %v6528 = vmax.f32 %v6527, %v3379
    %v6529 = vmax.f32 %v6528, %v3385
    %v6530 = vmax.f32 %v6529, %v3389
    %v6531 = vmax.f32 %v6530, %v3395
    %v6532 = vmax.f32 %v6531, %v3399
    %v6533 = vmax.f32 %v6532, %v3405
    %v6534 = vmax.f32 %v6533, %v3409
    %v6535 = vrot.slane %v6534, 4
    %v6536 = vmax.f32 %v6534, %v6535
    %v6537 = vrot.slane %v6536, 2
    %v6538 = vmax.f32 %v6536, %v6537
    %v6539 = vrot.slane %v6538, 1
    %v6540 = vmax.f32 %v6538, %v6539
    %v6541 = vmax.f32 %v3337, %v3341
    %v6542 = vmax.f32 %v6541, %v3347
    %v6543 = vmax.f32 %v6542, %v3351
    %v6544 = vmax.f32 %v6543, %v3357
    %v6545 = vmax.f32 %v6544, %v3361
    %v6546 = vmax.f32 %v6545, %v3367
    %v6547 = vmax.f32 %v6546, %v3371
    %v6548 = vmax.f32 %v6547, %v3377
    %v6549 = vmax.f32 %v6548, %v3381
    %v6550 = vmax.f32 %v6549, %v3387
    %v6551 = vmax.f32 %v6550, %v3391
    %v6552 = vmax.f32 %v6551, %v3397
    %v6553 = vmax.f32 %v6552, %v3401
    %v6554 = vmax.f32 %v6553, %v3407
    %v6555 = vmax.f32 %v6554, %v3411
    %v6556 = vrot.slane %v6555, 4
    %v6557 = vmax.f32 %v6555, %v6556
    %v6558 = vrot.slane %v6557, 2
    %v6559 = vmax.f32 %v6557, %v6558
    %v6560 = vrot.slane %v6559, 1
    %v6561 = vmax.f32 %v6559, %v6560
    %v6562 = vmax.f32 %v4008, %v4012
    %v6563 = vmax.f32 %v6562, %v4018
    %v6564 = vmax.f32 %v6563, %v4022
    %v6565 = vmax.f32 %v6564, %v4028
    %v6566 = vmax.f32 %v6565, %v4032
    %v6567 = vmax.f32 %v6566, %v4038
    %v6568 = vmax.f32 %v6567, %v4042
    %v6569 = vmax.f32 %v6568, %v4048
    %v6570 = vmax.f32 %v6569, %v4052
    %v6571 = vmax.f32 %v6570, %v4058
    %v6572 = vmax.f32 %v6571, %v4062
    %v6573 = vmax.f32 %v6572, %v4068
    %v6574 = vmax.f32 %v6573, %v4072
    %v6575 = vmax.f32 %v6574, %v4078
    %v6576 = vmax.f32 %v6575, %v4082
    %v6577 = vrot.slane %v6576, 4
    %v6578 = vmax.f32 %v6576, %v6577
    %v6579 = vrot.slane %v6578, 2
    %v6580 = vmax.f32 %v6578, %v6579
    %v6581 = vrot.slane %v6580, 1
    %v6582 = vmax.f32 %v6580, %v6581
    %v6583 = vmax.f32 %v4010, %v4014
    %v6584 = vmax.f32 %v6583, %v4020
    %v6585 = vmax.f32 %v6584, %v4024
    %v6586 = vmax.f32 %v6585, %v4030
    %v6587 = vmax.f32 %v6586, %v4034
    %v6588 = vmax.f32 %v6587, %v4040
    %v6589 = vmax.f32 %v6588, %v4044
    %v6590 = vmax.f32 %v6589, %v4050
    %v6591 = vmax.f32 %v6590, %v4054
    %v6592 = vmax.f32 %v6591, %v4060
    %v6593 = vmax.f32 %v6592, %v4064
    %v6594 = vmax.f32 %v6593, %v4070
    %v6595 = vmax.f32 %v6594, %v4074
    %v6596 = vmax.f32 %v6595, %v4080
    %v6597 = vmax.f32 %v6596, %v4084
    %v6598 = vrot.slane %v6597, 4
    %v6599 = vmax.f32 %v6597, %v6598
    %v6600 = vrot.slane %v6599, 2
    %v6601 = vmax.f32 %v6599, %v6600
    %v6602 = vrot.slane %v6601, 1
    %v6603 = vmax.f32 %v6601, %v6602
    %v6604 = vmax.f32 %v4681, %v4685
    %v6605 = vmax.f32 %v6604, %v4691
    %v6606 = vmax.f32 %v6605, %v4695
    %v6607 = vmax.f32 %v6606, %v4701
    %v6608 = vmax.f32 %v6607, %v4705
    %v6609 = vmax.f32 %v6608, %v4711
    %v6610 = vmax.f32 %v6609, %v4715
    %v6611 = vmax.f32 %v6610, %v4721
    %v6612 = vmax.f32 %v6611, %v4725
    %v6613 = vmax.f32 %v6612, %v4731
    %v6614 = vmax.f32 %v6613, %v4735
    %v6615 = vmax.f32 %v6614, %v4741
    %v6616 = vmax.f32 %v6615, %v4745
    %v6617 = vmax.f32 %v6616, %v4751
    %v6618 = vmax.f32 %v6617, %v4755
    %v6619 = vrot.slane %v6618, 4
    %v6620 = vmax.f32 %v6618, %v6619
    %v6621 = vrot.slane %v6620, 2
    %v6622 = vmax.f32 %v6620, %v6621
    %v6623 = vrot.slane %v6622, 1
    %v6624 = vmax.f32 %v6622, %v6623
    %v6625 = vmax.f32 %v4683, %v4687
    %v6626 = vmax.f32 %v6625, %v4693
    %v6627 = vmax.f32 %v6626, %v4697
    %v6628 = vmax.f32 %v6627, %v4703
    %v6629 = vmax.f32 %v6628, %v4707
    %v6630 = vmax.f32 %v6629, %v4713
    %v6631 = vmax.f32 %v6630, %v4717
    %v6632 = vmax.f32 %v6631, %v4723
    %v6633 = vmax.f32 %v6632, %v4727
    %v6634 = vmax.f32 %v6633, %v4733
    %v6635 = vmax.f32 %v6634, %v4737
    %v6636 = vmax.f32 %v6635, %v4743
    %v6637 = vmax.f32 %v6636, %v4747
    %v6638 = vmax.f32 %v6637, %v4753
    %v6639 = vmax.f32 %v6638, %v4757
    %v6640 = vrot.slane %v6639, 4
    %v6641 = vmax.f32 %v6639, %v6640
    %v6642 = vrot.slane %v6641, 2
    %v6643 = vmax.f32 %v6641, %v6642
    %v6644 = vrot.slane %v6643, 1
    %v6645 = vmax.f32 %v6643, %v6644
    %v6646 = vmax.f32 %v5354, %v5358
    %v6647 = vmax.f32 %v6646, %v5364
    %v6648 = vmax.f32 %v6647, %v5368
    %v6649 = vmax.f32 %v6648, %v5374
    %v6650 = vmax.f32 %v6649, %v5378
    %v6651 = vmax.f32 %v6650, %v5384
    %v6652 = vmax.f32 %v6651, %v5388
    %v6653 = vmax.f32 %v6652, %v5394
    %v6654 = vmax.f32 %v6653, %v5398
    %v6655 = vmax.f32 %v6654, %v5404
    %v6656 = vmax.f32 %v6655, %v5408
    %v6657 = vmax.f32 %v6656, %v5414
    %v6658 = vmax.f32 %v6657, %v5418
    %v6659 = vmax.f32 %v6658, %v5424
    %v6660 = vmax.f32 %v6659, %v5428
    %v6661 = vrot.slane %v6660, 4
    %v6662 = vmax.f32 %v6660, %v6661
    %v6663 = vrot.slane %v6662, 2
    %v6664 = vmax.f32 %v6662, %v6663
    %v6665 = vrot.slane %v6664, 1
    %v6666 = vmax.f32 %v6664, %v6665
    %v6667 = vmax.f32 %v5356, %v5360
    %v6668 = vmax.f32 %v6667, %v5366
    %v6669 = vmax.f32 %v6668, %v5370
    %v6670 = vmax.f32 %v6669, %v5376
    %v6671 = vmax.f32 %v6670, %v5380
    %v6672 = vmax.f32 %v6671, %v5386
    %v6673 = vmax.f32 %v6672, %v5390
    %v6674 = vmax.f32 %v6673, %v5396
    %v6675 = vmax.f32 %v6674, %v5400
    %v6676 = vmax.f32 %v6675, %v5406
    %v6677 = vmax.f32 %v6676, %v5410
    %v6678 = vmax.f32 %v6677, %v5416
    %v6679 = vmax.f32 %v6678, %v5420
    %v6680 = vmax.f32 %v6679, %v5426
    %v6681 = vmax.f32 %v6680, %v5430
    %v6682 = vrot.slane %v6681, 4
    %v6683 = vmax.f32 %v6681, %v6682
    %v6684 = vrot.slane %v6683, 2
    %v6685 = vmax.f32 %v6683, %v6684
    %v6686 = vrot.slane %v6685, 1
    %v6687 = vmax.f32 %v6685, %v6686
    %v6688 = vmax.f32 %v3415, %v3419
    %v6689 = vmax.f32 %v6688, %v3425
    %v6690 = vmax.f32 %v6689, %v3429
    %v6691 = vmax.f32 %v6690, %v3435
    %v6692 = vmax.f32 %v6691, %v3439
    %v6693 = vmax.f32 %v6692, %v3445
    %v6694 = vmax.f32 %v6693, %v3449
    %v6695 = vmax.f32 %v6694, %v3455
    %v6696 = vmax.f32 %v6695, %v3459
    %v6697 = vmax.f32 %v6696, %v3465
    %v6698 = vmax.f32 %v6697, %v3469
    %v6699 = vmax.f32 %v6698, %v3475
    %v6700 = vmax.f32 %v6699, %v3479
    %v6701 = vmax.f32 %v6700, %v3485
    %v6702 = vmax.f32 %v6701, %v3489
    %v6703 = vrot.slane %v6702, 4
    %v6704 = vmax.f32 %v6702, %v6703
    %v6705 = vrot.slane %v6704, 2
    %v6706 = vmax.f32 %v6704, %v6705
    %v6707 = vrot.slane %v6706, 1
    %v6708 = vmax.f32 %v6706, %v6707
    %v6709 = vmax.f32 %v3417, %v3421
    %v6710 = vmax.f32 %v6709, %v3427
    %v6711 = vmax.f32 %v6710, %v3431
    %v6712 = vmax.f32 %v6711, %v3437
    %v6713 = vmax.f32 %v6712, %v3441
    %v6714 = vmax.f32 %v6713, %v3447
    %v6715 = vmax.f32 %v6714, %v3451
    %v6716 = vmax.f32 %v6715, %v3457
    %v6717 = vmax.f32 %v6716, %v3461
    %v6718 = vmax.f32 %v6717, %v3467
    %v6719 = vmax.f32 %v6718, %v3471
    %v6720 = vmax.f32 %v6719, %v3477
    %v6721 = vmax.f32 %v6720, %v3481
    %v6722 = vmax.f32 %v6721, %v3487
    %v6723 = vmax.f32 %v6722, %v3491
    %v6724 = vrot.slane %v6723, 4
    %v6725 = vmax.f32 %v6723, %v6724
    %v6726 = vrot.slane %v6725, 2
    %v6727 = vmax.f32 %v6725, %v6726
    %v6728 = vrot.slane %v6727, 1
    %v6729 = vmax.f32 %v6727, %v6728
    %v6730 = vmax.f32 %v4088, %v4092
    %v6731 = vmax.f32 %v6730, %v4098
    %v6732 = vmax.f32 %v6731, %v4102
    %v6733 = vmax.f32 %v6732, %v4108
    %v6734 = vmax.f32 %v6733, %v4112
    %v6735 = vmax.f32 %v6734, %v4118
    %v6736 = vmax.f32 %v6735, %v4122
    %v6737 = vmax.f32 %v6736, %v4128
    %v6738 = vmax.f32 %v6737, %v4132
    %v6739 = vmax.f32 %v6738, %v4138
    %v6740 = vmax.f32 %v6739, %v4142
    %v6741 = vmax.f32 %v6740, %v4148
    %v6742 = vmax.f32 %v6741, %v4152
    %v6743 = vmax.f32 %v6742, %v4158
    %v6744 = vmax.f32 %v6743, %v4162
    %v6745 = vrot.slane %v6744, 4
    %v6746 = vmax.f32 %v6744, %v6745
    %v6747 = vrot.slane %v6746, 2
    %v6748 = vmax.f32 %v6746, %v6747
    %v6749 = vrot.slane %v6748, 1
    %v6750 = vmax.f32 %v6748, %v6749
    %v6751 = vmax.f32 %v4090, %v4094
    %v6752 = vmax.f32 %v6751, %v4100
    %v6753 = vmax.f32 %v6752, %v4104
    %v6754 = vmax.f32 %v6753, %v4110
    %v6755 = vmax.f32 %v6754, %v4114
    %v6756 = vmax.f32 %v6755, %v4120
    %v6757 = vmax.f32 %v6756, %v4124
    %v6758 = vmax.f32 %v6757, %v4130
    %v6759 = vmax.f32 %v6758, %v4134
    %v6760 = vmax.f32 %v6759, %v4140
    %v6761 = vmax.f32 %v6760, %v4144
    %v6762 = vmax.f32 %v6761, %v4150
    %v6763 = vmax.f32 %v6762, %v4154
    %v6764 = vmax.f32 %v6763, %v4160
    %v6765 = vmax.f32 %v6764, %v4164
    %v6766 = vrot.slane %v6765, 4
    %v6767 = vmax.f32 %v6765, %v6766
    %v6768 = vrot.slane %v6767, 2
    %v6769 = vmax.f32 %v6767, %v6768
    %v6770 = vrot.slane %v6769, 1
    %v6771 = vmax.f32 %v6769, %v6770
    %v6772 = vmax.f32 %v4761, %v4765
    %v6773 = vmax.f32 %v6772, %v4771
    %v6774 = vmax.f32 %v6773, %v4775
    %v6775 = vmax.f32 %v6774, %v4781
    %v6776 = vmax.f32 %v6775, %v4785
    %v6777 = vmax.f32 %v6776, %v4791
    %v6778 = vmax.f32 %v6777, %v4795
    %v6779 = vmax.f32 %v6778, %v4801
    %v6780 = vmax.f32 %v6779, %v4805
    %v6781 = vmax.f32 %v6780, %v4811
    %v6782 = vmax.f32 %v6781, %v4815
    %v6783 = vmax.f32 %v6782, %v4821
    %v6784 = vmax.f32 %v6783, %v4825
    %v6785 = vmax.f32 %v6784, %v4831
    %v6786 = vmax.f32 %v6785, %v4835
    %v6787 = vrot.slane %v6786, 4
    %v6788 = vmax.f32 %v6786, %v6787
    %v6789 = vrot.slane %v6788, 2
    %v6790 = vmax.f32 %v6788, %v6789
    %v6791 = vrot.slane %v6790, 1
    %v6792 = vmax.f32 %v6790, %v6791
    %v6793 = vmax.f32 %v4763, %v4767
    %v6794 = vmax.f32 %v6793, %v4773
    %v6795 = vmax.f32 %v6794, %v4777
    %v6796 = vmax.f32 %v6795, %v4783
    %v6797 = vmax.f32 %v6796, %v4787
    %v6798 = vmax.f32 %v6797, %v4793
    %v6799 = vmax.f32 %v6798, %v4797
    %v6800 = vmax.f32 %v6799, %v4803
    %v6801 = vmax.f32 %v6800, %v4807
    %v6802 = vmax.f32 %v6801, %v4813
    %v6803 = vmax.f32 %v6802, %v4817
    %v6804 = vmax.f32 %v6803, %v4823
    %v6805 = vmax.f32 %v6804, %v4827
    %v6806 = vmax.f32 %v6805, %v4833
    %v6807 = vmax.f32 %v6806, %v4837
    %v6808 = vrot.slane %v6807, 4
    %v6809 = vmax.f32 %v6807, %v6808
    %v6810 = vrot.slane %v6809, 2
    %v6811 = vmax.f32 %v6809, %v6810
    %v6812 = vrot.slane %v6811, 1
    %v6813 = vmax.f32 %v6811, %v6812
    %v6814 = vmax.f32 %v5434, %v5438
    %v6815 = vmax.f32 %v6814, %v5444
    %v6816 = vmax.f32 %v6815, %v5448
    %v6817 = vmax.f32 %v6816, %v5454
    %v6818 = vmax.f32 %v6817, %v5458
    %v6819 = vmax.f32 %v6818, %v5464
    %v6820 = vmax.f32 %v6819, %v5468
    %v6821 = vmax.f32 %v6820, %v5474
    %v6822 = vmax.f32 %v6821, %v5478
    %v6823 = vmax.f32 %v6822, %v5484
    %v6824 = vmax.f32 %v6823, %v5488
    %v6825 = vmax.f32 %v6824, %v5494
    %v6826 = vmax.f32 %v6825, %v5498
    %v6827 = vmax.f32 %v6826, %v5504
    %v6828 = vmax.f32 %v6827, %v5508
    %v6829 = vrot.slane %v6828, 4
    %v6830 = vmax.f32 %v6828, %v6829
    %v6831 = vrot.slane %v6830, 2
    %v6832 = vmax.f32 %v6830, %v6831
    %v6833 = vrot.slane %v6832, 1
    %v6834 = vmax.f32 %v6832, %v6833
    %v6835 = vmax.f32 %v5436, %v5440
    %v6836 = vmax.f32 %v6835, %v5446
    %v6837 = vmax.f32 %v6836, %v5450
    %v6838 = vmax.f32 %v6837, %v5456
    %v6839 = vmax.f32 %v6838, %v5460
    %v6840 = vmax.f32 %v6839, %v5466
    %v6841 = vmax.f32 %v6840, %v5470
    %v6842 = vmax.f32 %v6841, %v5476
    %v6843 = vmax.f32 %v6842, %v5480
    %v6844 = vmax.f32 %v6843, %v5486
    %v6845 = vmax.f32 %v6844, %v5490
    %v6846 = vmax.f32 %v6845, %v5496
    %v6847 = vmax.f32 %v6846, %v5500
    %v6848 = vmax.f32 %v6847, %v5506
    %v6849 = vmax.f32 %v6848, %v5510
    %v6850 = vrot.slane %v6849, 4
    %v6851 = vmax.f32 %v6849, %v6850
    %v6852 = vrot.slane %v6851, 2
    %v6853 = vmax.f32 %v6851, %v6852
    %v6854 = vrot.slane %v6853, 1
    %v6855 = vmax.f32 %v6853, %v6854
    %v6856 = vld [vmem:[%s6] sm:$0xff]
    %v6858 = vlaneseq
    %v6859 = vshrl.u32 %v6858, 7
    %v6860 = vsub.s32 0, %v6859
    %v6861 = vrot.slane %v6856, %v6860
    %v6862 = vlaneseq
    %v6863 = vshrl.u32 %v6862, 7
    %v6864 = vsub.s32 1, %v6863
    %v6865 = vrot.slane %v6856, %v6864
    %v6866 = vlaneseq
    %v6867 = vshrl.u32 %v6866, 7
    %v6868 = vsub.s32 2, %v6867
    %v6869 = vrot.slane %v6856, %v6868
    %v6870 = vlaneseq
    %v6871 = vshrl.u32 %v6870, 7
    %v6872 = vsub.s32 3, %v6871
    %v6873 = vrot.slane %v6856, %v6872
    %v6874 = vlaneseq
    %v6875 = vshrl.u32 %v6874, 7
    %v6876 = vsub.s32 4, %v6875
    %v6877 = vrot.slane %v6856, %v6876
    %v6878 = vlaneseq
    %v6879 = vshrl.u32 %v6878, 7
    %v6880 = vsub.s32 5, %v6879
    %v6881 = vrot.slane %v6856, %v6880
    %v6882 = vlaneseq
    %v6883 = vshrl.u32 %v6882, 7
    %v6884 = vsub.s32 6, %v6883
    %v6885 = vrot.slane %v6856, %v6884
    %v6886 = vlaneseq
    %v6887 = vshrl.u32 %v6886, 7
    %v6888 = vsub.s32 7, %v6887
    %v6889 = vrot.slane %v6856, %v6888
    %v6898 = vadd.f32 %v5532, %v6861
    %v6899 = vadd.f32 %v5553, %v6865
    %v6900 = vadd.f32 %v5574, %v6869
    %v6901 = vadd.f32 %v5595, %v6873
    %v6902 = vadd.f32 %v5616, %v6877
    %v6903 = vadd.f32 %v5637, %v6881
    %v6904 = vadd.f32 %v5658, %v6885
    %v6905 = vadd.f32 %v5679, %v6889
    %v6906 = vadd.f32 %v5700, %v6861
    %v6907 = vadd.f32 %v5721, %v6865
    %v6908 = vadd.f32 %v5742, %v6869
    %v6909 = vadd.f32 %v5763, %v6873
    %v6910 = vadd.f32 %v5784, %v6877
    %v6911 = vadd.f32 %v5805, %v6881
    %v6912 = vadd.f32 %v5826, %v6885
    %v6913 = vadd.f32 %v5847, %v6889
    %v6914 = vadd.f32 %v5868, %v6861
    %v6915 = vadd.f32 %v5889, %v6865
    %v6916 = vadd.f32 %v5910, %v6869
    %v6917 = vadd.f32 %v5931, %v6873
    %v6918 = vadd.f32 %v5952, %v6877
    %v6919 = vadd.f32 %v5973, %v6881
    %v6920 = vadd.f32 %v5994, %v6885
    %v6921 = vadd.f32 %v6015, %v6889
    %v6922 = vadd.f32 %v6036, %v6861
    %v6923 = vadd.f32 %v6057, %v6865
    %v6924 = vadd.f32 %v6078, %v6869
    %v6925 = vadd.f32 %v6099, %v6873
    %v6926 = vadd.f32 %v6120, %v6877
    %v6927 = vadd.f32 %v6141, %v6881
    %v6928 = vadd.f32 %v6162, %v6885
    %v6929 = vadd.f32 %v6183, %v6889
    %v6930 = vadd.f32 %v6204, %v6861
    %v6931 = vadd.f32 %v6225, %v6865
    %v6932 = vadd.f32 %v6246, %v6869
    %v6933 = vadd.f32 %v6267, %v6873
    %v6934 = vadd.f32 %v6288, %v6877
    %v6935 = vadd.f32 %v6309, %v6881
    %v6936 = vadd.f32 %v6330, %v6885
    %v6937 = vadd.f32 %v6351, %v6889
    %v6938 = vadd.f32 %v6372, %v6861
    %v6939 = vadd.f32 %v6393, %v6865
    %v6940 = vadd.f32 %v6414, %v6869
    %v6941 = vadd.f32 %v6435, %v6873
    %v6942 = vadd.f32 %v6456, %v6877
    %v6943 = vadd.f32 %v6477, %v6881
    %v6944 = vadd.f32 %v6498, %v6885
    %v6945 = vadd.f32 %v6519, %v6889
    %v6946 = vadd.f32 %v6540, %v6861
    %v6947 = vadd.f32 %v6561, %v6865
    %v6948 = vadd.f32 %v6582, %v6869
    %v6949 = vadd.f32 %v6603, %v6873
    %v6950 = vadd.f32 %v6624, %v6877
    %v6951 = vadd.f32 %v6645, %v6881
    %v6952 = vadd.f32 %v6666, %v6885
    %v6953 = vadd.f32 %v6687, %v6889
    %v6954 = vadd.f32 %v6708, %v6861
    %v6955 = vadd.f32 %v6729, %v6865
    %v6956 = vadd.f32 %v6750, %v6869
    %v6957 = vadd.f32 %v6771, %v6873
    %v6958 = vadd.f32 %v6792, %v6877
    %v6959 = vadd.f32 %v6813, %v6881
    %v6960 = vadd.f32 %v6834, %v6885
    %v6961 = vadd.f32 %v6855, %v6889
    %v6962 = vmax.f32 %v6898, 0.0
    %v6963 = vmax.f32 %v6899, 0.0
    %v6964 = vmax.f32 %v6900, 0.0
    %v6965 = vmax.f32 %v6901, 0.0
    %v6966 = vmax.f32 %v6902, 0.0
    %v6967 = vmax.f32 %v6903, 0.0
    %v6968 = vmax.f32 %v6904, 0.0
    %v6969 = vmax.f32 %v6905, 0.0
    %v6970 = vmax.f32 %v6906, 0.0
    %v6971 = vmax.f32 %v6907, 0.0
    %v6972 = vmax.f32 %v6908, 0.0
    %v6973 = vmax.f32 %v6909, 0.0
    %v6974 = vmax.f32 %v6910, 0.0
    %v6975 = vmax.f32 %v6911, 0.0
    %v6976 = vmax.f32 %v6912, 0.0
    %v6977 = vmax.f32 %v6913, 0.0
    %v6978 = vmax.f32 %v6914, 0.0
    %v6979 = vmax.f32 %v6915, 0.0
    %v6980 = vmax.f32 %v6916, 0.0
    %v6981 = vmax.f32 %v6917, 0.0
    %v6982 = vmax.f32 %v6918, 0.0
    %v6983 = vmax.f32 %v6919, 0.0
    %v6984 = vmax.f32 %v6920, 0.0
    %v6985 = vmax.f32 %v6921, 0.0
    %v6986 = vmax.f32 %v6922, 0.0
    %v6987 = vmax.f32 %v6923, 0.0
    %v6988 = vmax.f32 %v6924, 0.0
    %v6989 = vmax.f32 %v6925, 0.0
    %v6990 = vmax.f32 %v6926, 0.0
    %v6991 = vmax.f32 %v6927, 0.0
    %v6992 = vmax.f32 %v6928, 0.0
    %v6993 = vmax.f32 %v6929, 0.0
    %v6994 = vmax.f32 %v6930, 0.0
    %v6995 = vmax.f32 %v6931, 0.0
    %v6996 = vmax.f32 %v6932, 0.0
    %v6997 = vmax.f32 %v6933, 0.0
    %v6998 = vmax.f32 %v6934, 0.0
    %v6999 = vmax.f32 %v6935, 0.0
    %v7000 = vmax.f32 %v6936, 0.0
    %v7001 = vmax.f32 %v6937, 0.0
    %v7002 = vmax.f32 %v6938, 0.0
    %v7003 = vmax.f32 %v6939, 0.0
    %v7004 = vmax.f32 %v6940, 0.0
    %v7005 = vmax.f32 %v6941, 0.0
    %v7006 = vmax.f32 %v6942, 0.0
    %v7007 = vmax.f32 %v6943, 0.0
    %v7008 = vmax.f32 %v6944, 0.0
    %v7009 = vmax.f32 %v6945, 0.0
    %v7010 = vmax.f32 %v6946, 0.0
    %v7011 = vmax.f32 %v6947, 0.0
    %v7012 = vmax.f32 %v6948, 0.0
    %v7013 = vmax.f32 %v6949, 0.0
    %v7014 = vmax.f32 %v6950, 0.0
    %v7015 = vmax.f32 %v6951, 0.0
    %v7016 = vmax.f32 %v6952, 0.0
    %v7017 = vmax.f32 %v6953, 0.0
    %v7018 = vmax.f32 %v6954, 0.0
    %v7019 = vmax.f32 %v6955, 0.0
    %v7020 = vmax.f32 %v6956, 0.0
    %v7021 = vmax.f32 %v6957, 0.0
    %v7022 = vmax.f32 %v6958, 0.0
    %v7023 = vmax.f32 %v6959, 0.0
    %v7024 = vmax.f32 %v6960, 0.0
    %v7025 = vmax.f32 %v6961, 0.0
    %v7026 = vpack.c.bf16 %v6962, %v6962
    %v7027 = vpack.c.bf16 %v6963, %v6963
    %v7028 = vpack.c.bf16 %v6964, %v6964
    %v7029 = vpack.c.bf16 %v6965, %v6965
    %v7030 = vpack.c.bf16 %v6966, %v6966
    %v7031 = vpack.c.bf16 %v6967, %v6967
    %v7032 = vpack.c.bf16 %v6968, %v6968
    %v7033 = vpack.c.bf16 %v6969, %v6969
    %v7034 = vpack.c.bf16 %v6970, %v6970
    %v7035 = vpack.c.bf16 %v6971, %v6971
    %v7036 = vpack.c.bf16 %v6972, %v6972
    %v7037 = vpack.c.bf16 %v6973, %v6973
    %v7038 = vpack.c.bf16 %v6974, %v6974
    %v7039 = vpack.c.bf16 %v6975, %v6975
    %v7040 = vpack.c.bf16 %v6976, %v6976
    %v7041 = vpack.c.bf16 %v6977, %v6977
    %v7042 = vpack.c.bf16 %v6978, %v6978
    %v7043 = vpack.c.bf16 %v6979, %v6979
    %v7044 = vpack.c.bf16 %v6980, %v6980
    %v7045 = vpack.c.bf16 %v6981, %v6981
    %v7046 = vpack.c.bf16 %v6982, %v6982
    %v7047 = vpack.c.bf16 %v6983, %v6983
    %v7048 = vpack.c.bf16 %v6984, %v6984
    %v7049 = vpack.c.bf16 %v6985, %v6985
    %v7050 = vpack.c.bf16 %v6986, %v6986
    %v7051 = vpack.c.bf16 %v6987, %v6987
    %v7052 = vpack.c.bf16 %v6988, %v6988
    %v7053 = vpack.c.bf16 %v6989, %v6989
    %v7054 = vpack.c.bf16 %v6990, %v6990
    %v7055 = vpack.c.bf16 %v6991, %v6991
    %v7056 = vpack.c.bf16 %v6992, %v6992
    %v7057 = vpack.c.bf16 %v6993, %v6993
    %v7058 = vpack.c.bf16 %v6994, %v6994
    %v7059 = vpack.c.bf16 %v6995, %v6995
    %v7060 = vpack.c.bf16 %v6996, %v6996
    %v7061 = vpack.c.bf16 %v6997, %v6997
    %v7062 = vpack.c.bf16 %v6998, %v6998
    %v7063 = vpack.c.bf16 %v6999, %v6999
    %v7064 = vpack.c.bf16 %v7000, %v7000
    %v7065 = vpack.c.bf16 %v7001, %v7001
    %v7066 = vpack.c.bf16 %v7002, %v7002
    %v7067 = vpack.c.bf16 %v7003, %v7003
    %v7068 = vpack.c.bf16 %v7004, %v7004
    %v7069 = vpack.c.bf16 %v7005, %v7005
    %v7070 = vpack.c.bf16 %v7006, %v7006
    %v7071 = vpack.c.bf16 %v7007, %v7007
    %v7072 = vpack.c.bf16 %v7008, %v7008
    %v7073 = vpack.c.bf16 %v7009, %v7009
    %v7074 = vpack.c.bf16 %v7010, %v7010
    %v7075 = vpack.c.bf16 %v7011, %v7011
    %v7076 = vpack.c.bf16 %v7012, %v7012
    %v7077 = vpack.c.bf16 %v7013, %v7013
    %v7078 = vpack.c.bf16 %v7014, %v7014
    %v7079 = vpack.c.bf16 %v7015, %v7015
    %v7080 = vpack.c.bf16 %v7016, %v7016
    %v7081 = vpack.c.bf16 %v7017, %v7017
    %v7082 = vpack.c.bf16 %v7018, %v7018
    %v7083 = vpack.c.bf16 %v7019, %v7019
    %v7084 = vpack.c.bf16 %v7020, %v7020
    %v7085 = vpack.c.bf16 %v7021, %v7021
    %v7086 = vpack.c.bf16 %v7022, %v7022
    %v7087 = vpack.c.bf16 %v7023, %v7023
    %v7088 = vpack.c.bf16 %v7024, %v7024
    %v7089 = vpack.c.bf16 %v7025, %v7025
    %v7090 = vld [vmem:[#allocation2] sm:$0xff]
    %v7091 = vld [vmem:[#allocation2 + $0x8] sm:$0xff]
    %v7092 = vld [vmem:[#allocation2 + $0x10] sm:$0xff]
    %v7093 = vld [vmem:[#allocation2 + $0x18] sm:$0xff]
    %v7094 = vld [vmem:[#allocation2 + $0x20] sm:$0xff]
    %v7095 = vld [vmem:[#allocation2 + $0x28] sm:$0xff]
    %v7096 = vld [vmem:[#allocation2 + $0x30] sm:$0xff]
    %v7097 = vld [vmem:[#allocation2 + $0x38] sm:$0xff]
    %v7098 = vld [vmem:[#allocation2 + $0x40] sm:$0xff]
    %v7099 = vld [vmem:[#allocation2 + $0x48] sm:$0xff]
    %v7100 = vld [vmem:[#allocation2 + $0x50] sm:$0xff]
    %v7101 = vld [vmem:[#allocation2 + $0x58] sm:$0xff]
    %v7102 = vld [vmem:[#allocation2 + $0x60] sm:$0xff]
    %v7103 = vld [vmem:[#allocation2 + $0x68] sm:$0xff]
    %v7104 = vld [vmem:[#allocation2 + $0x70] sm:$0xff]
    %v7105 = vld [vmem:[#allocation2 + $0x78] sm:$0xff]
    %v7106 = vld [vmem:[#allocation2 + $0x80] sm:$0xff]
    %v7107 = vld [vmem:[#allocation2 + $0x88] sm:$0xff]
    %v7108 = vld [vmem:[#allocation2 + $0x90] sm:$0xff]
    %v7109 = vld [vmem:[#allocation2 + $0x98] sm:$0xff]
    %v7110 = vld [vmem:[#allocation2 + $0xa0] sm:$0xff]
    %v7111 = vld [vmem:[#allocation2 + $0xa8] sm:$0xff]
    %v7112 = vld [vmem:[#allocation2 + $0xb0] sm:$0xff]
    %v7113 = vld [vmem:[#allocation2 + $0xb8] sm:$0xff]
    %v7114 = vld [vmem:[#allocation2 + $0xc0] sm:$0xff]
    %v7115 = vld [vmem:[#allocation2 + $0xc8] sm:$0xff]
    %v7116 = vld [vmem:[#allocation2 + $0xd0] sm:$0xff]
    %v7117 = vld [vmem:[#allocation2 + $0xd8] sm:$0xff]
    %v7118 = vld [vmem:[#allocation2 + $0xe0] sm:$0xff]
    %v7119 = vld [vmem:[#allocation2 + $0xe8] sm:$0xff]
    %v7120 = vld [vmem:[#allocation2 + $0xf0] sm:$0xff]
    %v7121 = vld [vmem:[#allocation2 + $0xf8] sm:$0xff]
    %v7122 = vld [vmem:[#allocation2 + $0x100] sm:$0xff]
    %v7123 = vld [vmem:[#allocation2 + $0x108] sm:$0xff]
    %v7124 = vld [vmem:[#allocation2 + $0x110] sm:$0xff]
    %v7125 = vld [vmem:[#allocation2 + $0x118] sm:$0xff]
    %v7126 = vld [vmem:[#allocation2 + $0x120] sm:$0xff]
    %v7127 = vld [vmem:[#allocation2 + $0x128] sm:$0xff]
    %v7128 = vld [vmem:[#allocation2 + $0x130] sm:$0xff]
    %v7129 = vld [vmem:[#allocation2 + $0x138] sm:$0xff]
    %v7130 = vld [vmem:[#allocation2 + $0x140] sm:$0xff]
    %v7131 = vld [vmem:[#allocation2 + $0x148] sm:$0xff]
    %v7132 = vld [vmem:[#allocation2 + $0x150] sm:$0xff]
    %v7133 = vld [vmem:[#allocation2 + $0x158] sm:$0xff]
    %v7134 = vld [vmem:[#allocation2 + $0x160] sm:$0xff]
    %v7135 = vld [vmem:[#allocation2 + $0x168] sm:$0xff]
    %v7136 = vld [vmem:[#allocation2 + $0x170] sm:$0xff]
    %v7137 = vld [vmem:[#allocation2 + $0x178] sm:$0xff]
    %v7138 = vld [vmem:[#allocation2 + $0x180] sm:$0xff]
    %v7139 = vld [vmem:[#allocation2 + $0x188] sm:$0xff]
    %v7140 = vld [vmem:[#allocation2 + $0x190] sm:$0xff]
    %v7141 = vld [vmem:[#allocation2 + $0x198] sm:$0xff]
    %v7142 = vld [vmem:[#allocation2 + $0x1a0] sm:$0xff]
    %v7143 = vld [vmem:[#allocation2 + $0x1a8] sm:$0xff]
    %v7144 = vld [vmem:[#allocation2 + $0x1b0] sm:$0xff]
    %v7145 = vld [vmem:[#allocation2 + $0x1b8] sm:$0xff]
    %v7146 = vld [vmem:[#allocation2 + $0x1c0] sm:$0xff]
    %v7147 = vld [vmem:[#allocation2 + $0x1c8] sm:$0xff]
    %v7148 = vld [vmem:[#allocation2 + $0x1d0] sm:$0xff]
    %v7149 = vld [vmem:[#allocation2 + $0x1d8] sm:$0xff]
    %v7150 = vld [vmem:[#allocation2 + $0x1e0] sm:$0xff]
    %v7151 = vld [vmem:[#allocation2 + $0x1e8] sm:$0xff]
    %v7152 = vld [vmem:[#allocation2 + $0x1f0] sm:$0xff]
    %v7153 = vld [vmem:[#allocation2 + $0x1f8] sm:$0xff]
    %v7154 = vld [vmem:[#allocation2 + $0x200] sm:$0xff]
    %v7155 = vld [vmem:[#allocation2 + $0x208] sm:$0xff]
    %v7156 = vld [vmem:[#allocation2 + $0x210] sm:$0xff]
    %v7157 = vld [vmem:[#allocation2 + $0x218] sm:$0xff]
    %v7158 = vld [vmem:[#allocation2 + $0x220] sm:$0xff]
    %v7159 = vld [vmem:[#allocation2 + $0x228] sm:$0xff]
    %v7160 = vld [vmem:[#allocation2 + $0x230] sm:$0xff]
    %v7161 = vld [vmem:[#allocation2 + $0x238] sm:$0xff]
    %v7162 = vld [vmem:[#allocation2 + $0x240] sm:$0xff]
    %v7163 = vld [vmem:[#allocation2 + $0x248] sm:$0xff]
    %v7164 = vld [vmem:[#allocation2 + $0x250] sm:$0xff]
    %v7165 = vld [vmem:[#allocation2 + $0x258] sm:$0xff]
    %v7166 = vld [vmem:[#allocation2 + $0x260] sm:$0xff]
    %v7167 = vld [vmem:[#allocation2 + $0x268] sm:$0xff]
    %v7168 = vld [vmem:[#allocation2 + $0x270] sm:$0xff]
    %v7169 = vld [vmem:[#allocation2 + $0x278] sm:$0xff]
    %v7170 = vld [vmem:[#allocation2 + $0x280] sm:$0xff]
    %v7171 = vld [vmem:[#allocation2 + $0x288] sm:$0xff]
    %v7172 = vld [vmem:[#allocation2 + $0x290] sm:$0xff]
    %v7173 = vld [vmem:[#allocation2 + $0x298] sm:$0xff]
    %v7174 = vld [vmem:[#allocation2 + $0x2a0] sm:$0xff]
    %v7175 = vld [vmem:[#allocation2 + $0x2a8] sm:$0xff]
    %v7176 = vld [vmem:[#allocation2 + $0x2b0] sm:$0xff]
    %v7177 = vld [vmem:[#allocation2 + $0x2b8] sm:$0xff]
    %v7178 = vld [vmem:[#allocation2 + $0x2c0] sm:$0xff]
    %v7179 = vld [vmem:[#allocation2 + $0x2c8] sm:$0xff]
    %v7180 = vld [vmem:[#allocation2 + $0x2d0] sm:$0xff]
    %v7181 = vld [vmem:[#allocation2 + $0x2d8] sm:$0xff]
    %v7182 = vld [vmem:[#allocation2 + $0x2e0] sm:$0xff]
    %v7183 = vld [vmem:[#allocation2 + $0x2e8] sm:$0xff]
    %v7184 = vld [vmem:[#allocation2 + $0x2f0] sm:$0xff]
    %v7185 = vld [vmem:[#allocation2 + $0x2f8] sm:$0xff]
    %v7186 = vld [vmem:[#allocation2 + $0x300] sm:$0xff]
    %v7187 = vld [vmem:[#allocation2 + $0x308] sm:$0xff]
    %v7188 = vld [vmem:[#allocation2 + $0x310] sm:$0xff]
    %v7189 = vld [vmem:[#allocation2 + $0x318] sm:$0xff]
    %v7190 = vld [vmem:[#allocation2 + $0x320] sm:$0xff]
    %v7191 = vld [vmem:[#allocation2 + $0x328] sm:$0xff]
    %v7192 = vld [vmem:[#allocation2 + $0x330] sm:$0xff]
    %v7193 = vld [vmem:[#allocation2 + $0x338] sm:$0xff]
    %v7194 = vld [vmem:[#allocation2 + $0x340] sm:$0xff]
    %v7195 = vld [vmem:[#allocation2 + $0x348] sm:$0xff]
    %v7196 = vld [vmem:[#allocation2 + $0x350] sm:$0xff]
    %v7197 = vld [vmem:[#allocation2 + $0x358] sm:$0xff]
    %v7198 = vld [vmem:[#allocation2 + $0x360] sm:$0xff]
    %v7199 = vld [vmem:[#allocation2 + $0x368] sm:$0xff]
    %v7200 = vld [vmem:[#allocation2 + $0x370] sm:$0xff]
    %v7201 = vld [vmem:[#allocation2 + $0x378] sm:$0xff]
    %v7202 = vld [vmem:[#allocation2 + $0x380] sm:$0xff]
    %v7203 = vld [vmem:[#allocation2 + $0x388] sm:$0xff]
    %v7204 = vld [vmem:[#allocation2 + $0x390] sm:$0xff]
    %v7205 = vld [vmem:[#allocation2 + $0x398] sm:$0xff]
    %v7206 = vld [vmem:[#allocation2 + $0x3a0] sm:$0xff]
    %v7207 = vld [vmem:[#allocation2 + $0x3a8] sm:$0xff]
    %v7208 = vld [vmem:[#allocation2 + $0x3b0] sm:$0xff]
    %v7209 = vld [vmem:[#allocation2 + $0x3b8] sm:$0xff]
    %v7210 = vld [vmem:[#allocation2 + $0x3c0] sm:$0xff]
    %v7211 = vld [vmem:[#allocation2 + $0x3c8] sm:$0xff]
    %v7212 = vld [vmem:[#allocation2 + $0x3d0] sm:$0xff]
    %v7213 = vld [vmem:[#allocation2 + $0x3d8] sm:$0xff]
    %v7214 = vld [vmem:[#allocation2 + $0x3e0] sm:$0xff]
    %v7215 = vld [vmem:[#allocation2 + $0x3e8] sm:$0xff]
    %v7216 = vld [vmem:[#allocation2 + $0x3f0] sm:$0xff]
    %v7217 = vld [vmem:[#allocation2 + $0x3f8] sm:$0xff]
    %v7218 = vld [vmem:[#allocation2 + $0x400] sm:$0xff]
    %v7219 = vld [vmem:[#allocation2 + $0x408] sm:$0xff]
    %v7220 = vld [vmem:[#allocation2 + $0x410] sm:$0xff]
    %v7221 = vld [vmem:[#allocation2 + $0x418] sm:$0xff]
    %v7222 = vld [vmem:[#allocation2 + $0x420] sm:$0xff]
    %v7223 = vld [vmem:[#allocation2 + $0x428] sm:$0xff]
    %v7224 = vld [vmem:[#allocation2 + $0x430] sm:$0xff]
    %v7225 = vld [vmem:[#allocation2 + $0x438] sm:$0xff]
    %v7226 = vld [vmem:[#allocation2 + $0x440] sm:$0xff]
    %v7227 = vld [vmem:[#allocation2 + $0x448] sm:$0xff]
    %v7228 = vld [vmem:[#allocation2 + $0x450] sm:$0xff]
    %v7229 = vld [vmem:[#allocation2 + $0x458] sm:$0xff]
    %v7230 = vld [vmem:[#allocation2 + $0x460] sm:$0xff]
    %v7231 = vld [vmem:[#allocation2 + $0x468] sm:$0xff]
    %v7232 = vld [vmem:[#allocation2 + $0x470] sm:$0xff]
    %v7233 = vld [vmem:[#allocation2 + $0x478] sm:$0xff]
    %v7234 = vld [vmem:[#allocation2 + $0x480] sm:$0xff]
    %v7235 = vld [vmem:[#allocation2 + $0x488] sm:$0xff]
    %v7236 = vld [vmem:[#allocation2 + $0x490] sm:$0xff]
    %v7237 = vld [vmem:[#allocation2 + $0x498] sm:$0xff]
    %v7238 = vld [vmem:[#allocation2 + $0x4a0] sm:$0xff]
    %v7239 = vld [vmem:[#allocation2 + $0x4a8] sm:$0xff]
    %v7240 = vld [vmem:[#allocation2 + $0x4b0] sm:$0xff]
    %v7241 = vld [vmem:[#allocation2 + $0x4b8] sm:$0xff]
    %v7242 = vld [vmem:[#allocation2 + $0x4c0] sm:$0xff]
    %v7243 = vld [vmem:[#allocation2 + $0x4c8] sm:$0xff]
    %v7244 = vld [vmem:[#allocation2 + $0x4d0] sm:$0xff]
    %v7245 = vld [vmem:[#allocation2 + $0x4d8] sm:$0xff]
    %v7246 = vld [vmem:[#allocation2 + $0x4e0] sm:$0xff]
    %v7247 = vld [vmem:[#allocation2 + $0x4e8] sm:$0xff]
    %v7248 = vld [vmem:[#allocation2 + $0x4f0] sm:$0xff]
    %v7249 = vld [vmem:[#allocation2 + $0x4f8] sm:$0xff]
    %v7250 = vld [vmem:[#allocation2 + $0x500] sm:$0xff]
    %v7251 = vld [vmem:[#allocation2 + $0x508] sm:$0xff]
    %v7252 = vld [vmem:[#allocation2 + $0x510] sm:$0xff]
    %v7253 = vld [vmem:[#allocation2 + $0x518] sm:$0xff]
    %v7254 = vld [vmem:[#allocation2 + $0x520] sm:$0xff]
    %v7255 = vld [vmem:[#allocation2 + $0x528] sm:$0xff]
    %v7256 = vld [vmem:[#allocation2 + $0x530] sm:$0xff]
    %v7257 = vld [vmem:[#allocation2 + $0x538] sm:$0xff]
    %v7258 = vld [vmem:[#allocation2 + $0x540] sm:$0xff]
    %v7259 = vld [vmem:[#allocation2 + $0x548] sm:$0xff]
    %v7260 = vld [vmem:[#allocation2 + $0x550] sm:$0xff]
    %v7261 = vld [vmem:[#allocation2 + $0x558] sm:$0xff]
    %v7262 = vld [vmem:[#allocation2 + $0x560] sm:$0xff]
    %v7263 = vld [vmem:[#allocation2 + $0x568] sm:$0xff]
    %v7264 = vld [vmem:[#allocation2 + $0x570] sm:$0xff]
    %v7265 = vld [vmem:[#allocation2 + $0x578] sm:$0xff]
    %v7266 = vld [vmem:[#allocation2 + $0x580] sm:$0xff]
    %v7267 = vld [vmem:[#allocation2 + $0x588] sm:$0xff]
    %v7268 = vld [vmem:[#allocation2 + $0x590] sm:$0xff]
    %v7269 = vld [vmem:[#allocation2 + $0x598] sm:$0xff]
    %v7270 = vld [vmem:[#allocation2 + $0x5a0] sm:$0xff]
    %v7271 = vld [vmem:[#allocation2 + $0x5a8] sm:$0xff]
    %v7272 = vld [vmem:[#allocation2 + $0x5b0] sm:$0xff]
    %v7273 = vld [vmem:[#allocation2 + $0x5b8] sm:$0xff]
    %v7274 = vld [vmem:[#allocation2 + $0x5c0] sm:$0xff]
    %v7275 = vld [vmem:[#allocation2 + $0x5c8] sm:$0xff]
    %v7276 = vld [vmem:[#allocation2 + $0x5d0] sm:$0xff]
    %v7277 = vld [vmem:[#allocation2 + $0x5d8] sm:$0xff]
    %v7278 = vld [vmem:[#allocation2 + $0x5e0] sm:$0xff]
    %v7279 = vld [vmem:[#allocation2 + $0x5e8] sm:$0xff]
    %v7280 = vld [vmem:[#allocation2 + $0x5f0] sm:$0xff]
    %v7281 = vld [vmem:[#allocation2 + $0x5f8] sm:$0xff]
    %v7282 = vld [vmem:[#allocation2 + $0x600] sm:$0xff]
    %v7283 = vld [vmem:[#allocation2 + $0x608] sm:$0xff]
    %v7284 = vld [vmem:[#allocation2 + $0x610] sm:$0xff]
    %v7285 = vld [vmem:[#allocation2 + $0x618] sm:$0xff]
    %v7286 = vld [vmem:[#allocation2 + $0x620] sm:$0xff]
    %v7287 = vld [vmem:[#allocation2 + $0x628] sm:$0xff]
    %v7288 = vld [vmem:[#allocation2 + $0x630] sm:$0xff]
    %v7289 = vld [vmem:[#allocation2 + $0x638] sm:$0xff]
    %v7290 = vld [vmem:[#allocation2 + $0x640] sm:$0xff]
    %v7291 = vld [vmem:[#allocation2 + $0x648] sm:$0xff]
    %v7292 = vld [vmem:[#allocation2 + $0x650] sm:$0xff]
    %v7293 = vld [vmem:[#allocation2 + $0x658] sm:$0xff]
    %v7294 = vld [vmem:[#allocation2 + $0x660] sm:$0xff]
    %v7295 = vld [vmem:[#allocation2 + $0x668] sm:$0xff]
    %v7296 = vld [vmem:[#allocation2 + $0x670] sm:$0xff]
    %v7297 = vld [vmem:[#allocation2 + $0x678] sm:$0xff]
    %v7298 = vld [vmem:[#allocation2 + $0x680] sm:$0xff]
    %v7299 = vld [vmem:[#allocation2 + $0x688] sm:$0xff]
    %v7300 = vld [vmem:[#allocation2 + $0x690] sm:$0xff]
    %v7301 = vld [vmem:[#allocation2 + $0x698] sm:$0xff]
    %v7302 = vld [vmem:[#allocation2 + $0x6a0] sm:$0xff]
    %v7303 = vld [vmem:[#allocation2 + $0x6a8] sm:$0xff]
    %v7304 = vld [vmem:[#allocation2 + $0x6b0] sm:$0xff]
    %v7305 = vld [vmem:[#allocation2 + $0x6b8] sm:$0xff]
    %v7306 = vld [vmem:[#allocation2 + $0x6c0] sm:$0xff]
    %v7307 = vld [vmem:[#allocation2 + $0x6c8] sm:$0xff]
    %v7308 = vld [vmem:[#allocation2 + $0x6d0] sm:$0xff]
    %v7309 = vld [vmem:[#allocation2 + $0x6d8] sm:$0xff]
    %v7310 = vld [vmem:[#allocation2 + $0x6e0] sm:$0xff]
    %v7311 = vld [vmem:[#allocation2 + $0x6e8] sm:$0xff]
    %v7312 = vld [vmem:[#allocation2 + $0x6f0] sm:$0xff]
    %v7313 = vld [vmem:[#allocation2 + $0x6f8] sm:$0xff]
    %v7314 = vld [vmem:[#allocation2 + $0x700] sm:$0xff]
    %v7315 = vld [vmem:[#allocation2 + $0x708] sm:$0xff]
    %v7316 = vld [vmem:[#allocation2 + $0x710] sm:$0xff]
    %v7317 = vld [vmem:[#allocation2 + $0x718] sm:$0xff]
    %v7318 = vld [vmem:[#allocation2 + $0x720] sm:$0xff]
    %v7319 = vld [vmem:[#allocation2 + $0x728] sm:$0xff]
    %v7320 = vld [vmem:[#allocation2 + $0x730] sm:$0xff]
    %v7321 = vld [vmem:[#allocation2 + $0x738] sm:$0xff]
    %v7322 = vld [vmem:[#allocation2 + $0x740] sm:$0xff]
    %v7323 = vld [vmem:[#allocation2 + $0x748] sm:$0xff]
    %v7324 = vld [vmem:[#allocation2 + $0x750] sm:$0xff]
    %v7325 = vld [vmem:[#allocation2 + $0x758] sm:$0xff]
    %v7326 = vld [vmem:[#allocation2 + $0x760] sm:$0xff]
    %v7327 = vld [vmem:[#allocation2 + $0x768] sm:$0xff]
    %v7328 = vld [vmem:[#allocation2 + $0x770] sm:$0xff]
    %v7329 = vld [vmem:[#allocation2 + $0x778] sm:$0xff]
    %v7330 = vld [vmem:[#allocation2 + $0x780] sm:$0xff]
    %v7331 = vld [vmem:[#allocation2 + $0x788] sm:$0xff]
    %v7332 = vld [vmem:[#allocation2 + $0x790] sm:$0xff]
    %v7333 = vld [vmem:[#allocation2 + $0x798] sm:$0xff]
    %v7334 = vld [vmem:[#allocation2 + $0x7a0] sm:$0xff]
    %v7335 = vld [vmem:[#allocation2 + $0x7a8] sm:$0xff]
    %v7336 = vld [vmem:[#allocation2 + $0x7b0] sm:$0xff]
    %v7337 = vld [vmem:[#allocation2 + $0x7b8] sm:$0xff]
    %v7338 = vld [vmem:[#allocation2 + $0x7c0] sm:$0xff]
    %v7339 = vld [vmem:[#allocation2 + $0x7c8] sm:$0xff]
    %v7340 = vld [vmem:[#allocation2 + $0x7d0] sm:$0xff]
    %v7341 = vld [vmem:[#allocation2 + $0x7d8] sm:$0xff]
    %v7342 = vld [vmem:[#allocation2 + $0x7e0] sm:$0xff]
    %v7343 = vld [vmem:[#allocation2 + $0x7e8] sm:$0xff]
    %v7344 = vld [vmem:[#allocation2 + $0x7f0] sm:$0xff]
    %v7345 = vld [vmem:[#allocation2 + $0x7f8] sm:$0xff]
    %v7346 = vld [vmem:[%s8] sm:$0xf]
    %v7348 = vlaneseq
    %v7349 = vshrl.u32 %v7348, 7
    %v7350 = vsub.s32 0, %v7349
    %v7351 = vrot.slane %v7346, %v7350
    %v7352 = vlaneseq
    %v7353 = vshrl.u32 %v7352, 7
    %v7354 = vsub.s32 1, %v7353
    %v7355 = vrot.slane %v7346, %v7354
    %v7356 = vlaneseq
    %v7357 = vshrl.u32 %v7356, 7
    %v7358 = vsub.s32 2, %v7357
    %v7359 = vrot.slane %v7346, %v7358
    %v7360 = vlaneseq
    %v7361 = vshrl.u32 %v7360, 7
    %v7362 = vsub.s32 3, %v7361
    %v7363 = vrot.slane %v7346, %v7362
    %v7432 = vunpack.c.l.b16 %v7026
    %v7433 = vunpack.c.l.b16 %v7027
    %v7434 = vunpack.c.l.b16 %v7028
    %v7435 = vunpack.c.l.b16 %v7029
    %v7436 = vunpack.c.l.b16 %v7030
    %v7437 = vunpack.c.l.b16 %v7031
    %v7438 = vunpack.c.l.b16 %v7032
    %v7439 = vunpack.c.l.b16 %v7033
    %v7440 = vunpack.c.l.b16 %v7034
    %v7441 = vunpack.c.l.b16 %v7035
    %v7442 = vunpack.c.l.b16 %v7036
    %v7443 = vunpack.c.l.b16 %v7037
    %v7444 = vunpack.c.l.b16 %v7038
    %v7445 = vunpack.c.l.b16 %v7039
    %v7446 = vunpack.c.l.b16 %v7040
    %v7447 = vunpack.c.l.b16 %v7041
    %v7448 = vunpack.c.l.b16 %v7042
    %v7449 = vunpack.c.l.b16 %v7043
    %v7450 = vunpack.c.l.b16 %v7044
    %v7451 = vunpack.c.l.b16 %v7045
    %v7452 = vunpack.c.l.b16 %v7046
    %v7453 = vunpack.c.l.b16 %v7047
    %v7454 = vunpack.c.l.b16 %v7048
    %v7455 = vunpack.c.l.b16 %v7049
    %v7456 = vunpack.c.l.b16 %v7050
    %v7457 = vunpack.c.l.b16 %v7051
    %v7458 = vunpack.c.l.b16 %v7052
    %v7459 = vunpack.c.l.b16 %v7053
    %v7460 = vunpack.c.l.b16 %v7054
    %v7461 = vunpack.c.l.b16 %v7055
    %v7462 = vunpack.c.l.b16 %v7056
    %v7463 = vunpack.c.l.b16 %v7057
    %v7464 = vunpack.c.l.b16 %v7058
    %v7465 = vunpack.c.l.b16 %v7059
    %v7466 = vunpack.c.l.b16 %v7060
    %v7467 = vunpack.c.l.b16 %v7061
    %v7468 = vunpack.c.l.b16 %v7062
    %v7469 = vunpack.c.l.b16 %v7063
    %v7470 = vunpack.c.l.b16 %v7064
    %v7471 = vunpack.c.l.b16 %v7065
    %v7472 = vunpack.c.l.b16 %v7066
    %v7473 = vunpack.c.l.b16 %v7067
    %v7474 = vunpack.c.l.b16 %v7068
    %v7475 = vunpack.c.l.b16 %v7069
    %v7476 = vunpack.c.l.b16 %v7070
    %v7477 = vunpack.c.l.b16 %v7071
    %v7478 = vunpack.c.l.b16 %v7072
    %v7479 = vunpack.c.l.b16 %v7073
    %v7480 = vunpack.c.l.b16 %v7074
    %v7481 = vunpack.c.l.b16 %v7075
    %v7482 = vunpack.c.l.b16 %v7076
    %v7483 = vunpack.c.l.b16 %v7077
    %v7484 = vunpack.c.l.b16 %v7078
    %v7485 = vunpack.c.l.b16 %v7079
    %v7486 = vunpack.c.l.b16 %v7080
    %v7487 = vunpack.c.l.b16 %v7081
    %v7488 = vunpack.c.l.b16 %v7082
    %v7489 = vunpack.c.l.b16 %v7083
    %v7490 = vunpack.c.l.b16 %v7084
    %v7491 = vunpack.c.l.b16 %v7085
    %v7492 = vunpack.c.l.b16 %v7086
    %v7493 = vunpack.c.l.b16 %v7087
    %v7494 = vunpack.c.l.b16 %v7088
    %v7495 = vunpack.c.l.b16 %v7089
    %v7496 = vrot.slane %v7440, 7
    %vm7497 = vcmask 1041409
    %v7498 = vsel %vm7497, %v7496, %v7432
    %v7499 = vrot.slane %v7448, 6
    %vm7500 = vcmask 1042434
    %v7501 = vsel %vm7500, %v7499, %v7498
    %v7502 = vrot.slane %v7456, 5
    %vm7503 = vcmask 1043459
    %v7504 = vsel %vm7503, %v7502, %v7501
    %v7505 = vrot.slane %v7464, 4
    %vm7506 = vcmask 1044484
    %v7507 = vsel %vm7506, %v7505, %v7504
    %v7508 = vrot.slane %v7472, 3
    %vm7509 = vcmask 1045509
    %v7510 = vsel %vm7509, %v7508, %v7507
    %v7511 = vrot.slane %v7480, 2
    %vm7512 = vcmask 1046534
    %v7513 = vsel %vm7512, %v7511, %v7510
    %v7514 = vrot.slane %v7488, 1
    %vm7515 = vcmask 1047559
    %v7516 = vsel %vm7515, %v7514, %v7513
    %v7517 = vrot.slane %v7441, 7
    %v7518 = vsel %vm7497, %v7517, %v7433
    %v7519 = vrot.slane %v7449, 6
    %v7520 = vsel %vm7500, %v7519, %v7518
    %v7521 = vrot.slane %v7457, 5
    %v7522 = vsel %vm7503, %v7521, %v7520
    %v7523 = vrot.slane %v7465, 4
    %v7524 = vsel %vm7506, %v7523, %v7522
    %v7525 = vrot.slane %v7473, 3
    %v7526 = vsel %vm7509, %v7525, %v7524
    %v7527 = vrot.slane %v7481, 2
    %v7528 = vsel %vm7512, %v7527, %v7526
    %v7529 = vrot.slane %v7489, 1
    %v7530 = vsel %vm7515, %v7529, %v7528
    %v7531 = vrot.slane %v7442, 7
    %v7532 = vsel %vm7497, %v7531, %v7434
    %v7533 = vrot.slane %v7450, 6
    %v7534 = vsel %vm7500, %v7533, %v7532
    %v7535 = vrot.slane %v7458, 5
    %v7536 = vsel %vm7503, %v7535, %v7534
    %v7537 = vrot.slane %v7466, 4
    %v7538 = vsel %vm7506, %v7537, %v7536
    %v7539 = vrot.slane %v7474, 3
    %v7540 = vsel %vm7509, %v7539, %v7538
    %v7541 = vrot.slane %v7482, 2
    %v7542 = vsel %vm7512, %v7541, %v7540
    %v7543 = vrot.slane %v7490, 1
    %v7544 = vsel %vm7515, %v7543, %v7542
    %v7545 = vrot.slane %v7443, 7
    %v7546 = vsel %vm7497, %v7545, %v7435
    %v7547 = vrot.slane %v7451, 6
    %v7548 = vsel %vm7500, %v7547, %v7546
    %v7549 = vrot.slane %v7459, 5
    %v7550 = vsel %vm7503, %v7549, %v7548
    %v7551 = vrot.slane %v7467, 4
    %v7552 = vsel %vm7506, %v7551, %v7550
    %v7553 = vrot.slane %v7475, 3
    %v7554 = vsel %vm7509, %v7553, %v7552
    %v7555 = vrot.slane %v7483, 2
    %v7556 = vsel %vm7512, %v7555, %v7554
    %v7557 = vrot.slane %v7491, 1
    %v7558 = vsel %vm7515, %v7557, %v7556
    %v7559 = vrot.slane %v7444, 7
    %v7560 = vsel %vm7497, %v7559, %v7436
    %v7561 = vrot.slane %v7452, 6
    %v7562 = vsel %vm7500, %v7561, %v7560
    %v7563 = vrot.slane %v7460, 5
    %v7564 = vsel %vm7503, %v7563, %v7562
    %v7565 = vrot.slane %v7468, 4
    %v7566 = vsel %vm7506, %v7565, %v7564
    %v7567 = vrot.slane %v7476, 3
    %v7568 = vsel %vm7509, %v7567, %v7566
    %v7569 = vrot.slane %v7484, 2
    %v7570 = vsel %vm7512, %v7569, %v7568
    %v7571 = vrot.slane %v7492, 1
    %v7572 = vsel %vm7515, %v7571, %v7570
    %v7573 = vrot.slane %v7445, 7
    %v7574 = vsel %vm7497, %v7573, %v7437
    %v7575 = vrot.slane %v7453, 6
    %v7576 = vsel %vm7500, %v7575, %v7574
    %v7577 = vrot.slane %v7461, 5
    %v7578 = vsel %vm7503, %v7577, %v7576
    %v7579 = vrot.slane %v7469, 4
    %v7580 = vsel %vm7506, %v7579, %v7578
    %v7581 = vrot.slane %v7477, 3
    %v7582 = vsel %vm7509, %v7581, %v7580
    %v7583 = vrot.slane %v7485, 2
    %v7584 = vsel %vm7512, %v7583, %v7582
    %v7585 = vrot.slane %v7493, 1
    %v7586 = vsel %vm7515, %v7585, %v7584
    %v7587 = vrot.slane %v7446, 7
    %v7588 = vsel %vm7497, %v7587, %v7438
    %v7589 = vrot.slane %v7454, 6
    %v7590 = vsel %vm7500, %v7589, %v7588
    %v7591 = vrot.slane %v7462, 5
    %v7592 = vsel %vm7503, %v7591, %v7590
    %v7593 = vrot.slane %v7470, 4
    %v7594 = vsel %vm7506, %v7593, %v7592
    %v7595 = vrot.slane %v7478, 3
    %v7596 = vsel %vm7509, %v7595, %v7594
    %v7597 = vrot.slane %v7486, 2
    %v7598 = vsel %vm7512, %v7597, %v7596
    %v7599 = vrot.slane %v7494, 1
    %v7600 = vsel %vm7515, %v7599, %v7598
    %v7601 = vrot.slane %v7447, 7
    %v7602 = vsel %vm7497, %v7601, %v7439
    %v7603 = vrot.slane %v7455, 6
    %v7604 = vsel %vm7500, %v7603, %v7602
    %v7605 = vrot.slane %v7463, 5
    %v7606 = vsel %vm7503, %v7605, %v7604
    %v7607 = vrot.slane %v7471, 4
    %v7608 = vsel %vm7506, %v7607, %v7606
    %v7609 = vrot.slane %v7479, 3
    %v7610 = vsel %vm7509, %v7609, %v7608
    %v7611 = vrot.slane %v7487, 2
    %v7612 = vsel %vm7512, %v7611, %v7610
    %v7613 = vrot.slane %v7495, 1
    %v7614 = vsel %vm7515, %v7613, %v7612
    %v7615 = vpack.c.b16 %v7516, %v7516
    %v7616 = vpack.c.b16 %v7530, %v7530
    %v7617 = vpack.c.b16 %v7544, %v7544
    %v7618 = vpack.c.b16 %v7558, %v7558
    %v7619 = vpack.c.b16 %v7572, %v7572
    %v7620 = vpack.c.b16 %v7586, %v7586
    %v7621 = vpack.c.b16 %v7600, %v7600
    %v7622 = vpack.c.b16 %v7614, %v7614
    %v7887 = vunpack.c.l.b16 %v7090
    %v7888 = vunpack.c.h.b16 %v7090
    %v7889 = vunpack.c.l.b16 %v7091
    %v7890 = vunpack.c.h.b16 %v7091
    %v7891 = vunpack.c.l.b16 %v7092
    %v7892 = vunpack.c.h.b16 %v7092
    %v7893 = vunpack.c.l.b16 %v7093
    %v7894 = vunpack.c.h.b16 %v7093
    %v7895 = vunpack.c.l.b16 %v7094
    %v7896 = vunpack.c.h.b16 %v7094
    %v7897 = vunpack.c.l.b16 %v7095
    %v7898 = vunpack.c.h.b16 %v7095
    %v7899 = vunpack.c.l.b16 %v7096
    %v7900 = vunpack.c.h.b16 %v7096
    %v7901 = vunpack.c.l.b16 %v7097
    %v7902 = vunpack.c.h.b16 %v7097
    %v7903 = vunpack.c.l.b16 %v7098
    %v7904 = vunpack.c.h.b16 %v7098
    %v7905 = vunpack.c.l.b16 %v7099
    %v7906 = vunpack.c.h.b16 %v7099
    %v7907 = vunpack.c.l.b16 %v7100
    %v7908 = vunpack.c.h.b16 %v7100
    %v7909 = vunpack.c.l.b16 %v7101
    %v7910 = vunpack.c.h.b16 %v7101
    %v7911 = vunpack.c.l.b16 %v7102
    %v7912 = vunpack.c.h.b16 %v7102
    %v7913 = vunpack.c.l.b16 %v7103
    %v7914 = vunpack.c.h.b16 %v7103
    %v7915 = vunpack.c.l.b16 %v7104
    %v7916 = vunpack.c.h.b16 %v7104
    %v7917 = vunpack.c.l.b16 %v7105
    %v7918 = vunpack.c.h.b16 %v7105
    %v7919 = vunpack.c.l.b16 %v7106
    %v7920 = vunpack.c.h.b16 %v7106
    %v7921 = vunpack.c.l.b16 %v7107
    %v7922 = vunpack.c.h.b16 %v7107
    %v7923 = vunpack.c.l.b16 %v7108
    %v7924 = vunpack.c.h.b16 %v7108
    %v7925 = vunpack.c.l.b16 %v7109
    %v7926 = vunpack.c.h.b16 %v7109
    %v7927 = vunpack.c.l.b16 %v7110
    %v7928 = vunpack.c.h.b16 %v7110
    %v7929 = vunpack.c.l.b16 %v7111
    %v7930 = vunpack.c.h.b16 %v7111
    %v7931 = vunpack.c.l.b16 %v7112
    %v7932 = vunpack.c.h.b16 %v7112
    %v7933 = vunpack.c.l.b16 %v7113
    %v7934 = vunpack.c.h.b16 %v7113
    %v7935 = vunpack.c.l.b16 %v7114
    %v7936 = vunpack.c.h.b16 %v7114
    %v7937 = vunpack.c.l.b16 %v7115
    %v7938 = vunpack.c.h.b16 %v7115
    %v7939 = vunpack.c.l.b16 %v7116
    %v7940 = vunpack.c.h.b16 %v7116
    %v7941 = vunpack.c.l.b16 %v7117
    %v7942 = vunpack.c.h.b16 %v7117
    %v7943 = vunpack.c.l.b16 %v7118
    %v7944 = vunpack.c.h.b16 %v7118
    %v7945 = vunpack.c.l.b16 %v7119
    %v7946 = vunpack.c.h.b16 %v7119
    %v7947 = vunpack.c.l.b16 %v7120
    %v7948 = vunpack.c.h.b16 %v7120
    %v7949 = vunpack.c.l.b16 %v7121
    %v7950 = vunpack.c.h.b16 %v7121
    %v7951 = vunpack.c.l.b16 %v7122
    %v7952 = vunpack.c.h.b16 %v7122
    %v7953 = vunpack.c.l.b16 %v7123
    %v7954 = vunpack.c.h.b16 %v7123
    %v7955 = vunpack.c.l.b16 %v7124
    %v7956 = vunpack.c.h.b16 %v7124
    %v7957 = vunpack.c.l.b16 %v7125
    %v7958 = vunpack.c.h.b16 %v7125
    %v7959 = vunpack.c.l.b16 %v7126
    %v7960 = vunpack.c.h.b16 %v7126
    %v7961 = vunpack.c.l.b16 %v7127
    %v7962 = vunpack.c.h.b16 %v7127
    %v7963 = vunpack.c.l.b16 %v7128
    %v7964 = vunpack.c.h.b16 %v7128
    %v7965 = vunpack.c.l.b16 %v7129
    %v7966 = vunpack.c.h.b16 %v7129
    %v7967 = vunpack.c.l.b16 %v7130
    %v7968 = vunpack.c.h.b16 %v7130
    %v7969 = vunpack.c.l.b16 %v7131
    %v7970 = vunpack.c.h.b16 %v7131
    %v7971 = vunpack.c.l.b16 %v7132
    %v7972 = vunpack.c.h.b16 %v7132
    %v7973 = vunpack.c.l.b16 %v7133
    %v7974 = vunpack.c.h.b16 %v7133
    %v7975 = vunpack.c.l.b16 %v7134
    %v7976 = vunpack.c.h.b16 %v7134
    %v7977 = vunpack.c.l.b16 %v7135
    %v7978 = vunpack.c.h.b16 %v7135
    %v7979 = vunpack.c.l.b16 %v7136
    %v7980 = vunpack.c.h.b16 %v7136
    %v7981 = vunpack.c.l.b16 %v7137
    %v7982 = vunpack.c.h.b16 %v7137
    %v7983 = vunpack.c.l.b16 %v7138
    %v7984 = vunpack.c.h.b16 %v7138
    %v7985 = vunpack.c.l.b16 %v7139
    %v7986 = vunpack.c.h.b16 %v7139
    %v7987 = vunpack.c.l.b16 %v7140
    %v7988 = vunpack.c.h.b16 %v7140
    %v7989 = vunpack.c.l.b16 %v7141
    %v7990 = vunpack.c.h.b16 %v7141
    %v7991 = vunpack.c.l.b16 %v7142
    %v7992 = vunpack.c.h.b16 %v7142
    %v7993 = vunpack.c.l.b16 %v7143
    %v7994 = vunpack.c.h.b16 %v7143
    %v7995 = vunpack.c.l.b16 %v7144
    %v7996 = vunpack.c.h.b16 %v7144
    %v7997 = vunpack.c.l.b16 %v7145
    %v7998 = vunpack.c.h.b16 %v7145
    %v7999 = vunpack.c.l.b16 %v7146
    %v8000 = vunpack.c.h.b16 %v7146
    %v8001 = vunpack.c.l.b16 %v7147
    %v8002 = vunpack.c.h.b16 %v7147
    %v8003 = vunpack.c.l.b16 %v7148
    %v8004 = vunpack.c.h.b16 %v7148
    %v8005 = vunpack.c.l.b16 %v7149
    %v8006 = vunpack.c.h.b16 %v7149
    %v8007 = vunpack.c.l.b16 %v7150
    %v8008 = vunpack.c.h.b16 %v7150
    %v8009 = vunpack.c.l.b16 %v7151
    %v8010 = vunpack.c.h.b16 %v7151
    %v8011 = vunpack.c.l.b16 %v7152
    %v8012 = vunpack.c.h.b16 %v7152
    %v8013 = vunpack.c.l.b16 %v7153
    %v8014 = vunpack.c.h.b16 %v7153
    %v8015 = vunpack.c.l.b16 %v7154
    %v8016 = vunpack.c.h.b16 %v7154
    %v8017 = vunpack.c.l.b16 %v7155
    %v8018 = vunpack.c.h.b16 %v7155
    %v8019 = vunpack.c.l.b16 %v7156
    %v8020 = vunpack.c.h.b16 %v7156
    %v8021 = vunpack.c.l.b16 %v7157
    %v8022 = vunpack.c.h.b16 %v7157
    %v8023 = vunpack.c.l.b16 %v7158
    %v8024 = vunpack.c.h.b16 %v7158
    %v8025 = vunpack.c.l.b16 %v7159
    %v8026 = vunpack.c.h.b16 %v7159
    %v8027 = vunpack.c.l.b16 %v7160
    %v8028 = vunpack.c.h.b16 %v7160
    %v8029 = vunpack.c.l.b16 %v7161
    %v8030 = vunpack.c.h.b16 %v7161
    %v8031 = vunpack.c.l.b16 %v7162
    %v8032 = vunpack.c.h.b16 %v7162
    %v8033 = vunpack.c.l.b16 %v7163
    %v8034 = vunpack.c.h.b16 %v7163
    %v8035 = vunpack.c.l.b16 %v7164
    %v8036 = vunpack.c.h.b16 %v7164
    %v8037 = vunpack.c.l.b16 %v7165
    %v8038 = vunpack.c.h.b16 %v7165
    %v8039 = vunpack.c.l.b16 %v7166
    %v8040 = vunpack.c.h.b16 %v7166
    %v8041 = vunpack.c.l.b16 %v7167
    %v8042 = vunpack.c.h.b16 %v7167
    %v8043 = vunpack.c.l.b16 %v7168
    %v8044 = vunpack.c.h.b16 %v7168
    %v8045 = vunpack.c.l.b16 %v7169
    %v8046 = vunpack.c.h.b16 %v7169
    %v8047 = vunpack.c.l.b16 %v7170
    %v8048 = vunpack.c.h.b16 %v7170
    %v8049 = vunpack.c.l.b16 %v7171
    %v8050 = vunpack.c.h.b16 %v7171
    %v8051 = vunpack.c.l.b16 %v7172
    %v8052 = vunpack.c.h.b16 %v7172
    %v8053 = vunpack.c.l.b16 %v7173
    %v8054 = vunpack.c.h.b16 %v7173
    %v8055 = vunpack.c.l.b16 %v7174
    %v8056 = vunpack.c.h.b16 %v7174
    %v8057 = vunpack.c.l.b16 %v7175
    %v8058 = vunpack.c.h.b16 %v7175
    %v8059 = vunpack.c.l.b16 %v7176
    %v8060 = vunpack.c.h.b16 %v7176
    %v8061 = vunpack.c.l.b16 %v7177
    %v8062 = vunpack.c.h.b16 %v7177
    %v8063 = vunpack.c.l.b16 %v7178
    %v8064 = vunpack.c.h.b16 %v7178
    %v8065 = vunpack.c.l.b16 %v7179
    %v8066 = vunpack.c.h.b16 %v7179
    %v8067 = vunpack.c.l.b16 %v7180
    %v8068 = vunpack.c.h.b16 %v7180
    %v8069 = vunpack.c.l.b16 %v7181
    %v8070 = vunpack.c.h.b16 %v7181
    %v8071 = vunpack.c.l.b16 %v7182
    %v8072 = vunpack.c.h.b16 %v7182
    %v8073 = vunpack.c.l.b16 %v7183
    %v8074 = vunpack.c.h.b16 %v7183
    %v8075 = vunpack.c.l.b16 %v7184
    %v8076 = vunpack.c.h.b16 %v7184
    %v8077 = vunpack.c.l.b16 %v7185
    %v8078 = vunpack.c.h.b16 %v7185
    %v8079 = vunpack.c.l.b16 %v7186
    %v8080 = vunpack.c.h.b16 %v7186
    %v8081 = vunpack.c.l.b16 %v7187
    %v8082 = vunpack.c.h.b16 %v7187
    %v8083 = vunpack.c.l.b16 %v7188
    %v8084 = vunpack.c.h.b16 %v7188
    %v8085 = vunpack.c.l.b16 %v7189
    %v8086 = vunpack.c.h.b16 %v7189
    %v8087 = vunpack.c.l.b16 %v7190
    %v8088 = vunpack.c.h.b16 %v7190
    %v8089 = vunpack.c.l.b16 %v7191
    %v8090 = vunpack.c.h.b16 %v7191
    %v8091 = vunpack.c.l.b16 %v7192
    %v8092 = vunpack.c.h.b16 %v7192
    %v8093 = vunpack.c.l.b16 %v7193
    %v8094 = vunpack.c.h.b16 %v7193
    %v8095 = vunpack.c.l.b16 %v7194
    %v8096 = vunpack.c.h.b16 %v7194
    %v8097 = vunpack.c.l.b16 %v7195
    %v8098 = vunpack.c.h.b16 %v7195
    %v8099 = vunpack.c.l.b16 %v7196
    %v8100 = vunpack.c.h.b16 %v7196
    %v8101 = vunpack.c.l.b16 %v7197
    %v8102 = vunpack.c.h.b16 %v7197
    %v8103 = vunpack.c.l.b16 %v7198
    %v8104 = vunpack.c.h.b16 %v7198
    %v8105 = vunpack.c.l.b16 %v7199
    %v8106 = vunpack.c.h.b16 %v7199
    %v8107 = vunpack.c.l.b16 %v7200
    %v8108 = vunpack.c.h.b16 %v7200
    %v8109 = vunpack.c.l.b16 %v7201
    %v8110 = vunpack.c.h.b16 %v7201
    %v8111 = vunpack.c.l.b16 %v7202
    %v8112 = vunpack.c.h.b16 %v7202
    %v8113 = vunpack.c.l.b16 %v7203
    %v8114 = vunpack.c.h.b16 %v7203
    %v8115 = vunpack.c.l.b16 %v7204
    %v8116 = vunpack.c.h.b16 %v7204
    %v8117 = vunpack.c.l.b16 %v7205
    %v8118 = vunpack.c.h.b16 %v7205
    %v8119 = vunpack.c.l.b16 %v7206
    %v8120 = vunpack.c.h.b16 %v7206
    %v8121 = vunpack.c.l.b16 %v7207
    %v8122 = vunpack.c.h.b16 %v7207
    %v8123 = vunpack.c.l.b16 %v7208
    %v8124 = vunpack.c.h.b16 %v7208
    %v8125 = vunpack.c.l.b16 %v7209
    %v8126 = vunpack.c.h.b16 %v7209
    %v8127 = vunpack.c.l.b16 %v7210
    %v8128 = vunpack.c.h.b16 %v7210
    %v8129 = vunpack.c.l.b16 %v7211
    %v8130 = vunpack.c.h.b16 %v7211
    %v8131 = vunpack.c.l.b16 %v7212
    %v8132 = vunpack.c.h.b16 %v7212
    %v8133 = vunpack.c.l.b16 %v7213
    %v8134 = vunpack.c.h.b16 %v7213
    %v8135 = vunpack.c.l.b16 %v7214
    %v8136 = vunpack.c.h.b16 %v7214
    %v8137 = vunpack.c.l.b16 %v7215
    %v8138 = vunpack.c.h.b16 %v7215
    %v8139 = vunpack.c.l.b16 %v7216
    %v8140 = vunpack.c.h.b16 %v7216
    %v8141 = vunpack.c.l.b16 %v7217
    %v8142 = vunpack.c.h.b16 %v7217
    %v8143 = vunpack.c.l.b16 %v7218
    %v8144 = vunpack.c.h.b16 %v7218
    %v8145 = vunpack.c.l.b16 %v7219
    %v8146 = vunpack.c.h.b16 %v7219
    %v8147 = vunpack.c.l.b16 %v7220
    %v8148 = vunpack.c.h.b16 %v7220
    %v8149 = vunpack.c.l.b16 %v7221
    %v8150 = vunpack.c.h.b16 %v7221
    %v8151 = vunpack.c.l.b16 %v7222
    %v8152 = vunpack.c.h.b16 %v7222
    %v8153 = vunpack.c.l.b16 %v7223
    %v8154 = vunpack.c.h.b16 %v7223
    %v8155 = vunpack.c.l.b16 %v7224
    %v8156 = vunpack.c.h.b16 %v7224
    %v8157 = vunpack.c.l.b16 %v7225
    %v8158 = vunpack.c.h.b16 %v7225
    %v8159 = vunpack.c.l.b16 %v7226
    %v8160 = vunpack.c.h.b16 %v7226
    %v8161 = vunpack.c.l.b16 %v7227
    %v8162 = vunpack.c.h.b16 %v7227
    %v8163 = vunpack.c.l.b16 %v7228
    %v8164 = vunpack.c.h.b16 %v7228
    %v8165 = vunpack.c.l.b16 %v7229
    %v8166 = vunpack.c.h.b16 %v7229
    %v8167 = vunpack.c.l.b16 %v7230
    %v8168 = vunpack.c.h.b16 %v7230
    %v8169 = vunpack.c.l.b16 %v7231
    %v8170 = vunpack.c.h.b16 %v7231
    %v8171 = vunpack.c.l.b16 %v7232
    %v8172 = vunpack.c.h.b16 %v7232
    %v8173 = vunpack.c.l.b16 %v7233
    %v8174 = vunpack.c.h.b16 %v7233
    %v8175 = vunpack.c.l.b16 %v7234
    %v8176 = vunpack.c.h.b16 %v7234
    %v8177 = vunpack.c.l.b16 %v7235
    %v8178 = vunpack.c.h.b16 %v7235
    %v8179 = vunpack.c.l.b16 %v7236
    %v8180 = vunpack.c.h.b16 %v7236
    %v8181 = vunpack.c.l.b16 %v7237
    %v8182 = vunpack.c.h.b16 %v7237
    %v8183 = vunpack.c.l.b16 %v7238
    %v8184 = vunpack.c.h.b16 %v7238
    %v8185 = vunpack.c.l.b16 %v7239
    %v8186 = vunpack.c.h.b16 %v7239
    %v8187 = vunpack.c.l.b16 %v7240
    %v8188 = vunpack.c.h.b16 %v7240
    %v8189 = vunpack.c.l.b16 %v7241
    %v8190 = vunpack.c.h.b16 %v7241
    %v8191 = vunpack.c.l.b16 %v7242
    %v8192 = vunpack.c.h.b16 %v7242
    %v8193 = vunpack.c.l.b16 %v7243
    %v8194 = vunpack.c.h.b16 %v7243
    %v8195 = vunpack.c.l.b16 %v7244
    %v8196 = vunpack.c.h.b16 %v7244
    %v8197 = vunpack.c.l.b16 %v7245
    %v8198 = vunpack.c.h.b16 %v7245
    %v8199 = vunpack.c.l.b16 %v7246
    %v8200 = vunpack.c.h.b16 %v7246
    %v8201 = vunpack.c.l.b16 %v7247
    %v8202 = vunpack.c.h.b16 %v7247
    %v8203 = vunpack.c.l.b16 %v7248
    %v8204 = vunpack.c.h.b16 %v7248
    %v8205 = vunpack.c.l.b16 %v7249
    %v8206 = vunpack.c.h.b16 %v7249
    %v8207 = vunpack.c.l.b16 %v7250
    %v8208 = vunpack.c.h.b16 %v7250
    %v8209 = vunpack.c.l.b16 %v7251
    %v8210 = vunpack.c.h.b16 %v7251
    %v8211 = vunpack.c.l.b16 %v7252
    %v8212 = vunpack.c.h.b16 %v7252
    %v8213 = vunpack.c.l.b16 %v7253
    %v8214 = vunpack.c.h.b16 %v7253
    %v8215 = vunpack.c.l.b16 %v7254
    %v8216 = vunpack.c.h.b16 %v7254
    %v8217 = vunpack.c.l.b16 %v7255
    %v8218 = vunpack.c.h.b16 %v7255
    %v8219 = vunpack.c.l.b16 %v7256
    %v8220 = vunpack.c.h.b16 %v7256
    %v8221 = vunpack.c.l.b16 %v7257
    %v8222 = vunpack.c.h.b16 %v7257
    %v8223 = vunpack.c.l.b16 %v7258
    %v8224 = vunpack.c.h.b16 %v7258
    %v8225 = vunpack.c.l.b16 %v7259
    %v8226 = vunpack.c.h.b16 %v7259
    %v8227 = vunpack.c.l.b16 %v7260
    %v8228 = vunpack.c.h.b16 %v7260
    %v8229 = vunpack.c.l.b16 %v7261
    %v8230 = vunpack.c.h.b16 %v7261
    %v8231 = vunpack.c.l.b16 %v7262
    %v8232 = vunpack.c.h.b16 %v7262
    %v8233 = vunpack.c.l.b16 %v7263
    %v8234 = vunpack.c.h.b16 %v7263
    %v8235 = vunpack.c.l.b16 %v7264
    %v8236 = vunpack.c.h.b16 %v7264
    %v8237 = vunpack.c.l.b16 %v7265
    %v8238 = vunpack.c.h.b16 %v7265
    %v8239 = vunpack.c.l.b16 %v7266
    %v8240 = vunpack.c.h.b16 %v7266
    %v8241 = vunpack.c.l.b16 %v7267
    %v8242 = vunpack.c.h.b16 %v7267
    %v8243 = vunpack.c.l.b16 %v7268
    %v8244 = vunpack.c.h.b16 %v7268
    %v8245 = vunpack.c.l.b16 %v7269
    %v8246 = vunpack.c.h.b16 %v7269
    %v8247 = vunpack.c.l.b16 %v7270
    %v8248 = vunpack.c.h.b16 %v7270
    %v8249 = vunpack.c.l.b16 %v7271
    %v8250 = vunpack.c.h.b16 %v7271
    %v8251 = vunpack.c.l.b16 %v7272
    %v8252 = vunpack.c.h.b16 %v7272
    %v8253 = vunpack.c.l.b16 %v7273
    %v8254 = vunpack.c.h.b16 %v7273
    %v8255 = vunpack.c.l.b16 %v7274
    %v8256 = vunpack.c.h.b16 %v7274
    %v8257 = vunpack.c.l.b16 %v7275
    %v8258 = vunpack.c.h.b16 %v7275
    %v8259 = vunpack.c.l.b16 %v7276
    %v8260 = vunpack.c.h.b16 %v7276
    %v8261 = vunpack.c.l.b16 %v7277
    %v8262 = vunpack.c.h.b16 %v7277
    %v8263 = vunpack.c.l.b16 %v7278
    %v8264 = vunpack.c.h.b16 %v7278
    %v8265 = vunpack.c.l.b16 %v7279
    %v8266 = vunpack.c.h.b16 %v7279
    %v8267 = vunpack.c.l.b16 %v7280
    %v8268 = vunpack.c.h.b16 %v7280
    %v8269 = vunpack.c.l.b16 %v7281
    %v8270 = vunpack.c.h.b16 %v7281
    %v8271 = vunpack.c.l.b16 %v7282
    %v8272 = vunpack.c.h.b16 %v7282
    %v8273 = vunpack.c.l.b16 %v7283
    %v8274 = vunpack.c.h.b16 %v7283
    %v8275 = vunpack.c.l.b16 %v7284
    %v8276 = vunpack.c.h.b16 %v7284
    %v8277 = vunpack.c.l.b16 %v7285
    %v8278 = vunpack.c.h.b16 %v7285
    %v8279 = vunpack.c.l.b16 %v7286
    %v8280 = vunpack.c.h.b16 %v7286
    %v8281 = vunpack.c.l.b16 %v7287
    %v8282 = vunpack.c.h.b16 %v7287
    %v8283 = vunpack.c.l.b16 %v7288
    %v8284 = vunpack.c.h.b16 %v7288
    %v8285 = vunpack.c.l.b16 %v7289
    %v8286 = vunpack.c.h.b16 %v7289
    %v8287 = vunpack.c.l.b16 %v7290
    %v8288 = vunpack.c.h.b16 %v7290
    %v8289 = vunpack.c.l.b16 %v7291
    %v8290 = vunpack.c.h.b16 %v7291
    %v8291 = vunpack.c.l.b16 %v7292
    %v8292 = vunpack.c.h.b16 %v7292
    %v8293 = vunpack.c.l.b16 %v7293
    %v8294 = vunpack.c.h.b16 %v7293
    %v8295 = vunpack.c.l.b16 %v7294
    %v8296 = vunpack.c.h.b16 %v7294
    %v8297 = vunpack.c.l.b16 %v7295
    %v8298 = vunpack.c.h.b16 %v7295
    %v8299 = vunpack.c.l.b16 %v7296
    %v8300 = vunpack.c.h.b16 %v7296
    %v8301 = vunpack.c.l.b16 %v7297
    %v8302 = vunpack.c.h.b16 %v7297
    %v8303 = vunpack.c.l.b16 %v7298
    %v8304 = vunpack.c.h.b16 %v7298
    %v8305 = vunpack.c.l.b16 %v7299
    %v8306 = vunpack.c.h.b16 %v7299
    %v8307 = vunpack.c.l.b16 %v7300
    %v8308 = vunpack.c.h.b16 %v7300
    %v8309 = vunpack.c.l.b16 %v7301
    %v8310 = vunpack.c.h.b16 %v7301
    %v8311 = vunpack.c.l.b16 %v7302
    %v8312 = vunpack.c.h.b16 %v7302
    %v8313 = vunpack.c.l.b16 %v7303
    %v8314 = vunpack.c.h.b16 %v7303
    %v8315 = vunpack.c.l.b16 %v7304
    %v8316 = vunpack.c.h.b16 %v7304
    %v8317 = vunpack.c.l.b16 %v7305
    %v8318 = vunpack.c.h.b16 %v7305
    %v8319 = vunpack.c.l.b16 %v7306
    %v8320 = vunpack.c.h.b16 %v7306
    %v8321 = vunpack.c.l.b16 %v7307
    %v8322 = vunpack.c.h.b16 %v7307
    %v8323 = vunpack.c.l.b16 %v7308
    %v8324 = vunpack.c.h.b16 %v7308
    %v8325 = vunpack.c.l.b16 %v7309
    %v8326 = vunpack.c.h.b16 %v7309
    %v8327 = vunpack.c.l.b16 %v7310
    %v8328 = vunpack.c.h.b16 %v7310
    %v8329 = vunpack.c.l.b16 %v7311
    %v8330 = vunpack.c.h.b16 %v7311
    %v8331 = vunpack.c.l.b16 %v7312
    %v8332 = vunpack.c.h.b16 %v7312
    %v8333 = vunpack.c.l.b16 %v7313
    %v8334 = vunpack.c.h.b16 %v7313
    %v8335 = vunpack.c.l.b16 %v7314
    %v8336 = vunpack.c.h.b16 %v7314
    %v8337 = vunpack.c.l.b16 %v7315
    %v8338 = vunpack.c.h.b16 %v7315
    %v8339 = vunpack.c.l.b16 %v7316
    %v8340 = vunpack.c.h.b16 %v7316
    %v8341 = vunpack.c.l.b16 %v7317
    %v8342 = vunpack.c.h.b16 %v7317
    %v8343 = vunpack.c.l.b16 %v7318
    %v8344 = vunpack.c.h.b16 %v7318
    %v8345 = vunpack.c.l.b16 %v7319
    %v8346 = vunpack.c.h.b16 %v7319
    %v8347 = vunpack.c.l.b16 %v7320
    %v8348 = vunpack.c.h.b16 %v7320
    %v8349 = vunpack.c.l.b16 %v7321
    %v8350 = vunpack.c.h.b16 %v7321
    %v8351 = vunpack.c.l.b16 %v7322
    %v8352 = vunpack.c.h.b16 %v7322
    %v8353 = vunpack.c.l.b16 %v7323
    %v8354 = vunpack.c.h.b16 %v7323
    %v8355 = vunpack.c.l.b16 %v7324
    %v8356 = vunpack.c.h.b16 %v7324
    %v8357 = vunpack.c.l.b16 %v7325
    %v8358 = vunpack.c.h.b16 %v7325
    %v8359 = vunpack.c.l.b16 %v7326
    %v8360 = vunpack.c.h.b16 %v7326
    %v8361 = vunpack.c.l.b16 %v7327
    %v8362 = vunpack.c.h.b16 %v7327
    %v8363 = vunpack.c.l.b16 %v7328
    %v8364 = vunpack.c.h.b16 %v7328
    %v8365 = vunpack.c.l.b16 %v7329
    %v8366 = vunpack.c.h.b16 %v7329
    %v8367 = vunpack.c.l.b16 %v7330
    %v8368 = vunpack.c.h.b16 %v7330
    %v8369 = vunpack.c.l.b16 %v7331
    %v8370 = vunpack.c.h.b16 %v7331
    %v8371 = vunpack.c.l.b16 %v7332
    %v8372 = vunpack.c.h.b16 %v7332
    %v8373 = vunpack.c.l.b16 %v7333
    %v8374 = vunpack.c.h.b16 %v7333
    %v8375 = vunpack.c.l.b16 %v7334
    %v8376 = vunpack.c.h.b16 %v7334
    %v8377 = vunpack.c.l.b16 %v7335
    %v8378 = vunpack.c.h.b16 %v7335
    %v8379 = vunpack.c.l.b16 %v7336
    %v8380 = vunpack.c.h.b16 %v7336
    %v8381 = vunpack.c.l.b16 %v7337
    %v8382 = vunpack.c.h.b16 %v7337
    %v8383 = vunpack.c.l.b16 %v7338
    %v8384 = vunpack.c.h.b16 %v7338
    %v8385 = vunpack.c.l.b16 %v7339
    %v8386 = vunpack.c.h.b16 %v7339
    %v8387 = vunpack.c.l.b16 %v7340
    %v8388 = vunpack.c.h.b16 %v7340
    %v8389 = vunpack.c.l.b16 %v7341
    %v8390 = vunpack.c.h.b16 %v7341
    %v8391 = vunpack.c.l.b16 %v7342
    %v8392 = vunpack.c.h.b16 %v7342
    %v8393 = vunpack.c.l.b16 %v7343
    %v8394 = vunpack.c.h.b16 %v7343
    %v8395 = vunpack.c.l.b16 %v7344
    %v8396 = vunpack.c.h.b16 %v7344
    %v8397 = vunpack.c.l.b16 %v7345
    %v8398 = vunpack.c.h.b16 %v7345
    %v8399 = vpack.c.b16 %v7891, %v7887
    %v8400 = vpack.c.b16 %v7892, %v7888
    %v8401 = vpack.c.b16 %v7893, %v7889
    %v8402 = vpack.c.b16 %v7894, %v7890
    %v8403 = vpack.c.b16 %v7899, %v7895
    %v8404 = vpack.c.b16 %v7900, %v7896
    %v8405 = vpack.c.b16 %v7901, %v7897
    %v8406 = vpack.c.b16 %v7902, %v7898
    %v8407 = vpack.c.b16 %v7907, %v7903
    %v8408 = vpack.c.b16 %v7908, %v7904
    %v8409 = vpack.c.b16 %v7909, %v7905
    %v8410 = vpack.c.b16 %v7910, %v7906
    %v8411 = vpack.c.b16 %v7915, %v7911
    %v8412 = vpack.c.b16 %v7916, %v7912
    %v8413 = vpack.c.b16 %v7917, %v7913
    %v8414 = vpack.c.b16 %v7918, %v7914
    %v8415 = vpack.c.b16 %v7923, %v7919
    %v8416 = vpack.c.b16 %v7924, %v7920
    %v8417 = vpack.c.b16 %v7925, %v7921
    %v8418 = vpack.c.b16 %v7926, %v7922
    %v8419 = vpack.c.b16 %v7931, %v7927
    %v8420 = vpack.c.b16 %v7932, %v7928
    %v8421 = vpack.c.b16 %v7933, %v7929
    %v8422 = vpack.c.b16 %v7934, %v7930
    %v8423 = vpack.c.b16 %v7939, %v7935
    %v8424 = vpack.c.b16 %v7940, %v7936
    %v8425 = vpack.c.b16 %v7941, %v7937
    %v8426 = vpack.c.b16 %v7942, %v7938
    %v8427 = vpack.c.b16 %v7947, %v7943
    %v8428 = vpack.c.b16 %v7948, %v7944
    %v8429 = vpack.c.b16 %v7949, %v7945
    %v8430 = vpack.c.b16 %v7950, %v7946
    %v8431 = vpack.c.b16 %v7955, %v7951
    %v8432 = vpack.c.b16 %v7956, %v7952
    %v8433 = vpack.c.b16 %v7957, %v7953
    %v8434 = vpack.c.b16 %v7958, %v7954
    %v8435 = vpack.c.b16 %v7963, %v7959
    %v8436 = vpack.c.b16 %v7964, %v7960
    %v8437 = vpack.c.b16 %v7965, %v7961
    %v8438 = vpack.c.b16 %v7966, %v7962
    %v8439 = vpack.c.b16 %v7971, %v7967
    %v8440 = vpack.c.b16 %v7972, %v7968
    %v8441 = vpack.c.b16 %v7973, %v7969
    %v8442 = vpack.c.b16 %v7974, %v7970
    %v8443 = vpack.c.b16 %v7979, %v7975
    %v8444 = vpack.c.b16 %v7980, %v7976
    %v8445 = vpack.c.b16 %v7981, %v7977
    %v8446 = vpack.c.b16 %v7982, %v7978
    %v8447 = vpack.c.b16 %v7987, %v7983
    %v8448 = vpack.c.b16 %v7988, %v7984
    %v8449 = vpack.c.b16 %v7989, %v7985
    %v8450 = vpack.c.b16 %v7990, %v7986
    %v8451 = vpack.c.b16 %v7995, %v7991
    %v8452 = vpack.c.b16 %v7996, %v7992
    %v8453 = vpack.c.b16 %v7997, %v7993
    %v8454 = vpack.c.b16 %v7998, %v7994
    %v8455 = vpack.c.b16 %v8003, %v7999
    %v8456 = vpack.c.b16 %v8004, %v8000
    %v8457 = vpack.c.b16 %v8005, %v8001
    %v8458 = vpack.c.b16 %v8006, %v8002
    %v8459 = vpack.c.b16 %v8011, %v8007
    %v8460 = vpack.c.b16 %v8012, %v8008
    %v8461 = vpack.c.b16 %v8013, %v8009
    %v8462 = vpack.c.b16 %v8014, %v8010
    %v8463 = vpack.c.b16 %v8019, %v8015
    %v8464 = vpack.c.b16 %v8020, %v8016
    %v8465 = vpack.c.b16 %v8021, %v8017
    %v8466 = vpack.c.b16 %v8022, %v8018
    %v8467 = vpack.c.b16 %v8027, %v8023
    %v8468 = vpack.c.b16 %v8028, %v8024
    %v8469 = vpack.c.b16 %v8029, %v8025
    %v8470 = vpack.c.b16 %v8030, %v8026
    %v8471 = vpack.c.b16 %v8035, %v8031
    %v8472 = vpack.c.b16 %v8036, %v8032
    %v8473 = vpack.c.b16 %v8037, %v8033
    %v8474 = vpack.c.b16 %v8038, %v8034
    %v8475 = vpack.c.b16 %v8043, %v8039
    %v8476 = vpack.c.b16 %v8044, %v8040
    %v8477 = vpack.c.b16 %v8045, %v8041
    %v8478 = vpack.c.b16 %v8046, %v8042
    %v8479 = vpack.c.b16 %v8051, %v8047
    %v8480 = vpack.c.b16 %v8052, %v8048
    %v8481 = vpack.c.b16 %v8053, %v8049
    %v8482 = vpack.c.b16 %v8054, %v8050
    %v8483 = vpack.c.b16 %v8059, %v8055
    %v8484 = vpack.c.b16 %v8060, %v8056
    %v8485 = vpack.c.b16 %v8061, %v8057
    %v8486 = vpack.c.b16 %v8062, %v8058
    %v8487 = vpack.c.b16 %v8067, %v8063
    %v8488 = vpack.c.b16 %v8068, %v8064
    %v8489 = vpack.c.b16 %v8069, %v8065
    %v8490 = vpack.c.b16 %v8070, %v8066
    %v8491 = vpack.c.b16 %v8075, %v8071
    %v8492 = vpack.c.b16 %v8076, %v8072
    %v8493 = vpack.c.b16 %v8077, %v8073
    %v8494 = vpack.c.b16 %v8078, %v8074
    %v8495 = vpack.c.b16 %v8083, %v8079
    %v8496 = vpack.c.b16 %v8084, %v8080
    %v8497 = vpack.c.b16 %v8085, %v8081
    %v8498 = vpack.c.b16 %v8086, %v8082
    %v8499 = vpack.c.b16 %v8091, %v8087
    %v8500 = vpack.c.b16 %v8092, %v8088
    %v8501 = vpack.c.b16 %v8093, %v8089
    %v8502 = vpack.c.b16 %v8094, %v8090
    %v8503 = vpack.c.b16 %v8099, %v8095
    %v8504 = vpack.c.b16 %v8100, %v8096
    %v8505 = vpack.c.b16 %v8101, %v8097
    %v8506 = vpack.c.b16 %v8102, %v8098
    %v8507 = vpack.c.b16 %v8107, %v8103
    %v8508 = vpack.c.b16 %v8108, %v8104
    %v8509 = vpack.c.b16 %v8109, %v8105
    %v8510 = vpack.c.b16 %v8110, %v8106
    %v8511 = vpack.c.b16 %v8115, %v8111
    %v8512 = vpack.c.b16 %v8116, %v8112
    %v8513 = vpack.c.b16 %v8117, %v8113
    %v8514 = vpack.c.b16 %v8118, %v8114
    %v8515 = vpack.c.b16 %v8123, %v8119
    %v8516 = vpack.c.b16 %v8124, %v8120
    %v8517 = vpack.c.b16 %v8125, %v8121
    %v8518 = vpack.c.b16 %v8126, %v8122
    %v8519 = vpack.c.b16 %v8131, %v8127
    %v8520 = vpack.c.b16 %v8132, %v8128
    %v8521 = vpack.c.b16 %v8133, %v8129
    %v8522 = vpack.c.b16 %v8134, %v8130
    %v8523 = vpack.c.b16 %v8139, %v8135
    %v8524 = vpack.c.b16 %v8140, %v8136
    %v8525 = vpack.c.b16 %v8141, %v8137
    %v8526 = vpack.c.b16 %v8142, %v8138
    %v8527 = vpack.c.b16 %v8147, %v8143
    %v8528 = vpack.c.b16 %v8148, %v8144
    %v8529 = vpack.c.b16 %v8149, %v8145
    %v8530 = vpack.c.b16 %v8150, %v8146
    %v8531 = vpack.c.b16 %v8155, %v8151
    %v8532 = vpack.c.b16 %v8156, %v8152
    %v8533 = vpack.c.b16 %v8157, %v8153
    %v8534 = vpack.c.b16 %v8158, %v8154
    %v8535 = vpack.c.b16 %v8163, %v8159
    %v8536 = vpack.c.b16 %v8164, %v8160
    %v8537 = vpack.c.b16 %v8165, %v8161
    %v8538 = vpack.c.b16 %v8166, %v8162
    %v8539 = vpack.c.b16 %v8171, %v8167
    %v8540 = vpack.c.b16 %v8172, %v8168
    %v8541 = vpack.c.b16 %v8173, %v8169
    %v8542 = vpack.c.b16 %v8174, %v8170
    %v8543 = vpack.c.b16 %v8179, %v8175
    %v8544 = vpack.c.b16 %v8180, %v8176
    %v8545 = vpack.c.b16 %v8181, %v8177
    %v8546 = vpack.c.b16 %v8182, %v8178
    %v8547 = vpack.c.b16 %v8187, %v8183
    %v8548 = vpack.c.b16 %v8188, %v8184
    %v8549 = vpack.c.b16 %v8189, %v8185
    %v8550 = vpack.c.b16 %v8190, %v8186
    %v8551 = vpack.c.b16 %v8195, %v8191
    %v8552 = vpack.c.b16 %v8196, %v8192
    %v8553 = vpack.c.b16 %v8197, %v8193
    %v8554 = vpack.c.b16 %v8198, %v8194
    %v8555 = vpack.c.b16 %v8203, %v8199
    %v8556 = vpack.c.b16 %v8204, %v8200
    %v8557 = vpack.c.b16 %v8205, %v8201
    %v8558 = vpack.c.b16 %v8206, %v8202
    %v8559 = vpack.c.b16 %v8211, %v8207
    %v8560 = vpack.c.b16 %v8212, %v8208
    %v8561 = vpack.c.b16 %v8213, %v8209
    %v8562 = vpack.c.b16 %v8214, %v8210
    %v8563 = vpack.c.b16 %v8219, %v8215
    %v8564 = vpack.c.b16 %v8220, %v8216
    %v8565 = vpack.c.b16 %v8221, %v8217
    %v8566 = vpack.c.b16 %v8222, %v8218
    %v8567 = vpack.c.b16 %v8227, %v8223
    %v8568 = vpack.c.b16 %v8228, %v8224
    %v8569 = vpack.c.b16 %v8229, %v8225
    %v8570 = vpack.c.b16 %v8230, %v8226
    %v8571 = vpack.c.b16 %v8235, %v8231
    %v8572 = vpack.c.b16 %v8236, %v8232
    %v8573 = vpack.c.b16 %v8237, %v8233
    %v8574 = vpack.c.b16 %v8238, %v8234
    %v8575 = vpack.c.b16 %v8243, %v8239
    %v8576 = vpack.c.b16 %v8244, %v8240
    %v8577 = vpack.c.b16 %v8245, %v8241
    %v8578 = vpack.c.b16 %v8246, %v8242
    %v8579 = vpack.c.b16 %v8251, %v8247
    %v8580 = vpack.c.b16 %v8252, %v8248
    %v8581 = vpack.c.b16 %v8253, %v8249
    %v8582 = vpack.c.b16 %v8254, %v8250
    %v8583 = vpack.c.b16 %v8259, %v8255
    %v8584 = vpack.c.b16 %v8260, %v8256
    %v8585 = vpack.c.b16 %v8261, %v8257
    %v8586 = vpack.c.b16 %v8262, %v8258
    %v8587 = vpack.c.b16 %v8267, %v8263
    %v8588 = vpack.c.b16 %v8268, %v8264
    %v8589 = vpack.c.b16 %v8269, %v8265
    %v8590 = vpack.c.b16 %v8270, %v8266
    %v8591 = vpack.c.b16 %v8275, %v8271
    %v8592 = vpack.c.b16 %v8276, %v8272
    %v8593 = vpack.c.b16 %v8277, %v8273
    %v8594 = vpack.c.b16 %v8278, %v8274
    %v8595 = vpack.c.b16 %v8283, %v8279
    %v8596 = vpack.c.b16 %v8284, %v8280
    %v8597 = vpack.c.b16 %v8285, %v8281
    %v8598 = vpack.c.b16 %v8286, %v8282
    %v8599 = vpack.c.b16 %v8291, %v8287
    %v8600 = vpack.c.b16 %v8292, %v8288
    %v8601 = vpack.c.b16 %v8293, %v8289
    %v8602 = vpack.c.b16 %v8294, %v8290
    %v8603 = vpack.c.b16 %v8299, %v8295
    %v8604 = vpack.c.b16 %v8300, %v8296
    %v8605 = vpack.c.b16 %v8301, %v8297
    %v8606 = vpack.c.b16 %v8302, %v8298
    %v8607 = vpack.c.b16 %v8307, %v8303
    %v8608 = vpack.c.b16 %v8308, %v8304
    %v8609 = vpack.c.b16 %v8309, %v8305
    %v8610 = vpack.c.b16 %v8310, %v8306
    %v8611 = vpack.c.b16 %v8315, %v8311
    %v8612 = vpack.c.b16 %v8316, %v8312
    %v8613 = vpack.c.b16 %v8317, %v8313
    %v8614 = vpack.c.b16 %v8318, %v8314
    %v8615 = vpack.c.b16 %v8323, %v8319
    %v8616 = vpack.c.b16 %v8324, %v8320
    %v8617 = vpack.c.b16 %v8325, %v8321
    %v8618 = vpack.c.b16 %v8326, %v8322
    %v8619 = vpack.c.b16 %v8331, %v8327
    %v8620 = vpack.c.b16 %v8332, %v8328
    %v8621 = vpack.c.b16 %v8333, %v8329
    %v8622 = vpack.c.b16 %v8334, %v8330
    %v8623 = vpack.c.b16 %v8339, %v8335
    %v8624 = vpack.c.b16 %v8340, %v8336
    %v8625 = vpack.c.b16 %v8341, %v8337
    %v8626 = vpack.c.b16 %v8342, %v8338
    %v8627 = vpack.c.b16 %v8347, %v8343
    %v8628 = vpack.c.b16 %v8348, %v8344
    %v8629 = vpack.c.b16 %v8349, %v8345
    %v8630 = vpack.c.b16 %v8350, %v8346
    %v8631 = vpack.c.b16 %v8355, %v8351
    %v8632 = vpack.c.b16 %v8356, %v8352
    %v8633 = vpack.c.b16 %v8357, %v8353
    %v8634 = vpack.c.b16 %v8358, %v8354
    %v8635 = vpack.c.b16 %v8363, %v8359
    %v8636 = vpack.c.b16 %v8364, %v8360
    %v8637 = vpack.c.b16 %v8365, %v8361
    %v8638 = vpack.c.b16 %v8366, %v8362
    %v8639 = vpack.c.b16 %v8371, %v8367
    %v8640 = vpack.c.b16 %v8372, %v8368
    %v8641 = vpack.c.b16 %v8373, %v8369
    %v8642 = vpack.c.b16 %v8374, %v8370
    %v8643 = vpack.c.b16 %v8379, %v8375
    %v8644 = vpack.c.b16 %v8380, %v8376
    %v8645 = vpack.c.b16 %v8381, %v8377
    %v8646 = vpack.c.b16 %v8382, %v8378
    %v8647 = vpack.c.b16 %v8387, %v8383
    %v8648 = vpack.c.b16 %v8388, %v8384
    %v8649 = vpack.c.b16 %v8389, %v8385
    %v8650 = vpack.c.b16 %v8390, %v8386
    %v8651 = vpack.c.b16 %v8395, %v8391
    %v8652 = vpack.c.b16 %v8396, %v8392
    %v8653 = vpack.c.b16 %v8397, %v8393
    %v8654 = vpack.c.b16 %v8398, %v8394
    %8911 = vmatprep.subr.bf16.mxu0 %v8428
    %8912 = vmatpush1.bf16.msra.mxu0 %v8427
    %8913 = vmatprep.subr.bf16.mxu0 %v8424
    %8914 = vmatpush1.bf16.msra.mxu0 %v8423
    %8915 = vmatprep.subr.bf16.mxu0 %v8420
    %8916 = vmatpush1.bf16.msra.mxu0 %v8419
    %8917 = vmatprep.subr.bf16.mxu0 %v8416
    %8918 = vmatpush1.bf16.msra.mxu0 %v8415
    %8919 = vmatprep.subr.bf16.mxu0 %v8412
    %8920 = vmatpush1.bf16.msra.mxu0 %v8411
    %8921 = vmatprep.subr.bf16.mxu0 %v8408
    %8922 = vmatpush1.bf16.msra.mxu0 %v8407
    %8923 = vmatprep.subr.bf16.mxu0 %v8404
    %8924 = vmatpush1.bf16.msra.mxu0 %v8403
    %8925 = vmatprep.subr.bf16.mxu0 %v8400
    %8926 = vmatpush1.bf16.msra.mxu0 %v8399
    %8927 = vmatprep.subr.bf16.mxu0 %v8460
    %8928 = vmatpush2.bf16.msra.mxu0 %v8459
    %8929 = vmatprep.subr.bf16.mxu0 %v8456
    %8930 = vmatpush2.bf16.msra.mxu0 %v8455
    %8931 = vmatprep.subr.bf16.mxu0 %v8452
    %8932 = vmatpush2.bf16.msra.mxu0 %v8451
    %8933 = vmatprep.subr.bf16.mxu0 %v8448
    %8934 = vmatpush2.bf16.msra.mxu0 %v8447
    %8935 = vmatprep.subr.bf16.mxu0 %v8444
    %8936 = vmatpush2.bf16.msra.mxu0 %v8443
    %8937 = vmatprep.subr.bf16.mxu0 %v8440
    %8938 = vmatpush2.bf16.msra.mxu0 %v8439
    %8939 = vmatprep.subr.bf16.mxu0 %v8436
    %8940 = vmatpush2.bf16.msra.mxu0 %v8435
    %8941 = vmatprep.subr.bf16.mxu0 %v8432
    %8942 = vmatpush2.bf16.msra.mxu0 %v8431
    %8943 = vmatprep.mubr.bf16.mxu0 %v7616
    %8944 = vmatmul.mubr.bf16.gmra.mxu0 %v7615
    %v8945 = vpop.f32.mrf.mxu0
    %v8946 = vadd.f32 %v7351, %v8945
    %v8947 = vpop.f32.mrf.mxu0
    %v8948 = vadd.f32 %v7355, %v8947
    %v8949 = vpop.f32.mrf.mxu0
    %v8950 = vpop.f32.mrf.mxu0
    %8951 = vdwg.mxu0
    %8952 = vmatprep.subr.bf16.mxu0 %v8492
    %8953 = vmatpush1.bf16.msra.mxu0 %v8491
    %8954 = vmatprep.subr.bf16.mxu0 %v8488
    %8955 = vmatpush1.bf16.msra.mxu0 %v8487
    %8956 = vmatprep.subr.bf16.mxu0 %v8484
    %8957 = vmatpush1.bf16.msra.mxu0 %v8483
    %8958 = vmatprep.subr.bf16.mxu0 %v8480
    %8959 = vmatpush1.bf16.msra.mxu0 %v8479
    %8960 = vmatprep.subr.bf16.mxu0 %v8476
    %8961 = vmatpush1.bf16.msra.mxu0 %v8475
    %8962 = vmatprep.subr.bf16.mxu0 %v8472
    %8963 = vmatpush1.bf16.msra.mxu0 %v8471
    %8964 = vmatprep.subr.bf16.mxu0 %v8468
    %8965 = vmatpush1.bf16.msra.mxu0 %v8467
    %8966 = vmatprep.subr.bf16.mxu0 %v8464
    %8967 = vmatpush1.bf16.msra.mxu0 %v8463
    %8968 = vmatprep.subr.bf16.mxu0 %v8524
    %8969 = vmatpush2.bf16.msra.mxu0 %v8523
    %8970 = vmatprep.subr.bf16.mxu0 %v8520
    %8971 = vmatpush2.bf16.msra.mxu0 %v8519
    %8972 = vmatprep.subr.bf16.mxu0 %v8516
    %8973 = vmatpush2.bf16.msra.mxu0 %v8515
    %8974 = vmatprep.subr.bf16.mxu0 %v8512
    %8975 = vmatpush2.bf16.msra.mxu0 %v8511
    %8976 = vmatprep.subr.bf16.mxu0 %v8508
    %8977 = vmatpush2.bf16.msra.mxu0 %v8507
    %8978 = vmatprep.subr.bf16.mxu0 %v8504
    %8979 = vmatpush2.bf16.msra.mxu0 %v8503
    %8980 = vmatprep.subr.bf16.mxu0 %v8500
    %8981 = vmatpush2.bf16.msra.mxu0 %v8499
    %8982 = vmatprep.subr.bf16.mxu0 %v8496
    %8983 = vmatpush2.bf16.msra.mxu0 %v8495
    %8984 = vmatprep.mubr.bf16.mxu0 %v7618
    %8985 = vmatmul.mubr.bf16.gmra.mxu0 %v7617
    %v8986 = vpop.f32.mrf.mxu0
    %v8987 = vadd.f32 %v8946, %v8986
    %v8988 = vpop.f32.mrf.mxu0
    %v8989 = vadd.f32 %v8948, %v8988
    %v8990 = vpop.f32.mrf.mxu0
    %v8991 = vpop.f32.mrf.mxu0
    %8992 = vdwg.mxu0
    %8993 = vmatprep.subr.bf16.mxu0 %v8556
    %8994 = vmatpush1.bf16.msra.mxu0 %v8555
    %8995 = vmatprep.subr.bf16.mxu0 %v8552
    %8996 = vmatpush1.bf16.msra.mxu0 %v8551
    %8997 = vmatprep.subr.bf16.mxu0 %v8548
    %8998 = vmatpush1.bf16.msra.mxu0 %v8547
    %8999 = vmatprep.subr.bf16.mxu0 %v8544
    %9000 = vmatpush1.bf16.msra.mxu0 %v8543
    %9001 = vmatprep.subr.bf16.mxu0 %v8540
    %9002 = vmatpush1.bf16.msra.mxu0 %v8539
    %9003 = vmatprep.subr.bf16.mxu0 %v8536
    %9004 = vmatpush1.bf16.msra.mxu0 %v8535
    %9005 = vmatprep.subr.bf16.mxu0 %v8532
    %9006 = vmatpush1.bf16.msra.mxu0 %v8531
    %9007 = vmatprep.subr.bf16.mxu0 %v8528
    %9008 = vmatpush1.bf16.msra.mxu0 %v8527
    %9009 = vmatprep.subr.bf16.mxu0 %v8588
    %9010 = vmatpush2.bf16.msra.mxu0 %v8587
    %9011 = vmatprep.subr.bf16.mxu0 %v8584
    %9012 = vmatpush2.bf16.msra.mxu0 %v8583
    %9013 = vmatprep.subr.bf16.mxu0 %v8580
    %9014 = vmatpush2.bf16.msra.mxu0 %v8579
    %9015 = vmatprep.subr.bf16.mxu0 %v8576
    %9016 = vmatpush2.bf16.msra.mxu0 %v8575
    %9017 = vmatprep.subr.bf16.mxu0 %v8572
    %9018 = vmatpush2.bf16.msra.mxu0 %v8571
    %9019 = vmatprep.subr.bf16.mxu0 %v8568
    %9020 = vmatpush2.bf16.msra.mxu0 %v8567
    %9021 = vmatprep.subr.bf16.mxu0 %v8564
    %9022 = vmatpush2.bf16.msra.mxu0 %v8563
    %9023 = vmatprep.subr.bf16.mxu0 %v8560
    %9024 = vmatpush2.bf16.msra.mxu0 %v8559
    %9025 = vmatprep.mubr.bf16.mxu0 %v7620
    %9026 = vmatmul.mubr.bf16.gmra.mxu0 %v7619
    %v9027 = vpop.f32.mrf.mxu0
    %v9028 = vadd.f32 %v8987, %v9027
    %v9029 = vpop.f32.mrf.mxu0
    %v9030 = vadd.f32 %v8989, %v9029
    %v9031 = vpop.f32.mrf.mxu0
    %v9032 = vpop.f32.mrf.mxu0
    %9033 = vdwg.mxu0
    %9034 = vmatprep.subr.bf16.mxu0 %v8620
    %9035 = vmatpush1.bf16.msra.mxu0 %v8619
    %9036 = vmatprep.subr.bf16.mxu0 %v8616
    %9037 = vmatpush1.bf16.msra.mxu0 %v8615
    %9038 = vmatprep.subr.bf16.mxu0 %v8612
    %9039 = vmatpush1.bf16.msra.mxu0 %v8611
    %9040 = vmatprep.subr.bf16.mxu0 %v8608
    %9041 = vmatpush1.bf16.msra.mxu0 %v8607
    %9042 = vmatprep.subr.bf16.mxu0 %v8604
    %9043 = vmatpush1.bf16.msra.mxu0 %v8603
    %9044 = vmatprep.subr.bf16.mxu0 %v8600
    %9045 = vmatpush1.bf16.msra.mxu0 %v8599
    %9046 = vmatprep.subr.bf16.mxu0 %v8596
    %9047 = vmatpush1.bf16.msra.mxu0 %v8595
    %9048 = vmatprep.subr.bf16.mxu0 %v8592
    %9049 = vmatpush1.bf16.msra.mxu0 %v8591
    %9050 = vmatprep.subr.bf16.mxu0 %v8652
    %9051 = vmatpush2.bf16.msra.mxu0 %v8651
    %9052 = vmatprep.subr.bf16.mxu0 %v8648
    %9053 = vmatpush2.bf16.msra.mxu0 %v8647
    %9054 = vmatprep.subr.bf16.mxu0 %v8644
    %9055 = vmatpush2.bf16.msra.mxu0 %v8643
    %9056 = vmatprep.subr.bf16.mxu0 %v8640
    %9057 = vmatpush2.bf16.msra.mxu0 %v8639
    %9058 = vmatprep.subr.bf16.mxu0 %v8636
    %9059 = vmatpush2.bf16.msra.mxu0 %v8635
    %9060 = vmatprep.subr.bf16.mxu0 %v8632
    %9061 = vmatpush2.bf16.msra.mxu0 %v8631
    %9062 = vmatprep.subr.bf16.mxu0 %v8628
    %9063 = vmatpush2.bf16.msra.mxu0 %v8627
    %9064 = vmatprep.subr.bf16.mxu0 %v8624
    %9065 = vmatpush2.bf16.msra.mxu0 %v8623
    %9066 = vmatprep.mubr.bf16.mxu0 %v7622
    %9067 = vmatmul.mubr.bf16.gmra.mxu0 %v7621
    %v9068 = vpop.f32.mrf.mxu0
    %v9069 = vadd.f32 %v9028, %v9068
    %v9070 = vpop.f32.mrf.mxu0
    %v9071 = vadd.f32 %v9030, %v9070
    %v9072 = vpop.f32.mrf.mxu0
    %v9073 = vpop.f32.mrf.mxu0
    %9074 = vdwg.mxu0
    %9075 = vmatprep.subr.bf16.mxu0 %v8430
    %9076 = vmatpush1.bf16.msra.mxu0 %v8429
    %9077 = vmatprep.subr.bf16.mxu0 %v8426
    %9078 = vmatpush1.bf16.msra.mxu0 %v8425
    %9079 = vmatprep.subr.bf16.mxu0 %v8422
    %9080 = vmatpush1.bf16.msra.mxu0 %v8421
    %9081 = vmatprep.subr.bf16.mxu0 %v8418
    %9082 = vmatpush1.bf16.msra.mxu0 %v8417
    %9083 = vmatprep.subr.bf16.mxu0 %v8414
    %9084 = vmatpush1.bf16.msra.mxu0 %v8413
    %9085 = vmatprep.subr.bf16.mxu0 %v8410
    %9086 = vmatpush1.bf16.msra.mxu0 %v8409
    %9087 = vmatprep.subr.bf16.mxu0 %v8406
    %9088 = vmatpush1.bf16.msra.mxu0 %v8405
    %9089 = vmatprep.subr.bf16.mxu0 %v8402
    %9090 = vmatpush1.bf16.msra.mxu0 %v8401
    %9091 = vmatprep.subr.bf16.mxu0 %v8462
    %9092 = vmatpush2.bf16.msra.mxu0 %v8461
    %9093 = vmatprep.subr.bf16.mxu0 %v8458
    %9094 = vmatpush2.bf16.msra.mxu0 %v8457
    %9095 = vmatprep.subr.bf16.mxu0 %v8454
    %9096 = vmatpush2.bf16.msra.mxu0 %v8453
    %9097 = vmatprep.subr.bf16.mxu0 %v8450
    %9098 = vmatpush2.bf16.msra.mxu0 %v8449
    %9099 = vmatprep.subr.bf16.mxu0 %v8446
    %9100 = vmatpush2.bf16.msra.mxu0 %v8445
    %9101 = vmatprep.subr.bf16.mxu0 %v8442
    %9102 = vmatpush2.bf16.msra.mxu0 %v8441
    %9103 = vmatprep.subr.bf16.mxu0 %v8438
    %9104 = vmatpush2.bf16.msra.mxu0 %v8437
    %9105 = vmatprep.subr.bf16.mxu0 %v8434
    %9106 = vmatpush2.bf16.msra.mxu0 %v8433
    %9107 = vmatprep.mubr.bf16.mxu0 %v7616
    %9108 = vmatmul.mubr.bf16.gmra.mxu0 %v7615
    %v9109 = vpop.f32.mrf.mxu0
    %v9110 = vadd.f32 %v7359, %v9109
    %v9111 = vpop.f32.mrf.mxu0
    %v9112 = vadd.f32 %v7363, %v9111
    %v9113 = vpop.f32.mrf.mxu0
    %v9114 = vpop.f32.mrf.mxu0
    %9115 = vdwg.mxu0
    %9116 = vmatprep.subr.bf16.mxu0 %v8494
    %9117 = vmatpush1.bf16.msra.mxu0 %v8493
    %9118 = vmatprep.subr.bf16.mxu0 %v8490
    %9119 = vmatpush1.bf16.msra.mxu0 %v8489
    %9120 = vmatprep.subr.bf16.mxu0 %v8486
    %9121 = vmatpush1.bf16.msra.mxu0 %v8485
    %9122 = vmatprep.subr.bf16.mxu0 %v8482
    %9123 = vmatpush1.bf16.msra.mxu0 %v8481
    %9124 = vmatprep.subr.bf16.mxu0 %v8478
    %9125 = vmatpush1.bf16.msra.mxu0 %v8477
    %9126 = vmatprep.subr.bf16.mxu0 %v8474
    %9127 = vmatpush1.bf16.msra.mxu0 %v8473
    %9128 = vmatprep.subr.bf16.mxu0 %v8470
    %9129 = vmatpush1.bf16.msra.mxu0 %v8469
    %9130 = vmatprep.subr.bf16.mxu0 %v8466
    %9131 = vmatpush1.bf16.msra.mxu0 %v8465
    %9132 = vmatprep.subr.bf16.mxu0 %v8526
    %9133 = vmatpush2.bf16.msra.mxu0 %v8525
    %9134 = vmatprep.subr.bf16.mxu0 %v8522
    %9135 = vmatpush2.bf16.msra.mxu0 %v8521
    %9136 = vmatprep.subr.bf16.mxu0 %v8518
    %9137 = vmatpush2.bf16.msra.mxu0 %v8517
    %9138 = vmatprep.subr.bf16.mxu0 %v8514
    %9139 = vmatpush2.bf16.msra.mxu0 %v8513
    %9140 = vmatprep.subr.bf16.mxu0 %v8510
    %9141 = vmatpush2.bf16.msra.mxu0 %v8509
    %9142 = vmatprep.subr.bf16.mxu0 %v8506
    %9143 = vmatpush2.bf16.msra.mxu0 %v8505
    %9144 = vmatprep.subr.bf16.mxu0 %v8502
    %9145 = vmatpush2.bf16.msra.mxu0 %v8501
    %9146 = vmatprep.subr.bf16.mxu0 %v8498
    %9147 = vmatpush2.bf16.msra.mxu0 %v8497
    %9148 = vmatprep.mubr.bf16.mxu0 %v7618
    %9149 = vmatmul.mubr.bf16.gmra.mxu0 %v7617
    %v9150 = vpop.f32.mrf.mxu0
    %v9151 = vadd.f32 %v9110, %v9150
    %v9152 = vpop.f32.mrf.mxu0
    %v9153 = vadd.f32 %v9112, %v9152
    %v9154 = vpop.f32.mrf.mxu0
    %v9155 = vpop.f32.mrf.mxu0
    %9156 = vdwg.mxu0
    %9157 = vmatprep.subr.bf16.mxu0 %v8558
    %9158 = vmatpush1.bf16.msra.mxu0 %v8557
    %9159 = vmatprep.subr.bf16.mxu0 %v8554
    %9160 = vmatpush1.bf16.msra.mxu0 %v8553
    %9161 = vmatprep.subr.bf16.mxu0 %v8550
    %9162 = vmatpush1.bf16.msra.mxu0 %v8549
    %9163 = vmatprep.subr.bf16.mxu0 %v8546
    %9164 = vmatpush1.bf16.msra.mxu0 %v8545
    %9165 = vmatprep.subr.bf16.mxu0 %v8542
    %9166 = vmatpush1.bf16.msra.mxu0 %v8541
    %9167 = vmatprep.subr.bf16.mxu0 %v8538
    %9168 = vmatpush1.bf16.msra.mxu0 %v8537
    %9169 = vmatprep.subr.bf16.mxu0 %v8534
    %9170 = vmatpush1.bf16.msra.mxu0 %v8533
    %9171 = vmatprep.subr.bf16.mxu0 %v8530
    %9172 = vmatpush1.bf16.msra.mxu0 %v8529
    %9173 = vmatprep.subr.bf16.mxu0 %v8590
    %9174 = vmatpush2.bf16.msra.mxu0 %v8589
    %9175 = vmatprep.subr.bf16.mxu0 %v8586
    %9176 = vmatpush2.bf16.msra.mxu0 %v8585
    %9177 = vmatprep.subr.bf16.mxu0 %v8582
    %9178 = vmatpush2.bf16.msra.mxu0 %v8581
    %9179 = vmatprep.subr.bf16.mxu0 %v8578
    %9180 = vmatpush2.bf16.msra.mxu0 %v8577
    %9181 = vmatprep.subr.bf16.mxu0 %v8574
    %9182 = vmatpush2.bf16.msra.mxu0 %v8573
    %9183 = vmatprep.subr.bf16.mxu0 %v8570
    %9184 = vmatpush2.bf16.msra.mxu0 %v8569
    %9185 = vmatprep.subr.bf16.mxu0 %v8566
    %9186 = vmatpush2.bf16.msra.mxu0 %v8565
    %9187 = vmatprep.subr.bf16.mxu0 %v8562
    %9188 = vmatpush2.bf16.msra.mxu0 %v8561
    %9189 = vmatprep.mubr.bf16.mxu0 %v7620
    %9190 = vmatmul.mubr.bf16.gmra.mxu0 %v7619
    %v9191 = vpop.f32.mrf.mxu0
    %v9192 = vadd.f32 %v9151, %v9191
    %v9193 = vpop.f32.mrf.mxu0
    %v9194 = vadd.f32 %v9153, %v9193
    %v9195 = vpop.f32.mrf.mxu0
    %v9196 = vpop.f32.mrf.mxu0
    %9197 = vdwg.mxu0
    %9198 = vmatprep.subr.bf16.mxu0 %v8622
    %9199 = vmatpush1.bf16.msra.mxu0 %v8621
    %9200 = vmatprep.subr.bf16.mxu0 %v8618
    %9201 = vmatpush1.bf16.msra.mxu0 %v8617
    %9202 = vmatprep.subr.bf16.mxu0 %v8614
    %9203 = vmatpush1.bf16.msra.mxu0 %v8613
    %9204 = vmatprep.subr.bf16.mxu0 %v8610
    %9205 = vmatpush1.bf16.msra.mxu0 %v8609
    %9206 = vmatprep.subr.bf16.mxu0 %v8606
    %9207 = vmatpush1.bf16.msra.mxu0 %v8605
    %9208 = vmatprep.subr.bf16.mxu0 %v8602
    %9209 = vmatpush1.bf16.msra.mxu0 %v8601
    %9210 = vmatprep.subr.bf16.mxu0 %v8598
    %9211 = vmatpush1.bf16.msra.mxu0 %v8597
    %9212 = vmatprep.subr.bf16.mxu0 %v8594
    %9213 = vmatpush1.bf16.msra.mxu0 %v8593
    %9214 = vmatprep.subr.bf16.mxu0 %v8654
    %9215 = vmatpush2.bf16.msra.mxu0 %v8653
    %9216 = vmatprep.subr.bf16.mxu0 %v8650
    %9217 = vmatpush2.bf16.msra.mxu0 %v8649
    %9218 = vmatprep.subr.bf16.mxu0 %v8646
    %9219 = vmatpush2.bf16.msra.mxu0 %v8645
    %9220 = vmatprep.subr.bf16.mxu0 %v8642
    %9221 = vmatpush2.bf16.msra.mxu0 %v8641
    %9222 = vmatprep.subr.bf16.mxu0 %v8638
    %9223 = vmatpush2.bf16.msra.mxu0 %v8637
    %9224 = vmatprep.subr.bf16.mxu0 %v8634
    %9225 = vmatpush2.bf16.msra.mxu0 %v8633
    %9226 = vmatprep.subr.bf16.mxu0 %v8630
    %9227 = vmatpush2.bf16.msra.mxu0 %v8629
    %9228 = vmatprep.subr.bf16.mxu0 %v8626
    %9229 = vmatpush2.bf16.msra.mxu0 %v8625
    %9230 = vmatprep.mubr.bf16.mxu0 %v7622
    %9231 = vmatmul.mubr.bf16.gmra.mxu0 %v7621
    %v9232 = vpop.f32.mrf.mxu0
    %v9233 = vadd.f32 %v9192, %v9232
    %v9234 = vpop.f32.mrf.mxu0
    %v9235 = vadd.f32 %v9194, %v9234
    %v9236 = vpop.f32.mrf.mxu0
    %v9237 = vpop.f32.mrf.mxu0
    %9238 = vdwg.mxu0
    %v9239 = vmax.f32 %v9069, 0.0
    %v9240 = vmax.f32 %v9071, 0.0
    %v9241 = vmax.f32 %v9233, 0.0
    %v9242 = vmax.f32 %v9235, 0.0
    %v9243 = vpack.c.bf16 %v9239, %v9239
    %v9244 = vpack.c.bf16 %v9240, %v9240
    %v9245 = vpack.c.bf16 %v9241, %v9241
    %v9246 = vpack.c.bf16 %v9242, %v9242
    %v9247 = vld [vmem:[#allocation5] sm:$0xff]
    %v9248 = vld [vmem:[#allocation5 + $0x8] sm:$0xff]
    %v9249 = vld [vmem:[#allocation5 + $0x10] sm:$0xff]
    %v9250 = vld [vmem:[#allocation5 + $0x18] sm:$0xff]
    %v9251 = vld [vmem:[#allocation5 + $0x20] sm:$0xff]
    %v9252 = vld [vmem:[#allocation5 + $0x28] sm:$0xff]
    %v9253 = vld [vmem:[#allocation5 + $0x30] sm:$0xff]
    %v9254 = vld [vmem:[#allocation5 + $0x38] sm:$0xff]
    %v9255 = vld [vmem:[#allocation5 + $0x40] sm:$0xff]
    %v9256 = vld [vmem:[#allocation5 + $0x48] sm:$0xff]
    %v9257 = vld [vmem:[#allocation5 + $0x50] sm:$0xff]
    %v9258 = vld [vmem:[#allocation5 + $0x58] sm:$0xff]
    %v9259 = vld [vmem:[#allocation5 + $0x60] sm:$0xff]
    %v9260 = vld [vmem:[#allocation5 + $0x68] sm:$0xff]
    %v9261 = vld [vmem:[#allocation5 + $0x70] sm:$0xff]
    %v9262 = vld [vmem:[#allocation5 + $0x78] sm:$0xff]
    %v9263 = vld [vmem:[#allocation5 + $0x80] sm:$0xff]
    %v9264 = vld [vmem:[#allocation5 + $0x88] sm:$0xff]
    %v9265 = vld [vmem:[#allocation5 + $0x90] sm:$0xff]
    %v9266 = vld [vmem:[#allocation5 + $0x98] sm:$0xff]
    %v9267 = vld [vmem:[#allocation5 + $0xa0] sm:$0xff]
    %v9268 = vld [vmem:[#allocation5 + $0xa8] sm:$0xff]
    %v9269 = vld [vmem:[#allocation5 + $0xb0] sm:$0xff]
    %v9270 = vld [vmem:[#allocation5 + $0xb8] sm:$0xff]
    %v9271 = vld [vmem:[#allocation5 + $0xc0] sm:$0xff]
    %v9272 = vld [vmem:[#allocation5 + $0xc8] sm:$0xff]
    %v9273 = vld [vmem:[#allocation5 + $0xd0] sm:$0xff]
    %v9274 = vld [vmem:[#allocation5 + $0xd8] sm:$0xff]
    %v9275 = vld [vmem:[#allocation5 + $0xe0] sm:$0xff]
    %v9276 = vld [vmem:[#allocation5 + $0xe8] sm:$0xff]
    %v9277 = vld [vmem:[#allocation5 + $0xf0] sm:$0xff]
    %v9278 = vld [vmem:[#allocation5 + $0xf8] sm:$0xff]
    %v9279 = vld [vmem:[#allocation5 + $0x100] sm:$0xff]
    %v9280 = vld [vmem:[#allocation5 + $0x108] sm:$0xff]
    %v9281 = vld [vmem:[#allocation5 + $0x110] sm:$0xff]
    %v9282 = vld [vmem:[#allocation5 + $0x118] sm:$0xff]
    %v9283 = vld [vmem:[#allocation5 + $0x120] sm:$0xff]
    %v9284 = vld [vmem:[#allocation5 + $0x128] sm:$0xff]
    %v9285 = vld [vmem:[#allocation5 + $0x130] sm:$0xff]
    %v9286 = vld [vmem:[#allocation5 + $0x138] sm:$0xff]
    %v9287 = vld [vmem:[#allocation5 + $0x140] sm:$0xff]
    %v9288 = vld [vmem:[#allocation5 + $0x148] sm:$0xff]
    %v9289 = vld [vmem:[#allocation5 + $0x150] sm:$0xff]
    %v9290 = vld [vmem:[#allocation5 + $0x158] sm:$0xff]
    %v9291 = vld [vmem:[#allocation5 + $0x160] sm:$0xff]
    %v9292 = vld [vmem:[#allocation5 + $0x168] sm:$0xff]
    %v9293 = vld [vmem:[#allocation5 + $0x170] sm:$0xff]
    %v9294 = vld [vmem:[#allocation5 + $0x178] sm:$0xff]
    %v9295 = vld [vmem:[#allocation5 + $0x180] sm:$0xff]
    %v9296 = vld [vmem:[#allocation5 + $0x188] sm:$0xff]
    %v9297 = vld [vmem:[#allocation5 + $0x190] sm:$0xff]
    %v9298 = vld [vmem:[#allocation5 + $0x198] sm:$0xff]
    %v9299 = vld [vmem:[#allocation5 + $0x1a0] sm:$0xff]
    %v9300 = vld [vmem:[#allocation5 + $0x1a8] sm:$0xff]
    %v9301 = vld [vmem:[#allocation5 + $0x1b0] sm:$0xff]
    %v9302 = vld [vmem:[#allocation5 + $0x1b8] sm:$0xff]
    %v9303 = vld [vmem:[#allocation5 + $0x1c0] sm:$0xff]
    %v9304 = vld [vmem:[#allocation5 + $0x1c8] sm:$0xff]
    %v9305 = vld [vmem:[#allocation5 + $0x1d0] sm:$0xff]
    %v9306 = vld [vmem:[#allocation5 + $0x1d8] sm:$0xff]
    %v9307 = vld [vmem:[#allocation5 + $0x1e0] sm:$0xff]
    %v9308 = vld [vmem:[#allocation5 + $0x1e8] sm:$0xff]
    %v9309 = vld [vmem:[#allocation5 + $0x1f0] sm:$0xff]
    %v9310 = vld [vmem:[#allocation5 + $0x1f8] sm:$0xff]
    %v9311 = vld [vmem:[%s10] sm:$0x3]
    %v9313 = vlaneseq
    %v9314 = vshrl.u32 %v9313, 7
    %v9315 = vsub.s32 0, %v9314
    %v9316 = vrot.slane %v9311, %v9315
    %v9317 = vlaneseq
    %v9318 = vshrl.u32 %v9317, 7
    %v9319 = vsub.s32 1, %v9318
    %v9320 = vrot.slane %v9311, %v9319
    %v9387 = vunpack.c.l.b16 %v9247
    %v9388 = vunpack.c.h.b16 %v9247
    %v9389 = vunpack.c.l.b16 %v9248
    %v9390 = vunpack.c.h.b16 %v9248
    %v9391 = vunpack.c.l.b16 %v9249
    %v9392 = vunpack.c.h.b16 %v9249
    %v9393 = vunpack.c.l.b16 %v9250
    %v9394 = vunpack.c.h.b16 %v9250
    %v9395 = vunpack.c.l.b16 %v9251
    %v9396 = vunpack.c.h.b16 %v9251
    %v9397 = vunpack.c.l.b16 %v9252
    %v9398 = vunpack.c.h.b16 %v9252
    %v9399 = vunpack.c.l.b16 %v9253
    %v9400 = vunpack.c.h.b16 %v9253
    %v9401 = vunpack.c.l.b16 %v9254
    %v9402 = vunpack.c.h.b16 %v9254
    %v9403 = vunpack.c.l.b16 %v9255
    %v9404 = vunpack.c.h.b16 %v9255
    %v9405 = vunpack.c.l.b16 %v9256
    %v9406 = vunpack.c.h.b16 %v9256
    %v9407 = vunpack.c.l.b16 %v9257
    %v9408 = vunpack.c.h.b16 %v9257
    %v9409 = vunpack.c.l.b16 %v9258
    %v9410 = vunpack.c.h.b16 %v9258
    %v9411 = vunpack.c.l.b16 %v9259
    %v9412 = vunpack.c.h.b16 %v9259
    %v9413 = vunpack.c.l.b16 %v9260
    %v9414 = vunpack.c.h.b16 %v9260
    %v9415 = vunpack.c.l.b16 %v9261
    %v9416 = vunpack.c.h.b16 %v9261
    %v9417 = vunpack.c.l.b16 %v9262
    %v9418 = vunpack.c.h.b16 %v9262
    %v9419 = vunpack.c.l.b16 %v9263
    %v9420 = vunpack.c.h.b16 %v9263
    %v9421 = vunpack.c.l.b16 %v9264
    %v9422 = vunpack.c.h.b16 %v9264
    %v9423 = vunpack.c.l.b16 %v9265
    %v9424 = vunpack.c.h.b16 %v9265
    %v9425 = vunpack.c.l.b16 %v9266
    %v9426 = vunpack.c.h.b16 %v9266
    %v9427 = vunpack.c.l.b16 %v9267
    %v9428 = vunpack.c.h.b16 %v9267
    %v9429 = vunpack.c.l.b16 %v9268
    %v9430 = vunpack.c.h.b16 %v9268
    %v9431 = vunpack.c.l.b16 %v9269
    %v9432 = vunpack.c.h.b16 %v9269
    %v9433 = vunpack.c.l.b16 %v9270
    %v9434 = vunpack.c.h.b16 %v9270
    %v9435 = vunpack.c.l.b16 %v9271
    %v9436 = vunpack.c.h.b16 %v9271
    %v9437 = vunpack.c.l.b16 %v9272
    %v9438 = vunpack.c.h.b16 %v9272
    %v9439 = vunpack.c.l.b16 %v9273
    %v9440 = vunpack.c.h.b16 %v9273
    %v9441 = vunpack.c.l.b16 %v9274
    %v9442 = vunpack.c.h.b16 %v9274
    %v9443 = vunpack.c.l.b16 %v9275
    %v9444 = vunpack.c.h.b16 %v9275
    %v9445 = vunpack.c.l.b16 %v9276
    %v9446 = vunpack.c.h.b16 %v9276
    %v9447 = vunpack.c.l.b16 %v9277
    %v9448 = vunpack.c.h.b16 %v9277
    %v9449 = vunpack.c.l.b16 %v9278
    %v9450 = vunpack.c.h.b16 %v9278
    %v9451 = vunpack.c.l.b16 %v9279
    %v9452 = vunpack.c.h.b16 %v9279
    %v9453 = vunpack.c.l.b16 %v9280
    %v9454 = vunpack.c.h.b16 %v9280
    %v9455 = vunpack.c.l.b16 %v9281
    %v9456 = vunpack.c.h.b16 %v9281
    %v9457 = vunpack.c.l.b16 %v9282
    %v9458 = vunpack.c.h.b16 %v9282
    %v9459 = vunpack.c.l.b16 %v9283
    %v9460 = vunpack.c.h.b16 %v9283
    %v9461 = vunpack.c.l.b16 %v9284
    %v9462 = vunpack.c.h.b16 %v9284
    %v9463 = vunpack.c.l.b16 %v9285
    %v9464 = vunpack.c.h.b16 %v9285
    %v9465 = vunpack.c.l.b16 %v9286
    %v9466 = vunpack.c.h.b16 %v9286
    %v9467 = vunpack.c.l.b16 %v9287
    %v9468 = vunpack.c.h.b16 %v9287
    %v9469 = vunpack.c.l.b16 %v9288
    %v9470 = vunpack.c.h.b16 %v9288
    %v9471 = vunpack.c.l.b16 %v9289
    %v9472 = vunpack.c.h.b16 %v9289
    %v9473 = vunpack.c.l.b16 %v9290
    %v9474 = vunpack.c.h.b16 %v9290
    %v9475 = vunpack.c.l.b16 %v9291
    %v9476 = vunpack.c.h.b16 %v9291
    %v9477 = vunpack.c.l.b16 %v9292
    %v9478 = vunpack.c.h.b16 %v9292
    %v9479 = vunpack.c.l.b16 %v9293
    %v9480 = vunpack.c.h.b16 %v9293
    %v9481 = vunpack.c.l.b16 %v9294
    %v9482 = vunpack.c.h.b16 %v9294
    %v9483 = vunpack.c.l.b16 %v9295
    %v9484 = vunpack.c.h.b16 %v9295
    %v9485 = vunpack.c.l.b16 %v9296
    %v9486 = vunpack.c.h.b16 %v9296
    %v9487 = vunpack.c.l.b16 %v9297
    %v9488 = vunpack.c.h.b16 %v9297
    %v9489 = vunpack.c.l.b16 %v9298
    %v9490 = vunpack.c.h.b16 %v9298
    %v9491 = vunpack.c.l.b16 %v9299
    %v9492 = vunpack.c.h.b16 %v9299
    %v9493 = vunpack.c.l.b16 %v9300
    %v9494 = vunpack.c.h.b16 %v9300
    %v9495 = vunpack.c.l.b16 %v9301
    %v9496 = vunpack.c.h.b16 %v9301
    %v9497 = vunpack.c.l.b16 %v9302
    %v9498 = vunpack.c.h.b16 %v9302
    %v9499 = vunpack.c.l.b16 %v9303
    %v9500 = vunpack.c.h.b16 %v9303
    %v9501 = vunpack.c.l.b16 %v9304
    %v9502 = vunpack.c.h.b16 %v9304
    %v9503 = vunpack.c.l.b16 %v9305
    %v9504 = vunpack.c.h.b16 %v9305
    %v9505 = vunpack.c.l.b16 %v9306
    %v9506 = vunpack.c.h.b16 %v9306
    %v9507 = vunpack.c.l.b16 %v9307
    %v9508 = vunpack.c.h.b16 %v9307
    %v9509 = vunpack.c.l.b16 %v9308
    %v9510 = vunpack.c.h.b16 %v9308
    %v9511 = vunpack.c.l.b16 %v9309
    %v9512 = vunpack.c.h.b16 %v9309
    %v9513 = vunpack.c.l.b16 %v9310
    %v9514 = vunpack.c.h.b16 %v9310
    %v9515 = vpack.c.b16 %v9389, %v9387
    %v9516 = vpack.c.b16 %v9390, %v9388
    %v9517 = vpack.c.b16 %v9393, %v9391
    %v9518 = vpack.c.b16 %v9394, %v9392
    %v9519 = vpack.c.b16 %v9397, %v9395
    %v9520 = vpack.c.b16 %v9398, %v9396
    %v9521 = vpack.c.b16 %v9401, %v9399
    %v9522 = vpack.c.b16 %v9402, %v9400
    %v9523 = vpack.c.b16 %v9405, %v9403
    %v9524 = vpack.c.b16 %v9406, %v9404
    %v9525 = vpack.c.b16 %v9409, %v9407
    %v9526 = vpack.c.b16 %v9410, %v9408
    %v9527 = vpack.c.b16 %v9413, %v9411
    %v9528 = vpack.c.b16 %v9414, %v9412
    %v9529 = vpack.c.b16 %v9417, %v9415
    %v9530 = vpack.c.b16 %v9418, %v9416
    %v9531 = vpack.c.b16 %v9421, %v9419
    %v9532 = vpack.c.b16 %v9422, %v9420
    %v9533 = vpack.c.b16 %v9425, %v9423
    %v9534 = vpack.c.b16 %v9426, %v9424
    %v9535 = vpack.c.b16 %v9429, %v9427
    %v9536 = vpack.c.b16 %v9430, %v9428
    %v9537 = vpack.c.b16 %v9433, %v9431
    %v9538 = vpack.c.b16 %v9434, %v9432
    %v9539 = vpack.c.b16 %v9437, %v9435
    %v9540 = vpack.c.b16 %v9438, %v9436
    %v9541 = vpack.c.b16 %v9441, %v9439
    %v9542 = vpack.c.b16 %v9442, %v9440
    %v9543 = vpack.c.b16 %v9445, %v9443
    %v9544 = vpack.c.b16 %v9446, %v9444
    %v9545 = vpack.c.b16 %v9449, %v9447
    %v9546 = vpack.c.b16 %v9450, %v9448
    %v9547 = vpack.c.b16 %v9453, %v9451
    %v9548 = vpack.c.b16 %v9454, %v9452
    %v9549 = vpack.c.b16 %v9457, %v9455
    %v9550 = vpack.c.b16 %v9458, %v9456
    %v9551 = vpack.c.b16 %v9461, %v9459
    %v9552 = vpack.c.b16 %v9462, %v9460
    %v9553 = vpack.c.b16 %v9465, %v9463
    %v9554 = vpack.c.b16 %v9466, %v9464
    %v9555 = vpack.c.b16 %v9469, %v9467
    %v9556 = vpack.c.b16 %v9470, %v9468
    %v9557 = vpack.c.b16 %v9473, %v9471
    %v9558 = vpack.c.b16 %v9474, %v9472
    %v9559 = vpack.c.b16 %v9477, %v9475
    %v9560 = vpack.c.b16 %v9478, %v9476
    %v9561 = vpack.c.b16 %v9481, %v9479
    %v9562 = vpack.c.b16 %v9482, %v9480
    %v9563 = vpack.c.b16 %v9485, %v9483
    %v9564 = vpack.c.b16 %v9486, %v9484
    %v9565 = vpack.c.b16 %v9489, %v9487
    %v9566 = vpack.c.b16 %v9490, %v9488
    %v9567 = vpack.c.b16 %v9493, %v9491
    %v9568 = vpack.c.b16 %v9494, %v9492
    %v9569 = vpack.c.b16 %v9497, %v9495
    %v9570 = vpack.c.b16 %v9498, %v9496
    %v9571 = vpack.c.b16 %v9501, %v9499
    %v9572 = vpack.c.b16 %v9502, %v9500
    %v9573 = vpack.c.b16 %v9505, %v9503
    %v9574 = vpack.c.b16 %v9506, %v9504
    %v9575 = vpack.c.b16 %v9509, %v9507
    %v9576 = vpack.c.b16 %v9510, %v9508
    %v9577 = vpack.c.b16 %v9513, %v9511
    %v9578 = vpack.c.b16 %v9514, %v9512
    %9643 = vmatprep.subr.bf16.mxu0 %v9530
    %9644 = vmatpush1.bf16.msra.mxu0 %v9529
    %9645 = vmatprep.subr.bf16.mxu0 %v9528
    %9646 = vmatpush1.bf16.msra.mxu0 %v9527
    %9647 = vmatprep.subr.bf16.mxu0 %v9526
    %9648 = vmatpush1.bf16.msra.mxu0 %v9525
    %9649 = vmatprep.subr.bf16.mxu0 %v9524
    %9650 = vmatpush1.bf16.msra.mxu0 %v9523
    %9651 = vmatprep.subr.bf16.mxu0 %v9522
    %9652 = vmatpush1.bf16.msra.mxu0 %v9521
    %9653 = vmatprep.subr.bf16.mxu0 %v9520
    %9654 = vmatpush1.bf16.msra.mxu0 %v9519
    %9655 = vmatprep.subr.bf16.mxu0 %v9518
    %9656 = vmatpush1.bf16.msra.mxu0 %v9517
    %9657 = vmatprep.subr.bf16.mxu0 %v9516
    %9658 = vmatpush1.bf16.msra.mxu0 %v9515
    %9659 = vmatprep.subr.bf16.mxu0 %v9546
    %9660 = vmatpush2.bf16.msra.mxu0 %v9545
    %9661 = vmatprep.subr.bf16.mxu0 %v9544
    %9662 = vmatpush2.bf16.msra.mxu0 %v9543
    %9663 = vmatprep.subr.bf16.mxu0 %v9542
    %9664 = vmatpush2.bf16.msra.mxu0 %v9541
    %9665 = vmatprep.subr.bf16.mxu0 %v9540
    %9666 = vmatpush2.bf16.msra.mxu0 %v9539
    %9667 = vmatprep.subr.bf16.mxu0 %v9538
    %9668 = vmatpush2.bf16.msra.mxu0 %v9537
    %9669 = vmatprep.subr.bf16.mxu0 %v9536
    %9670 = vmatpush2.bf16.msra.mxu0 %v9535
    %9671 = vmatprep.subr.bf16.mxu0 %v9534
    %9672 = vmatpush2.bf16.msra.mxu0 %v9533
    %9673 = vmatprep.subr.bf16.mxu0 %v9532
    %9674 = vmatpush2.bf16.msra.mxu0 %v9531
    %9675 = vmatprep.mubr.bf16.mxu0 %v9244
    %9676 = vmatmul.mubr.bf16.gmra.mxu0 %v9243
    %v9677 = vpop.f32.mrf.mxu0
    %v9678 = vadd.f32 %v9316, %v9677
    %v9679 = vpop.f32.mrf.mxu0
    %v9680 = vadd.f32 %v9320, %v9679
    %v9681 = vpop.f32.mrf.mxu0
    %v9682 = vpop.f32.mrf.mxu0
    %9683 = vdwg.mxu0
    %9684 = vmatprep.subr.bf16.mxu0 %v9562
    %9685 = vmatpush1.bf16.msra.mxu0 %v9561
    %9686 = vmatprep.subr.bf16.mxu0 %v9560
    %9687 = vmatpush1.bf16.msra.mxu0 %v9559
    %9688 = vmatprep.subr.bf16.mxu0 %v9558
    %9689 = vmatpush1.bf16.msra.mxu0 %v9557
    %9690 = vmatprep.subr.bf16.mxu0 %v9556
    %9691 = vmatpush1.bf16.msra.mxu0 %v9555
    %9692 = vmatprep.subr.bf16.mxu0 %v9554
    %9693 = vmatpush1.bf16.msra.mxu0 %v9553
    %9694 = vmatprep.subr.bf16.mxu0 %v9552
    %9695 = vmatpush1.bf16.msra.mxu0 %v9551
    %9696 = vmatprep.subr.bf16.mxu0 %v9550
    %9697 = vmatpush1.bf16.msra.mxu0 %v9549
    %9698 = vmatprep.subr.bf16.mxu0 %v9548
    %9699 = vmatpush1.bf16.msra.mxu0 %v9547
    %9700 = vmatprep.subr.bf16.mxu0 %v9578
    %9701 = vmatpush2.bf16.msra.mxu0 %v9577
    %9702 = vmatprep.subr.bf16.mxu0 %v9576
    %9703 = vmatpush2.bf16.msra.mxu0 %v9575
    %9704 = vmatprep.subr.bf16.mxu0 %v9574
    %9705 = vmatpush2.bf16.msra.mxu0 %v9573
    %9706 = vmatprep.subr.bf16.mxu0 %v9572
    %9707 = vmatpush2.bf16.msra.mxu0 %v9571
    %9708 = vmatprep.subr.bf16.mxu0 %v9570
    %9709 = vmatpush2.bf16.msra.mxu0 %v9569
    %9710 = vmatprep.subr.bf16.mxu0 %v9568
    %9711 = vmatpush2.bf16.msra.mxu0 %v9567
    %9712 = vmatprep.subr.bf16.mxu0 %v9566
    %9713 = vmatpush2.bf16.msra.mxu0 %v9565
    %9714 = vmatprep.subr.bf16.mxu0 %v9564
    %9715 = vmatpush2.bf16.msra.mxu0 %v9563
    %9716 = vmatprep.mubr.bf16.mxu0 %v9246
    %9717 = vmatmul.mubr.bf16.gmra.mxu0 %v9245
    %v9718 = vpop.f32.mrf.mxu0
    %v9719 = vadd.f32 %v9678, %v9718
    %v9720 = vpop.f32.mrf.mxu0
    %v9721 = vadd.f32 %v9680, %v9720
    %v9722 = vpop.f32.mrf.mxu0
    %v9723 = vpop.f32.mrf.mxu0
    %9724 = vdwg.mxu0
    %v9725 = vmax.f32 %v9719, 0.0
    %v9726 = vmax.f32 %v9721, 0.0
    %v9727 = vpack.c.bf16 %v9725, %v9725
    %v9728 = vpack.c.bf16 %v9726, %v9726
    %v9729 = vld [vmem:[%s11] sm:$0xf]
    %v9730 = vld [vmem:[%s11 + $0x4] sm:$0xf]
    %v9731 = vld [vmem:[%s11 + $0x8] sm:$0xf]
    %v9732 = vld [vmem:[%s11 + $0xc] sm:$0xf]
    %v9733 = vld [vmem:[%s11 + $0x10] sm:$0xf]
    %v9734 = vld [vmem:[%s11 + $0x14] sm:$0xf]
    %v9735 = vld [vmem:[%s11 + $0x18] sm:$0xf]
    %v9736 = vld [vmem:[%s11 + $0x1c] sm:$0xf]
    %v9737 = vld [vmem:[%s11 + $0x20] sm:$0xf]
    %v9738 = vld [vmem:[%s11 + $0x24] sm:$0xf]
    %v9739 = vld [vmem:[%s11 + $0x28] sm:$0xf]
    %v9740 = vld [vmem:[%s11 + $0x2c] sm:$0xf]
    %v9741 = vld [vmem:[%s11 + $0x30] sm:$0xf]
    %v9742 = vld [vmem:[%s11 + $0x34] sm:$0xf]
    %v9743 = vld [vmem:[%s11 + $0x38] sm:$0xf]
    %v9744 = vld [vmem:[%s11 + $0x3c] sm:$0xf]
    %v9745 = vld [vmem:[%s11 + $0x40] sm:$0xf]
    %v9746 = vld [vmem:[%s11 + $0x44] sm:$0xf]
    %v9747 = vld [vmem:[%s11 + $0x48] sm:$0xf]
    %v9748 = vld [vmem:[%s11 + $0x4c] sm:$0xf]
    %v9749 = vld [vmem:[%s11 + $0x50] sm:$0xf]
    %v9750 = vld [vmem:[%s11 + $0x54] sm:$0xf]
    %v9751 = vld [vmem:[%s11 + $0x58] sm:$0xf]
    %v9752 = vld [vmem:[%s11 + $0x5c] sm:$0xf]
    %v9753 = vld [vmem:[%s11 + $0x60] sm:$0xf]
    %v9754 = vld [vmem:[%s11 + $0x64] sm:$0xf]
    %v9755 = vld [vmem:[%s11 + $0x68] sm:$0xf]
    %v9756 = vld [vmem:[%s11 + $0x6c] sm:$0xf]
    %v9757 = vld [vmem:[%s11 + $0x70] sm:$0xf]
    %v9758 = vld [vmem:[%s11 + $0x74] sm:$0xf]
    %v9759 = vld [vmem:[%s11 + $0x78] sm:$0xf]
    %v9760 = vld [vmem:[%s11 + $0x7c] sm:$0xf]
    %v9761 = vld [vmem:[%s12] sm:$0x1]
    %v9763 = vlaneseq
    %v9764 = vshrl.u32 %v9763, 7
    %v9765 = vsub.s32 0, %v9764
    %v9766 = vrot.slane %v9761, %v9765
    %v9800 = vunpack.c.l.b16 %v9729
    %v9801 = vunpack.c.l.b16 %v9730
    %v9802 = vunpack.c.l.b16 %v9731
    %v9803 = vunpack.c.l.b16 %v9732
    %v9804 = vunpack.c.l.b16 %v9733
    %v9805 = vunpack.c.l.b16 %v9734
    %v9806 = vunpack.c.l.b16 %v9735
    %v9807 = vunpack.c.l.b16 %v9736
    %v9808 = vunpack.c.l.b16 %v9737
    %v9809 = vunpack.c.l.b16 %v9738
    %v9810 = vunpack.c.l.b16 %v9739
    %v9811 = vunpack.c.l.b16 %v9740
    %v9812 = vunpack.c.l.b16 %v9741
    %v9813 = vunpack.c.l.b16 %v9742
    %v9814 = vunpack.c.l.b16 %v9743
    %v9815 = vunpack.c.l.b16 %v9744
    %v9816 = vunpack.c.l.b16 %v9745
    %v9817 = vunpack.c.l.b16 %v9746
    %v9818 = vunpack.c.l.b16 %v9747
    %v9819 = vunpack.c.l.b16 %v9748
    %v9820 = vunpack.c.l.b16 %v9749
    %v9821 = vunpack.c.l.b16 %v9750
    %v9822 = vunpack.c.l.b16 %v9751
    %v9823 = vunpack.c.l.b16 %v9752
    %v9824 = vunpack.c.l.b16 %v9753
    %v9825 = vunpack.c.l.b16 %v9754
    %v9826 = vunpack.c.l.b16 %v9755
    %v9827 = vunpack.c.l.b16 %v9756
    %v9828 = vunpack.c.l.b16 %v9757
    %v9829 = vunpack.c.l.b16 %v9758
    %v9830 = vunpack.c.l.b16 %v9759
    %v9831 = vunpack.c.l.b16 %v9760
    %v9832 = vpack.c.b16 %v9801, %v9800
    %v9833 = vpack.c.b16 %v9803, %v9802
    %v9834 = vpack.c.b16 %v9805, %v9804
    %v9835 = vpack.c.b16 %v9807, %v9806
    %v9836 = vpack.c.b16 %v9809, %v9808
    %v9837 = vpack.c.b16 %v9811, %v9810
    %v9838 = vpack.c.b16 %v9813, %v9812
    %v9839 = vpack.c.b16 %v9815, %v9814
    %v9840 = vpack.c.b16 %v9817, %v9816
    %v9841 = vpack.c.b16 %v9819, %v9818
    %v9842 = vpack.c.b16 %v9821, %v9820
    %v9843 = vpack.c.b16 %v9823, %v9822
    %v9844 = vpack.c.b16 %v9825, %v9824
    %v9845 = vpack.c.b16 %v9827, %v9826
    %v9846 = vpack.c.b16 %v9829, %v9828
    %v9847 = vpack.c.b16 %v9831, %v9830
    %9864 = vmatprep.subr.bf16.mxu0 0
    %9865 = vmatpush1.bf16.msra.mxu0 %v9839
    %9866 = vmatprep.subr.bf16.mxu0 0
    %9867 = vmatpush1.bf16.msra.mxu0 %v9838
    %9868 = vmatprep.subr.bf16.mxu0 0
    %9869 = vmatpush1.bf16.msra.mxu0 %v9837
    %9870 = vmatprep.subr.bf16.mxu0 0
    %9871 = vmatpush1.bf16.msra.mxu0 %v9836
    %9872 = vmatprep.subr.bf16.mxu0 0
    %9873 = vmatpush1.bf16.msra.mxu0 %v9835
    %9874 = vmatprep.subr.bf16.mxu0 0
    %9875 = vmatpush1.bf16.msra.mxu0 %v9834
    %9876 = vmatprep.subr.bf16.mxu0 0
    %9877 = vmatpush1.bf16.msra.mxu0 %v9833
    %9878 = vmatprep.subr.bf16.mxu0 0
    %9879 = vmatpush1.bf16.msra.mxu0 %v9832
    %9880 = vmatprep.subr.bf16.mxu0 0
    %9881 = vmatpush2.bf16.msra.mxu0 %v9847
    %9882 = vmatprep.subr.bf16.mxu0 0
    %9883 = vmatpush2.bf16.msra.mxu0 %v9846
    %9884 = vmatprep.subr.bf16.mxu0 0
    %9885 = vmatpush2.bf16.msra.mxu0 %v9845
    %9886 = vmatprep.subr.bf16.mxu0 0
    %9887 = vmatpush2.bf16.msra.mxu0 %v9844
    %9888 = vmatprep.subr.bf16.mxu0 0
    %9889 = vmatpush2.bf16.msra.mxu0 %v9843
    %9890 = vmatprep.subr.bf16.mxu0 0
    %9891 = vmatpush2.bf16.msra.mxu0 %v9842
    %9892 = vmatprep.subr.bf16.mxu0 0
    %9893 = vmatpush2.bf16.msra.mxu0 %v9841
    %9894 = vmatprep.subr.bf16.mxu0 0
    %9895 = vmatpush2.bf16.msra.mxu0 %v9840
    %9896 = vmatprep.mubr.bf16.mxu0 %v9728
    %9897 = vmatmul.mubr.bf16.gmra.mxu0 %v9727
    %v9898 = vpop.f32.mrf.mxu0
    %v9899 = vadd.f32 %v9766, %v9898
    %v9900 = vpop.f32.mrf.mxu0
    %v9901 = vpop.f32.mrf.mxu0
    %v9902 = vpop.f32.mrf.mxu0
    %9903 = vdwg.mxu0
    %vm9904 = vcmask 72704
    %9905 = vst.msk [vmem:[#allocation7] sm:$0xff] %vm9904, %v9899
    // Predicated region
    $region62: #{tpu_custom_call.1} parent=1 // pred_check
      _
    $region63: #{tpu_custom_call.1} parent=1 // pred_check_branch
      %9907 = sbr.rel (0) target = $region65
    $region64: #{tpu_custom_call.1} parent=1 // pred_region
      %s9909 = ssub.s32 128, 128
      %9910 = vsyncadd [#allocation4], %s9909
      %s9912 = sshll.u32 [#allocation7], 4
      %s9913 = int_to_ptr.vmem [resolvable:$true] %s9912
      %9915 = dma.vmem_to_hbm [thread:$0]  %s9913, 128, %s13, [#allocation4]
    $region65: #{tpu_custom_call.1} parent=1 // pred_fallthru
      _
    // Predicated region
    $region66: #{tpu_custom_call.1} parent=1 // pred_check
      _
    $region67: #{tpu_custom_call.1} parent=1 // pred_check_branch
      %9917 = sbr.rel (0) target = $region69
    $region68: #{tpu_custom_call.1} parent=1 // pred_region
      %9918 = dma.done [#allocation4], 128
    $region69: #{tpu_custom_call.1} parent=1 // pred_fallthru
      _
    %9919 = vsyncpa [#allocation3], 1
    %9920 = vsyncpa [#allocation6], 1
    %9921 = vsyncpa [#allocation4], 1

</llo_original>
